<compile_context>
chip_gen: v7x
topology: tpu7x:2x2x1
jax: 0.10.0
libtpu: 0.0.40
codegen_flags: <defaults>
</compile_context>

<pallas_src>
import functools

import jax
import jax.numpy as jnp
from jax import lax
from jax.experimental import pallas as pl
from jax.experimental.pallas import tpu as pltpu


def _round_up(x, m):
    return (x + m - 1) // m * m


def _pick_divisor_tile(dim, max_tile, align):
    """Largest multiple of `align` that divides `dim` and is <= max_tile."""
    best = align
    t = align
    while t <= min(dim, max_tile):
        if dim % t == 0:
            best = t
        t += align
    return best


def _choose_m(m):
    """(Mp, tm): pad/tile the M axis so tiles are never pathologically skinny
    unless M itself is tiny (avoids 16-wide tiles at 16*prime batch sizes)."""
    mp = _round_up(m, 16)
    if mp <= 256:
        return mp, mp
    tm = _pick_divisor_tile(mp, 256, 16)
    if tm < 128:                       # awkward shape: pad instead of shrinking tm
        mp = _round_up(mp, 256)
        tm = 256
    return mp, tm


# ---------------------------------------------------------------------------
# Pallas kernel 1: conv-as-matmul, single K block.
# out = relu(patches @ W + b) emitted directly as bf16.
# ---------------------------------------------------------------------------
def _conv_mm_kernel(a_ref, w_ref, b_ref, o_ref):
    y = jnp.dot(a_ref[...], w_ref[...], preferred_element_type=jnp.float32)
    y = y + b_ref[...]
    o_ref[...] = jnp.maximum(y, 0.0).astype(o_ref.dtype)


def conv_matmul_bias_relu(patches, w_pre, b_pre):
    """relu(patches @ w_pre + b_pre) -> bf16.
    patches: [M, K] bf16 (K already 128-aligned), w_pre: [K, N] bf16,
    b_pre: [1, N] f32.  Returns [Mp, N] bf16 (rows >= M are padding)."""
    m, k = patches.shape
    k2, n = w_pre.shape
    assert k == k2
    mp, tm = _choose_m(m)
    if mp != m:
        patches = jnp.pad(patches, ((0, mp - m), (0, 0)))
    return pl.pallas_call(
        _conv_mm_kernel,
        out_shape=jax.ShapeDtypeStruct((mp, n), jnp.bfloat16),
        grid=(mp // tm,),
        in_specs=[
            pl.BlockSpec((tm, k), lambda i: (i, 0)),
            pl.BlockSpec((k, n), lambda i: (0, 0)),
            pl.BlockSpec((1, n), lambda i: (0, 0)),
        ],
        out_specs=pl.BlockSpec((tm, n), lambda i: (i, 0)),
        compiler_params=pltpu.CompilerParams(
            dimension_semantics=("parallel",)),
    )(patches, w_pre, b_pre)


# ---------------------------------------------------------------------------
# Pallas kernel 2: fused fc1 (adv1||val1) + dueling head.
# K-tiled matmul accumulates into a VMEM f32 scratch; at the last K step the
# epilogue does relu(h) @ W2 + b2 (block-diag adv2||val2) and the combine
# val + adv - mean(adv), writing only the (tm, 128) Q block.
# ---------------------------------------------------------------------------
def _fc_dueling_kernel(a_ref, w1_ref, b1_ref, w2_ref, b2_ref, o_ref, acc_ref,
                       *, action_dim):
    k = pl.program_id(1)

    @pl.when(k == 0)
    def _():
        acc_ref[...] = jnp.broadcast_to(b1_ref[...], acc_ref.shape)

    acc_ref[...] += jnp.dot(a_ref[...], w1_ref[...],
                            preferred_element_type=jnp.float32)

    @pl.when(k == pl.num_programs(1) - 1)
    def _():
        h = jnp.maximum(acc_ref[...], 0.0).astype(jnp.bfloat16)
        q = jnp.dot(h, w2_ref[...], preferred_element_type=jnp.float32)
        q = q + b2_ref[...]
        lane = lax.broadcasted_iota(jnp.int32, q.shape, 1)
        adv_mask = lane < action_dim
        val = jnp.sum(jnp.where(lane == action_dim, q, 0.0),
                      axis=1, keepdims=True)
        mean = jnp.sum(jnp.where(adv_mask, q, 0.0),
                       axis=1, keepdims=True) * (1.0 / action_dim)
        o_ref[...] = jnp.where(adv_mask, q + val - mean, 0.0)


def fc_dueling(feat, w1_pre, b1_pre, w2_pre, b2_pre, action_dim):
    """feat: [M, 3136] bf16 -> Q: [M, action_dim] f32."""
    m, k = feat.shape
    kp, hdim = w1_pre.shape            # (3200, 1024)
    np2 = w2_pre.shape[1]              # 128
    mp, tm = _choose_m(m)
    if (mp, kp) != (m, k):
        feat = jnp.pad(feat, ((0, mp - m), (0, kp - k)))
    tk = _pick_divisor_tile(kp, 1024, 128)    # 640 for kp = 3200
    grid = (mp // tm, kp // tk)
    out = pl.pallas_call(
        functools.partial(_fc_dueling_kernel, action_dim=action_dim),
        out_shape=jax.ShapeDtypeStruct((mp, np2), jnp.float32),
        grid=grid,
        in_specs=[
            pl.BlockSpec((tm, tk), lambda i, kk: (i, kk)),
            pl.BlockSpec((tk, hdim), lambda i, kk: (kk, 0)),
            pl.BlockSpec((1, hdim), lambda i, kk: (0, 0)),
            pl.BlockSpec((hdim, np2), lambda i, kk: (0, 0)),
            pl.BlockSpec((1, np2), lambda i, kk: (0, 0)),
        ],
        out_specs=pl.BlockSpec((tm, np2), lambda i, kk: (i, 0)),
        scratch_shapes=[pltpu.VMEM((tm, hdim), jnp.float32)],
        compiler_params=pltpu.CompilerParams(
            dimension_semantics=("parallel", "arbitrary")),
    )(feat, w1_pre, b1_pre, w2_pre, b2_pre)
    return out[:m, :action_dim]


# ---------------------------------------------------------------------------
# Patch extraction: one XLA op per conv layer, bf16, feature order (c, i, j).
# ---------------------------------------------------------------------------
def extract_patches(x, kh, kw, stride):
    """x: [B, H, W, C] bf16 -> ([B*OH*OW, C*kh*kw] bf16, OH, OW)."""
    b = x.shape[0]
    p = lax.conv_general_dilated_patches(
        x, filter_shape=(kh, kw), window_strides=(stride, stride),
        padding="VALID", dimension_numbers=("NHWC", "HWIO", "NHWC"))
    oh, ow = p.shape[1], p.shape[2]
    return p.reshape(b * oh * ow, p.shape[3]), oh, ow


# ---------------------------------------------------------------------------
# Parameters (deterministic, synthetic — PyTorch layout) and one-time prep.
# ---------------------------------------------------------------------------
def init_params(key, action_dim):
    ks = jax.random.split(key, 14)

    def w(k, shape, scale=0.05):
        return (scale * jax.random.normal(k, shape)).astype(jnp.float32)

    return {
        "conv1_w": w(ks[0], (32, 8, 8, 8)),
        "conv1_b": w(ks[1], (32,)),
        "conv2_w": w(ks[2], (64, 32, 4, 4)),
        "conv2_b": w(ks[3], (64,)),
        "conv3_w": w(ks[4], (64, 64, 3, 3)),
        "conv3_b": w(ks[5], (64,)),
        "adv1_w": w(ks[6], (512, 3136), 0.02),
        "adv1_b": w(ks[7], (512,)),
        "adv2_w": w(ks[8], (action_dim, 512), 0.02),
        "adv2_b": w(ks[9], (action_dim,)),
        "val1_w": w(ks[10], (512, 3136), 0.02),
        "val1_b": w(ks[11], (512,)),
        "val2_w": w(ks[12], (1, 512), 0.02),
        "val2_b": w(ks[13], (1,)),
    }


def prepare_params(params, action_dim):
    """One-time (outside jit) transpose / pad / bf16-cast + adv/val fusion."""

    def conv_w_mat(w, cin_pad, scale=1.0):
        # Rows ordered (c, i, j) to match conv_general_dilated_patches output.
        cout, cin, kh, kw = w.shape
        m = jnp.zeros((cin_pad, kh, kw, cout), jnp.float32)
        m = m.at[:cin].set(jnp.transpose(w, (1, 2, 3, 0)) * scale)
        return m.reshape(cin_pad * kh * kw, cout)

    def pad_cols_bf16(m, n_pad):
        return jnp.pad(m, ((0, 0), (0, n_pad - m.shape[1]))).astype(jnp.bfloat16)

    def bias_row(b, n_pad):
        return jnp.pad(b, (0, n_pad - b.shape[0])).reshape(1, n_pad).astype(jnp.float32)

    # conv1: fold 1/255 normalization into the weights; out channels 32 -> 128.
    c1w = pad_cols_bf16(conv_w_mat(params["conv1_w"], 8, scale=1.0 / 255.0), 128)
    c1b = bias_row(params["conv1_b"], 128)
    # conv2: in channels padded 32 -> 128 (zero rows), out 64 -> 128.
    c2w = pad_cols_bf16(conv_w_mat(params["conv2_w"], 128), 128)
    c2b = bias_row(params["conv2_b"], 128)
    # conv3: in channels padded 64 -> 128, out stays 64 (feeds fc1 directly).
    c3w = conv_w_mat(params["conv3_w"], 128).astype(jnp.bfloat16)
    c3b = params["conv3_b"].reshape(1, 64).astype(jnp.float32)

    # Fused adv1 || val1: [3136, 1024].  PyTorch columns are (c, h, w) order;
    # our features are NHWC-flattened (h, w, c) -> permute, then pad K to 3200.
    wf = jnp.concatenate([params["adv1_w"], params["val1_w"]], axis=0)   # [1024, 3136]
    wf = wf.reshape(1024, 64, 7, 7).transpose(0, 2, 3, 1).reshape(1024, 3136).T
    wf = jnp.pad(wf, ((0, 3200 - 3136), (0, 0))).astype(jnp.bfloat16)
    bf = jnp.concatenate([params["adv1_b"], params["val1_b"]]
                         ).reshape(1, 1024).astype(jnp.float32)

    # Fused block-diagonal adv2 || val2 head: [1024, 128].
    A = action_dim
    wh = jnp.zeros((1024, 128), jnp.float32)
    wh = wh.at[:512, :A].set(params["adv2_w"].T)
    wh = wh.at[512:, A].set(params["val2_w"][0])
    bh = jnp.zeros((1, 128), jnp.float32)
    bh = bh.at[0, :A].set(params["adv2_b"])
    bh = bh.at[0, A].set(params["val2_b"][0])

    return {
        "conv1_w": c1w, "conv1_b": c1b,
        "conv2_w": c2w, "conv2_b": c2b,
        "conv3_w": c3w, "conv3_b": c3b,
        "fc1_w": wf, "fc1_b": bf,
        "fc2_w": wh.astype(jnp.bfloat16), "fc2_b": bh,
    }


def dueling_dqn_forward(prepped, x, *, action_dim):
    b = x.shape[0]
    # Single NCHW -> NHWC transpose + bf16 cast (1/255 is folded into conv1_w).
    x = jnp.transpose(x.astype(jnp.bfloat16), (0, 2, 3, 1))

    p1, oh1, ow1 = extract_patches(x, 8, 8, 4)                     # [B*400, 512]
    y1 = conv_matmul_bias_relu(p1, prepped["conv1_w"], prepped["conv1_b"])
    y1 = y1[:b * oh1 * ow1].reshape(b, oh1, ow1, 128)              # [B,20,20,128]

    p2, oh2, ow2 = extract_patches(y1, 4, 4, 2)                    # [B*81, 2048]
    y2 = conv_matmul_bias_relu(p2, prepped["conv2_w"], prepped["conv2_b"])
    y2 = y2[:b * oh2 * ow2].reshape(b, oh2, ow2, 128)              # [B,9,9,128]

    p3, oh3, ow3 = extract_patches(y2, 3, 3, 1)                    # [B*49, 1152]
    y3 = conv_matmul_bias_relu(p3, prepped["conv3_w"], prepped["conv3_b"])
    feat = y3[:b * oh3 * ow3].reshape(b, oh3 * ow3 * 64)           # [B, 3136] bf16

    return fc_dueling(feat, prepped["fc1_w"], prepped["fc1_b"],
                      prepped["fc2_w"], prepped["fc2_b"], action_dim)


# ---------------------------------------------------------------------------
# Pure-JAX reference (PyTorch semantics, original NCHW params) for validation
# ---------------------------------------------------------------------------
def reference_forward(params, x):
    x = x.astype(jnp.float32) / 255.0

    def conv(x, w, b, s):
        y = lax.conv_general_dilated(x, w, (s, s), "VALID",
                                     dimension_numbers=("NCHW", "OIHW", "NCHW"))
        return jax.nn.relu(y + b[None, :, None, None])

    x = conv(x, params["conv1_w"], params["conv1_b"], 4)
    x = conv(x, params["conv2_w"], params["conv2_b"], 2)
    x = conv(x, params["conv3_w"], params["conv3_b"], 1)
    feat = x.reshape(x.shape[0], -1)
    h_adv = jax.nn.relu(feat @ params["adv1_w"].T + params["adv1_b"])
    adv = h_adv @ params["adv2_w"].T + params["adv2_b"]
    h_val = jax.nn.relu(feat @ params["val1_w"].T + params["val1_b"])
    val = h_val @ params["val2_w"].T + params["val2_b"]
    return val + adv - adv.mean(axis=1, keepdims=True)


if __name__ == "__main__":
    action_dim = 6
    key = jax.random.PRNGKey(0)
    kx, kp = jax.random.split(key)
    # Atari-style input implied by fc_input_dim = 64*7*7: [B, 8, 84, 84]
    x = jax.random.uniform(kx, (2, 8, 84, 84), jnp.float32, 0.0, 255.0)
    params = init_params(kp, action_dim)
    prepped = prepare_params(params, action_dim)   # one-time, outside the jit hot path

    fwd = jax.jit(functools.partial(dueling_dqn_forward, action_dim=action_dim))
    out = jax.block_until_ready(fwd(prepped, x))
    assert out.shape == (2, action_dim)

    ref = reference_forward(params, x)
    max_err = float(jnp.max(jnp.abs(out - ref)))
    assert jnp.allclose(out, ref, rtol=2e-2, atol=2e-2), f"max err {max_err}"

    print("KERNEL_OK")
</pallas_src>

<mosaic_0001>
module attributes {stable_mosaic.version = 11 : i64} {
  func.func @_conv_mm_kernel(%arg0: i32, %arg1: memref<160x512xbf16, #tpu.memory_space<vmem>>, %arg2: memref<512x128xbf16, #tpu.memory_space<vmem>>, %arg3: memref<1x128xf32, #tpu.memory_space<vmem>>, %arg4: memref<160x128xbf16, #tpu.memory_space<vmem>>) attributes {dimension_semantics = [#tpu.dimension_semantics<parallel>], iteration_bounds = array<i64: 5>, scalar_prefetch = 0 : i64, scratch_operands = 0 : i64, tpu.core_type = #tpu.core_type<tc>, window_params = [{transform_indices = @transform_0, window_bounds = array<i64: 160, 512>}, {pipeline_mode = #tpu.pipeline_mode<synchronous>, transform_indices = @transform_1, window_bounds = array<i64: 512, 128>}, {pipeline_mode = #tpu.pipeline_mode<synchronous>, transform_indices = @transform_2, window_bounds = array<i64: 1, 128>}, {transform_indices = @transform_3, window_bounds = array<i64: 160, 128>}]} {
    %c0 = arith.constant 0 : index
    %c0_0 = arith.constant 0 : index
    %0 = vector.load %arg1[%c0, %c0_0] : memref<160x512xbf16, #tpu.memory_space<vmem>>, vector<160x512xbf16>
    %c0_1 = arith.constant 0 : index
    %c0_2 = arith.constant 0 : index
    %1 = vector.load %arg2[%c0_1, %c0_2] : memref<512x128xbf16, #tpu.memory_space<vmem>>, vector<512x128xbf16>
    %cst = arith.constant dense<0.000000e+00> : vector<160x128xf32>
    %2 = tpu.matmul %0, %1, %cst {dimension_numbers = #tpu.dot_dimension_numbers<[1], [0], [0], [1], [0, 0, 1, 1], [], []>} : vector<160x512xbf16>, vector<512x128xbf16>, vector<160x128xf32> -> vector<160x128xf32>
    %c0_3 = arith.constant 0 : index
    %c0_4 = arith.constant 0 : index
    %3 = vector.load %arg3[%c0_3, %c0_4] : memref<1x128xf32, #tpu.memory_space<vmem>>, vector<1x128xf32>
    %4 = vector.broadcast %3 : vector<1x128xf32> to vector<160x128xf32>
    %5 = arith.addf %2, %4 : vector<160x128xf32>
    %cst_5 = arith.constant 0.000000e+00 : f32
    %6 = vector.broadcast %cst_5 : f32 to vector<160x128xf32>
    %7 = arith.maximumf %5, %6 : vector<160x128xf32>
    %8 = arith.truncf %7 : vector<160x128xf32> to vector<160x128xbf16>
    %c0_6 = arith.constant 0 : index
    %c0_7 = arith.constant 0 : index
    %9 = vector.load %arg4[%c0_6, %c0_7] : memref<160x128xbf16, #tpu.memory_space<vmem>>, vector<160x128xbf16>
    tpu.vector_store %arg4[%c0_6, %c0_7], %8 {strides = array<i32>} : memref<160x128xbf16, #tpu.memory_space<vmem>>, vector<160x128xbf16>,
    return
  }
  func.func @transform_0(%arg0: i32) -> (i32, i32) {
    %c0_i32 = arith.constant 0 : i32
    %c0_i32_0 = arith.constant 0 : i32
    return %arg0, %c0_i32 : i32, i32
  }
  func.func @transform_1(%arg0: i32) -> (i32, i32) {
    %c0_i32 = arith.constant 0 : i32
    %c0_i32_0 = arith.constant 0 : i32
    %c0_i32_1 = arith.constant 0 : i32
    return %c0_i32, %c0_i32_0 : i32, i32
  }
  func.func @transform_2(%arg0: i32) -> (i32, i32) {
    %c0_i32 = arith.constant 0 : i32
    %c0_i32_0 = arith.constant 0 : i32
    %c0_i32_1 = arith.constant 0 : i32
    return %c0_i32, %c0_i32_0 : i32, i32
  }
  func.func @transform_3(%arg0: i32) -> (i32, i32) {
    %c0_i32 = arith.constant 0 : i32
    %c0_i32_0 = arith.constant 0 : i32
    return %arg0, %c0_i32 : i32, i32
  }
}

module attributes {stable_mosaic.version = 11 : i64} {
  func.func @_conv_mm_kernel(%arg0: i32, %arg1: memref<176x2048xbf16, #tpu.memory_space<vmem>>, %arg2: memref<2048x128xbf16, #tpu.memory_space<vmem>>, %arg3: memref<1x128xf32, #tpu.memory_space<vmem>>, %arg4: memref<176x128xbf16, #tpu.memory_space<vmem>>) attributes {dimension_semantics = [#tpu.dimension_semantics<parallel>], iteration_bounds = array<i64: 1>, scalar_prefetch = 0 : i64, scratch_operands = 0 : i64, tpu.core_type = #tpu.core_type<tc>, window_params = [{transform_indices = @transform_0, window_bounds = array<i64: 176, 2048>}, {pipeline_mode = #tpu.pipeline_mode<synchronous>, transform_indices = @transform_1, window_bounds = array<i64: 2048, 128>}, {pipeline_mode = #tpu.pipeline_mode<synchronous>, transform_indices = @transform_2, window_bounds = array<i64: 1, 128>}, {transform_indices = @transform_3, window_bounds = array<i64: 176, 128>}]} {
    %c0 = arith.constant 0 : index
    %c0_0 = arith.constant 0 : index
    %0 = vector.load %arg1[%c0, %c0_0] : memref<176x2048xbf16, #tpu.memory_space<vmem>>, vector<176x2048xbf16>
    %c0_1 = arith.constant 0 : index
    %c0_2 = arith.constant 0 : index
    %1 = vector.load %arg2[%c0_1, %c0_2] : memref<2048x128xbf16, #tpu.memory_space<vmem>>, vector<2048x128xbf16>
    %cst = arith.constant dense<0.000000e+00> : vector<176x128xf32>
    %2 = tpu.matmul %0, %1, %cst {dimension_numbers = #tpu.dot_dimension_numbers<[1], [0], [0], [1], [0, 0, 1, 1], [], []>} : vector<176x2048xbf16>, vector<2048x128xbf16>, vector<176x128xf32> -> vector<176x128xf32>
    %c0_3 = arith.constant 0 : index
    %c0_4 = arith.constant 0 : index
    %3 = vector.load %arg3[%c0_3, %c0_4] : memref<1x128xf32, #tpu.memory_space<vmem>>, vector<1x128xf32>
    %4 = vector.broadcast %3 : vector<1x128xf32> to vector<176x128xf32>
    %5 = arith.addf %2, %4 : vector<176x128xf32>
    %cst_5 = arith.constant 0.000000e+00 : f32
    %6 = vector.broadcast %cst_5 : f32 to vector<176x128xf32>
    %7 = arith.maximumf %5, %6 : vector<176x128xf32>
    %8 = arith.truncf %7 : vector<176x128xf32> to vector<176x128xbf16>
    %c0_6 = arith.constant 0 : index
    %c0_7 = arith.constant 0 : index
    %9 = vector.load %arg4[%c0_6, %c0_7] : memref<176x128xbf16, #tpu.memory_space<vmem>>, vector<176x128xbf16>
    tpu.vector_store %arg4[%c0_6, %c0_7], %8 {strides = array<i32>} : memref<176x128xbf16, #tpu.memory_space<vmem>>, vector<176x128xbf16>,
    return
  }
  func.func @transform_0(%arg0: i32) -> (i32, i32) {
    %c0_i32 = arith.constant 0 : i32
    %c0_i32_0 = arith.constant 0 : i32
    return %arg0, %c0_i32 : i32, i32
  }
  func.func @transform_1(%arg0: i32) -> (i32, i32) {
    %c0_i32 = arith.constant 0 : i32
    %c0_i32_0 = arith.constant 0 : i32
    %c0_i32_1 = arith.constant 0 : i32
    return %c0_i32, %c0_i32_0 : i32, i32
  }
  func.func @transform_2(%arg0: i32) -> (i32, i32) {
    %c0_i32 = arith.constant 0 : i32
    %c0_i32_0 = arith.constant 0 : i32
    %c0_i32_1 = arith.constant 0 : i32
    return %c0_i32, %c0_i32_0 : i32, i32
  }
  func.func @transform_3(%arg0: i32) -> (i32, i32) {
    %c0_i32 = arith.constant 0 : i32
    %c0_i32_0 = arith.constant 0 : i32
    return %arg0, %c0_i32 : i32, i32
  }
}

module attributes {stable_mosaic.version = 11 : i64} {
  func.func @_conv_mm_kernel(%arg0: i32, %arg1: memref<112x1152xbf16, #tpu.memory_space<vmem>>, %arg2: memref<1152x64xbf16, #tpu.memory_space<vmem>>, %arg3: memref<1x64xf32, #tpu.memory_space<vmem>>, %arg4: memref<112x64xbf16, #tpu.memory_space<vmem>>) attributes {dimension_semantics = [#tpu.dimension_semantics<parallel>], iteration_bounds = array<i64: 1>, scalar_prefetch = 0 : i64, scratch_operands = 0 : i64, tpu.core_type = #tpu.core_type<tc>, window_params = [{transform_indices = @transform_0, window_bounds = array<i64: 112, 1152>}, {pipeline_mode = #tpu.pipeline_mode<synchronous>, transform_indices = @transform_1, window_bounds = array<i64: 1152, 64>}, {pipeline_mode = #tpu.pipeline_mode<synchronous>, transform_indices = @transform_2, window_bounds = array<i64: 1, 64>}, {transform_indices = @transform_3, window_bounds = array<i64: 112, 64>}]} {
    %c0 = arith.constant 0 : index
    %c0_0 = arith.constant 0 : index
    %0 = vector.load %arg1[%c0, %c0_0] : memref<112x1152xbf16, #tpu.memory_space<vmem>>, vector<112x1152xbf16>
    %c0_1 = arith.constant 0 : index
    %c0_2 = arith.constant 0 : index
    %1 = vector.load %arg2[%c0_1, %c0_2] : memref<1152x64xbf16, #tpu.memory_space<vmem>>, vector<1152x64xbf16>
    %cst = arith.constant dense<0.000000e+00> : vector<112x64xf32>
    %2 = tpu.matmul %0, %1, %cst {dimension_numbers = #tpu.dot_dimension_numbers<[1], [0], [0], [1], [0, 0, 1, 1], [], []>} : vector<112x1152xbf16>, vector<1152x64xbf16>, vector<112x64xf32> -> vector<112x64xf32>
    %c0_3 = arith.constant 0 : index
    %c0_4 = arith.constant 0 : index
    %3 = vector.load %arg3[%c0_3, %c0_4] : memref<1x64xf32, #tpu.memory_space<vmem>>, vector<1x64xf32>
    %4 = vector.broadcast %3 : vector<1x64xf32> to vector<112x64xf32>
    %5 = arith.addf %2, %4 : vector<112x64xf32>
    %cst_5 = arith.constant 0.000000e+00 : f32
    %6 = vector.broadcast %cst_5 : f32 to vector<112x64xf32>
    %7 = arith.maximumf %5, %6 : vector<112x64xf32>
    %8 = arith.truncf %7 : vector<112x64xf32> to vector<112x64xbf16>
    %c0_6 = arith.constant 0 : index
    %c0_7 = arith.constant 0 : index
    %9 = vector.load %arg4[%c0_6, %c0_7] : memref<112x64xbf16, #tpu.memory_space<vmem>>, vector<112x64xbf16>
    tpu.vector_store %arg4[%c0_6, %c0_7], %8 {strides = array<i32>} : memref<112x64xbf16, #tpu.memory_space<vmem>>, vector<112x64xbf16>,
    return
  }
  func.func @transform_0(%arg0: i32) -> (i32, i32) {
    %c0_i32 = arith.constant 0 : i32
    %c0_i32_0 = arith.constant 0 : i32
    return %arg0, %c0_i32 : i32, i32
  }
  func.func @transform_1(%arg0: i32) -> (i32, i32) {
    %c0_i32 = arith.constant 0 : i32
    %c0_i32_0 = arith.constant 0 : i32
    %c0_i32_1 = arith.constant 0 : i32
    return %c0_i32, %c0_i32_0 : i32, i32
  }
  func.func @transform_2(%arg0: i32) -> (i32, i32) {
    %c0_i32 = arith.constant 0 : i32
    %c0_i32_0 = arith.constant 0 : i32
    %c0_i32_1 = arith.constant 0 : i32
    return %c0_i32, %c0_i32_0 : i32, i32
  }
  func.func @transform_3(%arg0: i32) -> (i32, i32) {
    %c0_i32 = arith.constant 0 : i32
    %c0_i32_0 = arith.constant 0 : i32
    return %arg0, %c0_i32 : i32, i32
  }
}

module attributes {stable_mosaic.version = 11 : i64} {
  func.func @_fc_dueling_kernel(%arg0: i32, %arg1: i32, %arg2: memref<16x640xbf16, #tpu.memory_space<vmem>>, %arg3: memref<640x1024xbf16, #tpu.memory_space<vmem>>, %arg4: memref<1x1024xf32, #tpu.memory_space<vmem>>, %arg5: memref<1024x128xbf16, #tpu.memory_space<vmem>>, %arg6: memref<1x128xf32, #tpu.memory_space<vmem>>, %arg7: memref<16x128xf32, #tpu.memory_space<vmem>>, %arg8: memref<16x1024xf32, #tpu.memory_space<vmem>>) attributes {dimension_semantics = [#tpu.dimension_semantics<parallel>, #tpu.dimension_semantics<arbitrary>], iteration_bounds = array<i64: 1, 5>, scalar_prefetch = 0 : i64, scratch_operands = 1 : i64, tpu.core_type = #tpu.core_type<tc>, window_params = [{transform_indices = @transform_0, window_bounds = array<i64: 16, 640>}, {transform_indices = @transform_1, window_bounds = array<i64: 640, 1024>}, {pipeline_mode = #tpu.pipeline_mode<synchronous>, transform_indices = @transform_2, window_bounds = array<i64: 1, 1024>}, {pipeline_mode = #tpu.pipeline_mode<synchronous>, transform_indices = @transform_3, window_bounds = array<i64: 1024, 128>}, {pipeline_mode = #tpu.pipeline_mode<synchronous>, transform_indices = @transform_4, window_bounds = array<i64: 1, 128>}, {transform_indices = @transform_5, window_bounds = array<i64: 16, 128>}]} {
    %c0_i32 = arith.constant 0 : i32
    %0 = arith.cmpi eq, %arg1, %c0_i32 : i32
    %1 = arith.extui %0 : i1 to i32
    %c0_i32_0 = arith.constant 0 : i32
    %2 = arith.cmpi ne, %1, %c0_i32_0 : i32
    scf.if %2 {
      %c0_9 = arith.constant 0 : index
      %c0_10 = arith.constant 0 : index
      %12 = vector.load %arg4[%c0_9, %c0_10] : memref<1x1024xf32, #tpu.memory_space<vmem>>, vector<1x1024xf32>
      %13 = vector.shape_cast %12 : vector<1x1024xf32> to vector<1x1024xf32>
      %14 = vector.broadcast %13 : vector<1x1024xf32> to vector<16x1024xf32>
      %c0_11 = arith.constant 0 : index
      %c0_12 = arith.constant 0 : index
      %15 = vector.load %arg8[%c0_11, %c0_12] : memref<16x1024xf32, #tpu.memory_space<vmem>>, vector<16x1024xf32>
      tpu.vector_store %arg8[%c0_11, %c0_12], %14 {strides = array<i32>} : memref<16x1024xf32, #tpu.memory_space<vmem>>, vector<16x1024xf32>,
    } else {
    }
    %c0 = arith.constant 0 : index
    %c0_1 = arith.constant 0 : index
    %3 = vector.load %arg8[%c0, %c0_1] : memref<16x1024xf32, #tpu.memory_space<vmem>>, vector<16x1024xf32>
    %c0_2 = arith.constant 0 : index
    %c0_3 = arith.constant 0 : index
    %4 = vector.load %arg2[%c0_2, %c0_3] : memref<16x640xbf16, #tpu.memory_space<vmem>>, vector<16x640xbf16>
    %c0_4 = arith.constant 0 : index
    %c0_5 = arith.constant 0 : index
    %5 = vector.load %arg3[%c0_4, %c0_5] : memref<640x1024xbf16, #tpu.memory_space<vmem>>, vector<640x1024xbf16>
    %cst = arith.constant dense<0.000000e+00> : vector<16x1024xf32>
    %6 = tpu.matmul %4, %5, %cst {dimension_numbers = #tpu.dot_dimension_numbers<[1], [0], [0], [1], [0, 0, 1, 1], [], []>} : vector<16x640xbf16>, vector<640x1024xbf16>, vector<16x1024xf32> -> vector<16x1024xf32>
    %7 = arith.addf %3, %6 : vector<16x1024xf32>
    %c0_6 = arith.constant 0 : index
    %c0_7 = arith.constant 0 : index
    %8 = vector.load %arg8[%c0_6, %c0_7] : memref<16x1024xf32, #tpu.memory_space<vmem>>, vector<16x1024xf32>
    tpu.vector_store %arg8[%c0_6, %c0_7], %7 {strides = array<i32>} : memref<16x1024xf32, #tpu.memory_space<vmem>>, vector<16x1024xf32>,
    %c4_i32 = arith.constant 4 : i32
    %9 = arith.cmpi eq, %arg1, %c4_i32 : i32
    %10 = arith.extui %9 : i1 to i32
    %c0_i32_8 = arith.constant 0 : i32
    %11 = arith.cmpi ne, %10, %c0_i32_8 : i32
    scf.if %11 {
      %c0_9 = arith.constant 0 : index
      %c0_10 = arith.constant 0 : index
      %12 = vector.load %arg8[%c0_9, %c0_10] : memref<16x1024xf32, #tpu.memory_space<vmem>>, vector<16x1024xf32>
      %cst_11 = arith.constant 0.000000e+00 : f32
      %13 = vector.broadcast %cst_11 : f32 to vector<16x1024xf32>
      %14 = arith.maximumf %12, %13 : vector<16x1024xf32>
      %15 = arith.truncf %14 : vector<16x1024xf32> to vector<16x1024xbf16>
      %c0_12 = arith.constant 0 : index
      %c0_13 = arith.constant 0 : index
      %16 = vector.load %arg5[%c0_12, %c0_13] : memref<1024x128xbf16, #tpu.memory_space<vmem>>, vector<1024x128xbf16>
      %cst_14 = arith.constant dense<0.000000e+00> : vector<16x128xf32>
      %17 = tpu.matmul %15, %16, %cst_14 {dimension_numbers = #tpu.dot_dimension_numbers<[1], [0], [0], [1], [0, 0, 1, 1], [], []>} : vector<16x1024xbf16>, vector<1024x128xbf16>, vector<16x128xf32> -> vector<16x128xf32>
      %c0_15 = arith.constant 0 : index
      %c0_16 = arith.constant 0 : index
      %18 = vector.load %arg6[%c0_15, %c0_16] : memref<1x128xf32, #tpu.memory_space<vmem>>, vector<1x128xf32>
      %19 = vector.broadcast %18 : vector<1x128xf32> to vector<16x128xf32>
      %20 = arith.addf %17, %19 : vector<16x128xf32>
      %21 = tpu.iota {dimensions = array<i32: 1>} : vector<16x128xi32>
      %c6_i32 = arith.constant 6 : i32
      %22 = vector.broadcast %c6_i32 : i32 to vector<16x128xi32>
      %23 = arith.cmpi slt, %21, %22 : vector<16x128xi32>
      %c6_i32_17 = arith.constant 6 : i32
      %24 = vector.broadcast %c6_i32_17 : i32 to vector<16x128xi32>
      %25 = arith.cmpi eq, %21, %24 : vector<16x128xi32>
      %cst_18 = arith.constant 0.000000e+00 : f32
      %26 = vector.broadcast %cst_18 : f32 to vector<16x128xf32>
      %27 = arith.select %25, %20, %26 : vector<16x128xi1>, vector<16x128xf32>
      %cst_19 = arith.constant dense<0.000000e+00> : vector<16xf32>
      %28 = vector.multi_reduction <add>, %27, %cst_19 [1] : vector<16x128xf32> to vector<16xf32>
      %29 = vector.shape_cast %28 : vector<16xf32> to vector<16x1xf32>
      %cst_20 = arith.constant 0.000000e+00 : f32
      %30 = vector.broadcast %cst_20 : f32 to vector<16x128xf32>
      %31 = arith.select %23, %20, %30 : vector<16x128xi1>, vector<16x128xf32>
      %cst_21 = arith.constant dense<0.000000e+00> : vector<16xf32>
      %32 = vector.multi_reduction <add>, %31, %cst_21 [1] : vector<16x128xf32> to vector<16xf32>
      %33 = vector.shape_cast %32 : vector<16xf32> to vector<16x1xf32>
      %cst_22 = arith.constant 0.166666672 : f32
      %34 = vector.broadcast %cst_22 : f32 to vector<16x1xf32>
      %35 = arith.mulf %33, %34 : vector<16x1xf32>
      %36 = vector.broadcast %29 : vector<16x1xf32> to vector<16x128xf32>
      %37 = arith.addf %20, %36 : vector<16x128xf32>
      %38 = vector.broadcast %35 : vector<16x1xf32> to vector<16x128xf32>
      %39 = arith.subf %37, %38 : vector<16x128xf32>
      %cst_23 = arith.constant 0.000000e+00 : f32
      %40 = vector.broadcast %cst_23 : f32 to vector<16x128xf32>
      %41 = arith.select %23, %39, %40 : vector<16x128xi1>, vector<16x128xf32>
      %c0_24 = arith.constant 0 : index
      %c0_25 = arith.constant 0 : index
      %42 = vector.load %arg7[%c0_24, %c0_25] : memref<16x128xf32, #tpu.memory_space<vmem>>, vector<16x128xf32>
      tpu.vector_store %arg7[%c0_24, %c0_25], %41 {strides = array<i32>} : memref<16x128xf32, #tpu.memory_space<vmem>>, vector<16x128xf32>,
    } else {
    }
    return
  }
  func.func @transform_0(%arg0: i32, %arg1: i32) -> (i32, i32) {
    %c0_i32 = arith.constant 0 : i32
    return %arg0, %arg1 : i32, i32
  }
  func.func @transform_1(%arg0: i32, %arg1: i32) -> (i32, i32) {
    %c0_i32 = arith.constant 0 : i32
    %c0_i32_0 = arith.constant 0 : i32
    return %arg1, %c0_i32 : i32, i32
  }
  func.func @transform_2(%arg0: i32, %arg1: i32) -> (i32, i32) {
    %c0_i32 = arith.constant 0 : i32
    %c0_i32_0 = arith.constant 0 : i32
    %c0_i32_1 = arith.constant 0 : i32
    return %c0_i32, %c0_i32_0 : i32, i32
  }
  func.func @transform_3(%arg0: i32, %arg1: i32) -> (i32, i32) {
    %c0_i32 = arith.constant 0 : i32
    %c0_i32_0 = arith.constant 0 : i32
    %c0_i32_1 = arith.constant 0 : i32
    return %c0_i32, %c0_i32_0 : i32, i32
  }
  func.func @transform_4(%arg0: i32, %arg1: i32) -> (i32, i32) {
    %c0_i32 = arith.constant 0 : i32
    %c0_i32_0 = arith.constant 0 : i32
    %c0_i32_1 = arith.constant 0 : i32
    return %c0_i32, %c0_i32_0 : i32, i32
  }
  func.func @transform_5(%arg0: i32, %arg1: i32) -> (i32, i32) {
    %c0_i32 = arith.constant 0 : i32
    %c0_i32_0 = arith.constant 0 : i32
    return %arg0, %c0_i32 : i32, i32
  }
}

</mosaic_0001>

<llo_original>
// kernel: dueling_dqn_forward.4
$region0: #{dueling_dqn_forward.4}
  #allocation0 [shape = 'u32[]', space=smem, size = 0x4, offset = 0x4, fixed_abs, tag = 'smem constant byte address 0x4 - core index']
  #allocation1 [shape = 'u32[144,128]{1,0:T(1,128)}', space=vmem, size = 0x12000, scoped, tag = 'internal scratch']
  %s0 = inlined_call_operand.vmem [shape: bf16[800,512], index: 0, kind: input, shape index: {}]
  %s1 = inlined_call_operand.vmem [shape: bf16[512,128], index: 1, kind: input, shape index: {}]
  %s2 = inlined_call_operand.vmem [shape: f32[1,128], index: 2, kind: input, shape index: {}]
  %s3 = inlined_call_operand.vmem [shape: bf16[800,128], index: 3, kind: output, shape index: {}]
  %s4 = sld [smem:[#allocation0]]
  $region45: #{dueling_dqn_forward.4} parent=0
    _
  %s6 = ssub.s32 1, %s4
  %s7 = scalar_select 0, %s6, %s4
  loop: start=0, step=1, limit=7
  $region2: #{dueling_dqn_forward.4} parent=0 // loop_pre_header
    _
  $region3: #{dueling_dqn_forward.4} parent=0 // loop_header
    %s9 = sphi 0, %s13
    %p10 = scmp.ge.s32.totalorder %s9, 7
    %s19 = sphi 0, %s21
    %s22 = sphi 0, %s19
    %s23 = sphi 0, %s22
    %s39 = sphi 0, %s23
    %s43 = sphi 0, %s43
    %s45 = sphi 0, %s43
    %s46 = sphi 0, %s45
    %s60 = sphi 0, %s46
    %s64 = sphi 0, %s64
    %s66 = sphi 0, %s64
    %s67 = sphi 0, %s66
    %s81 = sphi 0, %s67
    %s87 = sphi 0, %s89
    %s90 = sphi 0, %s87
    %s91 = sphi 0, %s90
    %s107 = sphi 0, %s91
  $region4: #{dueling_dqn_forward.4} parent=0 // loop_header_branch
    %12 = sbr.rel (%p10) target = $region8
  $region5: #{dueling_dqn_forward.4} parent=0 // loop_body
    %s14 = ssub.s32 %s9, 1
    %s15 = ssub.s32 %s9, 2
    %s16 = sadd.s32 %s9, 1
    %s17 = ssub.s32 %s9, %s16
    %p18 = scmp.eq.s32.totalorder %s17, 0
    %s20 = sadd.s32 %s19, 1
    %s21 = scalar_select %p18, %s19, %s20
    %p24 = pneg %p18
    %p25 = scmp.eq.s32.totalorder %s9, 4
    %p26 = por %p24, %p25
    %p27 = scmp.ne.s32.totalorder %s19, %s22
    %p28 = scmp.eq.s32.totalorder %s9, 0
    %p29 = por %p27, %p28
    %p30 = scmp.ne.s32.totalorder %s19, %s22
    %p31 = scmp.eq.s32.totalorder %s14, 4
    %p32 = por %p30, %p31
    %p33 = scmp.ne.s32.totalorder %s22, %s23
    %p34 = scmp.eq.s32.totalorder %s14, 0
    %p35 = por %p33, %p34
    %p36 = scmp.ne.s32.totalorder %s22, %s23
    %p37 = scmp.eq.s32.totalorder %s15, 4
    %p38 = por %p36, %p37
    %p40 = scmp.ne.s32.totalorder %s23, %s39
    %p41 = scmp.eq.s32.totalorder %s15, 0
    %p42 = por %p40, %p41
    %s44 = sadd.s32 %s43, 1
    %p47 = scmp.eq.s32.totalorder %s9, 4
    %p48 = scmp.ne.s32.totalorder %s43, %s45
    %p49 = scmp.eq.s32.totalorder %s9, 0
    %p50 = por %p48, %p49
    %p51 = scmp.ne.s32.totalorder %s43, %s45
    %p52 = scmp.eq.s32.totalorder %s14, 4
    %p53 = por %p51, %p52
    %p54 = scmp.ne.s32.totalorder %s45, %s46
    %p55 = scmp.eq.s32.totalorder %s14, 0
    %p56 = por %p54, %p55
    %p57 = scmp.ne.s32.totalorder %s45, %s46
    %p58 = scmp.eq.s32.totalorder %s15, 4
    %p59 = por %p57, %p58
    %p61 = scmp.ne.s32.totalorder %s46, %s60
    %p62 = scmp.eq.s32.totalorder %s15, 0
    %p63 = por %p61, %p62
    %s65 = sadd.s32 %s64, 1
    %p68 = scmp.eq.s32.totalorder %s9, 4
    %p69 = scmp.ne.s32.totalorder %s64, %s66
    %p70 = scmp.eq.s32.totalorder %s9, 0
    %p71 = por %p69, %p70
    %p72 = scmp.ne.s32.totalorder %s64, %s66
    %p73 = scmp.eq.s32.totalorder %s14, 4
    %p74 = por %p72, %p73
    %p75 = scmp.ne.s32.totalorder %s66, %s67
    %p76 = scmp.eq.s32.totalorder %s14, 0
    %p77 = por %p75, %p76
    %p78 = scmp.ne.s32.totalorder %s66, %s67
    %p79 = scmp.eq.s32.totalorder %s15, 4
    %p80 = por %p78, %p79
    %p82 = scmp.ne.s32.totalorder %s67, %s81
    %p83 = scmp.eq.s32.totalorder %s15, 0
    %p84 = por %p82, %p83
    %s85 = ssub.s32 %s9, %s16
    %p86 = scmp.eq.s32.totalorder %s85, 0
    %s88 = sadd.s32 %s87, 1
    %s89 = scalar_select %p86, %s87, %s88
    %p92 = pneg %p86
    %p93 = scmp.eq.s32.totalorder %s9, 4
    %p94 = por %p92, %p93
    %p95 = scmp.ne.s32.totalorder %s87, %s90
    %p96 = scmp.eq.s32.totalorder %s9, 0
    %p97 = por %p95, %p96
    %p98 = scmp.ne.s32.totalorder %s87, %s90
    %p99 = scmp.eq.s32.totalorder %s14, 4
    %p100 = por %p98, %p99
    %p101 = scmp.ne.s32.totalorder %s90, %s91
    %p102 = scmp.eq.s32.totalorder %s14, 0
    %p103 = por %p101, %p102
    %p104 = scmp.ne.s32.totalorder %s90, %s91
    %p105 = scmp.eq.s32.totalorder %s15, 4
    %p106 = por %p104, %p105
    %p108 = scmp.ne.s32.totalorder %s91, %s107
    %p109 = scmp.eq.s32.totalorder %s15, 0
    %p110 = por %p108, %p109
    %p111 = scmp.le.s32.totalorder 1, %s9
    %p112 = scmp.lt.s32.totalorder %s9, 6
    %p113 = pnand %p111, %p112
    %p114 = pneg %p113
    // Predicated region
    $region9: #{dueling_dqn_forward.4} parent=5 // pred_check
      _
    $region10: #{dueling_dqn_forward.4} parent=5 // pred_check_branch
      %116 = sbr.rel (%p113) target = $region12
    $region11: #{dueling_dqn_forward.4} parent=5 // pred_region
      %s117 = ssub.s32 %s9, 1
      // Predicated region
      $region13: #{dueling_dqn_forward.4} parent=11 // pred_check
        %p118 = pneg %p56
      $region14: #{dueling_dqn_forward.4} parent=11 // pred_check_branch
        %120 = sbr.rel (%p118) target = $region16
      $region15: #{dueling_dqn_forward.4} parent=11 // pred_region
        _
      $region16: #{dueling_dqn_forward.4} parent=11 // pred_fallthru
        _
      // Predicated region
      $region17: #{dueling_dqn_forward.4} parent=11 // pred_check
        %p121 = pneg %p77
      $region18: #{dueling_dqn_forward.4} parent=11 // pred_check_branch
        %123 = sbr.rel (%p121) target = $region20
      $region19: #{dueling_dqn_forward.4} parent=11 // pred_region
        _
      $region20: #{dueling_dqn_forward.4} parent=11 // pred_fallthru
        _
    $region12: #{dueling_dqn_forward.4} parent=5 // pred_fallthru
      _
    %p124 = scmp.lt.s32.totalorder %s9, 5
    // Predicated region
    $region21: #{dueling_dqn_forward.4} parent=5 // pred_check
      %p125 = pneg %p124
    $region22: #{dueling_dqn_forward.4} parent=5 // pred_check_branch
      %127 = sbr.rel (%p125) target = $region24
    $region23: #{dueling_dqn_forward.4} parent=5 // pred_region
      // Predicated region
      $region25: #{dueling_dqn_forward.4} parent=23 // pred_check
        %p128 = pneg %p29
      $region26: #{dueling_dqn_forward.4} parent=23 // pred_check_branch
        %130 = sbr.rel (%p128) target = $region28
      $region27: #{dueling_dqn_forward.4} parent=23 // pred_region
        %s131 = smul.u32 20, %s9
        %p132 = scmp.lt.s32.totalorder %s131, 99
        %s133 = scalar_select %p132, %s131, 99
        %s134 = smul.addr %s133, 4
        %s135 = smul.addr %s134, 4
        %s136 = scalar_lea.vmem %s0, %s135
        %s137 = smul.u32 20, %s9
      $region28: #{dueling_dqn_forward.4} parent=23 // pred_fallthru
        _
    $region24: #{dueling_dqn_forward.4} parent=5 // pred_fallthru
      _
    %p138 = scmp.le.s32.totalorder 1, %s9
    %p139 = scmp.lt.s32.totalorder %s9, 6
    %p140 = pnand %p138, %p139
    %p141 = pneg %p140
    // Predicated region
    $region29: #{dueling_dqn_forward.4} parent=5 // pred_check
      _
    $region30: #{dueling_dqn_forward.4} parent=5 // pred_check_branch
      %143 = sbr.rel (%p140) target = $region32
    $region31: #{dueling_dqn_forward.4} parent=5 // pred_region
      %s144 = ssub.s32 %s9, 1
      %s145 = smul.u32 20, %s14
      %p146 = scmp.lt.s32.totalorder %s145, 99
      %s147 = scalar_select %p146, %s145, 99
      %s148 = smul.addr %s147, 4
      %s149 = smul.addr %s148, 4
      %s150 = scalar_lea.vmem %s0, %s149
      %p151 = pneg %p35
      %p152 = pneg %p32
      %p153 = pneg %p56
      %p154 = pneg %p53
      %p155 = pneg %p77
      %p156 = pneg %p74
      %p157 = pneg %p103
      %p158 = pneg %p100
      %s159 = smul.u32 20, %s14
      %p160 = scmp.lt.s32.totalorder %s159, 99
      %s161 = scalar_select %p160, %s159, 99
      %s162 = smul.addr %s161, 4
      %s163 = scalar_lea.vmem %s3, %s162
      %s164 = smul.u32 20, %s14
      %p165 = scmp.lt.s32.totalorder %s164, 99
      %s166 = scalar_select %p165, %s164, 99
      %s167 = smul.addr %s166, 4
      %s168 = smul.addr %s167, 4
      %s169 = scalar_lea.vmem %s0, %s168
      %s170 = smul.u32 20, %s14
      %s171 = smul.u32 20, %s14
      %p172 = scmp.lt.s32.totalorder %s171, 99
      %s173 = scalar_select %p172, %s171, 99
      %s174 = smul.addr %s173, 4
      %s175 = scalar_lea.vmem %s3, %s174
      %s176 = smul.u32 20, %s14
      %v178 = vld [vmem:[%s169] sm:$0xff]
      %v179 = vld [vmem:[%s169 + $0x8] sm:$0xff]
      %v180 = vld [vmem:[%s169 + $0x10] sm:$0xff]
      %v181 = vld [vmem:[%s169 + $0x18] sm:$0xff]
      %v182 = vld [vmem:[%s169 + $0x20] sm:$0xff]
      %v183 = vld [vmem:[%s169 + $0x28] sm:$0xff]
      %v184 = vld [vmem:[%s169 + $0x30] sm:$0xff]
      %v185 = vld [vmem:[%s169 + $0x38] sm:$0xff]
      %v186 = vld [vmem:[%s169 + $0x40] sm:$0xff]
      %v187 = vld [vmem:[%s169 + $0x48] sm:$0xff]
      %v188 = vld [vmem:[%s169 + $0x50] sm:$0xff]
      %v189 = vld [vmem:[%s169 + $0x58] sm:$0xff]
      %v190 = vld [vmem:[%s169 + $0x60] sm:$0xff]
      %v191 = vld [vmem:[%s169 + $0x68] sm:$0xff]
      %v192 = vld [vmem:[%s169 + $0x70] sm:$0xff]
      %v193 = vld [vmem:[%s169 + $0x78] sm:$0xff]
      %v194 = vld [vmem:[%s169 + $0x80] sm:$0xff]
      %v195 = vld [vmem:[%s169 + $0x88] sm:$0xff]
      %v196 = vld [vmem:[%s169 + $0x90] sm:$0xff]
      %v197 = vld [vmem:[%s169 + $0x98] sm:$0xff]
      %v198 = vld [vmem:[%s169 + $0xa0] sm:$0xff]
      %v199 = vld [vmem:[%s169 + $0xa8] sm:$0xff]
      %v200 = vld [vmem:[%s169 + $0xb0] sm:$0xff]
      %v201 = vld [vmem:[%s169 + $0xb8] sm:$0xff]
      %v202 = vld [vmem:[%s169 + $0xc0] sm:$0xff]
      %v203 = vld [vmem:[%s169 + $0xc8] sm:$0xff]
      %v204 = vld [vmem:[%s169 + $0xd0] sm:$0xff]
      %v205 = vld [vmem:[%s169 + $0xd8] sm:$0xff]
      %v206 = vld [vmem:[%s169 + $0xe0] sm:$0xff]
      %v207 = vld [vmem:[%s169 + $0xe8] sm:$0xff]
      %v208 = vld [vmem:[%s169 + $0xf0] sm:$0xff]
      %v209 = vld [vmem:[%s169 + $0xf8] sm:$0xff]
      %v210 = vld [vmem:[%s169 + $0x100] sm:$0xff]
      %v211 = vld [vmem:[%s169 + $0x108] sm:$0xff]
      %v212 = vld [vmem:[%s169 + $0x110] sm:$0xff]
      %v213 = vld [vmem:[%s169 + $0x118] sm:$0xff]
      %v214 = vld [vmem:[%s169 + $0x120] sm:$0xff]
      %v215 = vld [vmem:[%s169 + $0x128] sm:$0xff]
      %v216 = vld [vmem:[%s169 + $0x130] sm:$0xff]
      %v217 = vld [vmem:[%s169 + $0x138] sm:$0xff]
      %v218 = vld [vmem:[%s1] sm:$0xf]
      %v219 = vld [vmem:[%s1 + $0x4] sm:$0xf]
      %v220 = vld [vmem:[%s1 + $0x8] sm:$0xf]
      %v221 = vld [vmem:[%s1 + $0xc] sm:$0xf]
      %v222 = vld [vmem:[%s1 + $0x10] sm:$0xf]
      %v223 = vld [vmem:[%s1 + $0x14] sm:$0xf]
      %v224 = vld [vmem:[%s1 + $0x18] sm:$0xf]
      %v225 = vld [vmem:[%s1 + $0x1c] sm:$0xf]
      %v226 = vld [vmem:[%s1 + $0x20] sm:$0xf]
      %v227 = vld [vmem:[%s1 + $0x24] sm:$0xf]
      %v228 = vld [vmem:[%s1 + $0x28] sm:$0xf]
      %v229 = vld [vmem:[%s1 + $0x2c] sm:$0xf]
      %v230 = vld [vmem:[%s1 + $0x30] sm:$0xf]
      %v231 = vld [vmem:[%s1 + $0x34] sm:$0xf]
      %v232 = vld [vmem:[%s1 + $0x38] sm:$0xf]
      %v233 = vld [vmem:[%s1 + $0x3c] sm:$0xf]
      %v234 = vld [vmem:[%s1 + $0x40] sm:$0xf]
      %v235 = vld [vmem:[%s1 + $0x44] sm:$0xf]
      %v236 = vld [vmem:[%s1 + $0x48] sm:$0xf]
      %v237 = vld [vmem:[%s1 + $0x4c] sm:$0xf]
      %v238 = vld [vmem:[%s1 + $0x50] sm:$0xf]
      %v239 = vld [vmem:[%s1 + $0x54] sm:$0xf]
      %v240 = vld [vmem:[%s1 + $0x58] sm:$0xf]
      %v241 = vld [vmem:[%s1 + $0x5c] sm:$0xf]
      %v242 = vld [vmem:[%s1 + $0x60] sm:$0xf]
      %v243 = vld [vmem:[%s1 + $0x64] sm:$0xf]
      %v244 = vld [vmem:[%s1 + $0x68] sm:$0xf]
      %v245 = vld [vmem:[%s1 + $0x6c] sm:$0xf]
      %v246 = vld [vmem:[%s1 + $0x70] sm:$0xf]
      %v247 = vld [vmem:[%s1 + $0x74] sm:$0xf]
      %v248 = vld [vmem:[%s1 + $0x78] sm:$0xf]
      %v249 = vld [vmem:[%s1 + $0x7c] sm:$0xf]
      %v250 = vld [vmem:[%s1 + $0x80] sm:$0xf]
      %v251 = vld [vmem:[%s1 + $0x84] sm:$0xf]
      %v252 = vld [vmem:[%s1 + $0x88] sm:$0xf]
      %v253 = vld [vmem:[%s1 + $0x8c] sm:$0xf]
      %v254 = vld [vmem:[%s1 + $0x90] sm:$0xf]
      %v255 = vld [vmem:[%s1 + $0x94] sm:$0xf]
      %v256 = vld [vmem:[%s1 + $0x98] sm:$0xf]
      %v257 = vld [vmem:[%s1 + $0x9c] sm:$0xf]
      %v258 = vld [vmem:[%s1 + $0xa0] sm:$0xf]
      %v259 = vld [vmem:[%s1 + $0xa4] sm:$0xf]
      %v260 = vld [vmem:[%s1 + $0xa8] sm:$0xf]
      %v261 = vld [vmem:[%s1 + $0xac] sm:$0xf]
      %v262 = vld [vmem:[%s1 + $0xb0] sm:$0xf]
      %v263 = vld [vmem:[%s1 + $0xb4] sm:$0xf]
      %v264 = vld [vmem:[%s1 + $0xb8] sm:$0xf]
      %v265 = vld [vmem:[%s1 + $0xbc] sm:$0xf]
      %v266 = vld [vmem:[%s1 + $0xc0] sm:$0xf]
      %v267 = vld [vmem:[%s1 + $0xc4] sm:$0xf]
      %v268 = vld [vmem:[%s1 + $0xc8] sm:$0xf]
      %v269 = vld [vmem:[%s1 + $0xcc] sm:$0xf]
      %v270 = vld [vmem:[%s1 + $0xd0] sm:$0xf]
      %v271 = vld [vmem:[%s1 + $0xd4] sm:$0xf]
      %v272 = vld [vmem:[%s1 + $0xd8] sm:$0xf]
      %v273 = vld [vmem:[%s1 + $0xdc] sm:$0xf]
      %v274 = vld [vmem:[%s1 + $0xe0] sm:$0xf]
      %v275 = vld [vmem:[%s1 + $0xe4] sm:$0xf]
      %v276 = vld [vmem:[%s1 + $0xe8] sm:$0xf]
      %v277 = vld [vmem:[%s1 + $0xec] sm:$0xf]
      %v278 = vld [vmem:[%s1 + $0xf0] sm:$0xf]
      %v279 = vld [vmem:[%s1 + $0xf4] sm:$0xf]
      %v280 = vld [vmem:[%s1 + $0xf8] sm:$0xf]
      %v281 = vld [vmem:[%s1 + $0xfc] sm:$0xf]
      %v282 = vld [vmem:[%s2] sm:$0x1]
      %v284 = vlaneseq
      %v285 = vshrl.u32 %v284, 7
      %v286 = vsub.s32 0, %v285
      %v287 = vrot.slane %v282, %v286
      %v329 = vunpack.c.l.b16 %v178
      %v330 = vunpack.c.h.b16 %v178
      %v331 = vunpack.c.l.b16 %v179
      %v332 = vunpack.c.h.b16 %v179
      %v333 = vunpack.c.l.b16 %v180
      %v334 = vunpack.c.h.b16 %v180
      %v335 = vunpack.c.l.b16 %v181
      %v336 = vunpack.c.h.b16 %v181
      %v337 = vunpack.c.l.b16 %v182
      %v338 = vunpack.c.h.b16 %v182
      %v339 = vunpack.c.l.b16 %v183
      %v340 = vunpack.c.h.b16 %v183
      %v341 = vunpack.c.l.b16 %v184
      %v342 = vunpack.c.h.b16 %v184
      %v343 = vunpack.c.l.b16 %v185
      %v344 = vunpack.c.h.b16 %v185
      %v345 = vunpack.c.l.b16 %v186
      %v346 = vunpack.c.h.b16 %v186
      %v347 = vunpack.c.l.b16 %v187
      %v348 = vunpack.c.h.b16 %v187
      %v349 = vunpack.c.l.b16 %v188
      %v350 = vunpack.c.h.b16 %v188
      %v351 = vunpack.c.l.b16 %v189
      %v352 = vunpack.c.h.b16 %v189
      %v353 = vunpack.c.l.b16 %v190
      %v354 = vunpack.c.h.b16 %v190
      %v355 = vunpack.c.l.b16 %v191
      %v356 = vunpack.c.h.b16 %v191
      %v357 = vunpack.c.l.b16 %v192
      %v358 = vunpack.c.h.b16 %v192
      %v359 = vunpack.c.l.b16 %v193
      %v360 = vunpack.c.h.b16 %v193
      %v361 = vunpack.c.l.b16 %v194
      %v362 = vunpack.c.h.b16 %v194
      %v363 = vunpack.c.l.b16 %v195
      %v364 = vunpack.c.h.b16 %v195
      %v365 = vunpack.c.l.b16 %v196
      %v366 = vunpack.c.h.b16 %v196
      %v367 = vunpack.c.l.b16 %v197
      %v368 = vunpack.c.h.b16 %v197
      %v369 = vunpack.c.l.b16 %v198
      %v370 = vunpack.c.h.b16 %v198
      %v371 = vunpack.c.l.b16 %v199
      %v372 = vunpack.c.h.b16 %v199
      %v373 = vunpack.c.l.b16 %v200
      %v374 = vunpack.c.h.b16 %v200
      %v375 = vunpack.c.l.b16 %v201
      %v376 = vunpack.c.h.b16 %v201
      %v377 = vunpack.c.l.b16 %v202
      %v378 = vunpack.c.h.b16 %v202
      %v379 = vunpack.c.l.b16 %v203
      %v380 = vunpack.c.h.b16 %v203
      %v381 = vunpack.c.l.b16 %v204
      %v382 = vunpack.c.h.b16 %v204
      %v383 = vunpack.c.l.b16 %v205
      %v384 = vunpack.c.h.b16 %v205
      %v385 = vunpack.c.l.b16 %v206
      %v386 = vunpack.c.h.b16 %v206
      %v387 = vunpack.c.l.b16 %v207
      %v388 = vunpack.c.h.b16 %v207
      %v389 = vunpack.c.l.b16 %v208
      %v390 = vunpack.c.h.b16 %v208
      %v391 = vunpack.c.l.b16 %v209
      %v392 = vunpack.c.h.b16 %v209
      %v393 = vunpack.c.l.b16 %v210
      %v394 = vunpack.c.h.b16 %v210
      %v395 = vunpack.c.l.b16 %v211
      %v396 = vunpack.c.h.b16 %v211
      %v397 = vunpack.c.l.b16 %v212
      %v398 = vunpack.c.h.b16 %v212
      %v399 = vunpack.c.l.b16 %v213
      %v400 = vunpack.c.h.b16 %v213
      %v401 = vunpack.c.l.b16 %v214
      %v402 = vunpack.c.h.b16 %v214
      %v403 = vunpack.c.l.b16 %v215
      %v404 = vunpack.c.h.b16 %v215
      %v405 = vunpack.c.l.b16 %v216
      %v406 = vunpack.c.h.b16 %v216
      %v407 = vunpack.c.l.b16 %v217
      %v408 = vunpack.c.h.b16 %v217
      %v409 = vpack.c.b16 %v333, %v329
      %v410 = vpack.c.b16 %v334, %v330
      %v411 = vpack.c.b16 %v335, %v331
      %v412 = vpack.c.b16 %v336, %v332
      %v413 = vpack.c.b16 %v341, %v337
      %v414 = vpack.c.b16 %v342, %v338
      %v415 = vpack.c.b16 %v343, %v339
      %v416 = vpack.c.b16 %v344, %v340
      %v417 = vpack.c.b16 %v349, %v345
      %v418 = vpack.c.b16 %v350, %v346
      %v419 = vpack.c.b16 %v351, %v347
      %v420 = vpack.c.b16 %v352, %v348
      %v421 = vpack.c.b16 %v357, %v353
      %v422 = vpack.c.b16 %v358, %v354
      %v423 = vpack.c.b16 %v359, %v355
      %v424 = vpack.c.b16 %v360, %v356
      %v425 = vpack.c.b16 %v365, %v361
      %v426 = vpack.c.b16 %v366, %v362
      %v427 = vpack.c.b16 %v367, %v363
      %v428 = vpack.c.b16 %v368, %v364
      %v429 = vpack.c.b16 %v373, %v369
      %v430 = vpack.c.b16 %v374, %v370
      %v431 = vpack.c.b16 %v375, %v371
      %v432 = vpack.c.b16 %v376, %v372
      %v433 = vpack.c.b16 %v381, %v377
      %v434 = vpack.c.b16 %v382, %v378
      %v435 = vpack.c.b16 %v383, %v379
      %v436 = vpack.c.b16 %v384, %v380
      %v437 = vpack.c.b16 %v389, %v385
      %v438 = vpack.c.b16 %v390, %v386
      %v439 = vpack.c.b16 %v391, %v387
      %v440 = vpack.c.b16 %v392, %v388
      %v441 = vpack.c.b16 %v397, %v393
      %v442 = vpack.c.b16 %v398, %v394
      %v443 = vpack.c.b16 %v399, %v395
      %v444 = vpack.c.b16 %v400, %v396
      %v445 = vpack.c.b16 %v405, %v401
      %v446 = vpack.c.b16 %v406, %v402
      %v447 = vpack.c.b16 %v407, %v403
      %v448 = vpack.c.b16 %v408, %v404
      %v553 = vunpack.c.l.b16 %v218
      %v554 = vunpack.c.l.b16 %v219
      %v555 = vunpack.c.l.b16 %v220
      %v556 = vunpack.c.l.b16 %v221
      %v557 = vunpack.c.l.b16 %v222
      %v558 = vunpack.c.l.b16 %v223
      %v559 = vunpack.c.l.b16 %v224
      %v560 = vunpack.c.l.b16 %v225
      %v561 = vunpack.c.l.b16 %v226
      %v562 = vunpack.c.l.b16 %v227
      %v563 = vunpack.c.l.b16 %v228
      %v564 = vunpack.c.l.b16 %v229
      %v565 = vunpack.c.l.b16 %v230
      %v566 = vunpack.c.l.b16 %v231
      %v567 = vunpack.c.l.b16 %v232
      %v568 = vunpack.c.l.b16 %v233
      %v569 = vunpack.c.l.b16 %v234
      %v570 = vunpack.c.l.b16 %v235
      %v571 = vunpack.c.l.b16 %v236
      %v572 = vunpack.c.l.b16 %v237
      %v573 = vunpack.c.l.b16 %v238
      %v574 = vunpack.c.l.b16 %v239
      %v575 = vunpack.c.l.b16 %v240
      %v576 = vunpack.c.l.b16 %v241
      %v577 = vunpack.c.l.b16 %v242
      %v578 = vunpack.c.l.b16 %v243
      %v579 = vunpack.c.l.b16 %v244
      %v580 = vunpack.c.l.b16 %v245
      %v581 = vunpack.c.l.b16 %v246
      %v582 = vunpack.c.l.b16 %v247
      %v583 = vunpack.c.l.b16 %v248
      %v584 = vunpack.c.l.b16 %v249
      %v585 = vunpack.c.l.b16 %v250
      %v586 = vunpack.c.l.b16 %v251
      %v587 = vunpack.c.l.b16 %v252
      %v588 = vunpack.c.l.b16 %v253
      %v589 = vunpack.c.l.b16 %v254
      %v590 = vunpack.c.l.b16 %v255
      %v591 = vunpack.c.l.b16 %v256
      %v592 = vunpack.c.l.b16 %v257
      %v593 = vunpack.c.l.b16 %v258
      %v594 = vunpack.c.l.b16 %v259
      %v595 = vunpack.c.l.b16 %v260
      %v596 = vunpack.c.l.b16 %v261
      %v597 = vunpack.c.l.b16 %v262
      %v598 = vunpack.c.l.b16 %v263
      %v599 = vunpack.c.l.b16 %v264
      %v600 = vunpack.c.l.b16 %v265
      %v601 = vunpack.c.l.b16 %v266
      %v602 = vunpack.c.l.b16 %v267
      %v603 = vunpack.c.l.b16 %v268
      %v604 = vunpack.c.l.b16 %v269
      %v605 = vunpack.c.l.b16 %v270
      %v606 = vunpack.c.l.b16 %v271
      %v607 = vunpack.c.l.b16 %v272
      %v608 = vunpack.c.l.b16 %v273
      %v609 = vunpack.c.l.b16 %v274
      %v610 = vunpack.c.l.b16 %v275
      %v611 = vunpack.c.l.b16 %v276
      %v612 = vunpack.c.l.b16 %v277
      %v613 = vunpack.c.l.b16 %v278
      %v614 = vunpack.c.l.b16 %v279
      %v615 = vunpack.c.l.b16 %v280
      %v616 = vunpack.c.l.b16 %v281
      %v617 = vpack.c.b16 %v554, %v553
      %v618 = vpack.c.b16 %v556, %v555
      %v619 = vpack.c.b16 %v558, %v557
      %v620 = vpack.c.b16 %v560, %v559
      %v621 = vpack.c.b16 %v562, %v561
      %v622 = vpack.c.b16 %v564, %v563
      %v623 = vpack.c.b16 %v566, %v565
      %v624 = vpack.c.b16 %v568, %v567
      %v625 = vpack.c.b16 %v570, %v569
      %v626 = vpack.c.b16 %v572, %v571
      %v627 = vpack.c.b16 %v574, %v573
      %v628 = vpack.c.b16 %v576, %v575
      %v629 = vpack.c.b16 %v578, %v577
      %v630 = vpack.c.b16 %v580, %v579
      %v631 = vpack.c.b16 %v582, %v581
      %v632 = vpack.c.b16 %v584, %v583
      %v633 = vpack.c.b16 %v586, %v585
      %v634 = vpack.c.b16 %v588, %v587
      %v635 = vpack.c.b16 %v590, %v589
      %v636 = vpack.c.b16 %v592, %v591
      %v637 = vpack.c.b16 %v594, %v593
      %v638 = vpack.c.b16 %v596, %v595
      %v639 = vpack.c.b16 %v598, %v597
      %v640 = vpack.c.b16 %v600, %v599
      %v641 = vpack.c.b16 %v602, %v601
      %v642 = vpack.c.b16 %v604, %v603
      %v643 = vpack.c.b16 %v606, %v605
      %v644 = vpack.c.b16 %v608, %v607
      %v645 = vpack.c.b16 %v610, %v609
      %v646 = vpack.c.b16 %v612, %v611
      %v647 = vpack.c.b16 %v614, %v613
      %v648 = vpack.c.b16 %v616, %v615
      %681 = vmatprep.subr.bf16.mxu0 0
      %682 = vmatpush1.bf16.msra.mxu0 %v617
      %683 = vmatprep.subr.bf16.mxu0 0
      %684 = vmatpush1.bf16.msra.mxu0 %v618
      %685 = vmatprep.subr.bf16.mxu0 0
      %686 = vmatpush1.bf16.msra.mxu0 %v619
      %687 = vmatprep.subr.bf16.mxu0 0
      %688 = vmatpush1.bf16.msra.mxu0 %v620
      %689 = vmatprep.subr.bf16.mxu0 0
      %690 = vmatpush1.bf16.msra.mxu0 %v621
      %691 = vmatprep.subr.bf16.mxu0 0
      %692 = vmatpush1.bf16.msra.mxu0 %v622
      %693 = vmatprep.subr.bf16.mxu0 0
      %694 = vmatpush1.bf16.msra.mxu0 %v623
      %695 = vmatprep.subr.bf16.mxu0 0
      %696 = vmatpush1.bf16.msra.mxu0 %v624
      %697 = vmatprep.subr.bf16.mxu0 0
      %698 = vmatpush1.bf16.msra.mxu0 %v625
      %699 = vmatprep.subr.bf16.mxu0 0
      %700 = vmatpush1.bf16.msra.mxu0 %v626
      %701 = vmatprep.subr.bf16.mxu0 0
      %702 = vmatpush1.bf16.msra.mxu0 %v627
      %703 = vmatprep.subr.bf16.mxu0 0
      %704 = vmatpush1.bf16.msra.mxu0 %v628
      %705 = vmatprep.subr.bf16.mxu0 0
      %706 = vmatpush1.bf16.msra.mxu0 %v629
      %707 = vmatprep.subr.bf16.mxu0 0
      %708 = vmatpush1.bf16.msra.mxu0 %v630
      %709 = vmatprep.subr.bf16.mxu0 0
      %710 = vmatpush1.bf16.msra.mxu0 %v631
      %711 = vmatprep.subr.bf16.mxu0 0
      %712 = vmatpush1.bf16.msra.mxu0 %v632
      %713 = vmatprep.mubr.bf16.mxu0 %v410
      %714 = vmatmul.mubr.bf16.gmra.mrb[0].mxu0 %v409
      %v715 = vpop.f32.mrb[0].mxu0
      %v716 = vadd.f32 %v287, %v715
      %v717 = vpop.f32.mrb[0].mxu0
      %v718 = vpop.f32.mrb[0].mxu0
      %v719 = vadd.f32 %v287, %v718
      %v720 = vpop.f32.mrb[0].mxu0
      %721 = vmatprep.mubr.bf16.mxu0 %v414
      %722 = vmatmul.mubr.bf16.gmra.mrb[0].mxu0 %v413
      %v723 = vpop.f32.mrb[0].mxu0
      %v724 = vadd.f32 %v287, %v723
      %v725 = vpop.f32.mrb[0].mxu0
      %v726 = vpop.f32.mrb[0].mxu0
      %v727 = vadd.f32 %v287, %v726
      %v728 = vpop.f32.mrb[0].mxu0
      %729 = vmatprep.mubr.bf16.mxu0 %v418
      %730 = vmatmul.mubr.bf16.gmra.mrb[0].mxu0 %v417
      %v731 = vpop.f32.mrb[0].mxu0
      %v732 = vadd.f32 %v287, %v731
      %v733 = vpop.f32.mrb[0].mxu0
      %v734 = vpop.f32.mrb[0].mxu0
      %v735 = vadd.f32 %v287, %v734
      %v736 = vpop.f32.mrb[0].mxu0
      %737 = vmatprep.mubr.bf16.mxu0 %v422
      %738 = vmatmul.mubr.bf16.gmra.mrb[0].mxu0 %v421
      %v739 = vpop.f32.mrb[0].mxu0
      %v740 = vadd.f32 %v287, %v739
      %v741 = vpop.f32.mrb[0].mxu0
      %v742 = vpop.f32.mrb[0].mxu0
      %v743 = vadd.f32 %v287, %v742
      %v744 = vpop.f32.mrb[0].mxu0
      %745 = vmatprep.mubr.bf16.mxu0 %v426
      %746 = vmatmul.mubr.bf16.gmra.mrb[0].mxu0 %v425
      %v747 = vpop.f32.mrb[0].mxu0
      %v748 = vadd.f32 %v287, %v747
      %v749 = vpop.f32.mrb[0].mxu0
      %v750 = vpop.f32.mrb[0].mxu0
      %v751 = vadd.f32 %v287, %v750
      %v752 = vpop.f32.mrb[0].mxu0
      %753 = vmatprep.mubr.bf16.mxu0 %v430
      %754 = vmatmul.mubr.bf16.gmra.mrb[0].mxu0 %v429
      %v755 = vpop.f32.mrb[0].mxu0
      %v756 = vadd.f32 %v287, %v755
      %v757 = vpop.f32.mrb[0].mxu0
      %v758 = vpop.f32.mrb[0].mxu0
      %v759 = vadd.f32 %v287, %v758
      %v760 = vpop.f32.mrb[0].mxu0
      %761 = vmatprep.mubr.bf16.mxu0 %v434
      %762 = vmatmul.mubr.bf16.gmra.mrb[0].mxu0 %v433
      %v763 = vpop.f32.mrb[0].mxu0
      %v764 = vadd.f32 %v287, %v763
      %v765 = vpop.f32.mrb[0].mxu0
      %v766 = vpop.f32.mrb[0].mxu0
      %v767 = vadd.f32 %v287, %v766
      %v768 = vpop.f32.mrb[0].mxu0
      %769 = vmatprep.mubr.bf16.mxu0 %v438
      %770 = vmatmul.mubr.bf16.gmra.mrb[0].mxu0 %v437
      %v771 = vpop.f32.mrb[0].mxu0
      %v772 = vadd.f32 %v287, %v771
      %v773 = vpop.f32.mrb[0].mxu0
      %v774 = vpop.f32.mrb[0].mxu0
      %v775 = vadd.f32 %v287, %v774
      %v776 = vpop.f32.mrb[0].mxu0
      %777 = vmatprep.mubr.bf16.mxu0 %v442
      %778 = vmatmul.mubr.bf16.gmra.mrb[0].mxu0 %v441
      %v779 = vpop.f32.mrb[0].mxu0
      %v780 = vadd.f32 %v287, %v779
      %v781 = vpop.f32.mrb[0].mxu0
      %v782 = vpop.f32.mrb[0].mxu0
      %v783 = vadd.f32 %v287, %v782
      %v784 = vpop.f32.mrb[0].mxu0
      %785 = vmatprep.mubr.bf16.mxu0 %v446
      %786 = vmatmul.mubr.bf16.gmra.mrb[0].mxu0 %v445
      %v787 = vpop.f32.mrb[0].mxu0
      %v788 = vadd.f32 %v287, %v787
      %v789 = vpop.f32.mrb[0].mxu0
      %v790 = vpop.f32.mrb[0].mxu0
      %v791 = vadd.f32 %v287, %v790
      %v792 = vpop.f32.mrb[0].mxu0
      %793 = vdwg.mxu0
      %794 = vmatprep.subr.bf16.mxu0 0
      %795 = vmatpush1.bf16.msra.mxu0 %v633
      %796 = vmatprep.subr.bf16.mxu0 0
      %797 = vmatpush1.bf16.msra.mxu0 %v634
      %798 = vmatprep.subr.bf16.mxu0 0
      %799 = vmatpush1.bf16.msra.mxu0 %v635
      %800 = vmatprep.subr.bf16.mxu0 0
      %801 = vmatpush1.bf16.msra.mxu0 %v636
      %802 = vmatprep.subr.bf16.mxu0 0
      %803 = vmatpush1.bf16.msra.mxu0 %v637
      %804 = vmatprep.subr.bf16.mxu0 0
      %805 = vmatpush1.bf16.msra.mxu0 %v638
      %806 = vmatprep.subr.bf16.mxu0 0
      %807 = vmatpush1.bf16.msra.mxu0 %v639
      %808 = vmatprep.subr.bf16.mxu0 0
      %809 = vmatpush1.bf16.msra.mxu0 %v640
      %810 = vmatprep.subr.bf16.mxu0 0
      %811 = vmatpush1.bf16.msra.mxu0 %v641
      %812 = vmatprep.subr.bf16.mxu0 0
      %813 = vmatpush1.bf16.msra.mxu0 %v642
      %814 = vmatprep.subr.bf16.mxu0 0
      %815 = vmatpush1.bf16.msra.mxu0 %v643
      %816 = vmatprep.subr.bf16.mxu0 0
      %817 = vmatpush1.bf16.msra.mxu0 %v644
      %818 = vmatprep.subr.bf16.mxu0 0
      %819 = vmatpush1.bf16.msra.mxu0 %v645
      %820 = vmatprep.subr.bf16.mxu0 0
      %821 = vmatpush1.bf16.msra.mxu0 %v646
      %822 = vmatprep.subr.bf16.mxu0 0
      %823 = vmatpush1.bf16.msra.mxu0 %v647
      %824 = vmatprep.subr.bf16.mxu0 0
      %825 = vmatpush1.bf16.msra.mxu0 %v648
      %826 = vmatprep.mubr.bf16.mxu0 %v412
      %827 = vmatmul.mubr.bf16.gmra.mrb[0].mxu0 %v411
      %v828 = vpop.f32.mrb[0].mxu0
      %v829 = vadd.f32 %v716, %v828
      %v830 = vpop.f32.mrb[0].mxu0
      %v831 = vpop.f32.mrb[0].mxu0
      %v832 = vadd.f32 %v719, %v831
      %v833 = vpop.f32.mrb[0].mxu0
      %834 = vmatprep.mubr.bf16.mxu0 %v416
      %835 = vmatmul.mubr.bf16.gmra.mrb[0].mxu0 %v415
      %v836 = vpop.f32.mrb[0].mxu0
      %v837 = vadd.f32 %v724, %v836
      %v838 = vpop.f32.mrb[0].mxu0
      %v839 = vpop.f32.mrb[0].mxu0
      %v840 = vadd.f32 %v727, %v839
      %v841 = vpop.f32.mrb[0].mxu0
      %842 = vmatprep.mubr.bf16.mxu0 %v420
      %843 = vmatmul.mubr.bf16.gmra.mrb[0].mxu0 %v419
      %v844 = vpop.f32.mrb[0].mxu0
      %v845 = vadd.f32 %v732, %v844
      %v846 = vpop.f32.mrb[0].mxu0
      %v847 = vpop.f32.mrb[0].mxu0
      %v848 = vadd.f32 %v735, %v847
      %v849 = vpop.f32.mrb[0].mxu0
      %850 = vmatprep.mubr.bf16.mxu0 %v424
      %851 = vmatmul.mubr.bf16.gmra.mrb[0].mxu0 %v423
      %v852 = vpop.f32.mrb[0].mxu0
      %v853 = vadd.f32 %v740, %v852
      %v854 = vpop.f32.mrb[0].mxu0
      %v855 = vpop.f32.mrb[0].mxu0
      %v856 = vadd.f32 %v743, %v855
      %v857 = vpop.f32.mrb[0].mxu0
      %858 = vmatprep.mubr.bf16.mxu0 %v428
      %859 = vmatmul.mubr.bf16.gmra.mrb[0].mxu0 %v427
      %v860 = vpop.f32.mrb[0].mxu0
      %v861 = vadd.f32 %v748, %v860
      %v862 = vpop.f32.mrb[0].mxu0
      %v863 = vpop.f32.mrb[0].mxu0
      %v864 = vadd.f32 %v751, %v863
      %v865 = vpop.f32.mrb[0].mxu0
      %866 = vmatprep.mubr.bf16.mxu0 %v432
      %867 = vmatmul.mubr.bf16.gmra.mrb[0].mxu0 %v431
      %v868 = vpop.f32.mrb[0].mxu0
      %v869 = vadd.f32 %v756, %v868
      %v870 = vpop.f32.mrb[0].mxu0
      %v871 = vpop.f32.mrb[0].mxu0
      %v872 = vadd.f32 %v759, %v871
      %v873 = vpop.f32.mrb[0].mxu0
      %874 = vmatprep.mubr.bf16.mxu0 %v436
      %875 = vmatmul.mubr.bf16.gmra.mrb[0].mxu0 %v435
      %v876 = vpop.f32.mrb[0].mxu0
      %v877 = vadd.f32 %v764, %v876
      %v878 = vpop.f32.mrb[0].mxu0
      %v879 = vpop.f32.mrb[0].mxu0
      %v880 = vadd.f32 %v767, %v879
      %v881 = vpop.f32.mrb[0].mxu0
      %882 = vmatprep.mubr.bf16.mxu0 %v440
      %883 = vmatmul.mubr.bf16.gmra.mrb[0].mxu0 %v439
      %v884 = vpop.f32.mrb[0].mxu0
      %v885 = vadd.f32 %v772, %v884
      %v886 = vpop.f32.mrb[0].mxu0
      %v887 = vpop.f32.mrb[0].mxu0
      %v888 = vadd.f32 %v775, %v887
      %v889 = vpop.f32.mrb[0].mxu0
      %890 = vmatprep.mubr.bf16.mxu0 %v444
      %891 = vmatmul.mubr.bf16.gmra.mrb[0].mxu0 %v443
      %v892 = vpop.f32.mrb[0].mxu0
      %v893 = vadd.f32 %v780, %v892
      %v894 = vpop.f32.mrb[0].mxu0
      %v895 = vpop.f32.mrb[0].mxu0
      %v896 = vadd.f32 %v783, %v895
      %v897 = vpop.f32.mrb[0].mxu0
      %898 = vmatprep.mubr.bf16.mxu0 %v448
      %899 = vmatmul.mubr.bf16.gmra.mrb[0].mxu0 %v447
      %v900 = vpop.f32.mrb[0].mxu0
      %v901 = vadd.f32 %v788, %v900
      %v902 = vpop.f32.mrb[0].mxu0
      %v903 = vpop.f32.mrb[0].mxu0
      %v904 = vadd.f32 %v791, %v903
      %v905 = vpop.f32.mrb[0].mxu0
      %906 = vdwg.mxu0
      %v907 = vmax.f32 %v829, 0.0
      %v908 = vmax.f32 %v832, 0.0
      %v909 = vmax.f32 %v837, 0.0
      %v910 = vmax.f32 %v840, 0.0
      %v911 = vmax.f32 %v845, 0.0
      %v912 = vmax.f32 %v848, 0.0
      %v913 = vmax.f32 %v853, 0.0
      %v914 = vmax.f32 %v856, 0.0
      %v915 = vmax.f32 %v861, 0.0
      %v916 = vmax.f32 %v864, 0.0
      %v917 = vmax.f32 %v869, 0.0
      %v918 = vmax.f32 %v872, 0.0
      %v919 = vmax.f32 %v877, 0.0
      %v920 = vmax.f32 %v880, 0.0
      %v921 = vmax.f32 %v885, 0.0
      %v922 = vmax.f32 %v888, 0.0
      %v923 = vmax.f32 %v893, 0.0
      %v924 = vmax.f32 %v896, 0.0
      %v925 = vmax.f32 %v901, 0.0
      %v926 = vmax.f32 %v904, 0.0
      %v927 = vpack.c.bf16 %v908, %v907
      %v928 = vpack.c.bf16 %v910, %v909
      %v929 = vpack.c.bf16 %v912, %v911
      %v930 = vpack.c.bf16 %v914, %v913
      %v931 = vpack.c.bf16 %v916, %v915
      %v932 = vpack.c.bf16 %v918, %v917
      %v933 = vpack.c.bf16 %v920, %v919
      %v934 = vpack.c.bf16 %v922, %v921
      %v935 = vpack.c.bf16 %v924, %v923
      %v936 = vpack.c.bf16 %v926, %v925
      %v947 = vunpack.c.l.b16 %v927
      %v948 = vunpack.c.h.b16 %v927
      %v949 = vunpack.c.l.b16 %v928
      %v950 = vunpack.c.h.b16 %v928
      %v951 = vunpack.c.l.b16 %v929
      %v952 = vunpack.c.h.b16 %v929
      %v953 = vunpack.c.l.b16 %v930
      %v954 = vunpack.c.h.b16 %v930
      %v955 = vunpack.c.l.b16 %v931
      %v956 = vunpack.c.h.b16 %v931
      %v957 = vunpack.c.l.b16 %v932
      %v958 = vunpack.c.h.b16 %v932
      %v959 = vunpack.c.l.b16 %v933
      %v960 = vunpack.c.h.b16 %v933
      %v961 = vunpack.c.l.b16 %v934
      %v962 = vunpack.c.h.b16 %v934
      %v963 = vunpack.c.l.b16 %v935
      %v964 = vunpack.c.h.b16 %v935
      %v965 = vunpack.c.l.b16 %v936
      %v966 = vunpack.c.h.b16 %v936
      %v967 = vpack.c.b16 %v947, %v947
      %v968 = vpack.c.b16 %v948, %v948
      %v969 = vpack.c.b16 %v949, %v949
      %v970 = vpack.c.b16 %v950, %v950
      %v971 = vpack.c.b16 %v951, %v951
      %v972 = vpack.c.b16 %v952, %v952
      %v973 = vpack.c.b16 %v953, %v953
      %v974 = vpack.c.b16 %v954, %v954
      %v975 = vpack.c.b16 %v955, %v955
      %v976 = vpack.c.b16 %v956, %v956
      %v977 = vpack.c.b16 %v957, %v957
      %v978 = vpack.c.b16 %v958, %v958
      %v979 = vpack.c.b16 %v959, %v959
      %v980 = vpack.c.b16 %v960, %v960
      %v981 = vpack.c.b16 %v961, %v961
      %v982 = vpack.c.b16 %v962, %v962
      %v983 = vpack.c.b16 %v963, %v963
      %v984 = vpack.c.b16 %v964, %v964
      %v985 = vpack.c.b16 %v965, %v965
      %v986 = vpack.c.b16 %v966, %v966
      %1007 = vst [vmem:[%s175] sm:$0xf] %v967
      %1008 = vst [vmem:[%s175 + $0x4] sm:$0xf] %v968
      %1009 = vst [vmem:[%s175 + $0x8] sm:$0xf] %v969
      %1010 = vst [vmem:[%s175 + $0xc] sm:$0xf] %v970
      %1011 = vst [vmem:[%s175 + $0x10] sm:$0xf] %v971
      %1012 = vst [vmem:[%s175 + $0x14] sm:$0xf] %v972
      %1013 = vst [vmem:[%s175 + $0x18] sm:$0xf] %v973
      %1014 = vst [vmem:[%s175 + $0x1c] sm:$0xf] %v974
      %1015 = vst [vmem:[%s175 + $0x20] sm:$0xf] %v975
      %1016 = vst [vmem:[%s175 + $0x24] sm:$0xf] %v976
      %1017 = vst [vmem:[%s175 + $0x28] sm:$0xf] %v977
      %1018 = vst [vmem:[%s175 + $0x2c] sm:$0xf] %v978
      %1019 = vst [vmem:[%s175 + $0x30] sm:$0xf] %v979
      %1020 = vst [vmem:[%s175 + $0x34] sm:$0xf] %v980
      %1021 = vst [vmem:[%s175 + $0x38] sm:$0xf] %v981
      %1022 = vst [vmem:[%s175 + $0x3c] sm:$0xf] %v982
      %1023 = vst [vmem:[%s175 + $0x40] sm:$0xf] %v983
      %1024 = vst [vmem:[%s175 + $0x44] sm:$0xf] %v984
      %1025 = vst [vmem:[%s175 + $0x48] sm:$0xf] %v985
      %1026 = vst [vmem:[%s175 + $0x4c] sm:$0xf] %v986
      %s1027 = smul.u32 20, %s14
      %p1028 = scmp.lt.s32.totalorder %s1027, 99
      %s1029 = scalar_select %p1028, %s1027, 99
      %s1030 = smul.addr %s1029, 4
      %s1031 = scalar_lea.vmem %s3, %s1030
      // Predicated region
      $region33: #{dueling_dqn_forward.4} parent=31 // pred_check
        %p1032 = pneg %p100
      $region34: #{dueling_dqn_forward.4} parent=31 // pred_check_branch
        %1034 = sbr.rel (%p1032) target = $region36
      $region35: #{dueling_dqn_forward.4} parent=31 // pred_region
        %s1035 = smul.u32 20, %s14
      $region36: #{dueling_dqn_forward.4} parent=31 // pred_fallthru
        _
    $region32: #{dueling_dqn_forward.4} parent=5 // pred_fallthru
      _
    %p1036 = scmp.le.s32.totalorder 2, %s9
    // Predicated region
    $region37: #{dueling_dqn_forward.4} parent=5 // pred_check
      %p1037 = pneg %p1036
    $region38: #{dueling_dqn_forward.4} parent=5 // pred_check_branch
      %1039 = sbr.rel (%p1037) target = $region40
    $region39: #{dueling_dqn_forward.4} parent=5 // pred_region
      %s1040 = ssub.s32 %s9, 2
      // Predicated region
      $region41: #{dueling_dqn_forward.4} parent=39 // pred_check
        %p1041 = pneg %p106
      $region42: #{dueling_dqn_forward.4} parent=39 // pred_check_branch
        %1043 = sbr.rel (%p1041) target = $region44
      $region43: #{dueling_dqn_forward.4} parent=39 // pred_region
        %s1044 = smul.u32 20, %s15
        %p1045 = scmp.lt.s32.totalorder %s1044, 99
        %s1046 = scalar_select %p1045, %s1044, 99
        %s1047 = smul.addr %s1046, 4
        %s1048 = scalar_lea.vmem %s3, %s1047
      $region44: #{dueling_dqn_forward.4} parent=39 // pred_fallthru
        _
    $region40: #{dueling_dqn_forward.4} parent=5 // pred_fallthru
      _
  $region6: #{dueling_dqn_forward.4} parent=0 // loop_footer
    %s13 = sadd.s32 1, %s9
  $region7: #{dueling_dqn_forward.4} parent=0 // loop_footer_branch
    %8 = sbr.rel target = $region3
  $region8: #{dueling_dqn_forward.4} parent=0 // loop_exit
    _

// kernel: dueling_dqn_forward.5
$region0: #{dueling_dqn_forward.5}
  #allocation0 [shape = 'u32[]', space=smem, size = 0x4, offset = 0x4, fixed_abs, tag = 'smem constant byte address 0x4 - core index']
  #allocation1 [shape = 'u32[144,128]{1,0:T(1,128)}', space=vmem, size = 0x12000, scoped, tag = 'internal scratch']
  %s0 = inlined_call_operand.vmem [shape: bf16[176,2048], index: 0, kind: input, shape index: {}]
  %s1 = inlined_call_operand.vmem [shape: bf16[2048,128], index: 1, kind: input, shape index: {}]
  %s2 = inlined_call_operand.vmem [shape: f32[1,128], index: 2, kind: input, shape index: {}]
  %s3 = inlined_call_operand.vmem [shape: bf16[176,128], index: 3, kind: output, shape index: {}]
  %s4 = sld [smem:[#allocation0]]
  $region22: #{dueling_dqn_forward.5} parent=0
    _
  %s6 = ssub.s32 1, %s4
  %s7 = scalar_select 0, %s6, %s4
  // Predicated region
  $region2: #{dueling_dqn_forward.5} parent=0 // pred_check
    _
  $region3: #{dueling_dqn_forward.5} parent=0 // pred_check_branch
    %9 = sbr.rel (0) target = $region5
  $region4: #{dueling_dqn_forward.5} parent=0 // pred_region
    _
  $region5: #{dueling_dqn_forward.5} parent=0 // pred_fallthru
    _
  // Predicated region
  $region6: #{dueling_dqn_forward.5} parent=0 // pred_check
    _
  $region7: #{dueling_dqn_forward.5} parent=0 // pred_check_branch
    %11 = sbr.rel (0) target = $region9
  $region8: #{dueling_dqn_forward.5} parent=0 // pred_region
    _
  $region9: #{dueling_dqn_forward.5} parent=0 // pred_fallthru
    _
  // Predicated region
  $region10: #{dueling_dqn_forward.5} parent=0 // pred_check
    _
  $region11: #{dueling_dqn_forward.5} parent=0 // pred_check_branch
    %13 = sbr.rel (0) target = $region13
  $region12: #{dueling_dqn_forward.5} parent=0 // pred_region
    _
  $region13: #{dueling_dqn_forward.5} parent=0 // pred_fallthru
    _
  %v15 = vld [vmem:[%s0] sm:$0xff]
  %v16 = vld [vmem:[%s0 + $0x8] sm:$0xff]
  %v17 = vld [vmem:[%s0 + $0x10] sm:$0xff]
  %v18 = vld [vmem:[%s0 + $0x18] sm:$0xff]
  %v19 = vld [vmem:[%s0 + $0x20] sm:$0xff]
  %v20 = vld [vmem:[%s0 + $0x28] sm:$0xff]
  %v21 = vld [vmem:[%s0 + $0x30] sm:$0xff]
  %v22 = vld [vmem:[%s0 + $0x38] sm:$0xff]
  %v23 = vld [vmem:[%s0 + $0x40] sm:$0xff]
  %v24 = vld [vmem:[%s0 + $0x48] sm:$0xff]
  %v25 = vld [vmem:[%s0 + $0x50] sm:$0xff]
  %v26 = vld [vmem:[%s0 + $0x58] sm:$0xff]
  %v27 = vld [vmem:[%s0 + $0x60] sm:$0xff]
  %v28 = vld [vmem:[%s0 + $0x68] sm:$0xff]
  %v29 = vld [vmem:[%s0 + $0x70] sm:$0xff]
  %v30 = vld [vmem:[%s0 + $0x78] sm:$0xff]
  %v31 = vld [vmem:[%s0 + $0x80] sm:$0xff]
  %v32 = vld [vmem:[%s0 + $0x88] sm:$0xff]
  %v33 = vld [vmem:[%s0 + $0x90] sm:$0xff]
  %v34 = vld [vmem:[%s0 + $0x98] sm:$0xff]
  %v35 = vld [vmem:[%s0 + $0xa0] sm:$0xff]
  %v36 = vld [vmem:[%s0 + $0xa8] sm:$0xff]
  %v37 = vld [vmem:[%s0 + $0xb0] sm:$0xff]
  %v38 = vld [vmem:[%s0 + $0xb8] sm:$0xff]
  %v39 = vld [vmem:[%s0 + $0xc0] sm:$0xff]
  %v40 = vld [vmem:[%s0 + $0xc8] sm:$0xff]
  %v41 = vld [vmem:[%s0 + $0xd0] sm:$0xff]
  %v42 = vld [vmem:[%s0 + $0xd8] sm:$0xff]
  %v43 = vld [vmem:[%s0 + $0xe0] sm:$0xff]
  %v44 = vld [vmem:[%s0 + $0xe8] sm:$0xff]
  %v45 = vld [vmem:[%s0 + $0xf0] sm:$0xff]
  %v46 = vld [vmem:[%s0 + $0xf8] sm:$0xff]
  %v47 = vld [vmem:[%s0 + $0x100] sm:$0xff]
  %v48 = vld [vmem:[%s0 + $0x108] sm:$0xff]
  %v49 = vld [vmem:[%s0 + $0x110] sm:$0xff]
  %v50 = vld [vmem:[%s0 + $0x118] sm:$0xff]
  %v51 = vld [vmem:[%s0 + $0x120] sm:$0xff]
  %v52 = vld [vmem:[%s0 + $0x128] sm:$0xff]
  %v53 = vld [vmem:[%s0 + $0x130] sm:$0xff]
  %v54 = vld [vmem:[%s0 + $0x138] sm:$0xff]
  %v55 = vld [vmem:[%s0 + $0x140] sm:$0xff]
  %v56 = vld [vmem:[%s0 + $0x148] sm:$0xff]
  %v57 = vld [vmem:[%s0 + $0x150] sm:$0xff]
  %v58 = vld [vmem:[%s0 + $0x158] sm:$0xff]
  %v59 = vld [vmem:[%s0 + $0x160] sm:$0xff]
  %v60 = vld [vmem:[%s0 + $0x168] sm:$0xff]
  %v61 = vld [vmem:[%s0 + $0x170] sm:$0xff]
  %v62 = vld [vmem:[%s0 + $0x178] sm:$0xff]
  %v63 = vld [vmem:[%s0 + $0x180] sm:$0xff]
  %v64 = vld [vmem:[%s0 + $0x188] sm:$0xff]
  %v65 = vld [vmem:[%s0 + $0x190] sm:$0xff]
  %v66 = vld [vmem:[%s0 + $0x198] sm:$0xff]
  %v67 = vld [vmem:[%s0 + $0x1a0] sm:$0xff]
  %v68 = vld [vmem:[%s0 + $0x1a8] sm:$0xff]
  %v69 = vld [vmem:[%s0 + $0x1b0] sm:$0xff]
  %v70 = vld [vmem:[%s0 + $0x1b8] sm:$0xff]
  %v71 = vld [vmem:[%s0 + $0x1c0] sm:$0xff]
  %v72 = vld [vmem:[%s0 + $0x1c8] sm:$0xff]
  %v73 = vld [vmem:[%s0 + $0x1d0] sm:$0xff]
  %v74 = vld [vmem:[%s0 + $0x1d8] sm:$0xff]
  %v75 = vld [vmem:[%s0 + $0x1e0] sm:$0xff]
  %v76 = vld [vmem:[%s0 + $0x1e8] sm:$0xff]
  %v77 = vld [vmem:[%s0 + $0x1f0] sm:$0xff]
  %v78 = vld [vmem:[%s0 + $0x1f8] sm:$0xff]
  %v79 = vld [vmem:[%s0 + $0x200] sm:$0xff]
  %v80 = vld [vmem:[%s0 + $0x208] sm:$0xff]
  %v81 = vld [vmem:[%s0 + $0x210] sm:$0xff]
  %v82 = vld [vmem:[%s0 + $0x218] sm:$0xff]
  %v83 = vld [vmem:[%s0 + $0x220] sm:$0xff]
  %v84 = vld [vmem:[%s0 + $0x228] sm:$0xff]
  %v85 = vld [vmem:[%s0 + $0x230] sm:$0xff]
  %v86 = vld [vmem:[%s0 + $0x238] sm:$0xff]
  %v87 = vld [vmem:[%s0 + $0x240] sm:$0xff]
  %v88 = vld [vmem:[%s0 + $0x248] sm:$0xff]
  %v89 = vld [vmem:[%s0 + $0x250] sm:$0xff]
  %v90 = vld [vmem:[%s0 + $0x258] sm:$0xff]
  %v91 = vld [vmem:[%s0 + $0x260] sm:$0xff]
  %v92 = vld [vmem:[%s0 + $0x268] sm:$0xff]
  %v93 = vld [vmem:[%s0 + $0x270] sm:$0xff]
  %v94 = vld [vmem:[%s0 + $0x278] sm:$0xff]
  %v95 = vld [vmem:[%s0 + $0x280] sm:$0xff]
  %v96 = vld [vmem:[%s0 + $0x288] sm:$0xff]
  %v97 = vld [vmem:[%s0 + $0x290] sm:$0xff]
  %v98 = vld [vmem:[%s0 + $0x298] sm:$0xff]
  %v99 = vld [vmem:[%s0 + $0x2a0] sm:$0xff]
  %v100 = vld [vmem:[%s0 + $0x2a8] sm:$0xff]
  %v101 = vld [vmem:[%s0 + $0x2b0] sm:$0xff]
  %v102 = vld [vmem:[%s0 + $0x2b8] sm:$0xff]
  %v103 = vld [vmem:[%s0 + $0x2c0] sm:$0xff]
  %v104 = vld [vmem:[%s0 + $0x2c8] sm:$0xff]
  %v105 = vld [vmem:[%s0 + $0x2d0] sm:$0xff]
  %v106 = vld [vmem:[%s0 + $0x2d8] sm:$0xff]
  %v107 = vld [vmem:[%s0 + $0x2e0] sm:$0xff]
  %v108 = vld [vmem:[%s0 + $0x2e8] sm:$0xff]
  %v109 = vld [vmem:[%s0 + $0x2f0] sm:$0xff]
  %v110 = vld [vmem:[%s0 + $0x2f8] sm:$0xff]
  %v111 = vld [vmem:[%s0 + $0x300] sm:$0xff]
  %v112 = vld [vmem:[%s0 + $0x308] sm:$0xff]
  %v113 = vld [vmem:[%s0 + $0x310] sm:$0xff]
  %v114 = vld [vmem:[%s0 + $0x318] sm:$0xff]
  %v115 = vld [vmem:[%s0 + $0x320] sm:$0xff]
  %v116 = vld [vmem:[%s0 + $0x328] sm:$0xff]
  %v117 = vld [vmem:[%s0 + $0x330] sm:$0xff]
  %v118 = vld [vmem:[%s0 + $0x338] sm:$0xff]
  %v119 = vld [vmem:[%s0 + $0x340] sm:$0xff]
  %v120 = vld [vmem:[%s0 + $0x348] sm:$0xff]
  %v121 = vld [vmem:[%s0 + $0x350] sm:$0xff]
  %v122 = vld [vmem:[%s0 + $0x358] sm:$0xff]
  %v123 = vld [vmem:[%s0 + $0x360] sm:$0xff]
  %v124 = vld [vmem:[%s0 + $0x368] sm:$0xff]
  %v125 = vld [vmem:[%s0 + $0x370] sm:$0xff]
  %v126 = vld [vmem:[%s0 + $0x378] sm:$0xff]
  %v127 = vld [vmem:[%s0 + $0x380] sm:$0xff]
  %v128 = vld [vmem:[%s0 + $0x388] sm:$0xff]
  %v129 = vld [vmem:[%s0 + $0x390] sm:$0xff]
  %v130 = vld [vmem:[%s0 + $0x398] sm:$0xff]
  %v131 = vld [vmem:[%s0 + $0x3a0] sm:$0xff]
  %v132 = vld [vmem:[%s0 + $0x3a8] sm:$0xff]
  %v133 = vld [vmem:[%s0 + $0x3b0] sm:$0xff]
  %v134 = vld [vmem:[%s0 + $0x3b8] sm:$0xff]
  %v135 = vld [vmem:[%s0 + $0x3c0] sm:$0xff]
  %v136 = vld [vmem:[%s0 + $0x3c8] sm:$0xff]
  %v137 = vld [vmem:[%s0 + $0x3d0] sm:$0xff]
  %v138 = vld [vmem:[%s0 + $0x3d8] sm:$0xff]
  %v139 = vld [vmem:[%s0 + $0x3e0] sm:$0xff]
  %v140 = vld [vmem:[%s0 + $0x3e8] sm:$0xff]
  %v141 = vld [vmem:[%s0 + $0x3f0] sm:$0xff]
  %v142 = vld [vmem:[%s0 + $0x3f8] sm:$0xff]
  %v143 = vld [vmem:[%s0 + $0x400] sm:$0xff]
  %v144 = vld [vmem:[%s0 + $0x408] sm:$0xff]
  %v145 = vld [vmem:[%s0 + $0x410] sm:$0xff]
  %v146 = vld [vmem:[%s0 + $0x418] sm:$0xff]
  %v147 = vld [vmem:[%s0 + $0x420] sm:$0xff]
  %v148 = vld [vmem:[%s0 + $0x428] sm:$0xff]
  %v149 = vld [vmem:[%s0 + $0x430] sm:$0xff]
  %v150 = vld [vmem:[%s0 + $0x438] sm:$0xff]
  %v151 = vld [vmem:[%s0 + $0x440] sm:$0xff]
  %v152 = vld [vmem:[%s0 + $0x448] sm:$0xff]
  %v153 = vld [vmem:[%s0 + $0x450] sm:$0xff]
  %v154 = vld [vmem:[%s0 + $0x458] sm:$0xff]
  %v155 = vld [vmem:[%s0 + $0x460] sm:$0xff]
  %v156 = vld [vmem:[%s0 + $0x468] sm:$0xff]
  %v157 = vld [vmem:[%s0 + $0x470] sm:$0xff]
  %v158 = vld [vmem:[%s0 + $0x478] sm:$0xff]
  %v159 = vld [vmem:[%s0 + $0x480] sm:$0xff]
  %v160 = vld [vmem:[%s0 + $0x488] sm:$0xff]
  %v161 = vld [vmem:[%s0 + $0x490] sm:$0xff]
  %v162 = vld [vmem:[%s0 + $0x498] sm:$0xff]
  %v163 = vld [vmem:[%s0 + $0x4a0] sm:$0xff]
  %v164 = vld [vmem:[%s0 + $0x4a8] sm:$0xff]
  %v165 = vld [vmem:[%s0 + $0x4b0] sm:$0xff]
  %v166 = vld [vmem:[%s0 + $0x4b8] sm:$0xff]
  %v167 = vld [vmem:[%s0 + $0x4c0] sm:$0xff]
  %v168 = vld [vmem:[%s0 + $0x4c8] sm:$0xff]
  %v169 = vld [vmem:[%s0 + $0x4d0] sm:$0xff]
  %v170 = vld [vmem:[%s0 + $0x4d8] sm:$0xff]
  %v171 = vld [vmem:[%s0 + $0x4e0] sm:$0xff]
  %v172 = vld [vmem:[%s0 + $0x4e8] sm:$0xff]
  %v173 = vld [vmem:[%s0 + $0x4f0] sm:$0xff]
  %v174 = vld [vmem:[%s0 + $0x4f8] sm:$0xff]
  %v175 = vld [vmem:[%s0 + $0x500] sm:$0xff]
  %v176 = vld [vmem:[%s0 + $0x508] sm:$0xff]
  %v177 = vld [vmem:[%s0 + $0x510] sm:$0xff]
  %v178 = vld [vmem:[%s0 + $0x518] sm:$0xff]
  %v179 = vld [vmem:[%s0 + $0x520] sm:$0xff]
  %v180 = vld [vmem:[%s0 + $0x528] sm:$0xff]
  %v181 = vld [vmem:[%s0 + $0x530] sm:$0xff]
  %v182 = vld [vmem:[%s0 + $0x538] sm:$0xff]
  %v183 = vld [vmem:[%s0 + $0x540] sm:$0xff]
  %v184 = vld [vmem:[%s0 + $0x548] sm:$0xff]
  %v185 = vld [vmem:[%s0 + $0x550] sm:$0xff]
  %v186 = vld [vmem:[%s0 + $0x558] sm:$0xff]
  %v187 = vld [vmem:[%s0 + $0x560] sm:$0xff]
  %v188 = vld [vmem:[%s0 + $0x568] sm:$0xff]
  %v189 = vld [vmem:[%s0 + $0x570] sm:$0xff]
  %v190 = vld [vmem:[%s0 + $0x578] sm:$0xff]
  %v191 = vld [vmem:[%s1] sm:$0xf]
  %v192 = vld [vmem:[%s1 + $0x4] sm:$0xf]
  %v193 = vld [vmem:[%s1 + $0x8] sm:$0xf]
  %v194 = vld [vmem:[%s1 + $0xc] sm:$0xf]
  %v195 = vld [vmem:[%s1 + $0x10] sm:$0xf]
  %v196 = vld [vmem:[%s1 + $0x14] sm:$0xf]
  %v197 = vld [vmem:[%s1 + $0x18] sm:$0xf]
  %v198 = vld [vmem:[%s1 + $0x1c] sm:$0xf]
  %v199 = vld [vmem:[%s1 + $0x20] sm:$0xf]
  %v200 = vld [vmem:[%s1 + $0x24] sm:$0xf]
  %v201 = vld [vmem:[%s1 + $0x28] sm:$0xf]
  %v202 = vld [vmem:[%s1 + $0x2c] sm:$0xf]
  %v203 = vld [vmem:[%s1 + $0x30] sm:$0xf]
  %v204 = vld [vmem:[%s1 + $0x34] sm:$0xf]
  %v205 = vld [vmem:[%s1 + $0x38] sm:$0xf]
  %v206 = vld [vmem:[%s1 + $0x3c] sm:$0xf]
  %v207 = vld [vmem:[%s1 + $0x40] sm:$0xf]
  %v208 = vld [vmem:[%s1 + $0x44] sm:$0xf]
  %v209 = vld [vmem:[%s1 + $0x48] sm:$0xf]
  %v210 = vld [vmem:[%s1 + $0x4c] sm:$0xf]
  %v211 = vld [vmem:[%s1 + $0x50] sm:$0xf]
  %v212 = vld [vmem:[%s1 + $0x54] sm:$0xf]
  %v213 = vld [vmem:[%s1 + $0x58] sm:$0xf]
  %v214 = vld [vmem:[%s1 + $0x5c] sm:$0xf]
  %v215 = vld [vmem:[%s1 + $0x60] sm:$0xf]
  %v216 = vld [vmem:[%s1 + $0x64] sm:$0xf]
  %v217 = vld [vmem:[%s1 + $0x68] sm:$0xf]
  %v218 = vld [vmem:[%s1 + $0x6c] sm:$0xf]
  %v219 = vld [vmem:[%s1 + $0x70] sm:$0xf]
  %v220 = vld [vmem:[%s1 + $0x74] sm:$0xf]
  %v221 = vld [vmem:[%s1 + $0x78] sm:$0xf]
  %v222 = vld [vmem:[%s1 + $0x7c] sm:$0xf]
  %v223 = vld [vmem:[%s1 + $0x80] sm:$0xf]
  %v224 = vld [vmem:[%s1 + $0x84] sm:$0xf]
  %v225 = vld [vmem:[%s1 + $0x88] sm:$0xf]
  %v226 = vld [vmem:[%s1 + $0x8c] sm:$0xf]
  %v227 = vld [vmem:[%s1 + $0x90] sm:$0xf]
  %v228 = vld [vmem:[%s1 + $0x94] sm:$0xf]
  %v229 = vld [vmem:[%s1 + $0x98] sm:$0xf]
  %v230 = vld [vmem:[%s1 + $0x9c] sm:$0xf]
  %v231 = vld [vmem:[%s1 + $0xa0] sm:$0xf]
  %v232 = vld [vmem:[%s1 + $0xa4] sm:$0xf]
  %v233 = vld [vmem:[%s1 + $0xa8] sm:$0xf]
  %v234 = vld [vmem:[%s1 + $0xac] sm:$0xf]
  %v235 = vld [vmem:[%s1 + $0xb0] sm:$0xf]
  %v236 = vld [vmem:[%s1 + $0xb4] sm:$0xf]
  %v237 = vld [vmem:[%s1 + $0xb8] sm:$0xf]
  %v238 = vld [vmem:[%s1 + $0xbc] sm:$0xf]
  %v239 = vld [vmem:[%s1 + $0xc0] sm:$0xf]
  %v240 = vld [vmem:[%s1 + $0xc4] sm:$0xf]
  %v241 = vld [vmem:[%s1 + $0xc8] sm:$0xf]
  %v242 = vld [vmem:[%s1 + $0xcc] sm:$0xf]
  %v243 = vld [vmem:[%s1 + $0xd0] sm:$0xf]
  %v244 = vld [vmem:[%s1 + $0xd4] sm:$0xf]
  %v245 = vld [vmem:[%s1 + $0xd8] sm:$0xf]
  %v246 = vld [vmem:[%s1 + $0xdc] sm:$0xf]
  %v247 = vld [vmem:[%s1 + $0xe0] sm:$0xf]
  %v248 = vld [vmem:[%s1 + $0xe4] sm:$0xf]
  %v249 = vld [vmem:[%s1 + $0xe8] sm:$0xf]
  %v250 = vld [vmem:[%s1 + $0xec] sm:$0xf]
  %v251 = vld [vmem:[%s1 + $0xf0] sm:$0xf]
  %v252 = vld [vmem:[%s1 + $0xf4] sm:$0xf]
  %v253 = vld [vmem:[%s1 + $0xf8] sm:$0xf]
  %v254 = vld [vmem:[%s1 + $0xfc] sm:$0xf]
  %v255 = vld [vmem:[%s1 + $0x100] sm:$0xf]
  %v256 = vld [vmem:[%s1 + $0x104] sm:$0xf]
  %v257 = vld [vmem:[%s1 + $0x108] sm:$0xf]
  %v258 = vld [vmem:[%s1 + $0x10c] sm:$0xf]
  %v259 = vld [vmem:[%s1 + $0x110] sm:$0xf]
  %v260 = vld [vmem:[%s1 + $0x114] sm:$0xf]
  %v261 = vld [vmem:[%s1 + $0x118] sm:$0xf]
  %v262 = vld [vmem:[%s1 + $0x11c] sm:$0xf]
  %v263 = vld [vmem:[%s1 + $0x120] sm:$0xf]
  %v264 = vld [vmem:[%s1 + $0x124] sm:$0xf]
  %v265 = vld [vmem:[%s1 + $0x128] sm:$0xf]
  %v266 = vld [vmem:[%s1 + $0x12c] sm:$0xf]
  %v267 = vld [vmem:[%s1 + $0x130] sm:$0xf]
  %v268 = vld [vmem:[%s1 + $0x134] sm:$0xf]
  %v269 = vld [vmem:[%s1 + $0x138] sm:$0xf]
  %v270 = vld [vmem:[%s1 + $0x13c] sm:$0xf]
  %v271 = vld [vmem:[%s1 + $0x140] sm:$0xf]
  %v272 = vld [vmem:[%s1 + $0x144] sm:$0xf]
  %v273 = vld [vmem:[%s1 + $0x148] sm:$0xf]
  %v274 = vld [vmem:[%s1 + $0x14c] sm:$0xf]
  %v275 = vld [vmem:[%s1 + $0x150] sm:$0xf]
  %v276 = vld [vmem:[%s1 + $0x154] sm:$0xf]
  %v277 = vld [vmem:[%s1 + $0x158] sm:$0xf]
  %v278 = vld [vmem:[%s1 + $0x15c] sm:$0xf]
  %v279 = vld [vmem:[%s1 + $0x160] sm:$0xf]
  %v280 = vld [vmem:[%s1 + $0x164] sm:$0xf]
  %v281 = vld [vmem:[%s1 + $0x168] sm:$0xf]
  %v282 = vld [vmem:[%s1 + $0x16c] sm:$0xf]
  %v283 = vld [vmem:[%s1 + $0x170] sm:$0xf]
  %v284 = vld [vmem:[%s1 + $0x174] sm:$0xf]
  %v285 = vld [vmem:[%s1 + $0x178] sm:$0xf]
  %v286 = vld [vmem:[%s1 + $0x17c] sm:$0xf]
  %v287 = vld [vmem:[%s1 + $0x180] sm:$0xf]
  %v288 = vld [vmem:[%s1 + $0x184] sm:$0xf]
  %v289 = vld [vmem:[%s1 + $0x188] sm:$0xf]
  %v290 = vld [vmem:[%s1 + $0x18c] sm:$0xf]
  %v291 = vld [vmem:[%s1 + $0x190] sm:$0xf]
  %v292 = vld [vmem:[%s1 + $0x194] sm:$0xf]
  %v293 = vld [vmem:[%s1 + $0x198] sm:$0xf]
  %v294 = vld [vmem:[%s1 + $0x19c] sm:$0xf]
  %v295 = vld [vmem:[%s1 + $0x1a0] sm:$0xf]
  %v296 = vld [vmem:[%s1 + $0x1a4] sm:$0xf]
  %v297 = vld [vmem:[%s1 + $0x1a8] sm:$0xf]
  %v298 = vld [vmem:[%s1 + $0x1ac] sm:$0xf]
  %v299 = vld [vmem:[%s1 + $0x1b0] sm:$0xf]
  %v300 = vld [vmem:[%s1 + $0x1b4] sm:$0xf]
  %v301 = vld [vmem:[%s1 + $0x1b8] sm:$0xf]
  %v302 = vld [vmem:[%s1 + $0x1bc] sm:$0xf]
  %v303 = vld [vmem:[%s1 + $0x1c0] sm:$0xf]
  %v304 = vld [vmem:[%s1 + $0x1c4] sm:$0xf]
  %v305 = vld [vmem:[%s1 + $0x1c8] sm:$0xf]
  %v306 = vld [vmem:[%s1 + $0x1cc] sm:$0xf]
  %v307 = vld [vmem:[%s1 + $0x1d0] sm:$0xf]
  %v308 = vld [vmem:[%s1 + $0x1d4] sm:$0xf]
  %v309 = vld [vmem:[%s1 + $0x1d8] sm:$0xf]
  %v310 = vld [vmem:[%s1 + $0x1dc] sm:$0xf]
  %v311 = vld [vmem:[%s1 + $0x1e0] sm:$0xf]
  %v312 = vld [vmem:[%s1 + $0x1e4] sm:$0xf]
  %v313 = vld [vmem:[%s1 + $0x1e8] sm:$0xf]
  %v314 = vld [vmem:[%s1 + $0x1ec] sm:$0xf]
  %v315 = vld [vmem:[%s1 + $0x1f0] sm:$0xf]
  %v316 = vld [vmem:[%s1 + $0x1f4] sm:$0xf]
  %v317 = vld [vmem:[%s1 + $0x1f8] sm:$0xf]
  %v318 = vld [vmem:[%s1 + $0x1fc] sm:$0xf]
  %v319 = vld [vmem:[%s1 + $0x200] sm:$0xf]
  %v320 = vld [vmem:[%s1 + $0x204] sm:$0xf]
  %v321 = vld [vmem:[%s1 + $0x208] sm:$0xf]
  %v322 = vld [vmem:[%s1 + $0x20c] sm:$0xf]
  %v323 = vld [vmem:[%s1 + $0x210] sm:$0xf]
  %v324 = vld [vmem:[%s1 + $0x214] sm:$0xf]
  %v325 = vld [vmem:[%s1 + $0x218] sm:$0xf]
  %v326 = vld [vmem:[%s1 + $0x21c] sm:$0xf]
  %v327 = vld [vmem:[%s1 + $0x220] sm:$0xf]
  %v328 = vld [vmem:[%s1 + $0x224] sm:$0xf]
  %v329 = vld [vmem:[%s1 + $0x228] sm:$0xf]
  %v330 = vld [vmem:[%s1 + $0x22c] sm:$0xf]
  %v331 = vld [vmem:[%s1 + $0x230] sm:$0xf]
  %v332 = vld [vmem:[%s1 + $0x234] sm:$0xf]
  %v333 = vld [vmem:[%s1 + $0x238] sm:$0xf]
  %v334 = vld [vmem:[%s1 + $0x23c] sm:$0xf]
  %v335 = vld [vmem:[%s1 + $0x240] sm:$0xf]
  %v336 = vld [vmem:[%s1 + $0x244] sm:$0xf]
  %v337 = vld [vmem:[%s1 + $0x248] sm:$0xf]
  %v338 = vld [vmem:[%s1 + $0x24c] sm:$0xf]
  %v339 = vld [vmem:[%s1 + $0x250] sm:$0xf]
  %v340 = vld [vmem:[%s1 + $0x254] sm:$0xf]
  %v341 = vld [vmem:[%s1 + $0x258] sm:$0xf]
  %v342 = vld [vmem:[%s1 + $0x25c] sm:$0xf]
  %v343 = vld [vmem:[%s1 + $0x260] sm:$0xf]
  %v344 = vld [vmem:[%s1 + $0x264] sm:$0xf]
  %v345 = vld [vmem:[%s1 + $0x268] sm:$0xf]
  %v346 = vld [vmem:[%s1 + $0x26c] sm:$0xf]
  %v347 = vld [vmem:[%s1 + $0x270] sm:$0xf]
  %v348 = vld [vmem:[%s1 + $0x274] sm:$0xf]
  %v349 = vld [vmem:[%s1 + $0x278] sm:$0xf]
  %v350 = vld [vmem:[%s1 + $0x27c] sm:$0xf]
  %v351 = vld [vmem:[%s1 + $0x280] sm:$0xf]
  %v352 = vld [vmem:[%s1 + $0x284] sm:$0xf]
  %v353 = vld [vmem:[%s1 + $0x288] sm:$0xf]
  %v354 = vld [vmem:[%s1 + $0x28c] sm:$0xf]
  %v355 = vld [vmem:[%s1 + $0x290] sm:$0xf]
  %v356 = vld [vmem:[%s1 + $0x294] sm:$0xf]
  %v357 = vld [vmem:[%s1 + $0x298] sm:$0xf]
  %v358 = vld [vmem:[%s1 + $0x29c] sm:$0xf]
  %v359 = vld [vmem:[%s1 + $0x2a0] sm:$0xf]
  %v360 = vld [vmem:[%s1 + $0x2a4] sm:$0xf]
  %v361 = vld [vmem:[%s1 + $0x2a8] sm:$0xf]
  %v362 = vld [vmem:[%s1 + $0x2ac] sm:$0xf]
  %v363 = vld [vmem:[%s1 + $0x2b0] sm:$0xf]
  %v364 = vld [vmem:[%s1 + $0x2b4] sm:$0xf]
  %v365 = vld [vmem:[%s1 + $0x2b8] sm:$0xf]
  %v366 = vld [vmem:[%s1 + $0x2bc] sm:$0xf]
  %v367 = vld [vmem:[%s1 + $0x2c0] sm:$0xf]
  %v368 = vld [vmem:[%s1 + $0x2c4] sm:$0xf]
  %v369 = vld [vmem:[%s1 + $0x2c8] sm:$0xf]
  %v370 = vld [vmem:[%s1 + $0x2cc] sm:$0xf]
  %v371 = vld [vmem:[%s1 + $0x2d0] sm:$0xf]
  %v372 = vld [vmem:[%s1 + $0x2d4] sm:$0xf]
  %v373 = vld [vmem:[%s1 + $0x2d8] sm:$0xf]
  %v374 = vld [vmem:[%s1 + $0x2dc] sm:$0xf]
  %v375 = vld [vmem:[%s1 + $0x2e0] sm:$0xf]
  %v376 = vld [vmem:[%s1 + $0x2e4] sm:$0xf]
  %v377 = vld [vmem:[%s1 + $0x2e8] sm:$0xf]
  %v378 = vld [vmem:[%s1 + $0x2ec] sm:$0xf]
  %v379 = vld [vmem:[%s1 + $0x2f0] sm:$0xf]
  %v380 = vld [vmem:[%s1 + $0x2f4] sm:$0xf]
  %v381 = vld [vmem:[%s1 + $0x2f8] sm:$0xf]
  %v382 = vld [vmem:[%s1 + $0x2fc] sm:$0xf]
  %v383 = vld [vmem:[%s1 + $0x300] sm:$0xf]
  %v384 = vld [vmem:[%s1 + $0x304] sm:$0xf]
  %v385 = vld [vmem:[%s1 + $0x308] sm:$0xf]
  %v386 = vld [vmem:[%s1 + $0x30c] sm:$0xf]
  %v387 = vld [vmem:[%s1 + $0x310] sm:$0xf]
  %v388 = vld [vmem:[%s1 + $0x314] sm:$0xf]
  %v389 = vld [vmem:[%s1 + $0x318] sm:$0xf]
  %v390 = vld [vmem:[%s1 + $0x31c] sm:$0xf]
  %v391 = vld [vmem:[%s1 + $0x320] sm:$0xf]
  %v392 = vld [vmem:[%s1 + $0x324] sm:$0xf]
  %v393 = vld [vmem:[%s1 + $0x328] sm:$0xf]
  %v394 = vld [vmem:[%s1 + $0x32c] sm:$0xf]
  %v395 = vld [vmem:[%s1 + $0x330] sm:$0xf]
  %v396 = vld [vmem:[%s1 + $0x334] sm:$0xf]
  %v397 = vld [vmem:[%s1 + $0x338] sm:$0xf]
  %v398 = vld [vmem:[%s1 + $0x33c] sm:$0xf]
  %v399 = vld [vmem:[%s1 + $0x340] sm:$0xf]
  %v400 = vld [vmem:[%s1 + $0x344] sm:$0xf]
  %v401 = vld [vmem:[%s1 + $0x348] sm:$0xf]
  %v402 = vld [vmem:[%s1 + $0x34c] sm:$0xf]
  %v403 = vld [vmem:[%s1 + $0x350] sm:$0xf]
  %v404 = vld [vmem:[%s1 + $0x354] sm:$0xf]
  %v405 = vld [vmem:[%s1 + $0x358] sm:$0xf]
  %v406 = vld [vmem:[%s1 + $0x35c] sm:$0xf]
  %v407 = vld [vmem:[%s1 + $0x360] sm:$0xf]
  %v408 = vld [vmem:[%s1 + $0x364] sm:$0xf]
  %v409 = vld [vmem:[%s1 + $0x368] sm:$0xf]
  %v410 = vld [vmem:[%s1 + $0x36c] sm:$0xf]
  %v411 = vld [vmem:[%s1 + $0x370] sm:$0xf]
  %v412 = vld [vmem:[%s1 + $0x374] sm:$0xf]
  %v413 = vld [vmem:[%s1 + $0x378] sm:$0xf]
  %v414 = vld [vmem:[%s1 + $0x37c] sm:$0xf]
  %v415 = vld [vmem:[%s1 + $0x380] sm:$0xf]
  %v416 = vld [vmem:[%s1 + $0x384] sm:$0xf]
  %v417 = vld [vmem:[%s1 + $0x388] sm:$0xf]
  %v418 = vld [vmem:[%s1 + $0x38c] sm:$0xf]
  %v419 = vld [vmem:[%s1 + $0x390] sm:$0xf]
  %v420 = vld [vmem:[%s1 + $0x394] sm:$0xf]
  %v421 = vld [vmem:[%s1 + $0x398] sm:$0xf]
  %v422 = vld [vmem:[%s1 + $0x39c] sm:$0xf]
  %v423 = vld [vmem:[%s1 + $0x3a0] sm:$0xf]
  %v424 = vld [vmem:[%s1 + $0x3a4] sm:$0xf]
  %v425 = vld [vmem:[%s1 + $0x3a8] sm:$0xf]
  %v426 = vld [vmem:[%s1 + $0x3ac] sm:$0xf]
  %v427 = vld [vmem:[%s1 + $0x3b0] sm:$0xf]
  %v428 = vld [vmem:[%s1 + $0x3b4] sm:$0xf]
  %v429 = vld [vmem:[%s1 + $0x3b8] sm:$0xf]
  %v430 = vld [vmem:[%s1 + $0x3bc] sm:$0xf]
  %v431 = vld [vmem:[%s1 + $0x3c0] sm:$0xf]
  %v432 = vld [vmem:[%s1 + $0x3c4] sm:$0xf]
  %v433 = vld [vmem:[%s1 + $0x3c8] sm:$0xf]
  %v434 = vld [vmem:[%s1 + $0x3cc] sm:$0xf]
  %v435 = vld [vmem:[%s1 + $0x3d0] sm:$0xf]
  %v436 = vld [vmem:[%s1 + $0x3d4] sm:$0xf]
  %v437 = vld [vmem:[%s1 + $0x3d8] sm:$0xf]
  %v438 = vld [vmem:[%s1 + $0x3dc] sm:$0xf]
  %v439 = vld [vmem:[%s1 + $0x3e0] sm:$0xf]
  %v440 = vld [vmem:[%s1 + $0x3e4] sm:$0xf]
  %v441 = vld [vmem:[%s1 + $0x3e8] sm:$0xf]
  %v442 = vld [vmem:[%s1 + $0x3ec] sm:$0xf]
  %v443 = vld [vmem:[%s1 + $0x3f0] sm:$0xf]
  %v444 = vld [vmem:[%s1 + $0x3f4] sm:$0xf]
  %v445 = vld [vmem:[%s1 + $0x3f8] sm:$0xf]
  %v446 = vld [vmem:[%s1 + $0x3fc] sm:$0xf]
  %v447 = vld [vmem:[%s2] sm:$0x1]
  %v449 = vlaneseq
  %v450 = vshrl.u32 %v449, 7
  %v451 = vsub.s32 0, %v450
  %v452 = vrot.slane %v447, %v451
  %v630 = vunpack.c.l.b16 %v15
  %v631 = vunpack.c.h.b16 %v15
  %v632 = vunpack.c.l.b16 %v16
  %v633 = vunpack.c.h.b16 %v16
  %v634 = vunpack.c.l.b16 %v17
  %v635 = vunpack.c.h.b16 %v17
  %v636 = vunpack.c.l.b16 %v18
  %v637 = vunpack.c.h.b16 %v18
  %v638 = vunpack.c.l.b16 %v19
  %v639 = vunpack.c.h.b16 %v19
  %v640 = vunpack.c.l.b16 %v20
  %v641 = vunpack.c.h.b16 %v20
  %v642 = vunpack.c.l.b16 %v21
  %v643 = vunpack.c.h.b16 %v21
  %v644 = vunpack.c.l.b16 %v22
  %v645 = vunpack.c.h.b16 %v22
  %v646 = vunpack.c.l.b16 %v23
  %v647 = vunpack.c.h.b16 %v23
  %v648 = vunpack.c.l.b16 %v24
  %v649 = vunpack.c.h.b16 %v24
  %v650 = vunpack.c.l.b16 %v25
  %v651 = vunpack.c.h.b16 %v25
  %v652 = vunpack.c.l.b16 %v26
  %v653 = vunpack.c.h.b16 %v26
  %v654 = vunpack.c.l.b16 %v27
  %v655 = vunpack.c.h.b16 %v27
  %v656 = vunpack.c.l.b16 %v28
  %v657 = vunpack.c.h.b16 %v28
  %v658 = vunpack.c.l.b16 %v29
  %v659 = vunpack.c.h.b16 %v29
  %v660 = vunpack.c.l.b16 %v30
  %v661 = vunpack.c.h.b16 %v30
  %v662 = vunpack.c.l.b16 %v31
  %v663 = vunpack.c.h.b16 %v31
  %v664 = vunpack.c.l.b16 %v32
  %v665 = vunpack.c.h.b16 %v32
  %v666 = vunpack.c.l.b16 %v33
  %v667 = vunpack.c.h.b16 %v33
  %v668 = vunpack.c.l.b16 %v34
  %v669 = vunpack.c.h.b16 %v34
  %v670 = vunpack.c.l.b16 %v35
  %v671 = vunpack.c.h.b16 %v35
  %v672 = vunpack.c.l.b16 %v36
  %v673 = vunpack.c.h.b16 %v36
  %v674 = vunpack.c.l.b16 %v37
  %v675 = vunpack.c.h.b16 %v37
  %v676 = vunpack.c.l.b16 %v38
  %v677 = vunpack.c.h.b16 %v38
  %v678 = vunpack.c.l.b16 %v39
  %v679 = vunpack.c.h.b16 %v39
  %v680 = vunpack.c.l.b16 %v40
  %v681 = vunpack.c.h.b16 %v40
  %v682 = vunpack.c.l.b16 %v41
  %v683 = vunpack.c.h.b16 %v41
  %v684 = vunpack.c.l.b16 %v42
  %v685 = vunpack.c.h.b16 %v42
  %v686 = vunpack.c.l.b16 %v43
  %v687 = vunpack.c.h.b16 %v43
  %v688 = vunpack.c.l.b16 %v44
  %v689 = vunpack.c.h.b16 %v44
  %v690 = vunpack.c.l.b16 %v45
  %v691 = vunpack.c.h.b16 %v45
  %v692 = vunpack.c.l.b16 %v46
  %v693 = vunpack.c.h.b16 %v46
  %v694 = vunpack.c.l.b16 %v47
  %v695 = vunpack.c.h.b16 %v47
  %v696 = vunpack.c.l.b16 %v48
  %v697 = vunpack.c.h.b16 %v48
  %v698 = vunpack.c.l.b16 %v49
  %v699 = vunpack.c.h.b16 %v49
  %v700 = vunpack.c.l.b16 %v50
  %v701 = vunpack.c.h.b16 %v50
  %v702 = vunpack.c.l.b16 %v51
  %v703 = vunpack.c.h.b16 %v51
  %v704 = vunpack.c.l.b16 %v52
  %v705 = vunpack.c.h.b16 %v52
  %v706 = vunpack.c.l.b16 %v53
  %v707 = vunpack.c.h.b16 %v53
  %v708 = vunpack.c.l.b16 %v54
  %v709 = vunpack.c.h.b16 %v54
  %v710 = vunpack.c.l.b16 %v55
  %v711 = vunpack.c.h.b16 %v55
  %v712 = vunpack.c.l.b16 %v56
  %v713 = vunpack.c.h.b16 %v56
  %v714 = vunpack.c.l.b16 %v57
  %v715 = vunpack.c.h.b16 %v57
  %v716 = vunpack.c.l.b16 %v58
  %v717 = vunpack.c.h.b16 %v58
  %v718 = vunpack.c.l.b16 %v59
  %v719 = vunpack.c.h.b16 %v59
  %v720 = vunpack.c.l.b16 %v60
  %v721 = vunpack.c.h.b16 %v60
  %v722 = vunpack.c.l.b16 %v61
  %v723 = vunpack.c.h.b16 %v61
  %v724 = vunpack.c.l.b16 %v62
  %v725 = vunpack.c.h.b16 %v62
  %v726 = vunpack.c.l.b16 %v63
  %v727 = vunpack.c.h.b16 %v63
  %v728 = vunpack.c.l.b16 %v64
  %v729 = vunpack.c.h.b16 %v64
  %v730 = vunpack.c.l.b16 %v65
  %v731 = vunpack.c.h.b16 %v65
  %v732 = vunpack.c.l.b16 %v66
  %v733 = vunpack.c.h.b16 %v66
  %v734 = vunpack.c.l.b16 %v67
  %v735 = vunpack.c.h.b16 %v67
  %v736 = vunpack.c.l.b16 %v68
  %v737 = vunpack.c.h.b16 %v68
  %v738 = vunpack.c.l.b16 %v69
  %v739 = vunpack.c.h.b16 %v69
  %v740 = vunpack.c.l.b16 %v70
  %v741 = vunpack.c.h.b16 %v70
  %v742 = vunpack.c.l.b16 %v71
  %v743 = vunpack.c.h.b16 %v71
  %v744 = vunpack.c.l.b16 %v72
  %v745 = vunpack.c.h.b16 %v72
  %v746 = vunpack.c.l.b16 %v73
  %v747 = vunpack.c.h.b16 %v73
  %v748 = vunpack.c.l.b16 %v74
  %v749 = vunpack.c.h.b16 %v74
  %v750 = vunpack.c.l.b16 %v75
  %v751 = vunpack.c.h.b16 %v75
  %v752 = vunpack.c.l.b16 %v76
  %v753 = vunpack.c.h.b16 %v76
  %v754 = vunpack.c.l.b16 %v77
  %v755 = vunpack.c.h.b16 %v77
  %v756 = vunpack.c.l.b16 %v78
  %v757 = vunpack.c.h.b16 %v78
  %v758 = vunpack.c.l.b16 %v79
  %v759 = vunpack.c.h.b16 %v79
  %v760 = vunpack.c.l.b16 %v80
  %v761 = vunpack.c.h.b16 %v80
  %v762 = vunpack.c.l.b16 %v81
  %v763 = vunpack.c.h.b16 %v81
  %v764 = vunpack.c.l.b16 %v82
  %v765 = vunpack.c.h.b16 %v82
  %v766 = vunpack.c.l.b16 %v83
  %v767 = vunpack.c.h.b16 %v83
  %v768 = vunpack.c.l.b16 %v84
  %v769 = vunpack.c.h.b16 %v84
  %v770 = vunpack.c.l.b16 %v85
  %v771 = vunpack.c.h.b16 %v85
  %v772 = vunpack.c.l.b16 %v86
  %v773 = vunpack.c.h.b16 %v86
  %v774 = vunpack.c.l.b16 %v87
  %v775 = vunpack.c.h.b16 %v87
  %v776 = vunpack.c.l.b16 %v88
  %v777 = vunpack.c.h.b16 %v88
  %v778 = vunpack.c.l.b16 %v89
  %v779 = vunpack.c.h.b16 %v89
  %v780 = vunpack.c.l.b16 %v90
  %v781 = vunpack.c.h.b16 %v90
  %v782 = vunpack.c.l.b16 %v91
  %v783 = vunpack.c.h.b16 %v91
  %v784 = vunpack.c.l.b16 %v92
  %v785 = vunpack.c.h.b16 %v92
  %v786 = vunpack.c.l.b16 %v93
  %v787 = vunpack.c.h.b16 %v93
  %v788 = vunpack.c.l.b16 %v94
  %v789 = vunpack.c.h.b16 %v94
  %v790 = vunpack.c.l.b16 %v95
  %v791 = vunpack.c.h.b16 %v95
  %v792 = vunpack.c.l.b16 %v96
  %v793 = vunpack.c.h.b16 %v96
  %v794 = vunpack.c.l.b16 %v97
  %v795 = vunpack.c.h.b16 %v97
  %v796 = vunpack.c.l.b16 %v98
  %v797 = vunpack.c.h.b16 %v98
  %v798 = vunpack.c.l.b16 %v99
  %v799 = vunpack.c.h.b16 %v99
  %v800 = vunpack.c.l.b16 %v100
  %v801 = vunpack.c.h.b16 %v100
  %v802 = vunpack.c.l.b16 %v101
  %v803 = vunpack.c.h.b16 %v101
  %v804 = vunpack.c.l.b16 %v102
  %v805 = vunpack.c.h.b16 %v102
  %v806 = vunpack.c.l.b16 %v103
  %v807 = vunpack.c.h.b16 %v103
  %v808 = vunpack.c.l.b16 %v104
  %v809 = vunpack.c.h.b16 %v104
  %v810 = vunpack.c.l.b16 %v105
  %v811 = vunpack.c.h.b16 %v105
  %v812 = vunpack.c.l.b16 %v106
  %v813 = vunpack.c.h.b16 %v106
  %v814 = vunpack.c.l.b16 %v107
  %v815 = vunpack.c.h.b16 %v107
  %v816 = vunpack.c.l.b16 %v108
  %v817 = vunpack.c.h.b16 %v108
  %v818 = vunpack.c.l.b16 %v109
  %v819 = vunpack.c.h.b16 %v109
  %v820 = vunpack.c.l.b16 %v110
  %v821 = vunpack.c.h.b16 %v110
  %v822 = vunpack.c.l.b16 %v111
  %v823 = vunpack.c.h.b16 %v111
  %v824 = vunpack.c.l.b16 %v112
  %v825 = vunpack.c.h.b16 %v112
  %v826 = vunpack.c.l.b16 %v113
  %v827 = vunpack.c.h.b16 %v113
  %v828 = vunpack.c.l.b16 %v114
  %v829 = vunpack.c.h.b16 %v114
  %v830 = vunpack.c.l.b16 %v115
  %v831 = vunpack.c.h.b16 %v115
  %v832 = vunpack.c.l.b16 %v116
  %v833 = vunpack.c.h.b16 %v116
  %v834 = vunpack.c.l.b16 %v117
  %v835 = vunpack.c.h.b16 %v117
  %v836 = vunpack.c.l.b16 %v118
  %v837 = vunpack.c.h.b16 %v118
  %v838 = vunpack.c.l.b16 %v119
  %v839 = vunpack.c.h.b16 %v119
  %v840 = vunpack.c.l.b16 %v120
  %v841 = vunpack.c.h.b16 %v120
  %v842 = vunpack.c.l.b16 %v121
  %v843 = vunpack.c.h.b16 %v121
  %v844 = vunpack.c.l.b16 %v122
  %v845 = vunpack.c.h.b16 %v122
  %v846 = vunpack.c.l.b16 %v123
  %v847 = vunpack.c.h.b16 %v123
  %v848 = vunpack.c.l.b16 %v124
  %v849 = vunpack.c.h.b16 %v124
  %v850 = vunpack.c.l.b16 %v125
  %v851 = vunpack.c.h.b16 %v125
  %v852 = vunpack.c.l.b16 %v126
  %v853 = vunpack.c.h.b16 %v126
  %v854 = vunpack.c.l.b16 %v127
  %v855 = vunpack.c.h.b16 %v127
  %v856 = vunpack.c.l.b16 %v128
  %v857 = vunpack.c.h.b16 %v128
  %v858 = vunpack.c.l.b16 %v129
  %v859 = vunpack.c.h.b16 %v129
  %v860 = vunpack.c.l.b16 %v130
  %v861 = vunpack.c.h.b16 %v130
  %v862 = vunpack.c.l.b16 %v131
  %v863 = vunpack.c.h.b16 %v131
  %v864 = vunpack.c.l.b16 %v132
  %v865 = vunpack.c.h.b16 %v132
  %v866 = vunpack.c.l.b16 %v133
  %v867 = vunpack.c.h.b16 %v133
  %v868 = vunpack.c.l.b16 %v134
  %v869 = vunpack.c.h.b16 %v134
  %v870 = vunpack.c.l.b16 %v135
  %v871 = vunpack.c.h.b16 %v135
  %v872 = vunpack.c.l.b16 %v136
  %v873 = vunpack.c.h.b16 %v136
  %v874 = vunpack.c.l.b16 %v137
  %v875 = vunpack.c.h.b16 %v137
  %v876 = vunpack.c.l.b16 %v138
  %v877 = vunpack.c.h.b16 %v138
  %v878 = vunpack.c.l.b16 %v139
  %v879 = vunpack.c.h.b16 %v139
  %v880 = vunpack.c.l.b16 %v140
  %v881 = vunpack.c.h.b16 %v140
  %v882 = vunpack.c.l.b16 %v141
  %v883 = vunpack.c.h.b16 %v141
  %v884 = vunpack.c.l.b16 %v142
  %v885 = vunpack.c.h.b16 %v142
  %v886 = vunpack.c.l.b16 %v143
  %v887 = vunpack.c.h.b16 %v143
  %v888 = vunpack.c.l.b16 %v144
  %v889 = vunpack.c.h.b16 %v144
  %v890 = vunpack.c.l.b16 %v145
  %v891 = vunpack.c.h.b16 %v145
  %v892 = vunpack.c.l.b16 %v146
  %v893 = vunpack.c.h.b16 %v146
  %v894 = vunpack.c.l.b16 %v147
  %v895 = vunpack.c.h.b16 %v147
  %v896 = vunpack.c.l.b16 %v148
  %v897 = vunpack.c.h.b16 %v148
  %v898 = vunpack.c.l.b16 %v149
  %v899 = vunpack.c.h.b16 %v149
  %v900 = vunpack.c.l.b16 %v150
  %v901 = vunpack.c.h.b16 %v150
  %v902 = vunpack.c.l.b16 %v151
  %v903 = vunpack.c.h.b16 %v151
  %v904 = vunpack.c.l.b16 %v152
  %v905 = vunpack.c.h.b16 %v152
  %v906 = vunpack.c.l.b16 %v153
  %v907 = vunpack.c.h.b16 %v153
  %v908 = vunpack.c.l.b16 %v154
  %v909 = vunpack.c.h.b16 %v154
  %v910 = vunpack.c.l.b16 %v155
  %v911 = vunpack.c.h.b16 %v155
  %v912 = vunpack.c.l.b16 %v156
  %v913 = vunpack.c.h.b16 %v156
  %v914 = vunpack.c.l.b16 %v157
  %v915 = vunpack.c.h.b16 %v157
  %v916 = vunpack.c.l.b16 %v158
  %v917 = vunpack.c.h.b16 %v158
  %v918 = vunpack.c.l.b16 %v159
  %v919 = vunpack.c.h.b16 %v159
  %v920 = vunpack.c.l.b16 %v160
  %v921 = vunpack.c.h.b16 %v160
  %v922 = vunpack.c.l.b16 %v161
  %v923 = vunpack.c.h.b16 %v161
  %v924 = vunpack.c.l.b16 %v162
  %v925 = vunpack.c.h.b16 %v162
  %v926 = vunpack.c.l.b16 %v163
  %v927 = vunpack.c.h.b16 %v163
  %v928 = vunpack.c.l.b16 %v164
  %v929 = vunpack.c.h.b16 %v164
  %v930 = vunpack.c.l.b16 %v165
  %v931 = vunpack.c.h.b16 %v165
  %v932 = vunpack.c.l.b16 %v166
  %v933 = vunpack.c.h.b16 %v166
  %v934 = vunpack.c.l.b16 %v167
  %v935 = vunpack.c.h.b16 %v167
  %v936 = vunpack.c.l.b16 %v168
  %v937 = vunpack.c.h.b16 %v168
  %v938 = vunpack.c.l.b16 %v169
  %v939 = vunpack.c.h.b16 %v169
  %v940 = vunpack.c.l.b16 %v170
  %v941 = vunpack.c.h.b16 %v170
  %v942 = vunpack.c.l.b16 %v171
  %v943 = vunpack.c.h.b16 %v171
  %v944 = vunpack.c.l.b16 %v172
  %v945 = vunpack.c.h.b16 %v172
  %v946 = vunpack.c.l.b16 %v173
  %v947 = vunpack.c.h.b16 %v173
  %v948 = vunpack.c.l.b16 %v174
  %v949 = vunpack.c.h.b16 %v174
  %v950 = vunpack.c.l.b16 %v175
  %v951 = vunpack.c.h.b16 %v175
  %v952 = vunpack.c.l.b16 %v176
  %v953 = vunpack.c.h.b16 %v176
  %v954 = vunpack.c.l.b16 %v177
  %v955 = vunpack.c.h.b16 %v177
  %v956 = vunpack.c.l.b16 %v178
  %v957 = vunpack.c.h.b16 %v178
  %v958 = vunpack.c.l.b16 %v179
  %v959 = vunpack.c.h.b16 %v179
  %v960 = vunpack.c.l.b16 %v180
  %v961 = vunpack.c.h.b16 %v180
  %v962 = vunpack.c.l.b16 %v181
  %v963 = vunpack.c.h.b16 %v181
  %v964 = vunpack.c.l.b16 %v182
  %v965 = vunpack.c.h.b16 %v182
  %v966 = vunpack.c.l.b16 %v183
  %v967 = vunpack.c.h.b16 %v183
  %v968 = vunpack.c.l.b16 %v184
  %v969 = vunpack.c.h.b16 %v184
  %v970 = vunpack.c.l.b16 %v185
  %v971 = vunpack.c.h.b16 %v185
  %v972 = vunpack.c.l.b16 %v186
  %v973 = vunpack.c.h.b16 %v186
  %v974 = vunpack.c.l.b16 %v187
  %v975 = vunpack.c.h.b16 %v187
  %v976 = vunpack.c.l.b16 %v188
  %v977 = vunpack.c.h.b16 %v188
  %v978 = vunpack.c.l.b16 %v189
  %v979 = vunpack.c.h.b16 %v189
  %v980 = vunpack.c.l.b16 %v190
  %v981 = vunpack.c.h.b16 %v190
  %v982 = vpack.c.b16 %v646, %v630
  %v983 = vpack.c.b16 %v647, %v631
  %v984 = vpack.c.b16 %v648, %v632
  %v985 = vpack.c.b16 %v649, %v633
  %v986 = vpack.c.b16 %v650, %v634
  %v987 = vpack.c.b16 %v651, %v635
  %v988 = vpack.c.b16 %v652, %v636
  %v989 = vpack.c.b16 %v653, %v637
  %v990 = vpack.c.b16 %v654, %v638
  %v991 = vpack.c.b16 %v655, %v639
  %v992 = vpack.c.b16 %v656, %v640
  %v993 = vpack.c.b16 %v657, %v641
  %v994 = vpack.c.b16 %v658, %v642
  %v995 = vpack.c.b16 %v659, %v643
  %v996 = vpack.c.b16 %v660, %v644
  %v997 = vpack.c.b16 %v661, %v645
  %v998 = vpack.c.b16 %v678, %v662
  %v999 = vpack.c.b16 %v679, %v663
  %v1000 = vpack.c.b16 %v680, %v664
  %v1001 = vpack.c.b16 %v681, %v665
  %v1002 = vpack.c.b16 %v682, %v666
  %v1003 = vpack.c.b16 %v683, %v667
  %v1004 = vpack.c.b16 %v684, %v668
  %v1005 = vpack.c.b16 %v685, %v669
  %v1006 = vpack.c.b16 %v686, %v670
  %v1007 = vpack.c.b16 %v687, %v671
  %v1008 = vpack.c.b16 %v688, %v672
  %v1009 = vpack.c.b16 %v689, %v673
  %v1010 = vpack.c.b16 %v690, %v674
  %v1011 = vpack.c.b16 %v691, %v675
  %v1012 = vpack.c.b16 %v692, %v676
  %v1013 = vpack.c.b16 %v693, %v677
  %v1014 = vpack.c.b16 %v710, %v694
  %v1015 = vpack.c.b16 %v711, %v695
  %v1016 = vpack.c.b16 %v712, %v696
  %v1017 = vpack.c.b16 %v713, %v697
  %v1018 = vpack.c.b16 %v714, %v698
  %v1019 = vpack.c.b16 %v715, %v699
  %v1020 = vpack.c.b16 %v716, %v700
  %v1021 = vpack.c.b16 %v717, %v701
  %v1022 = vpack.c.b16 %v718, %v702
  %v1023 = vpack.c.b16 %v719, %v703
  %v1024 = vpack.c.b16 %v720, %v704
  %v1025 = vpack.c.b16 %v721, %v705
  %v1026 = vpack.c.b16 %v722, %v706
  %v1027 = vpack.c.b16 %v723, %v707
  %v1028 = vpack.c.b16 %v724, %v708
  %v1029 = vpack.c.b16 %v725, %v709
  %v1030 = vpack.c.b16 %v742, %v726
  %v1031 = vpack.c.b16 %v743, %v727
  %v1032 = vpack.c.b16 %v744, %v728
  %v1033 = vpack.c.b16 %v745, %v729
  %v1034 = vpack.c.b16 %v746, %v730
  %v1035 = vpack.c.b16 %v747, %v731
  %v1036 = vpack.c.b16 %v748, %v732
  %v1037 = vpack.c.b16 %v749, %v733
  %v1038 = vpack.c.b16 %v750, %v734
  %v1039 = vpack.c.b16 %v751, %v735
  %v1040 = vpack.c.b16 %v752, %v736
  %v1041 = vpack.c.b16 %v753, %v737
  %v1042 = vpack.c.b16 %v754, %v738
  %v1043 = vpack.c.b16 %v755, %v739
  %v1044 = vpack.c.b16 %v756, %v740
  %v1045 = vpack.c.b16 %v757, %v741
  %v1046 = vpack.c.b16 %v774, %v758
  %v1047 = vpack.c.b16 %v775, %v759
  %v1048 = vpack.c.b16 %v776, %v760
  %v1049 = vpack.c.b16 %v777, %v761
  %v1050 = vpack.c.b16 %v778, %v762
  %v1051 = vpack.c.b16 %v779, %v763
  %v1052 = vpack.c.b16 %v780, %v764
  %v1053 = vpack.c.b16 %v781, %v765
  %v1054 = vpack.c.b16 %v782, %v766
  %v1055 = vpack.c.b16 %v783, %v767
  %v1056 = vpack.c.b16 %v784, %v768
  %v1057 = vpack.c.b16 %v785, %v769
  %v1058 = vpack.c.b16 %v786, %v770
  %v1059 = vpack.c.b16 %v787, %v771
  %v1060 = vpack.c.b16 %v788, %v772
  %v1061 = vpack.c.b16 %v789, %v773
  %v1062 = vpack.c.b16 %v806, %v790
  %v1063 = vpack.c.b16 %v807, %v791
  %v1064 = vpack.c.b16 %v808, %v792
  %v1065 = vpack.c.b16 %v809, %v793
  %v1066 = vpack.c.b16 %v810, %v794
  %v1067 = vpack.c.b16 %v811, %v795
  %v1068 = vpack.c.b16 %v812, %v796
  %v1069 = vpack.c.b16 %v813, %v797
  %v1070 = vpack.c.b16 %v814, %v798
  %v1071 = vpack.c.b16 %v815, %v799
  %v1072 = vpack.c.b16 %v816, %v800
  %v1073 = vpack.c.b16 %v817, %v801
  %v1074 = vpack.c.b16 %v818, %v802
  %v1075 = vpack.c.b16 %v819, %v803
  %v1076 = vpack.c.b16 %v820, %v804
  %v1077 = vpack.c.b16 %v821, %v805
  %v1078 = vpack.c.b16 %v838, %v822
  %v1079 = vpack.c.b16 %v839, %v823
  %v1080 = vpack.c.b16 %v840, %v824
  %v1081 = vpack.c.b16 %v841, %v825
  %v1082 = vpack.c.b16 %v842, %v826
  %v1083 = vpack.c.b16 %v843, %v827
  %v1084 = vpack.c.b16 %v844, %v828
  %v1085 = vpack.c.b16 %v845, %v829
  %v1086 = vpack.c.b16 %v846, %v830
  %v1087 = vpack.c.b16 %v847, %v831
  %v1088 = vpack.c.b16 %v848, %v832
  %v1089 = vpack.c.b16 %v849, %v833
  %v1090 = vpack.c.b16 %v850, %v834
  %v1091 = vpack.c.b16 %v851, %v835
  %v1092 = vpack.c.b16 %v852, %v836
  %v1093 = vpack.c.b16 %v853, %v837
  %v1094 = vpack.c.b16 %v870, %v854
  %v1095 = vpack.c.b16 %v871, %v855
  %v1096 = vpack.c.b16 %v872, %v856
  %v1097 = vpack.c.b16 %v873, %v857
  %v1098 = vpack.c.b16 %v874, %v858
  %v1099 = vpack.c.b16 %v875, %v859
  %v1100 = vpack.c.b16 %v876, %v860
  %v1101 = vpack.c.b16 %v877, %v861
  %v1102 = vpack.c.b16 %v878, %v862
  %v1103 = vpack.c.b16 %v879, %v863
  %v1104 = vpack.c.b16 %v880, %v864
  %v1105 = vpack.c.b16 %v881, %v865
  %v1106 = vpack.c.b16 %v882, %v866
  %v1107 = vpack.c.b16 %v883, %v867
  %v1108 = vpack.c.b16 %v884, %v868
  %v1109 = vpack.c.b16 %v885, %v869
  %v1110 = vpack.c.b16 %v902, %v886
  %v1111 = vpack.c.b16 %v903, %v887
  %v1112 = vpack.c.b16 %v904, %v888
  %v1113 = vpack.c.b16 %v905, %v889
  %v1114 = vpack.c.b16 %v906, %v890
  %v1115 = vpack.c.b16 %v907, %v891
  %v1116 = vpack.c.b16 %v908, %v892
  %v1117 = vpack.c.b16 %v909, %v893
  %v1118 = vpack.c.b16 %v910, %v894
  %v1119 = vpack.c.b16 %v911, %v895
  %v1120 = vpack.c.b16 %v912, %v896
  %v1121 = vpack.c.b16 %v913, %v897
  %v1122 = vpack.c.b16 %v914, %v898
  %v1123 = vpack.c.b16 %v915, %v899
  %v1124 = vpack.c.b16 %v916, %v900
  %v1125 = vpack.c.b16 %v917, %v901
  %v1126 = vpack.c.b16 %v934, %v918
  %v1127 = vpack.c.b16 %v935, %v919
  %v1128 = vpack.c.b16 %v936, %v920
  %v1129 = vpack.c.b16 %v937, %v921
  %v1130 = vpack.c.b16 %v938, %v922
  %v1131 = vpack.c.b16 %v939, %v923
  %v1132 = vpack.c.b16 %v940, %v924
  %v1133 = vpack.c.b16 %v941, %v925
  %v1134 = vpack.c.b16 %v942, %v926
  %v1135 = vpack.c.b16 %v943, %v927
  %v1136 = vpack.c.b16 %v944, %v928
  %v1137 = vpack.c.b16 %v945, %v929
  %v1138 = vpack.c.b16 %v946, %v930
  %v1139 = vpack.c.b16 %v947, %v931
  %v1140 = vpack.c.b16 %v948, %v932
  %v1141 = vpack.c.b16 %v949, %v933
  %v1142 = vpack.c.b16 %v966, %v950
  %v1143 = vpack.c.b16 %v967, %v951
  %v1144 = vpack.c.b16 %v968, %v952
  %v1145 = vpack.c.b16 %v969, %v953
  %v1146 = vpack.c.b16 %v970, %v954
  %v1147 = vpack.c.b16 %v971, %v955
  %v1148 = vpack.c.b16 %v972, %v956
  %v1149 = vpack.c.b16 %v973, %v957
  %v1150 = vpack.c.b16 %v974, %v958
  %v1151 = vpack.c.b16 %v975, %v959
  %v1152 = vpack.c.b16 %v976, %v960
  %v1153 = vpack.c.b16 %v977, %v961
  %v1154 = vpack.c.b16 %v978, %v962
  %v1155 = vpack.c.b16 %v979, %v963
  %v1156 = vpack.c.b16 %v980, %v964
  %v1157 = vpack.c.b16 %v981, %v965
  %v1590 = vunpack.c.l.b16 %v191
  %v1591 = vunpack.c.l.b16 %v192
  %v1592 = vunpack.c.l.b16 %v193
  %v1593 = vunpack.c.l.b16 %v194
  %v1594 = vunpack.c.l.b16 %v195
  %v1595 = vunpack.c.l.b16 %v196
  %v1596 = vunpack.c.l.b16 %v197
  %v1597 = vunpack.c.l.b16 %v198
  %v1598 = vunpack.c.l.b16 %v199
  %v1599 = vunpack.c.l.b16 %v200
  %v1600 = vunpack.c.l.b16 %v201
  %v1601 = vunpack.c.l.b16 %v202
  %v1602 = vunpack.c.l.b16 %v203
  %v1603 = vunpack.c.l.b16 %v204
  %v1604 = vunpack.c.l.b16 %v205
  %v1605 = vunpack.c.l.b16 %v206
  %v1606 = vunpack.c.l.b16 %v207
  %v1607 = vunpack.c.l.b16 %v208
  %v1608 = vunpack.c.l.b16 %v209
  %v1609 = vunpack.c.l.b16 %v210
  %v1610 = vunpack.c.l.b16 %v211
  %v1611 = vunpack.c.l.b16 %v212
  %v1612 = vunpack.c.l.b16 %v213
  %v1613 = vunpack.c.l.b16 %v214
  %v1614 = vunpack.c.l.b16 %v215
  %v1615 = vunpack.c.l.b16 %v216
  %v1616 = vunpack.c.l.b16 %v217
  %v1617 = vunpack.c.l.b16 %v218
  %v1618 = vunpack.c.l.b16 %v219
  %v1619 = vunpack.c.l.b16 %v220
  %v1620 = vunpack.c.l.b16 %v221
  %v1621 = vunpack.c.l.b16 %v222
  %v1622 = vunpack.c.l.b16 %v223
  %v1623 = vunpack.c.l.b16 %v224
  %v1624 = vunpack.c.l.b16 %v225
  %v1625 = vunpack.c.l.b16 %v226
  %v1626 = vunpack.c.l.b16 %v227
  %v1627 = vunpack.c.l.b16 %v228
  %v1628 = vunpack.c.l.b16 %v229
  %v1629 = vunpack.c.l.b16 %v230
  %v1630 = vunpack.c.l.b16 %v231
  %v1631 = vunpack.c.l.b16 %v232
  %v1632 = vunpack.c.l.b16 %v233
  %v1633 = vunpack.c.l.b16 %v234
  %v1634 = vunpack.c.l.b16 %v235
  %v1635 = vunpack.c.l.b16 %v236
  %v1636 = vunpack.c.l.b16 %v237
  %v1637 = vunpack.c.l.b16 %v238
  %v1638 = vunpack.c.l.b16 %v239
  %v1639 = vunpack.c.l.b16 %v240
  %v1640 = vunpack.c.l.b16 %v241
  %v1641 = vunpack.c.l.b16 %v242
  %v1642 = vunpack.c.l.b16 %v243
  %v1643 = vunpack.c.l.b16 %v244
  %v1644 = vunpack.c.l.b16 %v245
  %v1645 = vunpack.c.l.b16 %v246
  %v1646 = vunpack.c.l.b16 %v247
  %v1647 = vunpack.c.l.b16 %v248
  %v1648 = vunpack.c.l.b16 %v249
  %v1649 = vunpack.c.l.b16 %v250
  %v1650 = vunpack.c.l.b16 %v251
  %v1651 = vunpack.c.l.b16 %v252
  %v1652 = vunpack.c.l.b16 %v253
  %v1653 = vunpack.c.l.b16 %v254
  %v1654 = vunpack.c.l.b16 %v255
  %v1655 = vunpack.c.l.b16 %v256
  %v1656 = vunpack.c.l.b16 %v257
  %v1657 = vunpack.c.l.b16 %v258
  %v1658 = vunpack.c.l.b16 %v259
  %v1659 = vunpack.c.l.b16 %v260
  %v1660 = vunpack.c.l.b16 %v261
  %v1661 = vunpack.c.l.b16 %v262
  %v1662 = vunpack.c.l.b16 %v263
  %v1663 = vunpack.c.l.b16 %v264
  %v1664 = vunpack.c.l.b16 %v265
  %v1665 = vunpack.c.l.b16 %v266
  %v1666 = vunpack.c.l.b16 %v267
  %v1667 = vunpack.c.l.b16 %v268
  %v1668 = vunpack.c.l.b16 %v269
  %v1669 = vunpack.c.l.b16 %v270
  %v1670 = vunpack.c.l.b16 %v271
  %v1671 = vunpack.c.l.b16 %v272
  %v1672 = vunpack.c.l.b16 %v273
  %v1673 = vunpack.c.l.b16 %v274
  %v1674 = vunpack.c.l.b16 %v275
  %v1675 = vunpack.c.l.b16 %v276
  %v1676 = vunpack.c.l.b16 %v277
  %v1677 = vunpack.c.l.b16 %v278
  %v1678 = vunpack.c.l.b16 %v279
  %v1679 = vunpack.c.l.b16 %v280
  %v1680 = vunpack.c.l.b16 %v281
  %v1681 = vunpack.c.l.b16 %v282
  %v1682 = vunpack.c.l.b16 %v283
  %v1683 = vunpack.c.l.b16 %v284
  %v1684 = vunpack.c.l.b16 %v285
  %v1685 = vunpack.c.l.b16 %v286
  %v1686 = vunpack.c.l.b16 %v287
  %v1687 = vunpack.c.l.b16 %v288
  %v1688 = vunpack.c.l.b16 %v289
  %v1689 = vunpack.c.l.b16 %v290
  %v1690 = vunpack.c.l.b16 %v291
  %v1691 = vunpack.c.l.b16 %v292
  %v1692 = vunpack.c.l.b16 %v293
  %v1693 = vunpack.c.l.b16 %v294
  %v1694 = vunpack.c.l.b16 %v295
  %v1695 = vunpack.c.l.b16 %v296
  %v1696 = vunpack.c.l.b16 %v297
  %v1697 = vunpack.c.l.b16 %v298
  %v1698 = vunpack.c.l.b16 %v299
  %v1699 = vunpack.c.l.b16 %v300
  %v1700 = vunpack.c.l.b16 %v301
  %v1701 = vunpack.c.l.b16 %v302
  %v1702 = vunpack.c.l.b16 %v303
  %v1703 = vunpack.c.l.b16 %v304
  %v1704 = vunpack.c.l.b16 %v305
  %v1705 = vunpack.c.l.b16 %v306
  %v1706 = vunpack.c.l.b16 %v307
  %v1707 = vunpack.c.l.b16 %v308
  %v1708 = vunpack.c.l.b16 %v309
  %v1709 = vunpack.c.l.b16 %v310
  %v1710 = vunpack.c.l.b16 %v311
  %v1711 = vunpack.c.l.b16 %v312
  %v1712 = vunpack.c.l.b16 %v313
  %v1713 = vunpack.c.l.b16 %v314
  %v1714 = vunpack.c.l.b16 %v315
  %v1715 = vunpack.c.l.b16 %v316
  %v1716 = vunpack.c.l.b16 %v317
  %v1717 = vunpack.c.l.b16 %v318
  %v1718 = vunpack.c.l.b16 %v319
  %v1719 = vunpack.c.l.b16 %v320
  %v1720 = vunpack.c.l.b16 %v321
  %v1721 = vunpack.c.l.b16 %v322
  %v1722 = vunpack.c.l.b16 %v323
  %v1723 = vunpack.c.l.b16 %v324
  %v1724 = vunpack.c.l.b16 %v325
  %v1725 = vunpack.c.l.b16 %v326
  %v1726 = vunpack.c.l.b16 %v327
  %v1727 = vunpack.c.l.b16 %v328
  %v1728 = vunpack.c.l.b16 %v329
  %v1729 = vunpack.c.l.b16 %v330
  %v1730 = vunpack.c.l.b16 %v331
  %v1731 = vunpack.c.l.b16 %v332
  %v1732 = vunpack.c.l.b16 %v333
  %v1733 = vunpack.c.l.b16 %v334
  %v1734 = vunpack.c.l.b16 %v335
  %v1735 = vunpack.c.l.b16 %v336
  %v1736 = vunpack.c.l.b16 %v337
  %v1737 = vunpack.c.l.b16 %v338
  %v1738 = vunpack.c.l.b16 %v339
  %v1739 = vunpack.c.l.b16 %v340
  %v1740 = vunpack.c.l.b16 %v341
  %v1741 = vunpack.c.l.b16 %v342
  %v1742 = vunpack.c.l.b16 %v343
  %v1743 = vunpack.c.l.b16 %v344
  %v1744 = vunpack.c.l.b16 %v345
  %v1745 = vunpack.c.l.b16 %v346
  %v1746 = vunpack.c.l.b16 %v347
  %v1747 = vunpack.c.l.b16 %v348
  %v1748 = vunpack.c.l.b16 %v349
  %v1749 = vunpack.c.l.b16 %v350
  %v1750 = vunpack.c.l.b16 %v351
  %v1751 = vunpack.c.l.b16 %v352
  %v1752 = vunpack.c.l.b16 %v353
  %v1753 = vunpack.c.l.b16 %v354
  %v1754 = vunpack.c.l.b16 %v355
  %v1755 = vunpack.c.l.b16 %v356
  %v1756 = vunpack.c.l.b16 %v357
  %v1757 = vunpack.c.l.b16 %v358
  %v1758 = vunpack.c.l.b16 %v359
  %v1759 = vunpack.c.l.b16 %v360
  %v1760 = vunpack.c.l.b16 %v361
  %v1761 = vunpack.c.l.b16 %v362
  %v1762 = vunpack.c.l.b16 %v363
  %v1763 = vunpack.c.l.b16 %v364
  %v1764 = vunpack.c.l.b16 %v365
  %v1765 = vunpack.c.l.b16 %v366
  %v1766 = vunpack.c.l.b16 %v367
  %v1767 = vunpack.c.l.b16 %v368
  %v1768 = vunpack.c.l.b16 %v369
  %v1769 = vunpack.c.l.b16 %v370
  %v1770 = vunpack.c.l.b16 %v371
  %v1771 = vunpack.c.l.b16 %v372
  %v1772 = vunpack.c.l.b16 %v373
  %v1773 = vunpack.c.l.b16 %v374
  %v1774 = vunpack.c.l.b16 %v375
  %v1775 = vunpack.c.l.b16 %v376
  %v1776 = vunpack.c.l.b16 %v377
  %v1777 = vunpack.c.l.b16 %v378
  %v1778 = vunpack.c.l.b16 %v379
  %v1779 = vunpack.c.l.b16 %v380
  %v1780 = vunpack.c.l.b16 %v381
  %v1781 = vunpack.c.l.b16 %v382
  %v1782 = vunpack.c.l.b16 %v383
  %v1783 = vunpack.c.l.b16 %v384
  %v1784 = vunpack.c.l.b16 %v385
  %v1785 = vunpack.c.l.b16 %v386
  %v1786 = vunpack.c.l.b16 %v387
  %v1787 = vunpack.c.l.b16 %v388
  %v1788 = vunpack.c.l.b16 %v389
  %v1789 = vunpack.c.l.b16 %v390
  %v1790 = vunpack.c.l.b16 %v391
  %v1791 = vunpack.c.l.b16 %v392
  %v1792 = vunpack.c.l.b16 %v393
  %v1793 = vunpack.c.l.b16 %v394
  %v1794 = vunpack.c.l.b16 %v395
  %v1795 = vunpack.c.l.b16 %v396
  %v1796 = vunpack.c.l.b16 %v397
  %v1797 = vunpack.c.l.b16 %v398
  %v1798 = vunpack.c.l.b16 %v399
  %v1799 = vunpack.c.l.b16 %v400
  %v1800 = vunpack.c.l.b16 %v401
  %v1801 = vunpack.c.l.b16 %v402
  %v1802 = vunpack.c.l.b16 %v403
  %v1803 = vunpack.c.l.b16 %v404
  %v1804 = vunpack.c.l.b16 %v405
  %v1805 = vunpack.c.l.b16 %v406
  %v1806 = vunpack.c.l.b16 %v407
  %v1807 = vunpack.c.l.b16 %v408
  %v1808 = vunpack.c.l.b16 %v409
  %v1809 = vunpack.c.l.b16 %v410
  %v1810 = vunpack.c.l.b16 %v411
  %v1811 = vunpack.c.l.b16 %v412
  %v1812 = vunpack.c.l.b16 %v413
  %v1813 = vunpack.c.l.b16 %v414
  %v1814 = vunpack.c.l.b16 %v415
  %v1815 = vunpack.c.l.b16 %v416
  %v1816 = vunpack.c.l.b16 %v417
  %v1817 = vunpack.c.l.b16 %v418
  %v1818 = vunpack.c.l.b16 %v419
  %v1819 = vunpack.c.l.b16 %v420
  %v1820 = vunpack.c.l.b16 %v421
  %v1821 = vunpack.c.l.b16 %v422
  %v1822 = vunpack.c.l.b16 %v423
  %v1823 = vunpack.c.l.b16 %v424
  %v1824 = vunpack.c.l.b16 %v425
  %v1825 = vunpack.c.l.b16 %v426
  %v1826 = vunpack.c.l.b16 %v427
  %v1827 = vunpack.c.l.b16 %v428
  %v1828 = vunpack.c.l.b16 %v429
  %v1829 = vunpack.c.l.b16 %v430
  %v1830 = vunpack.c.l.b16 %v431
  %v1831 = vunpack.c.l.b16 %v432
  %v1832 = vunpack.c.l.b16 %v433
  %v1833 = vunpack.c.l.b16 %v434
  %v1834 = vunpack.c.l.b16 %v435
  %v1835 = vunpack.c.l.b16 %v436
  %v1836 = vunpack.c.l.b16 %v437
  %v1837 = vunpack.c.l.b16 %v438
  %v1838 = vunpack.c.l.b16 %v439
  %v1839 = vunpack.c.l.b16 %v440
  %v1840 = vunpack.c.l.b16 %v441
  %v1841 = vunpack.c.l.b16 %v442
  %v1842 = vunpack.c.l.b16 %v443
  %v1843 = vunpack.c.l.b16 %v444
  %v1844 = vunpack.c.l.b16 %v445
  %v1845 = vunpack.c.l.b16 %v446
  %v1846 = vpack.c.b16 %v1591, %v1590
  %v1847 = vpack.c.b16 %v1593, %v1592
  %v1848 = vpack.c.b16 %v1595, %v1594
  %v1849 = vpack.c.b16 %v1597, %v1596
  %v1850 = vpack.c.b16 %v1599, %v1598
  %v1851 = vpack.c.b16 %v1601, %v1600
  %v1852 = vpack.c.b16 %v1603, %v1602
  %v1853 = vpack.c.b16 %v1605, %v1604
  %v1854 = vpack.c.b16 %v1607, %v1606
  %v1855 = vpack.c.b16 %v1609, %v1608
  %v1856 = vpack.c.b16 %v1611, %v1610
  %v1857 = vpack.c.b16 %v1613, %v1612
  %v1858 = vpack.c.b16 %v1615, %v1614
  %v1859 = vpack.c.b16 %v1617, %v1616
  %v1860 = vpack.c.b16 %v1619, %v1618
  %v1861 = vpack.c.b16 %v1621, %v1620
  %v1862 = vpack.c.b16 %v1623, %v1622
  %v1863 = vpack.c.b16 %v1625, %v1624
  %v1864 = vpack.c.b16 %v1627, %v1626
  %v1865 = vpack.c.b16 %v1629, %v1628
  %v1866 = vpack.c.b16 %v1631, %v1630
  %v1867 = vpack.c.b16 %v1633, %v1632
  %v1868 = vpack.c.b16 %v1635, %v1634
  %v1869 = vpack.c.b16 %v1637, %v1636
  %v1870 = vpack.c.b16 %v1639, %v1638
  %v1871 = vpack.c.b16 %v1641, %v1640
  %v1872 = vpack.c.b16 %v1643, %v1642
  %v1873 = vpack.c.b16 %v1645, %v1644
  %v1874 = vpack.c.b16 %v1647, %v1646
  %v1875 = vpack.c.b16 %v1649, %v1648
  %v1876 = vpack.c.b16 %v1651, %v1650
  %v1877 = vpack.c.b16 %v1653, %v1652
  %v1878 = vpack.c.b16 %v1655, %v1654
  %v1879 = vpack.c.b16 %v1657, %v1656
  %v1880 = vpack.c.b16 %v1659, %v1658
  %v1881 = vpack.c.b16 %v1661, %v1660
  %v1882 = vpack.c.b16 %v1663, %v1662
  %v1883 = vpack.c.b16 %v1665, %v1664
  %v1884 = vpack.c.b16 %v1667, %v1666
  %v1885 = vpack.c.b16 %v1669, %v1668
  %v1886 = vpack.c.b16 %v1671, %v1670
  %v1887 = vpack.c.b16 %v1673, %v1672
  %v1888 = vpack.c.b16 %v1675, %v1674
  %v1889 = vpack.c.b16 %v1677, %v1676
  %v1890 = vpack.c.b16 %v1679, %v1678
  %v1891 = vpack.c.b16 %v1681, %v1680
  %v1892 = vpack.c.b16 %v1683, %v1682
  %v1893 = vpack.c.b16 %v1685, %v1684
  %v1894 = vpack.c.b16 %v1687, %v1686
  %v1895 = vpack.c.b16 %v1689, %v1688
  %v1896 = vpack.c.b16 %v1691, %v1690
  %v1897 = vpack.c.b16 %v1693, %v1692
  %v1898 = vpack.c.b16 %v1695, %v1694
  %v1899 = vpack.c.b16 %v1697, %v1696
  %v1900 = vpack.c.b16 %v1699, %v1698
  %v1901 = vpack.c.b16 %v1701, %v1700
  %v1902 = vpack.c.b16 %v1703, %v1702
  %v1903 = vpack.c.b16 %v1705, %v1704
  %v1904 = vpack.c.b16 %v1707, %v1706
  %v1905 = vpack.c.b16 %v1709, %v1708
  %v1906 = vpack.c.b16 %v1711, %v1710
  %v1907 = vpack.c.b16 %v1713, %v1712
  %v1908 = vpack.c.b16 %v1715, %v1714
  %v1909 = vpack.c.b16 %v1717, %v1716
  %v1910 = vpack.c.b16 %v1719, %v1718
  %v1911 = vpack.c.b16 %v1721, %v1720
  %v1912 = vpack.c.b16 %v1723, %v1722
  %v1913 = vpack.c.b16 %v1725, %v1724
  %v1914 = vpack.c.b16 %v1727, %v1726
  %v1915 = vpack.c.b16 %v1729, %v1728
  %v1916 = vpack.c.b16 %v1731, %v1730
  %v1917 = vpack.c.b16 %v1733, %v1732
  %v1918 = vpack.c.b16 %v1735, %v1734
  %v1919 = vpack.c.b16 %v1737, %v1736
  %v1920 = vpack.c.b16 %v1739, %v1738
  %v1921 = vpack.c.b16 %v1741, %v1740
  %v1922 = vpack.c.b16 %v1743, %v1742
  %v1923 = vpack.c.b16 %v1745, %v1744
  %v1924 = vpack.c.b16 %v1747, %v1746
  %v1925 = vpack.c.b16 %v1749, %v1748
  %v1926 = vpack.c.b16 %v1751, %v1750
  %v1927 = vpack.c.b16 %v1753, %v1752
  %v1928 = vpack.c.b16 %v1755, %v1754
  %v1929 = vpack.c.b16 %v1757, %v1756
  %v1930 = vpack.c.b16 %v1759, %v1758
  %v1931 = vpack.c.b16 %v1761, %v1760
  %v1932 = vpack.c.b16 %v1763, %v1762
  %v1933 = vpack.c.b16 %v1765, %v1764
  %v1934 = vpack.c.b16 %v1767, %v1766
  %v1935 = vpack.c.b16 %v1769, %v1768
  %v1936 = vpack.c.b16 %v1771, %v1770
  %v1937 = vpack.c.b16 %v1773, %v1772
  %v1938 = vpack.c.b16 %v1775, %v1774
  %v1939 = vpack.c.b16 %v1777, %v1776
  %v1940 = vpack.c.b16 %v1779, %v1778
  %v1941 = vpack.c.b16 %v1781, %v1780
  %v1942 = vpack.c.b16 %v1783, %v1782
  %v1943 = vpack.c.b16 %v1785, %v1784
  %v1944 = vpack.c.b16 %v1787, %v1786
  %v1945 = vpack.c.b16 %v1789, %v1788
  %v1946 = vpack.c.b16 %v1791, %v1790
  %v1947 = vpack.c.b16 %v1793, %v1792
  %v1948 = vpack.c.b16 %v1795, %v1794
  %v1949 = vpack.c.b16 %v1797, %v1796
  %v1950 = vpack.c.b16 %v1799, %v1798
  %v1951 = vpack.c.b16 %v1801, %v1800
  %v1952 = vpack.c.b16 %v1803, %v1802
  %v1953 = vpack.c.b16 %v1805, %v1804
  %v1954 = vpack.c.b16 %v1807, %v1806
  %v1955 = vpack.c.b16 %v1809, %v1808
  %v1956 = vpack.c.b16 %v1811, %v1810
  %v1957 = vpack.c.b16 %v1813, %v1812
  %v1958 = vpack.c.b16 %v1815, %v1814
  %v1959 = vpack.c.b16 %v1817, %v1816
  %v1960 = vpack.c.b16 %v1819, %v1818
  %v1961 = vpack.c.b16 %v1821, %v1820
  %v1962 = vpack.c.b16 %v1823, %v1822
  %v1963 = vpack.c.b16 %v1825, %v1824
  %v1964 = vpack.c.b16 %v1827, %v1826
  %v1965 = vpack.c.b16 %v1829, %v1828
  %v1966 = vpack.c.b16 %v1831, %v1830
  %v1967 = vpack.c.b16 %v1833, %v1832
  %v1968 = vpack.c.b16 %v1835, %v1834
  %v1969 = vpack.c.b16 %v1837, %v1836
  %v1970 = vpack.c.b16 %v1839, %v1838
  %v1971 = vpack.c.b16 %v1841, %v1840
  %v1972 = vpack.c.b16 %v1843, %v1842
  %v1973 = vpack.c.b16 %v1845, %v1844
  %2102 = vmatprep.subr.bf16.mxu0 0
  %2103 = vmatpush1.bf16.msra.mxu0 %v1846
  %2104 = vmatprep.subr.bf16.mxu0 0
  %2105 = vmatpush1.bf16.msra.mxu0 %v1847
  %2106 = vmatprep.subr.bf16.mxu0 0
  %2107 = vmatpush1.bf16.msra.mxu0 %v1848
  %2108 = vmatprep.subr.bf16.mxu0 0
  %2109 = vmatpush1.bf16.msra.mxu0 %v1849
  %2110 = vmatprep.subr.bf16.mxu0 0
  %2111 = vmatpush1.bf16.msra.mxu0 %v1850
  %2112 = vmatprep.subr.bf16.mxu0 0
  %2113 = vmatpush1.bf16.msra.mxu0 %v1851
  %2114 = vmatprep.subr.bf16.mxu0 0
  %2115 = vmatpush1.bf16.msra.mxu0 %v1852
  %2116 = vmatprep.subr.bf16.mxu0 0
  %2117 = vmatpush1.bf16.msra.mxu0 %v1853
  %2118 = vmatprep.subr.bf16.mxu0 0
  %2119 = vmatpush1.bf16.msra.mxu0 %v1854
  %2120 = vmatprep.subr.bf16.mxu0 0
  %2121 = vmatpush1.bf16.msra.mxu0 %v1855
  %2122 = vmatprep.subr.bf16.mxu0 0
  %2123 = vmatpush1.bf16.msra.mxu0 %v1856
  %2124 = vmatprep.subr.bf16.mxu0 0
  %2125 = vmatpush1.bf16.msra.mxu0 %v1857
  %2126 = vmatprep.subr.bf16.mxu0 0
  %2127 = vmatpush1.bf16.msra.mxu0 %v1858
  %2128 = vmatprep.subr.bf16.mxu0 0
  %2129 = vmatpush1.bf16.msra.mxu0 %v1859
  %2130 = vmatprep.subr.bf16.mxu0 0
  %2131 = vmatpush1.bf16.msra.mxu0 %v1860
  %2132 = vmatprep.subr.bf16.mxu0 0
  %2133 = vmatpush1.bf16.msra.mxu0 %v1861
  %2134 = vmatprep.mubr.bf16.mxu0 %v983
  %2135 = vmatmul.mubr.bf16.gmra.mrb[0].mxu0 %v982
  %v2136 = vpop.f32.mrb[0].mxu0
  %v2137 = vadd.f32 %v452, %v2136
  %v2138 = vpop.f32.mrb[0].mxu0
  %v2139 = vpop.f32.mrb[0].mxu0
  %v2140 = vadd.f32 %v452, %v2139
  %v2141 = vpop.f32.mrb[0].mxu0
  %2142 = vmatprep.mubr.bf16.mxu0 %v999
  %2143 = vmatmul.mubr.bf16.gmra.mrb[0].mxu0 %v998
  %v2144 = vpop.f32.mrb[0].mxu0
  %v2145 = vadd.f32 %v452, %v2144
  %v2146 = vpop.f32.mrb[0].mxu0
  %v2147 = vpop.f32.mrb[0].mxu0
  %v2148 = vadd.f32 %v452, %v2147
  %v2149 = vpop.f32.mrb[0].mxu0
  %2150 = vmatprep.mubr.bf16.mxu0 %v1015
  %2151 = vmatmul.mubr.bf16.gmra.mrb[0].mxu0 %v1014
  %v2152 = vpop.f32.mrb[0].mxu0
  %v2153 = vadd.f32 %v452, %v2152
  %v2154 = vpop.f32.mrb[0].mxu0
  %v2155 = vpop.f32.mrb[0].mxu0
  %v2156 = vadd.f32 %v452, %v2155
  %v2157 = vpop.f32.mrb[0].mxu0
  %2158 = vmatprep.mubr.bf16.mxu0 %v1031
  %2159 = vmatmul.mubr.bf16.gmra.mrb[0].mxu0 %v1030
  %v2160 = vpop.f32.mrb[0].mxu0
  %v2161 = vadd.f32 %v452, %v2160
  %v2162 = vpop.f32.mrb[0].mxu0
  %v2163 = vpop.f32.mrb[0].mxu0
  %v2164 = vadd.f32 %v452, %v2163
  %v2165 = vpop.f32.mrb[0].mxu0
  %2166 = vmatprep.mubr.bf16.mxu0 %v1047
  %2167 = vmatmul.mubr.bf16.gmra.mrb[0].mxu0 %v1046
  %v2168 = vpop.f32.mrb[0].mxu0
  %v2169 = vadd.f32 %v452, %v2168
  %v2170 = vpop.f32.mrb[0].mxu0
  %v2171 = vpop.f32.mrb[0].mxu0
  %v2172 = vadd.f32 %v452, %v2171
  %v2173 = vpop.f32.mrb[0].mxu0
  %2174 = vmatprep.mubr.bf16.mxu0 %v1063
  %2175 = vmatmul.mubr.bf16.gmra.mrb[0].mxu0 %v1062
  %v2176 = vpop.f32.mrb[0].mxu0
  %v2177 = vadd.f32 %v452, %v2176
  %v2178 = vpop.f32.mrb[0].mxu0
  %v2179 = vpop.f32.mrb[0].mxu0
  %v2180 = vadd.f32 %v452, %v2179
  %v2181 = vpop.f32.mrb[0].mxu0
  %2182 = vmatprep.mubr.bf16.mxu0 %v1079
  %2183 = vmatmul.mubr.bf16.gmra.mrb[0].mxu0 %v1078
  %v2184 = vpop.f32.mrb[0].mxu0
  %v2185 = vadd.f32 %v452, %v2184
  %v2186 = vpop.f32.mrb[0].mxu0
  %v2187 = vpop.f32.mrb[0].mxu0
  %v2188 = vadd.f32 %v452, %v2187
  %v2189 = vpop.f32.mrb[0].mxu0
  %2190 = vmatprep.mubr.bf16.mxu0 %v1095
  %2191 = vmatmul.mubr.bf16.gmra.mrb[0].mxu0 %v1094
  %v2192 = vpop.f32.mrb[0].mxu0
  %v2193 = vadd.f32 %v452, %v2192
  %v2194 = vpop.f32.mrb[0].mxu0
  %v2195 = vpop.f32.mrb[0].mxu0
  %v2196 = vadd.f32 %v452, %v2195
  %v2197 = vpop.f32.mrb[0].mxu0
  %2198 = vmatprep.mubr.bf16.mxu0 %v1111
  %2199 = vmatmul.mubr.bf16.gmra.mrb[0].mxu0 %v1110
  %v2200 = vpop.f32.mrb[0].mxu0
  %v2201 = vadd.f32 %v452, %v2200
  %v2202 = vpop.f32.mrb[0].mxu0
  %v2203 = vpop.f32.mrb[0].mxu0
  %v2204 = vadd.f32 %v452, %v2203
  %v2205 = vpop.f32.mrb[0].mxu0
  %2206 = vmatprep.mubr.bf16.mxu0 %v1127
  %2207 = vmatmul.mubr.bf16.gmra.mrb[0].mxu0 %v1126
  %v2208 = vpop.f32.mrb[0].mxu0
  %v2209 = vadd.f32 %v452, %v2208
  %v2210 = vpop.f32.mrb[0].mxu0
  %v2211 = vpop.f32.mrb[0].mxu0
  %v2212 = vadd.f32 %v452, %v2211
  %v2213 = vpop.f32.mrb[0].mxu0
  %2214 = vmatprep.mubr.bf16.mxu0 %v1143
  %2215 = vmatmul.mubr.bf16.gmra.mrb[0].mxu0 %v1142
  %v2216 = vpop.f32.mrb[0].mxu0
  %v2217 = vadd.f32 %v452, %v2216
  %v2218 = vpop.f32.mrb[0].mxu0
  %v2219 = vpop.f32.mrb[0].mxu0
  %v2220 = vadd.f32 %v452, %v2219
  %v2221 = vpop.f32.mrb[0].mxu0
  %2222 = vdwg.mxu0
  %2223 = vmatprep.subr.bf16.mxu0 0
  %2224 = vmatpush1.bf16.msra.mxu0 %v1862
  %2225 = vmatprep.subr.bf16.mxu0 0
  %2226 = vmatpush1.bf16.msra.mxu0 %v1863
  %2227 = vmatprep.subr.bf16.mxu0 0
  %2228 = vmatpush1.bf16.msra.mxu0 %v1864
  %2229 = vmatprep.subr.bf16.mxu0 0
  %2230 = vmatpush1.bf16.msra.mxu0 %v1865
  %2231 = vmatprep.subr.bf16.mxu0 0
  %2232 = vmatpush1.bf16.msra.mxu0 %v1866
  %2233 = vmatprep.subr.bf16.mxu0 0
  %2234 = vmatpush1.bf16.msra.mxu0 %v1867
  %2235 = vmatprep.subr.bf16.mxu0 0
  %2236 = vmatpush1.bf16.msra.mxu0 %v1868
  %2237 = vmatprep.subr.bf16.mxu0 0
  %2238 = vmatpush1.bf16.msra.mxu0 %v1869
  %2239 = vmatprep.subr.bf16.mxu0 0
  %2240 = vmatpush1.bf16.msra.mxu0 %v1870
  %2241 = vmatprep.subr.bf16.mxu0 0
  %2242 = vmatpush1.bf16.msra.mxu0 %v1871
  %2243 = vmatprep.subr.bf16.mxu0 0
  %2244 = vmatpush1.bf16.msra.mxu0 %v1872
  %2245 = vmatprep.subr.bf16.mxu0 0
  %2246 = vmatpush1.bf16.msra.mxu0 %v1873
  %2247 = vmatprep.subr.bf16.mxu0 0
  %2248 = vmatpush1.bf16.msra.mxu0 %v1874
  %2249 = vmatprep.subr.bf16.mxu0 0
  %2250 = vmatpush1.bf16.msra.mxu0 %v1875
  %2251 = vmatprep.subr.bf16.mxu0 0
  %2252 = vmatpush1.bf16.msra.mxu0 %v1876
  %2253 = vmatprep.subr.bf16.mxu0 0
  %2254 = vmatpush1.bf16.msra.mxu0 %v1877
  %2255 = vmatprep.mubr.bf16.mxu0 %v985
  %2256 = vmatmul.mubr.bf16.gmra.mrb[0].mxu0 %v984
  %v2257 = vpop.f32.mrb[0].mxu0
  %v2258 = vadd.f32 %v2137, %v2257
  %v2259 = vpop.f32.mrb[0].mxu0
  %v2260 = vpop.f32.mrb[0].mxu0
  %v2261 = vadd.f32 %v2140, %v2260
  %v2262 = vpop.f32.mrb[0].mxu0
  %2263 = vmatprep.mubr.bf16.mxu0 %v1001
  %2264 = vmatmul.mubr.bf16.gmra.mrb[0].mxu0 %v1000
  %v2265 = vpop.f32.mrb[0].mxu0
  %v2266 = vadd.f32 %v2145, %v2265
  %v2267 = vpop.f32.mrb[0].mxu0
  %v2268 = vpop.f32.mrb[0].mxu0
  %v2269 = vadd.f32 %v2148, %v2268
  %v2270 = vpop.f32.mrb[0].mxu0
  %2271 = vmatprep.mubr.bf16.mxu0 %v1017
  %2272 = vmatmul.mubr.bf16.gmra.mrb[0].mxu0 %v1016
  %v2273 = vpop.f32.mrb[0].mxu0
  %v2274 = vadd.f32 %v2153, %v2273
  %v2275 = vpop.f32.mrb[0].mxu0
  %v2276 = vpop.f32.mrb[0].mxu0
  %v2277 = vadd.f32 %v2156, %v2276
  %v2278 = vpop.f32.mrb[0].mxu0
  %2279 = vmatprep.mubr.bf16.mxu0 %v1033
  %2280 = vmatmul.mubr.bf16.gmra.mrb[0].mxu0 %v1032
  %v2281 = vpop.f32.mrb[0].mxu0
  %v2282 = vadd.f32 %v2161, %v2281
  %v2283 = vpop.f32.mrb[0].mxu0
  %v2284 = vpop.f32.mrb[0].mxu0
  %v2285 = vadd.f32 %v2164, %v2284
  %v2286 = vpop.f32.mrb[0].mxu0
  %2287 = vmatprep.mubr.bf16.mxu0 %v1049
  %2288 = vmatmul.mubr.bf16.gmra.mrb[0].mxu0 %v1048
  %v2289 = vpop.f32.mrb[0].mxu0
  %v2290 = vadd.f32 %v2169, %v2289
  %v2291 = vpop.f32.mrb[0].mxu0
  %v2292 = vpop.f32.mrb[0].mxu0
  %v2293 = vadd.f32 %v2172, %v2292
  %v2294 = vpop.f32.mrb[0].mxu0
  %2295 = vmatprep.mubr.bf16.mxu0 %v1065
  %2296 = vmatmul.mubr.bf16.gmra.mrb[0].mxu0 %v1064
  %v2297 = vpop.f32.mrb[0].mxu0
  %v2298 = vadd.f32 %v2177, %v2297
  %v2299 = vpop.f32.mrb[0].mxu0
  %v2300 = vpop.f32.mrb[0].mxu0
  %v2301 = vadd.f32 %v2180, %v2300
  %v2302 = vpop.f32.mrb[0].mxu0
  %2303 = vmatprep.mubr.bf16.mxu0 %v1081
  %2304 = vmatmul.mubr.bf16.gmra.mrb[0].mxu0 %v1080
  %v2305 = vpop.f32.mrb[0].mxu0
  %v2306 = vadd.f32 %v2185, %v2305
  %v2307 = vpop.f32.mrb[0].mxu0
  %v2308 = vpop.f32.mrb[0].mxu0
  %v2309 = vadd.f32 %v2188, %v2308
  %v2310 = vpop.f32.mrb[0].mxu0
  %2311 = vmatprep.mubr.bf16.mxu0 %v1097
  %2312 = vmatmul.mubr.bf16.gmra.mrb[0].mxu0 %v1096
  %v2313 = vpop.f32.mrb[0].mxu0
  %v2314 = vadd.f32 %v2193, %v2313
  %v2315 = vpop.f32.mrb[0].mxu0
  %v2316 = vpop.f32.mrb[0].mxu0
  %v2317 = vadd.f32 %v2196, %v2316
  %v2318 = vpop.f32.mrb[0].mxu0
  %2319 = vmatprep.mubr.bf16.mxu0 %v1113
  %2320 = vmatmul.mubr.bf16.gmra.mrb[0].mxu0 %v1112
  %v2321 = vpop.f32.mrb[0].mxu0
  %v2322 = vadd.f32 %v2201, %v2321
  %v2323 = vpop.f32.mrb[0].mxu0
  %v2324 = vpop.f32.mrb[0].mxu0
  %v2325 = vadd.f32 %v2204, %v2324
  %v2326 = vpop.f32.mrb[0].mxu0
  %2327 = vmatprep.mubr.bf16.mxu0 %v1129
  %2328 = vmatmul.mubr.bf16.gmra.mrb[0].mxu0 %v1128
  %v2329 = vpop.f32.mrb[0].mxu0
  %v2330 = vadd.f32 %v2209, %v2329
  %v2331 = vpop.f32.mrb[0].mxu0
  %v2332 = vpop.f32.mrb[0].mxu0
  %v2333 = vadd.f32 %v2212, %v2332
  %v2334 = vpop.f32.mrb[0].mxu0
  %2335 = vmatprep.mubr.bf16.mxu0 %v1145
  %2336 = vmatmul.mubr.bf16.gmra.mrb[0].mxu0 %v1144
  %v2337 = vpop.f32.mrb[0].mxu0
  %v2338 = vadd.f32 %v2217, %v2337
  %v2339 = vpop.f32.mrb[0].mxu0
  %v2340 = vpop.f32.mrb[0].mxu0
  %v2341 = vadd.f32 %v2220, %v2340
  %v2342 = vpop.f32.mrb[0].mxu0
  %2343 = vdwg.mxu0
  %2344 = vmatprep.subr.bf16.mxu0 0
  %2345 = vmatpush1.bf16.msra.mxu0 %v1878
  %2346 = vmatprep.subr.bf16.mxu0 0
  %2347 = vmatpush1.bf16.msra.mxu0 %v1879
  %2348 = vmatprep.subr.bf16.mxu0 0
  %2349 = vmatpush1.bf16.msra.mxu0 %v1880
  %2350 = vmatprep.subr.bf16.mxu0 0
  %2351 = vmatpush1.bf16.msra.mxu0 %v1881
  %2352 = vmatprep.subr.bf16.mxu0 0
  %2353 = vmatpush1.bf16.msra.mxu0 %v1882
  %2354 = vmatprep.subr.bf16.mxu0 0
  %2355 = vmatpush1.bf16.msra.mxu0 %v1883
  %2356 = vmatprep.subr.bf16.mxu0 0
  %2357 = vmatpush1.bf16.msra.mxu0 %v1884
  %2358 = vmatprep.subr.bf16.mxu0 0
  %2359 = vmatpush1.bf16.msra.mxu0 %v1885
  %2360 = vmatprep.subr.bf16.mxu0 0
  %2361 = vmatpush1.bf16.msra.mxu0 %v1886
  %2362 = vmatprep.subr.bf16.mxu0 0
  %2363 = vmatpush1.bf16.msra.mxu0 %v1887
  %2364 = vmatprep.subr.bf16.mxu0 0
  %2365 = vmatpush1.bf16.msra.mxu0 %v1888
  %2366 = vmatprep.subr.bf16.mxu0 0
  %2367 = vmatpush1.bf16.msra.mxu0 %v1889
  %2368 = vmatprep.subr.bf16.mxu0 0
  %2369 = vmatpush1.bf16.msra.mxu0 %v1890
  %2370 = vmatprep.subr.bf16.mxu0 0
  %2371 = vmatpush1.bf16.msra.mxu0 %v1891
  %2372 = vmatprep.subr.bf16.mxu0 0
  %2373 = vmatpush1.bf16.msra.mxu0 %v1892
  %2374 = vmatprep.subr.bf16.mxu0 0
  %2375 = vmatpush1.bf16.msra.mxu0 %v1893
  %2376 = vmatprep.mubr.bf16.mxu0 %v987
  %2377 = vmatmul.mubr.bf16.gmra.mrb[0].mxu0 %v986
  %v2378 = vpop.f32.mrb[0].mxu0
  %v2379 = vadd.f32 %v2258, %v2378
  %v2380 = vpop.f32.mrb[0].mxu0
  %v2381 = vpop.f32.mrb[0].mxu0
  %v2382 = vadd.f32 %v2261, %v2381
  %v2383 = vpop.f32.mrb[0].mxu0
  %2384 = vmatprep.mubr.bf16.mxu0 %v1003
  %2385 = vmatmul.mubr.bf16.gmra.mrb[0].mxu0 %v1002
  %v2386 = vpop.f32.mrb[0].mxu0
  %v2387 = vadd.f32 %v2266, %v2386
  %v2388 = vpop.f32.mrb[0].mxu0
  %v2389 = vpop.f32.mrb[0].mxu0
  %v2390 = vadd.f32 %v2269, %v2389
  %v2391 = vpop.f32.mrb[0].mxu0
  %2392 = vmatprep.mubr.bf16.mxu0 %v1019
  %2393 = vmatmul.mubr.bf16.gmra.mrb[0].mxu0 %v1018
  %v2394 = vpop.f32.mrb[0].mxu0
  %v2395 = vadd.f32 %v2274, %v2394
  %v2396 = vpop.f32.mrb[0].mxu0
  %v2397 = vpop.f32.mrb[0].mxu0
  %v2398 = vadd.f32 %v2277, %v2397
  %v2399 = vpop.f32.mrb[0].mxu0
  %2400 = vmatprep.mubr.bf16.mxu0 %v1035
  %2401 = vmatmul.mubr.bf16.gmra.mrb[0].mxu0 %v1034
  %v2402 = vpop.f32.mrb[0].mxu0
  %v2403 = vadd.f32 %v2282, %v2402
  %v2404 = vpop.f32.mrb[0].mxu0
  %v2405 = vpop.f32.mrb[0].mxu0
  %v2406 = vadd.f32 %v2285, %v2405
  %v2407 = vpop.f32.mrb[0].mxu0
  %2408 = vmatprep.mubr.bf16.mxu0 %v1051
  %2409 = vmatmul.mubr.bf16.gmra.mrb[0].mxu0 %v1050
  %v2410 = vpop.f32.mrb[0].mxu0
  %v2411 = vadd.f32 %v2290, %v2410
  %v2412 = vpop.f32.mrb[0].mxu0
  %v2413 = vpop.f32.mrb[0].mxu0
  %v2414 = vadd.f32 %v2293, %v2413
  %v2415 = vpop.f32.mrb[0].mxu0
  %2416 = vmatprep.mubr.bf16.mxu0 %v1067
  %2417 = vmatmul.mubr.bf16.gmra.mrb[0].mxu0 %v1066
  %v2418 = vpop.f32.mrb[0].mxu0
  %v2419 = vadd.f32 %v2298, %v2418
  %v2420 = vpop.f32.mrb[0].mxu0
  %v2421 = vpop.f32.mrb[0].mxu0
  %v2422 = vadd.f32 %v2301, %v2421
  %v2423 = vpop.f32.mrb[0].mxu0
  %2424 = vmatprep.mubr.bf16.mxu0 %v1083
  %2425 = vmatmul.mubr.bf16.gmra.mrb[0].mxu0 %v1082
  %v2426 = vpop.f32.mrb[0].mxu0
  %v2427 = vadd.f32 %v2306, %v2426
  %v2428 = vpop.f32.mrb[0].mxu0
  %v2429 = vpop.f32.mrb[0].mxu0
  %v2430 = vadd.f32 %v2309, %v2429
  %v2431 = vpop.f32.mrb[0].mxu0
  %2432 = vmatprep.mubr.bf16.mxu0 %v1099
  %2433 = vmatmul.mubr.bf16.gmra.mrb[0].mxu0 %v1098
  %v2434 = vpop.f32.mrb[0].mxu0
  %v2435 = vadd.f32 %v2314, %v2434
  %v2436 = vpop.f32.mrb[0].mxu0
  %v2437 = vpop.f32.mrb[0].mxu0
  %v2438 = vadd.f32 %v2317, %v2437
  %v2439 = vpop.f32.mrb[0].mxu0
  %2440 = vmatprep.mubr.bf16.mxu0 %v1115
  %2441 = vmatmul.mubr.bf16.gmra.mrb[0].mxu0 %v1114
  %v2442 = vpop.f32.mrb[0].mxu0
  %v2443 = vadd.f32 %v2322, %v2442
  %v2444 = vpop.f32.mrb[0].mxu0
  %v2445 = vpop.f32.mrb[0].mxu0
  %v2446 = vadd.f32 %v2325, %v2445
  %v2447 = vpop.f32.mrb[0].mxu0
  %2448 = vmatprep.mubr.bf16.mxu0 %v1131
  %2449 = vmatmul.mubr.bf16.gmra.mrb[0].mxu0 %v1130
  %v2450 = vpop.f32.mrb[0].mxu0
  %v2451 = vadd.f32 %v2330, %v2450
  %v2452 = vpop.f32.mrb[0].mxu0
  %v2453 = vpop.f32.mrb[0].mxu0
  %v2454 = vadd.f32 %v2333, %v2453
  %v2455 = vpop.f32.mrb[0].mxu0
  %2456 = vmatprep.mubr.bf16.mxu0 %v1147
  %2457 = vmatmul.mubr.bf16.gmra.mrb[0].mxu0 %v1146
  %v2458 = vpop.f32.mrb[0].mxu0
  %v2459 = vadd.f32 %v2338, %v2458
  %v2460 = vpop.f32.mrb[0].mxu0
  %v2461 = vpop.f32.mrb[0].mxu0
  %v2462 = vadd.f32 %v2341, %v2461
  %v2463 = vpop.f32.mrb[0].mxu0
  %2464 = vdwg.mxu0
  %2465 = vmatprep.subr.bf16.mxu0 0
  %2466 = vmatpush1.bf16.msra.mxu0 %v1894
  %2467 = vmatprep.subr.bf16.mxu0 0
  %2468 = vmatpush1.bf16.msra.mxu0 %v1895
  %2469 = vmatprep.subr.bf16.mxu0 0
  %2470 = vmatpush1.bf16.msra.mxu0 %v1896
  %2471 = vmatprep.subr.bf16.mxu0 0
  %2472 = vmatpush1.bf16.msra.mxu0 %v1897
  %2473 = vmatprep.subr.bf16.mxu0 0
  %2474 = vmatpush1.bf16.msra.mxu0 %v1898
  %2475 = vmatprep.subr.bf16.mxu0 0
  %2476 = vmatpush1.bf16.msra.mxu0 %v1899
  %2477 = vmatprep.subr.bf16.mxu0 0
  %2478 = vmatpush1.bf16.msra.mxu0 %v1900
  %2479 = vmatprep.subr.bf16.mxu0 0
  %2480 = vmatpush1.bf16.msra.mxu0 %v1901
  %2481 = vmatprep.subr.bf16.mxu0 0
  %2482 = vmatpush1.bf16.msra.mxu0 %v1902
  %2483 = vmatprep.subr.bf16.mxu0 0
  %2484 = vmatpush1.bf16.msra.mxu0 %v1903
  %2485 = vmatprep.subr.bf16.mxu0 0
  %2486 = vmatpush1.bf16.msra.mxu0 %v1904
  %2487 = vmatprep.subr.bf16.mxu0 0
  %2488 = vmatpush1.bf16.msra.mxu0 %v1905
  %2489 = vmatprep.subr.bf16.mxu0 0
  %2490 = vmatpush1.bf16.msra.mxu0 %v1906
  %2491 = vmatprep.subr.bf16.mxu0 0
  %2492 = vmatpush1.bf16.msra.mxu0 %v1907
  %2493 = vmatprep.subr.bf16.mxu0 0
  %2494 = vmatpush1.bf16.msra.mxu0 %v1908
  %2495 = vmatprep.subr.bf16.mxu0 0
  %2496 = vmatpush1.bf16.msra.mxu0 %v1909
  %2497 = vmatprep.mubr.bf16.mxu0 %v989
  %2498 = vmatmul.mubr.bf16.gmra.mrb[0].mxu0 %v988
  %v2499 = vpop.f32.mrb[0].mxu0
  %v2500 = vadd.f32 %v2379, %v2499
  %v2501 = vpop.f32.mrb[0].mxu0
  %v2502 = vpop.f32.mrb[0].mxu0
  %v2503 = vadd.f32 %v2382, %v2502
  %v2504 = vpop.f32.mrb[0].mxu0
  %2505 = vmatprep.mubr.bf16.mxu0 %v1005
  %2506 = vmatmul.mubr.bf16.gmra.mrb[0].mxu0 %v1004
  %v2507 = vpop.f32.mrb[0].mxu0
  %v2508 = vadd.f32 %v2387, %v2507
  %v2509 = vpop.f32.mrb[0].mxu0
  %v2510 = vpop.f32.mrb[0].mxu0
  %v2511 = vadd.f32 %v2390, %v2510
  %v2512 = vpop.f32.mrb[0].mxu0
  %2513 = vmatprep.mubr.bf16.mxu0 %v1021
  %2514 = vmatmul.mubr.bf16.gmra.mrb[0].mxu0 %v1020
  %v2515 = vpop.f32.mrb[0].mxu0
  %v2516 = vadd.f32 %v2395, %v2515
  %v2517 = vpop.f32.mrb[0].mxu0
  %v2518 = vpop.f32.mrb[0].mxu0
  %v2519 = vadd.f32 %v2398, %v2518
  %v2520 = vpop.f32.mrb[0].mxu0
  %2521 = vmatprep.mubr.bf16.mxu0 %v1037
  %2522 = vmatmul.mubr.bf16.gmra.mrb[0].mxu0 %v1036
  %v2523 = vpop.f32.mrb[0].mxu0
  %v2524 = vadd.f32 %v2403, %v2523
  %v2525 = vpop.f32.mrb[0].mxu0
  %v2526 = vpop.f32.mrb[0].mxu0
  %v2527 = vadd.f32 %v2406, %v2526
  %v2528 = vpop.f32.mrb[0].mxu0
  %2529 = vmatprep.mubr.bf16.mxu0 %v1053
  %2530 = vmatmul.mubr.bf16.gmra.mrb[0].mxu0 %v1052
  %v2531 = vpop.f32.mrb[0].mxu0
  %v2532 = vadd.f32 %v2411, %v2531
  %v2533 = vpop.f32.mrb[0].mxu0
  %v2534 = vpop.f32.mrb[0].mxu0
  %v2535 = vadd.f32 %v2414, %v2534
  %v2536 = vpop.f32.mrb[0].mxu0
  %2537 = vmatprep.mubr.bf16.mxu0 %v1069
  %2538 = vmatmul.mubr.bf16.gmra.mrb[0].mxu0 %v1068
  %v2539 = vpop.f32.mrb[0].mxu0
  %v2540 = vadd.f32 %v2419, %v2539
  %v2541 = vpop.f32.mrb[0].mxu0
  %v2542 = vpop.f32.mrb[0].mxu0
  %v2543 = vadd.f32 %v2422, %v2542
  %v2544 = vpop.f32.mrb[0].mxu0
  %2545 = vmatprep.mubr.bf16.mxu0 %v1085
  %2546 = vmatmul.mubr.bf16.gmra.mrb[0].mxu0 %v1084
  %v2547 = vpop.f32.mrb[0].mxu0
  %v2548 = vadd.f32 %v2427, %v2547
  %v2549 = vpop.f32.mrb[0].mxu0
  %v2550 = vpop.f32.mrb[0].mxu0
  %v2551 = vadd.f32 %v2430, %v2550
  %v2552 = vpop.f32.mrb[0].mxu0
  %2553 = vmatprep.mubr.bf16.mxu0 %v1101
  %2554 = vmatmul.mubr.bf16.gmra.mrb[0].mxu0 %v1100
  %v2555 = vpop.f32.mrb[0].mxu0
  %v2556 = vadd.f32 %v2435, %v2555
  %v2557 = vpop.f32.mrb[0].mxu0
  %v2558 = vpop.f32.mrb[0].mxu0
  %v2559 = vadd.f32 %v2438, %v2558
  %v2560 = vpop.f32.mrb[0].mxu0
  %2561 = vmatprep.mubr.bf16.mxu0 %v1117
  %2562 = vmatmul.mubr.bf16.gmra.mrb[0].mxu0 %v1116
  %v2563 = vpop.f32.mrb[0].mxu0
  %v2564 = vadd.f32 %v2443, %v2563
  %v2565 = vpop.f32.mrb[0].mxu0
  %v2566 = vpop.f32.mrb[0].mxu0
  %v2567 = vadd.f32 %v2446, %v2566
  %v2568 = vpop.f32.mrb[0].mxu0
  %2569 = vmatprep.mubr.bf16.mxu0 %v1133
  %2570 = vmatmul.mubr.bf16.gmra.mrb[0].mxu0 %v1132
  %v2571 = vpop.f32.mrb[0].mxu0
  %v2572 = vadd.f32 %v2451, %v2571
  %v2573 = vpop.f32.mrb[0].mxu0
  %v2574 = vpop.f32.mrb[0].mxu0
  %v2575 = vadd.f32 %v2454, %v2574
  %v2576 = vpop.f32.mrb[0].mxu0
  %2577 = vmatprep.mubr.bf16.mxu0 %v1149
  %2578 = vmatmul.mubr.bf16.gmra.mrb[0].mxu0 %v1148
  %v2579 = vpop.f32.mrb[0].mxu0
  %v2580 = vadd.f32 %v2459, %v2579
  %v2581 = vpop.f32.mrb[0].mxu0
  %v2582 = vpop.f32.mrb[0].mxu0
  %v2583 = vadd.f32 %v2462, %v2582
  %v2584 = vpop.f32.mrb[0].mxu0
  %2585 = vdwg.mxu0
  %2586 = vmatprep.subr.bf16.mxu0 0
  %2587 = vmatpush1.bf16.msra.mxu0 %v1910
  %2588 = vmatprep.subr.bf16.mxu0 0
  %2589 = vmatpush1.bf16.msra.mxu0 %v1911
  %2590 = vmatprep.subr.bf16.mxu0 0
  %2591 = vmatpush1.bf16.msra.mxu0 %v1912
  %2592 = vmatprep.subr.bf16.mxu0 0
  %2593 = vmatpush1.bf16.msra.mxu0 %v1913
  %2594 = vmatprep.subr.bf16.mxu0 0
  %2595 = vmatpush1.bf16.msra.mxu0 %v1914
  %2596 = vmatprep.subr.bf16.mxu0 0
  %2597 = vmatpush1.bf16.msra.mxu0 %v1915
  %2598 = vmatprep.subr.bf16.mxu0 0
  %2599 = vmatpush1.bf16.msra.mxu0 %v1916
  %2600 = vmatprep.subr.bf16.mxu0 0
  %2601 = vmatpush1.bf16.msra.mxu0 %v1917
  %2602 = vmatprep.subr.bf16.mxu0 0
  %2603 = vmatpush1.bf16.msra.mxu0 %v1918
  %2604 = vmatprep.subr.bf16.mxu0 0
  %2605 = vmatpush1.bf16.msra.mxu0 %v1919
  %2606 = vmatprep.subr.bf16.mxu0 0
  %2607 = vmatpush1.bf16.msra.mxu0 %v1920
  %2608 = vmatprep.subr.bf16.mxu0 0
  %2609 = vmatpush1.bf16.msra.mxu0 %v1921
  %2610 = vmatprep.subr.bf16.mxu0 0
  %2611 = vmatpush1.bf16.msra.mxu0 %v1922
  %2612 = vmatprep.subr.bf16.mxu0 0
  %2613 = vmatpush1.bf16.msra.mxu0 %v1923
  %2614 = vmatprep.subr.bf16.mxu0 0
  %2615 = vmatpush1.bf16.msra.mxu0 %v1924
  %2616 = vmatprep.subr.bf16.mxu0 0
  %2617 = vmatpush1.bf16.msra.mxu0 %v1925
  %2618 = vmatprep.mubr.bf16.mxu0 %v991
  %2619 = vmatmul.mubr.bf16.gmra.mrb[0].mxu0 %v990
  %v2620 = vpop.f32.mrb[0].mxu0
  %v2621 = vadd.f32 %v2500, %v2620
  %v2622 = vpop.f32.mrb[0].mxu0
  %v2623 = vpop.f32.mrb[0].mxu0
  %v2624 = vadd.f32 %v2503, %v2623
  %v2625 = vpop.f32.mrb[0].mxu0
  %2626 = vmatprep.mubr.bf16.mxu0 %v1007
  %2627 = vmatmul.mubr.bf16.gmra.mrb[0].mxu0 %v1006
  %v2628 = vpop.f32.mrb[0].mxu0
  %v2629 = vadd.f32 %v2508, %v2628
  %v2630 = vpop.f32.mrb[0].mxu0
  %v2631 = vpop.f32.mrb[0].mxu0
  %v2632 = vadd.f32 %v2511, %v2631
  %v2633 = vpop.f32.mrb[0].mxu0
  %2634 = vmatprep.mubr.bf16.mxu0 %v1023
  %2635 = vmatmul.mubr.bf16.gmra.mrb[0].mxu0 %v1022
  %v2636 = vpop.f32.mrb[0].mxu0
  %v2637 = vadd.f32 %v2516, %v2636
  %v2638 = vpop.f32.mrb[0].mxu0
  %v2639 = vpop.f32.mrb[0].mxu0
  %v2640 = vadd.f32 %v2519, %v2639
  %v2641 = vpop.f32.mrb[0].mxu0
  %2642 = vmatprep.mubr.bf16.mxu0 %v1039
  %2643 = vmatmul.mubr.bf16.gmra.mrb[0].mxu0 %v1038
  %v2644 = vpop.f32.mrb[0].mxu0
  %v2645 = vadd.f32 %v2524, %v2644
  %v2646 = vpop.f32.mrb[0].mxu0
  %v2647 = vpop.f32.mrb[0].mxu0
  %v2648 = vadd.f32 %v2527, %v2647
  %v2649 = vpop.f32.mrb[0].mxu0
  %2650 = vmatprep.mubr.bf16.mxu0 %v1055
  %2651 = vmatmul.mubr.bf16.gmra.mrb[0].mxu0 %v1054
  %v2652 = vpop.f32.mrb[0].mxu0
  %v2653 = vadd.f32 %v2532, %v2652
  %v2654 = vpop.f32.mrb[0].mxu0
  %v2655 = vpop.f32.mrb[0].mxu0
  %v2656 = vadd.f32 %v2535, %v2655
  %v2657 = vpop.f32.mrb[0].mxu0
  %2658 = vmatprep.mubr.bf16.mxu0 %v1071
  %2659 = vmatmul.mubr.bf16.gmra.mrb[0].mxu0 %v1070
  %v2660 = vpop.f32.mrb[0].mxu0
  %v2661 = vadd.f32 %v2540, %v2660
  %v2662 = vpop.f32.mrb[0].mxu0
  %v2663 = vpop.f32.mrb[0].mxu0
  %v2664 = vadd.f32 %v2543, %v2663
  %v2665 = vpop.f32.mrb[0].mxu0
  %2666 = vmatprep.mubr.bf16.mxu0 %v1087
  %2667 = vmatmul.mubr.bf16.gmra.mrb[0].mxu0 %v1086
  %v2668 = vpop.f32.mrb[0].mxu0
  %v2669 = vadd.f32 %v2548, %v2668
  %v2670 = vpop.f32.mrb[0].mxu0
  %v2671 = vpop.f32.mrb[0].mxu0
  %v2672 = vadd.f32 %v2551, %v2671
  %v2673 = vpop.f32.mrb[0].mxu0
  %2674 = vmatprep.mubr.bf16.mxu0 %v1103
  %2675 = vmatmul.mubr.bf16.gmra.mrb[0].mxu0 %v1102
  %v2676 = vpop.f32.mrb[0].mxu0
  %v2677 = vadd.f32 %v2556, %v2676
  %v2678 = vpop.f32.mrb[0].mxu0
  %v2679 = vpop.f32.mrb[0].mxu0
  %v2680 = vadd.f32 %v2559, %v2679
  %v2681 = vpop.f32.mrb[0].mxu0
  %2682 = vmatprep.mubr.bf16.mxu0 %v1119
  %2683 = vmatmul.mubr.bf16.gmra.mrb[0].mxu0 %v1118
  %v2684 = vpop.f32.mrb[0].mxu0
  %v2685 = vadd.f32 %v2564, %v2684
  %v2686 = vpop.f32.mrb[0].mxu0
  %v2687 = vpop.f32.mrb[0].mxu0
  %v2688 = vadd.f32 %v2567, %v2687
  %v2689 = vpop.f32.mrb[0].mxu0
  %2690 = vmatprep.mubr.bf16.mxu0 %v1135
  %2691 = vmatmul.mubr.bf16.gmra.mrb[0].mxu0 %v1134
  %v2692 = vpop.f32.mrb[0].mxu0
  %v2693 = vadd.f32 %v2572, %v2692
  %v2694 = vpop.f32.mrb[0].mxu0
  %v2695 = vpop.f32.mrb[0].mxu0
  %v2696 = vadd.f32 %v2575, %v2695
  %v2697 = vpop.f32.mrb[0].mxu0
  %2698 = vmatprep.mubr.bf16.mxu0 %v1151
  %2699 = vmatmul.mubr.bf16.gmra.mrb[0].mxu0 %v1150
  %v2700 = vpop.f32.mrb[0].mxu0
  %v2701 = vadd.f32 %v2580, %v2700
  %v2702 = vpop.f32.mrb[0].mxu0
  %v2703 = vpop.f32.mrb[0].mxu0
  %v2704 = vadd.f32 %v2583, %v2703
  %v2705 = vpop.f32.mrb[0].mxu0
  %2706 = vdwg.mxu0
  %2707 = vmatprep.subr.bf16.mxu0 0
  %2708 = vmatpush1.bf16.msra.mxu0 %v1926
  %2709 = vmatprep.subr.bf16.mxu0 0
  %2710 = vmatpush1.bf16.msra.mxu0 %v1927
  %2711 = vmatprep.subr.bf16.mxu0 0
  %2712 = vmatpush1.bf16.msra.mxu0 %v1928
  %2713 = vmatprep.subr.bf16.mxu0 0
  %2714 = vmatpush1.bf16.msra.mxu0 %v1929
  %2715 = vmatprep.subr.bf16.mxu0 0
  %2716 = vmatpush1.bf16.msra.mxu0 %v1930
  %2717 = vmatprep.subr.bf16.mxu0 0
  %2718 = vmatpush1.bf16.msra.mxu0 %v1931
  %2719 = vmatprep.subr.bf16.mxu0 0
  %2720 = vmatpush1.bf16.msra.mxu0 %v1932
  %2721 = vmatprep.subr.bf16.mxu0 0
  %2722 = vmatpush1.bf16.msra.mxu0 %v1933
  %2723 = vmatprep.subr.bf16.mxu0 0
  %2724 = vmatpush1.bf16.msra.mxu0 %v1934
  %2725 = vmatprep.subr.bf16.mxu0 0
  %2726 = vmatpush1.bf16.msra.mxu0 %v1935
  %2727 = vmatprep.subr.bf16.mxu0 0
  %2728 = vmatpush1.bf16.msra.mxu0 %v1936
  %2729 = vmatprep.subr.bf16.mxu0 0
  %2730 = vmatpush1.bf16.msra.mxu0 %v1937
  %2731 = vmatprep.subr.bf16.mxu0 0
  %2732 = vmatpush1.bf16.msra.mxu0 %v1938
  %2733 = vmatprep.subr.bf16.mxu0 0
  %2734 = vmatpush1.bf16.msra.mxu0 %v1939
  %2735 = vmatprep.subr.bf16.mxu0 0
  %2736 = vmatpush1.bf16.msra.mxu0 %v1940
  %2737 = vmatprep.subr.bf16.mxu0 0
  %2738 = vmatpush1.bf16.msra.mxu0 %v1941
  %2739 = vmatprep.mubr.bf16.mxu0 %v993
  %2740 = vmatmul.mubr.bf16.gmra.mrb[0].mxu0 %v992
  %v2741 = vpop.f32.mrb[0].mxu0
  %v2742 = vadd.f32 %v2621, %v2741
  %v2743 = vpop.f32.mrb[0].mxu0
  %v2744 = vpop.f32.mrb[0].mxu0
  %v2745 = vadd.f32 %v2624, %v2744
  %v2746 = vpop.f32.mrb[0].mxu0
  %2747 = vmatprep.mubr.bf16.mxu0 %v1009
  %2748 = vmatmul.mubr.bf16.gmra.mrb[0].mxu0 %v1008
  %v2749 = vpop.f32.mrb[0].mxu0
  %v2750 = vadd.f32 %v2629, %v2749
  %v2751 = vpop.f32.mrb[0].mxu0
  %v2752 = vpop.f32.mrb[0].mxu0
  %v2753 = vadd.f32 %v2632, %v2752
  %v2754 = vpop.f32.mrb[0].mxu0
  %2755 = vmatprep.mubr.bf16.mxu0 %v1025
  %2756 = vmatmul.mubr.bf16.gmra.mrb[0].mxu0 %v1024
  %v2757 = vpop.f32.mrb[0].mxu0
  %v2758 = vadd.f32 %v2637, %v2757
  %v2759 = vpop.f32.mrb[0].mxu0
  %v2760 = vpop.f32.mrb[0].mxu0
  %v2761 = vadd.f32 %v2640, %v2760
  %v2762 = vpop.f32.mrb[0].mxu0
  %2763 = vmatprep.mubr.bf16.mxu0 %v1041
  %2764 = vmatmul.mubr.bf16.gmra.mrb[0].mxu0 %v1040
  %v2765 = vpop.f32.mrb[0].mxu0
  %v2766 = vadd.f32 %v2645, %v2765
  %v2767 = vpop.f32.mrb[0].mxu0
  %v2768 = vpop.f32.mrb[0].mxu0
  %v2769 = vadd.f32 %v2648, %v2768
  %v2770 = vpop.f32.mrb[0].mxu0
  %2771 = vmatprep.mubr.bf16.mxu0 %v1057
  %2772 = vmatmul.mubr.bf16.gmra.mrb[0].mxu0 %v1056
  %v2773 = vpop.f32.mrb[0].mxu0
  %v2774 = vadd.f32 %v2653, %v2773
  %v2775 = vpop.f32.mrb[0].mxu0
  %v2776 = vpop.f32.mrb[0].mxu0
  %v2777 = vadd.f32 %v2656, %v2776
  %v2778 = vpop.f32.mrb[0].mxu0
  %2779 = vmatprep.mubr.bf16.mxu0 %v1073
  %2780 = vmatmul.mubr.bf16.gmra.mrb[0].mxu0 %v1072
  %v2781 = vpop.f32.mrb[0].mxu0
  %v2782 = vadd.f32 %v2661, %v2781
  %v2783 = vpop.f32.mrb[0].mxu0
  %v2784 = vpop.f32.mrb[0].mxu0
  %v2785 = vadd.f32 %v2664, %v2784
  %v2786 = vpop.f32.mrb[0].mxu0
  %2787 = vmatprep.mubr.bf16.mxu0 %v1089
  %2788 = vmatmul.mubr.bf16.gmra.mrb[0].mxu0 %v1088
  %v2789 = vpop.f32.mrb[0].mxu0
  %v2790 = vadd.f32 %v2669, %v2789
  %v2791 = vpop.f32.mrb[0].mxu0
  %v2792 = vpop.f32.mrb[0].mxu0
  %v2793 = vadd.f32 %v2672, %v2792
  %v2794 = vpop.f32.mrb[0].mxu0
  %2795 = vmatprep.mubr.bf16.mxu0 %v1105
  %2796 = vmatmul.mubr.bf16.gmra.mrb[0].mxu0 %v1104
  %v2797 = vpop.f32.mrb[0].mxu0
  %v2798 = vadd.f32 %v2677, %v2797
  %v2799 = vpop.f32.mrb[0].mxu0
  %v2800 = vpop.f32.mrb[0].mxu0
  %v2801 = vadd.f32 %v2680, %v2800
  %v2802 = vpop.f32.mrb[0].mxu0
  %2803 = vmatprep.mubr.bf16.mxu0 %v1121
  %2804 = vmatmul.mubr.bf16.gmra.mrb[0].mxu0 %v1120
  %v2805 = vpop.f32.mrb[0].mxu0
  %v2806 = vadd.f32 %v2685, %v2805
  %v2807 = vpop.f32.mrb[0].mxu0
  %v2808 = vpop.f32.mrb[0].mxu0
  %v2809 = vadd.f32 %v2688, %v2808
  %v2810 = vpop.f32.mrb[0].mxu0
  %2811 = vmatprep.mubr.bf16.mxu0 %v1137
  %2812 = vmatmul.mubr.bf16.gmra.mrb[0].mxu0 %v1136
  %v2813 = vpop.f32.mrb[0].mxu0
  %v2814 = vadd.f32 %v2693, %v2813
  %v2815 = vpop.f32.mrb[0].mxu0
  %v2816 = vpop.f32.mrb[0].mxu0
  %v2817 = vadd.f32 %v2696, %v2816
  %v2818 = vpop.f32.mrb[0].mxu0
  %2819 = vmatprep.mubr.bf16.mxu0 %v1153
  %2820 = vmatmul.mubr.bf16.gmra.mrb[0].mxu0 %v1152
  %v2821 = vpop.f32.mrb[0].mxu0
  %v2822 = vadd.f32 %v2701, %v2821
  %v2823 = vpop.f32.mrb[0].mxu0
  %v2824 = vpop.f32.mrb[0].mxu0
  %v2825 = vadd.f32 %v2704, %v2824
  %v2826 = vpop.f32.mrb[0].mxu0
  %2827 = vdwg.mxu0
  %2828 = vmatprep.subr.bf16.mxu0 0
  %2829 = vmatpush1.bf16.msra.mxu0 %v1942
  %2830 = vmatprep.subr.bf16.mxu0 0
  %2831 = vmatpush1.bf16.msra.mxu0 %v1943
  %2832 = vmatprep.subr.bf16.mxu0 0
  %2833 = vmatpush1.bf16.msra.mxu0 %v1944
  %2834 = vmatprep.subr.bf16.mxu0 0
  %2835 = vmatpush1.bf16.msra.mxu0 %v1945
  %2836 = vmatprep.subr.bf16.mxu0 0
  %2837 = vmatpush1.bf16.msra.mxu0 %v1946
  %2838 = vmatprep.subr.bf16.mxu0 0
  %2839 = vmatpush1.bf16.msra.mxu0 %v1947
  %2840 = vmatprep.subr.bf16.mxu0 0
  %2841 = vmatpush1.bf16.msra.mxu0 %v1948
  %2842 = vmatprep.subr.bf16.mxu0 0
  %2843 = vmatpush1.bf16.msra.mxu0 %v1949
  %2844 = vmatprep.subr.bf16.mxu0 0
  %2845 = vmatpush1.bf16.msra.mxu0 %v1950
  %2846 = vmatprep.subr.bf16.mxu0 0
  %2847 = vmatpush1.bf16.msra.mxu0 %v1951
  %2848 = vmatprep.subr.bf16.mxu0 0
  %2849 = vmatpush1.bf16.msra.mxu0 %v1952
  %2850 = vmatprep.subr.bf16.mxu0 0
  %2851 = vmatpush1.bf16.msra.mxu0 %v1953
  %2852 = vmatprep.subr.bf16.mxu0 0
  %2853 = vmatpush1.bf16.msra.mxu0 %v1954
  %2854 = vmatprep.subr.bf16.mxu0 0
  %2855 = vmatpush1.bf16.msra.mxu0 %v1955
  %2856 = vmatprep.subr.bf16.mxu0 0
  %2857 = vmatpush1.bf16.msra.mxu0 %v1956
  %2858 = vmatprep.subr.bf16.mxu0 0
  %2859 = vmatpush1.bf16.msra.mxu0 %v1957
  %2860 = vmatprep.mubr.bf16.mxu0 %v995
  %2861 = vmatmul.mubr.bf16.gmra.mrb[0].mxu0 %v994
  %v2862 = vpop.f32.mrb[0].mxu0
  %v2863 = vadd.f32 %v2742, %v2862
  %v2864 = vpop.f32.mrb[0].mxu0
  %v2865 = vpop.f32.mrb[0].mxu0
  %v2866 = vadd.f32 %v2745, %v2865
  %v2867 = vpop.f32.mrb[0].mxu0
  %2868 = vmatprep.mubr.bf16.mxu0 %v1011
  %2869 = vmatmul.mubr.bf16.gmra.mrb[0].mxu0 %v1010
  %v2870 = vpop.f32.mrb[0].mxu0
  %v2871 = vadd.f32 %v2750, %v2870
  %v2872 = vpop.f32.mrb[0].mxu0
  %v2873 = vpop.f32.mrb[0].mxu0
  %v2874 = vadd.f32 %v2753, %v2873
  %v2875 = vpop.f32.mrb[0].mxu0
  %2876 = vmatprep.mubr.bf16.mxu0 %v1027
  %2877 = vmatmul.mubr.bf16.gmra.mrb[0].mxu0 %v1026
  %v2878 = vpop.f32.mrb[0].mxu0
  %v2879 = vadd.f32 %v2758, %v2878
  %v2880 = vpop.f32.mrb[0].mxu0
  %v2881 = vpop.f32.mrb[0].mxu0
  %v2882 = vadd.f32 %v2761, %v2881
  %v2883 = vpop.f32.mrb[0].mxu0
  %2884 = vmatprep.mubr.bf16.mxu0 %v1043
  %2885 = vmatmul.mubr.bf16.gmra.mrb[0].mxu0 %v1042
  %v2886 = vpop.f32.mrb[0].mxu0
  %v2887 = vadd.f32 %v2766, %v2886
  %v2888 = vpop.f32.mrb[0].mxu0
  %v2889 = vpop.f32.mrb[0].mxu0
  %v2890 = vadd.f32 %v2769, %v2889
  %v2891 = vpop.f32.mrb[0].mxu0
  %2892 = vmatprep.mubr.bf16.mxu0 %v1059
  %2893 = vmatmul.mubr.bf16.gmra.mrb[0].mxu0 %v1058
  %v2894 = vpop.f32.mrb[0].mxu0
  %v2895 = vadd.f32 %v2774, %v2894
  %v2896 = vpop.f32.mrb[0].mxu0
  %v2897 = vpop.f32.mrb[0].mxu0
  %v2898 = vadd.f32 %v2777, %v2897
  %v2899 = vpop.f32.mrb[0].mxu0
  %2900 = vmatprep.mubr.bf16.mxu0 %v1075
  %2901 = vmatmul.mubr.bf16.gmra.mrb[0].mxu0 %v1074
  %v2902 = vpop.f32.mrb[0].mxu0
  %v2903 = vadd.f32 %v2782, %v2902
  %v2904 = vpop.f32.mrb[0].mxu0
  %v2905 = vpop.f32.mrb[0].mxu0
  %v2906 = vadd.f32 %v2785, %v2905
  %v2907 = vpop.f32.mrb[0].mxu0
  %2908 = vmatprep.mubr.bf16.mxu0 %v1091
  %2909 = vmatmul.mubr.bf16.gmra.mrb[0].mxu0 %v1090
  %v2910 = vpop.f32.mrb[0].mxu0
  %v2911 = vadd.f32 %v2790, %v2910
  %v2912 = vpop.f32.mrb[0].mxu0
  %v2913 = vpop.f32.mrb[0].mxu0
  %v2914 = vadd.f32 %v2793, %v2913
  %v2915 = vpop.f32.mrb[0].mxu0
  %2916 = vmatprep.mubr.bf16.mxu0 %v1107
  %2917 = vmatmul.mubr.bf16.gmra.mrb[0].mxu0 %v1106
  %v2918 = vpop.f32.mrb[0].mxu0
  %v2919 = vadd.f32 %v2798, %v2918
  %v2920 = vpop.f32.mrb[0].mxu0
  %v2921 = vpop.f32.mrb[0].mxu0
  %v2922 = vadd.f32 %v2801, %v2921
  %v2923 = vpop.f32.mrb[0].mxu0
  %2924 = vmatprep.mubr.bf16.mxu0 %v1123
  %2925 = vmatmul.mubr.bf16.gmra.mrb[0].mxu0 %v1122
  %v2926 = vpop.f32.mrb[0].mxu0
  %v2927 = vadd.f32 %v2806, %v2926
  %v2928 = vpop.f32.mrb[0].mxu0
  %v2929 = vpop.f32.mrb[0].mxu0
  %v2930 = vadd.f32 %v2809, %v2929
  %v2931 = vpop.f32.mrb[0].mxu0
  %2932 = vmatprep.mubr.bf16.mxu0 %v1139
  %2933 = vmatmul.mubr.bf16.gmra.mrb[0].mxu0 %v1138
  %v2934 = vpop.f32.mrb[0].mxu0
  %v2935 = vadd.f32 %v2814, %v2934
  %v2936 = vpop.f32.mrb[0].mxu0
  %v2937 = vpop.f32.mrb[0].mxu0
  %v2938 = vadd.f32 %v2817, %v2937
  %v2939 = vpop.f32.mrb[0].mxu0
  %2940 = vmatprep.mubr.bf16.mxu0 %v1155
  %2941 = vmatmul.mubr.bf16.gmra.mrb[0].mxu0 %v1154
  %v2942 = vpop.f32.mrb[0].mxu0
  %v2943 = vadd.f32 %v2822, %v2942
  %v2944 = vpop.f32.mrb[0].mxu0
  %v2945 = vpop.f32.mrb[0].mxu0
  %v2946 = vadd.f32 %v2825, %v2945
  %v2947 = vpop.f32.mrb[0].mxu0
  %2948 = vdwg.mxu0
  %2949 = vmatprep.subr.bf16.mxu0 0
  %2950 = vmatpush1.bf16.msra.mxu0 %v1958
  %2951 = vmatprep.subr.bf16.mxu0 0
  %2952 = vmatpush1.bf16.msra.mxu0 %v1959
  %2953 = vmatprep.subr.bf16.mxu0 0
  %2954 = vmatpush1.bf16.msra.mxu0 %v1960
  %2955 = vmatprep.subr.bf16.mxu0 0
  %2956 = vmatpush1.bf16.msra.mxu0 %v1961
  %2957 = vmatprep.subr.bf16.mxu0 0
  %2958 = vmatpush1.bf16.msra.mxu0 %v1962
  %2959 = vmatprep.subr.bf16.mxu0 0
  %2960 = vmatpush1.bf16.msra.mxu0 %v1963
  %2961 = vmatprep.subr.bf16.mxu0 0
  %2962 = vmatpush1.bf16.msra.mxu0 %v1964
  %2963 = vmatprep.subr.bf16.mxu0 0
  %2964 = vmatpush1.bf16.msra.mxu0 %v1965
  %2965 = vmatprep.subr.bf16.mxu0 0
  %2966 = vmatpush1.bf16.msra.mxu0 %v1966
  %2967 = vmatprep.subr.bf16.mxu0 0
  %2968 = vmatpush1.bf16.msra.mxu0 %v1967
  %2969 = vmatprep.subr.bf16.mxu0 0
  %2970 = vmatpush1.bf16.msra.mxu0 %v1968
  %2971 = vmatprep.subr.bf16.mxu0 0
  %2972 = vmatpush1.bf16.msra.mxu0 %v1969
  %2973 = vmatprep.subr.bf16.mxu0 0
  %2974 = vmatpush1.bf16.msra.mxu0 %v1970
  %2975 = vmatprep.subr.bf16.mxu0 0
  %2976 = vmatpush1.bf16.msra.mxu0 %v1971
  %2977 = vmatprep.subr.bf16.mxu0 0
  %2978 = vmatpush1.bf16.msra.mxu0 %v1972
  %2979 = vmatprep.subr.bf16.mxu0 0
  %2980 = vmatpush1.bf16.msra.mxu0 %v1973
  %2981 = vmatprep.mubr.bf16.mxu0 %v997
  %2982 = vmatmul.mubr.bf16.gmra.mrb[0].mxu0 %v996
  %v2983 = vpop.f32.mrb[0].mxu0
  %v2984 = vadd.f32 %v2863, %v2983
  %v2985 = vpop.f32.mrb[0].mxu0
  %v2986 = vpop.f32.mrb[0].mxu0
  %v2987 = vadd.f32 %v2866, %v2986
  %v2988 = vpop.f32.mrb[0].mxu0
  %2989 = vmatprep.mubr.bf16.mxu0 %v1013
  %2990 = vmatmul.mubr.bf16.gmra.mrb[0].mxu0 %v1012
  %v2991 = vpop.f32.mrb[0].mxu0
  %v2992 = vadd.f32 %v2871, %v2991
  %v2993 = vpop.f32.mrb[0].mxu0
  %v2994 = vpop.f32.mrb[0].mxu0
  %v2995 = vadd.f32 %v2874, %v2994
  %v2996 = vpop.f32.mrb[0].mxu0
  %2997 = vmatprep.mubr.bf16.mxu0 %v1029
  %2998 = vmatmul.mubr.bf16.gmra.mrb[0].mxu0 %v1028
  %v2999 = vpop.f32.mrb[0].mxu0
  %v3000 = vadd.f32 %v2879, %v2999
  %v3001 = vpop.f32.mrb[0].mxu0
  %v3002 = vpop.f32.mrb[0].mxu0
  %v3003 = vadd.f32 %v2882, %v3002
  %v3004 = vpop.f32.mrb[0].mxu0
  %3005 = vmatprep.mubr.bf16.mxu0 %v1045
  %3006 = vmatmul.mubr.bf16.gmra.mrb[0].mxu0 %v1044
  %v3007 = vpop.f32.mrb[0].mxu0
  %v3008 = vadd.f32 %v2887, %v3007
  %v3009 = vpop.f32.mrb[0].mxu0
  %v3010 = vpop.f32.mrb[0].mxu0
  %v3011 = vadd.f32 %v2890, %v3010
  %v3012 = vpop.f32.mrb[0].mxu0
  %3013 = vmatprep.mubr.bf16.mxu0 %v1061
  %3014 = vmatmul.mubr.bf16.gmra.mrb[0].mxu0 %v1060
  %v3015 = vpop.f32.mrb[0].mxu0
  %v3016 = vadd.f32 %v2895, %v3015
  %v3017 = vpop.f32.mrb[0].mxu0
  %v3018 = vpop.f32.mrb[0].mxu0
  %v3019 = vadd.f32 %v2898, %v3018
  %v3020 = vpop.f32.mrb[0].mxu0
  %3021 = vmatprep.mubr.bf16.mxu0 %v1077
  %3022 = vmatmul.mubr.bf16.gmra.mrb[0].mxu0 %v1076
  %v3023 = vpop.f32.mrb[0].mxu0
  %v3024 = vadd.f32 %v2903, %v3023
  %v3025 = vpop.f32.mrb[0].mxu0
  %v3026 = vpop.f32.mrb[0].mxu0
  %v3027 = vadd.f32 %v2906, %v3026
  %v3028 = vpop.f32.mrb[0].mxu0
  %3029 = vmatprep.mubr.bf16.mxu0 %v1093
  %3030 = vmatmul.mubr.bf16.gmra.mrb[0].mxu0 %v1092
  %v3031 = vpop.f32.mrb[0].mxu0
  %v3032 = vadd.f32 %v2911, %v3031
  %v3033 = vpop.f32.mrb[0].mxu0
  %v3034 = vpop.f32.mrb[0].mxu0
  %v3035 = vadd.f32 %v2914, %v3034
  %v3036 = vpop.f32.mrb[0].mxu0
  %3037 = vmatprep.mubr.bf16.mxu0 %v1109
  %3038 = vmatmul.mubr.bf16.gmra.mrb[0].mxu0 %v1108
  %v3039 = vpop.f32.mrb[0].mxu0
  %v3040 = vadd.f32 %v2919, %v3039
  %v3041 = vpop.f32.mrb[0].mxu0
  %v3042 = vpop.f32.mrb[0].mxu0
  %v3043 = vadd.f32 %v2922, %v3042
  %v3044 = vpop.f32.mrb[0].mxu0
  %3045 = vmatprep.mubr.bf16.mxu0 %v1125
  %3046 = vmatmul.mubr.bf16.gmra.mrb[0].mxu0 %v1124
  %v3047 = vpop.f32.mrb[0].mxu0
  %v3048 = vadd.f32 %v2927, %v3047
  %v3049 = vpop.f32.mrb[0].mxu0
  %v3050 = vpop.f32.mrb[0].mxu0
  %v3051 = vadd.f32 %v2930, %v3050
  %v3052 = vpop.f32.mrb[0].mxu0
  %3053 = vmatprep.mubr.bf16.mxu0 %v1141
  %3054 = vmatmul.mubr.bf16.gmra.mrb[0].mxu0 %v1140
  %v3055 = vpop.f32.mrb[0].mxu0
  %v3056 = vadd.f32 %v2935, %v3055
  %v3057 = vpop.f32.mrb[0].mxu0
  %v3058 = vpop.f32.mrb[0].mxu0
  %v3059 = vadd.f32 %v2938, %v3058
  %v3060 = vpop.f32.mrb[0].mxu0
  %3061 = vmatprep.mubr.bf16.mxu0 %v1157
  %3062 = vmatmul.mubr.bf16.gmra.mrb[0].mxu0 %v1156
  %v3063 = vpop.f32.mrb[0].mxu0
  %v3064 = vadd.f32 %v2943, %v3063
  %v3065 = vpop.f32.mrb[0].mxu0
  %v3066 = vpop.f32.mrb[0].mxu0
  %v3067 = vadd.f32 %v2946, %v3066
  %v3068 = vpop.f32.mrb[0].mxu0
  %3069 = vdwg.mxu0
  %v3070 = vmax.f32 %v2984, 0.0
  %v3071 = vmax.f32 %v2987, 0.0
  %v3072 = vmax.f32 %v2992, 0.0
  %v3073 = vmax.f32 %v2995, 0.0
  %v3074 = vmax.f32 %v3000, 0.0
  %v3075 = vmax.f32 %v3003, 0.0
  %v3076 = vmax.f32 %v3008, 0.0
  %v3077 = vmax.f32 %v3011, 0.0
  %v3078 = vmax.f32 %v3016, 0.0
  %v3079 = vmax.f32 %v3019, 0.0
  %v3080 = vmax.f32 %v3024, 0.0
  %v3081 = vmax.f32 %v3027, 0.0
  %v3082 = vmax.f32 %v3032, 0.0
  %v3083 = vmax.f32 %v3035, 0.0
  %v3084 = vmax.f32 %v3040, 0.0
  %v3085 = vmax.f32 %v3043, 0.0
  %v3086 = vmax.f32 %v3048, 0.0
  %v3087 = vmax.f32 %v3051, 0.0
  %v3088 = vmax.f32 %v3056, 0.0
  %v3089 = vmax.f32 %v3059, 0.0
  %v3090 = vmax.f32 %v3064, 0.0
  %v3091 = vmax.f32 %v3067, 0.0
  %v3092 = vpack.c.bf16 %v3071, %v3070
  %v3093 = vpack.c.bf16 %v3073, %v3072
  %v3094 = vpack.c.bf16 %v3075, %v3074
  %v3095 = vpack.c.bf16 %v3077, %v3076
  %v3096 = vpack.c.bf16 %v3079, %v3078
  %v3097 = vpack.c.bf16 %v3081, %v3080
  %v3098 = vpack.c.bf16 %v3083, %v3082
  %v3099 = vpack.c.bf16 %v3085, %v3084
  %v3100 = vpack.c.bf16 %v3087, %v3086
  %v3101 = vpack.c.bf16 %v3089, %v3088
  %v3102 = vpack.c.bf16 %v3091, %v3090
  %v3114 = vunpack.c.l.b16 %v3092
  %v3115 = vunpack.c.h.b16 %v3092
  %v3116 = vunpack.c.l.b16 %v3093
  %v3117 = vunpack.c.h.b16 %v3093
  %v3118 = vunpack.c.l.b16 %v3094
  %v3119 = vunpack.c.h.b16 %v3094
  %v3120 = vunpack.c.l.b16 %v3095
  %v3121 = vunpack.c.h.b16 %v3095
  %v3122 = vunpack.c.l.b16 %v3096
  %v3123 = vunpack.c.h.b16 %v3096
  %v3124 = vunpack.c.l.b16 %v3097
  %v3125 = vunpack.c.h.b16 %v3097
  %v3126 = vunpack.c.l.b16 %v3098
  %v3127 = vunpack.c.h.b16 %v3098
  %v3128 = vunpack.c.l.b16 %v3099
  %v3129 = vunpack.c.h.b16 %v3099
  %v3130 = vunpack.c.l.b16 %v3100
  %v3131 = vunpack.c.h.b16 %v3100
  %v3132 = vunpack.c.l.b16 %v3101
  %v3133 = vunpack.c.h.b16 %v3101
  %v3134 = vunpack.c.l.b16 %v3102
  %v3135 = vunpack.c.h.b16 %v3102
  %v3136 = vpack.c.b16 %v3114, %v3114
  %v3137 = vpack.c.b16 %v3115, %v3115
  %v3138 = vpack.c.b16 %v3116, %v3116
  %v3139 = vpack.c.b16 %v3117, %v3117
  %v3140 = vpack.c.b16 %v3118, %v3118
  %v3141 = vpack.c.b16 %v3119, %v3119
  %v3142 = vpack.c.b16 %v3120, %v3120
  %v3143 = vpack.c.b16 %v3121, %v3121
  %v3144 = vpack.c.b16 %v3122, %v3122
  %v3145 = vpack.c.b16 %v3123, %v3123
  %v3146 = vpack.c.b16 %v3124, %v3124
  %v3147 = vpack.c.b16 %v3125, %v3125
  %v3148 = vpack.c.b16 %v3126, %v3126
  %v3149 = vpack.c.b16 %v3127, %v3127
  %v3150 = vpack.c.b16 %v3128, %v3128
  %v3151 = vpack.c.b16 %v3129, %v3129
  %v3152 = vpack.c.b16 %v3130, %v3130
  %v3153 = vpack.c.b16 %v3131, %v3131
  %v3154 = vpack.c.b16 %v3132, %v3132
  %v3155 = vpack.c.b16 %v3133, %v3133
  %v3156 = vpack.c.b16 %v3134, %v3134
  %v3157 = vpack.c.b16 %v3135, %v3135
  %3180 = vst [vmem:[%s3] sm:$0xf] %v3136
  %3181 = vst [vmem:[%s3 + $0x4] sm:$0xf] %v3137
  %3182 = vst [vmem:[%s3 + $0x8] sm:$0xf] %v3138
  %3183 = vst [vmem:[%s3 + $0xc] sm:$0xf] %v3139
  %3184 = vst [vmem:[%s3 + $0x10] sm:$0xf] %v3140
  %3185 = vst [vmem:[%s3 + $0x14] sm:$0xf] %v3141
  %3186 = vst [vmem:[%s3 + $0x18] sm:$0xf] %v3142
  %3187 = vst [vmem:[%s3 + $0x1c] sm:$0xf] %v3143
  %3188 = vst [vmem:[%s3 + $0x20] sm:$0xf] %v3144
  %3189 = vst [vmem:[%s3 + $0x24] sm:$0xf] %v3145
  %3190 = vst [vmem:[%s3 + $0x28] sm:$0xf] %v3146
  %3191 = vst [vmem:[%s3 + $0x2c] sm:$0xf] %v3147
  %3192 = vst [vmem:[%s3 + $0x30] sm:$0xf] %v3148
  %3193 = vst [vmem:[%s3 + $0x34] sm:$0xf] %v3149
  %3194 = vst [vmem:[%s3 + $0x38] sm:$0xf] %v3150
  %3195 = vst [vmem:[%s3 + $0x3c] sm:$0xf] %v3151
  %3196 = vst [vmem:[%s3 + $0x40] sm:$0xf] %v3152
  %3197 = vst [vmem:[%s3 + $0x44] sm:$0xf] %v3153
  %3198 = vst [vmem:[%s3 + $0x48] sm:$0xf] %v3154
  %3199 = vst [vmem:[%s3 + $0x4c] sm:$0xf] %v3155
  %3200 = vst [vmem:[%s3 + $0x50] sm:$0xf] %v3156
  %3201 = vst [vmem:[%s3 + $0x54] sm:$0xf] %v3157
  // Predicated region
  $region14: #{dueling_dqn_forward.5} parent=0 // pred_check
    _
  $region15: #{dueling_dqn_forward.5} parent=0 // pred_check_branch
    %3203 = sbr.rel (0) target = $region17
  $region16: #{dueling_dqn_forward.5} parent=0 // pred_region
    _
  $region17: #{dueling_dqn_forward.5} parent=0 // pred_fallthru
    _
  // Predicated region
  $region18: #{dueling_dqn_forward.5} parent=0 // pred_check
    _
  $region19: #{dueling_dqn_forward.5} parent=0 // pred_check_branch
    %3205 = sbr.rel (0) target = $region21
  $region20: #{dueling_dqn_forward.5} parent=0 // pred_region
    _
  $region21: #{dueling_dqn_forward.5} parent=0 // pred_fallthru
    _

// kernel: dueling_dqn_forward.6
$region0: #{dueling_dqn_forward.6}
  #allocation0 [shape = 'u32[]', space=smem, size = 0x4, offset = 0x4, fixed_abs, tag = 'smem constant byte address 0x4 - core index']
  #allocation1 [shape = 'u32[144,128]{1,0:T(1,128)}', space=vmem, size = 0x12000, scoped, tag = 'internal scratch']
  %s0 = inlined_call_operand.vmem [shape: bf16[112,1152], index: 0, kind: input, shape index: {}]
  %s1 = inlined_call_operand.vmem [shape: bf16[1152,64], index: 1, kind: input, shape index: {}]
  %s2 = inlined_call_operand.vmem [shape: f32[1,64], index: 2, kind: input, shape index: {}]
  %s3 = inlined_call_operand.vmem [shape: bf16[112,64], index: 3, kind: output, shape index: {}]
  %s4 = sld [smem:[#allocation0]]
  $region22: #{dueling_dqn_forward.6} parent=0
    _
  %s6 = ssub.s32 1, %s4
  %s7 = scalar_select 0, %s6, %s4
  // Predicated region
  $region2: #{dueling_dqn_forward.6} parent=0 // pred_check
    _
  $region3: #{dueling_dqn_forward.6} parent=0 // pred_check_branch
    %9 = sbr.rel (0) target = $region5
  $region4: #{dueling_dqn_forward.6} parent=0 // pred_region
    _
  $region5: #{dueling_dqn_forward.6} parent=0 // pred_fallthru
    _
  // Predicated region
  $region6: #{dueling_dqn_forward.6} parent=0 // pred_check
    _
  $region7: #{dueling_dqn_forward.6} parent=0 // pred_check_branch
    %11 = sbr.rel (0) target = $region9
  $region8: #{dueling_dqn_forward.6} parent=0 // pred_region
    _
  $region9: #{dueling_dqn_forward.6} parent=0 // pred_fallthru
    _
  // Predicated region
  $region10: #{dueling_dqn_forward.6} parent=0 // pred_check
    _
  $region11: #{dueling_dqn_forward.6} parent=0 // pred_check_branch
    %13 = sbr.rel (0) target = $region13
  $region12: #{dueling_dqn_forward.6} parent=0 // pred_region
    _
  $region13: #{dueling_dqn_forward.6} parent=0 // pred_fallthru
    _
  %v15 = vld [vmem:[%s0] sm:$0xff]
  %v16 = vld [vmem:[%s0 + $0x8] sm:$0xff]
  %v17 = vld [vmem:[%s0 + $0x10] sm:$0xff]
  %v18 = vld [vmem:[%s0 + $0x18] sm:$0xff]
  %v19 = vld [vmem:[%s0 + $0x20] sm:$0xf]
  %v20 = vld [vmem:[%s0 + $0x24] sm:$0xff]
  %v21 = vld [vmem:[%s0 + $0x2c] sm:$0xff]
  %v22 = vld [vmem:[%s0 + $0x34] sm:$0xff]
  %v23 = vld [vmem:[%s0 + $0x3c] sm:$0xff]
  %v24 = vld [vmem:[%s0 + $0x44] sm:$0xf]
  %v25 = vld [vmem:[%s0 + $0x48] sm:$0xff]
  %v26 = vld [vmem:[%s0 + $0x50] sm:$0xff]
  %v27 = vld [vmem:[%s0 + $0x58] sm:$0xff]
  %v28 = vld [vmem:[%s0 + $0x60] sm:$0xff]
  %v29 = vld [vmem:[%s0 + $0x68] sm:$0xf]
  %v30 = vld [vmem:[%s0 + $0x6c] sm:$0xff]
  %v31 = vld [vmem:[%s0 + $0x74] sm:$0xff]
  %v32 = vld [vmem:[%s0 + $0x7c] sm:$0xff]
  %v33 = vld [vmem:[%s0 + $0x84] sm:$0xff]
  %v34 = vld [vmem:[%s0 + $0x8c] sm:$0xf]
  %v35 = vld [vmem:[%s0 + $0x90] sm:$0xff]
  %v36 = vld [vmem:[%s0 + $0x98] sm:$0xff]
  %v37 = vld [vmem:[%s0 + $0xa0] sm:$0xff]
  %v38 = vld [vmem:[%s0 + $0xa8] sm:$0xff]
  %v39 = vld [vmem:[%s0 + $0xb0] sm:$0xf]
  %v40 = vld [vmem:[%s0 + $0xb4] sm:$0xff]
  %v41 = vld [vmem:[%s0 + $0xbc] sm:$0xff]
  %v42 = vld [vmem:[%s0 + $0xc4] sm:$0xff]
  %v43 = vld [vmem:[%s0 + $0xcc] sm:$0xff]
  %v44 = vld [vmem:[%s0 + $0xd4] sm:$0xf]
  %v45 = vld [vmem:[%s0 + $0xd8] sm:$0xff]
  %v46 = vld [vmem:[%s0 + $0xe0] sm:$0xff]
  %v47 = vld [vmem:[%s0 + $0xe8] sm:$0xff]
  %v48 = vld [vmem:[%s0 + $0xf0] sm:$0xff]
  %v49 = vld [vmem:[%s0 + $0xf8] sm:$0xf]
  %v50 = vld [vmem:[%s0 + $0xfc] sm:$0xff]
  %v51 = vld [vmem:[%s0 + $0x104] sm:$0xff]
  %v52 = vld [vmem:[%s0 + $0x10c] sm:$0xff]
  %v53 = vld [vmem:[%s0 + $0x114] sm:$0xff]
  %v54 = vld [vmem:[%s0 + $0x11c] sm:$0xf]
  %v55 = vld [vmem:[%s0 + $0x120] sm:$0xff]
  %v56 = vld [vmem:[%s0 + $0x128] sm:$0xff]
  %v57 = vld [vmem:[%s0 + $0x130] sm:$0xff]
  %v58 = vld [vmem:[%s0 + $0x138] sm:$0xff]
  %v59 = vld [vmem:[%s0 + $0x140] sm:$0xf]
  %v60 = vld [vmem:[%s0 + $0x144] sm:$0xff]
  %v61 = vld [vmem:[%s0 + $0x14c] sm:$0xff]
  %v62 = vld [vmem:[%s0 + $0x154] sm:$0xff]
  %v63 = vld [vmem:[%s0 + $0x15c] sm:$0xff]
  %v64 = vld [vmem:[%s0 + $0x164] sm:$0xf]
  %v65 = vld [vmem:[%s0 + $0x168] sm:$0xff]
  %v66 = vld [vmem:[%s0 + $0x170] sm:$0xff]
  %v67 = vld [vmem:[%s0 + $0x178] sm:$0xff]
  %v68 = vld [vmem:[%s0 + $0x180] sm:$0xff]
  %v69 = vld [vmem:[%s0 + $0x188] sm:$0xf]
  %v70 = vld [vmem:[%s0 + $0x18c] sm:$0xff]
  %v71 = vld [vmem:[%s0 + $0x194] sm:$0xff]
  %v72 = vld [vmem:[%s0 + $0x19c] sm:$0xff]
  %v73 = vld [vmem:[%s0 + $0x1a4] sm:$0xff]
  %v74 = vld [vmem:[%s0 + $0x1ac] sm:$0xf]
  %v75 = vld [vmem:[%s0 + $0x1b0] sm:$0xff]
  %v76 = vld [vmem:[%s0 + $0x1b8] sm:$0xff]
  %v77 = vld [vmem:[%s0 + $0x1c0] sm:$0xff]
  %v78 = vld [vmem:[%s0 + $0x1c8] sm:$0xff]
  %v79 = vld [vmem:[%s0 + $0x1d0] sm:$0xf]
  %v80 = vld [vmem:[%s0 + $0x1d4] sm:$0xff]
  %v81 = vld [vmem:[%s0 + $0x1dc] sm:$0xff]
  %v82 = vld [vmem:[%s0 + $0x1e4] sm:$0xff]
  %v83 = vld [vmem:[%s0 + $0x1ec] sm:$0xff]
  %v84 = vld [vmem:[%s0 + $0x1f4] sm:$0xf]
  %v85 = vld [vmem:[%s1] sm:$0xf]
  %v86 = vld [vmem:[%s1 + $0x4] sm:$0xf]
  %v87 = vld [vmem:[%s1 + $0x8] sm:$0xf]
  %v88 = vld [vmem:[%s1 + $0xc] sm:$0xf]
  %v89 = vld [vmem:[%s1 + $0x10] sm:$0xf]
  %v90 = vld [vmem:[%s1 + $0x14] sm:$0xf]
  %v91 = vld [vmem:[%s1 + $0x18] sm:$0xf]
  %v92 = vld [vmem:[%s1 + $0x1c] sm:$0xf]
  %v93 = vld [vmem:[%s1 + $0x20] sm:$0xf]
  %v94 = vld [vmem:[%s1 + $0x24] sm:$0xf]
  %v95 = vld [vmem:[%s1 + $0x28] sm:$0xf]
  %v96 = vld [vmem:[%s1 + $0x2c] sm:$0xf]
  %v97 = vld [vmem:[%s1 + $0x30] sm:$0xf]
  %v98 = vld [vmem:[%s1 + $0x34] sm:$0xf]
  %v99 = vld [vmem:[%s1 + $0x38] sm:$0xf]
  %v100 = vld [vmem:[%s1 + $0x3c] sm:$0xf]
  %v101 = vld [vmem:[%s1 + $0x40] sm:$0xf]
  %v102 = vld [vmem:[%s1 + $0x44] sm:$0xf]
  %v103 = vld [vmem:[%s1 + $0x48] sm:$0xf]
  %v104 = vld [vmem:[%s1 + $0x4c] sm:$0xf]
  %v105 = vld [vmem:[%s1 + $0x50] sm:$0xf]
  %v106 = vld [vmem:[%s1 + $0x54] sm:$0xf]
  %v107 = vld [vmem:[%s1 + $0x58] sm:$0xf]
  %v108 = vld [vmem:[%s1 + $0x5c] sm:$0xf]
  %v109 = vld [vmem:[%s1 + $0x60] sm:$0xf]
  %v110 = vld [vmem:[%s1 + $0x64] sm:$0xf]
  %v111 = vld [vmem:[%s1 + $0x68] sm:$0xf]
  %v112 = vld [vmem:[%s1 + $0x6c] sm:$0xf]
  %v113 = vld [vmem:[%s1 + $0x70] sm:$0xf]
  %v114 = vld [vmem:[%s1 + $0x74] sm:$0xf]
  %v115 = vld [vmem:[%s1 + $0x78] sm:$0xf]
  %v116 = vld [vmem:[%s1 + $0x7c] sm:$0xf]
  %v117 = vld [vmem:[%s1 + $0x80] sm:$0xf]
  %v118 = vld [vmem:[%s1 + $0x84] sm:$0xf]
  %v119 = vld [vmem:[%s1 + $0x88] sm:$0xf]
  %v120 = vld [vmem:[%s1 + $0x8c] sm:$0xf]
  %v121 = vld [vmem:[%s1 + $0x90] sm:$0xf]
  %v122 = vld [vmem:[%s1 + $0x94] sm:$0xf]
  %v123 = vld [vmem:[%s1 + $0x98] sm:$0xf]
  %v124 = vld [vmem:[%s1 + $0x9c] sm:$0xf]
  %v125 = vld [vmem:[%s1 + $0xa0] sm:$0xf]
  %v126 = vld [vmem:[%s1 + $0xa4] sm:$0xf]
  %v127 = vld [vmem:[%s1 + $0xa8] sm:$0xf]
  %v128 = vld [vmem:[%s1 + $0xac] sm:$0xf]
  %v129 = vld [vmem:[%s1 + $0xb0] sm:$0xf]
  %v130 = vld [vmem:[%s1 + $0xb4] sm:$0xf]
  %v131 = vld [vmem:[%s1 + $0xb8] sm:$0xf]
  %v132 = vld [vmem:[%s1 + $0xbc] sm:$0xf]
  %v133 = vld [vmem:[%s1 + $0xc0] sm:$0xf]
  %v134 = vld [vmem:[%s1 + $0xc4] sm:$0xf]
  %v135 = vld [vmem:[%s1 + $0xc8] sm:$0xf]
  %v136 = vld [vmem:[%s1 + $0xcc] sm:$0xf]
  %v137 = vld [vmem:[%s1 + $0xd0] sm:$0xf]
  %v138 = vld [vmem:[%s1 + $0xd4] sm:$0xf]
  %v139 = vld [vmem:[%s1 + $0xd8] sm:$0xf]
  %v140 = vld [vmem:[%s1 + $0xdc] sm:$0xf]
  %v141 = vld [vmem:[%s1 + $0xe0] sm:$0xf]
  %v142 = vld [vmem:[%s1 + $0xe4] sm:$0xf]
  %v143 = vld [vmem:[%s1 + $0xe8] sm:$0xf]
  %v144 = vld [vmem:[%s1 + $0xec] sm:$0xf]
  %v145 = vld [vmem:[%s1 + $0xf0] sm:$0xf]
  %v146 = vld [vmem:[%s1 + $0xf4] sm:$0xf]
  %v147 = vld [vmem:[%s1 + $0xf8] sm:$0xf]
  %v148 = vld [vmem:[%s1 + $0xfc] sm:$0xf]
  %v149 = vld [vmem:[%s1 + $0x100] sm:$0xf]
  %v150 = vld [vmem:[%s1 + $0x104] sm:$0xf]
  %v151 = vld [vmem:[%s1 + $0x108] sm:$0xf]
  %v152 = vld [vmem:[%s1 + $0x10c] sm:$0xf]
  %v153 = vld [vmem:[%s1 + $0x110] sm:$0xf]
  %v154 = vld [vmem:[%s1 + $0x114] sm:$0xf]
  %v155 = vld [vmem:[%s1 + $0x118] sm:$0xf]
  %v156 = vld [vmem:[%s1 + $0x11c] sm:$0xf]
  %v157 = vld [vmem:[%s1 + $0x120] sm:$0xf]
  %v158 = vld [vmem:[%s1 + $0x124] sm:$0xf]
  %v159 = vld [vmem:[%s1 + $0x128] sm:$0xf]
  %v160 = vld [vmem:[%s1 + $0x12c] sm:$0xf]
  %v161 = vld [vmem:[%s1 + $0x130] sm:$0xf]
  %v162 = vld [vmem:[%s1 + $0x134] sm:$0xf]
  %v163 = vld [vmem:[%s1 + $0x138] sm:$0xf]
  %v164 = vld [vmem:[%s1 + $0x13c] sm:$0xf]
  %v165 = vld [vmem:[%s1 + $0x140] sm:$0xf]
  %v166 = vld [vmem:[%s1 + $0x144] sm:$0xf]
  %v167 = vld [vmem:[%s1 + $0x148] sm:$0xf]
  %v168 = vld [vmem:[%s1 + $0x14c] sm:$0xf]
  %v169 = vld [vmem:[%s1 + $0x150] sm:$0xf]
  %v170 = vld [vmem:[%s1 + $0x154] sm:$0xf]
  %v171 = vld [vmem:[%s1 + $0x158] sm:$0xf]
  %v172 = vld [vmem:[%s1 + $0x15c] sm:$0xf]
  %v173 = vld [vmem:[%s1 + $0x160] sm:$0xf]
  %v174 = vld [vmem:[%s1 + $0x164] sm:$0xf]
  %v175 = vld [vmem:[%s1 + $0x168] sm:$0xf]
  %v176 = vld [vmem:[%s1 + $0x16c] sm:$0xf]
  %v177 = vld [vmem:[%s1 + $0x170] sm:$0xf]
  %v178 = vld [vmem:[%s1 + $0x174] sm:$0xf]
  %v179 = vld [vmem:[%s1 + $0x178] sm:$0xf]
  %v180 = vld [vmem:[%s1 + $0x17c] sm:$0xf]
  %v181 = vld [vmem:[%s1 + $0x180] sm:$0xf]
  %v182 = vld [vmem:[%s1 + $0x184] sm:$0xf]
  %v183 = vld [vmem:[%s1 + $0x188] sm:$0xf]
  %v184 = vld [vmem:[%s1 + $0x18c] sm:$0xf]
  %v185 = vld [vmem:[%s1 + $0x190] sm:$0xf]
  %v186 = vld [vmem:[%s1 + $0x194] sm:$0xf]
  %v187 = vld [vmem:[%s1 + $0x198] sm:$0xf]
  %v188 = vld [vmem:[%s1 + $0x19c] sm:$0xf]
  %v189 = vld [vmem:[%s1 + $0x1a0] sm:$0xf]
  %v190 = vld [vmem:[%s1 + $0x1a4] sm:$0xf]
  %v191 = vld [vmem:[%s1 + $0x1a8] sm:$0xf]
  %v192 = vld [vmem:[%s1 + $0x1ac] sm:$0xf]
  %v193 = vld [vmem:[%s1 + $0x1b0] sm:$0xf]
  %v194 = vld [vmem:[%s1 + $0x1b4] sm:$0xf]
  %v195 = vld [vmem:[%s1 + $0x1b8] sm:$0xf]
  %v196 = vld [vmem:[%s1 + $0x1bc] sm:$0xf]
  %v197 = vld [vmem:[%s1 + $0x1c0] sm:$0xf]
  %v198 = vld [vmem:[%s1 + $0x1c4] sm:$0xf]
  %v199 = vld [vmem:[%s1 + $0x1c8] sm:$0xf]
  %v200 = vld [vmem:[%s1 + $0x1cc] sm:$0xf]
  %v201 = vld [vmem:[%s1 + $0x1d0] sm:$0xf]
  %v202 = vld [vmem:[%s1 + $0x1d4] sm:$0xf]
  %v203 = vld [vmem:[%s1 + $0x1d8] sm:$0xf]
  %v204 = vld [vmem:[%s1 + $0x1dc] sm:$0xf]
  %v205 = vld [vmem:[%s1 + $0x1e0] sm:$0xf]
  %v206 = vld [vmem:[%s1 + $0x1e4] sm:$0xf]
  %v207 = vld [vmem:[%s1 + $0x1e8] sm:$0xf]
  %v208 = vld [vmem:[%s1 + $0x1ec] sm:$0xf]
  %v209 = vld [vmem:[%s1 + $0x1f0] sm:$0xf]
  %v210 = vld [vmem:[%s1 + $0x1f4] sm:$0xf]
  %v211 = vld [vmem:[%s1 + $0x1f8] sm:$0xf]
  %v212 = vld [vmem:[%s1 + $0x1fc] sm:$0xf]
  %v213 = vld [vmem:[%s1 + $0x200] sm:$0xf]
  %v214 = vld [vmem:[%s1 + $0x204] sm:$0xf]
  %v215 = vld [vmem:[%s1 + $0x208] sm:$0xf]
  %v216 = vld [vmem:[%s1 + $0x20c] sm:$0xf]
  %v217 = vld [vmem:[%s1 + $0x210] sm:$0xf]
  %v218 = vld [vmem:[%s1 + $0x214] sm:$0xf]
  %v219 = vld [vmem:[%s1 + $0x218] sm:$0xf]
  %v220 = vld [vmem:[%s1 + $0x21c] sm:$0xf]
  %v221 = vld [vmem:[%s1 + $0x220] sm:$0xf]
  %v222 = vld [vmem:[%s1 + $0x224] sm:$0xf]
  %v223 = vld [vmem:[%s1 + $0x228] sm:$0xf]
  %v224 = vld [vmem:[%s1 + $0x22c] sm:$0xf]
  %v225 = vld [vmem:[%s1 + $0x230] sm:$0xf]
  %v226 = vld [vmem:[%s1 + $0x234] sm:$0xf]
  %v227 = vld [vmem:[%s1 + $0x238] sm:$0xf]
  %v228 = vld [vmem:[%s1 + $0x23c] sm:$0xf]
  %v229 = vld [vmem:[%s2] sm:$0x1]
  %v231 = vlaneseq
  %v232 = vshrl.u32 %v231, 7
  %v233 = vsub.s32 0, %v232
  %v234 = vrot.slane %v229, %v233
  %v306 = vunpack.c.l.b16 %v15
  %v307 = vunpack.c.h.b16 %v15
  %v308 = vunpack.c.l.b16 %v16
  %v309 = vunpack.c.h.b16 %v16
  %v310 = vunpack.c.l.b16 %v17
  %v311 = vunpack.c.h.b16 %v17
  %v312 = vunpack.c.l.b16 %v18
  %v313 = vunpack.c.h.b16 %v18
  %v314 = vunpack.c.l.b16 %v19
  %v315 = vunpack.c.l.b16 %v20
  %v316 = vunpack.c.h.b16 %v20
  %v317 = vunpack.c.l.b16 %v21
  %v318 = vunpack.c.h.b16 %v21
  %v319 = vunpack.c.l.b16 %v22
  %v320 = vunpack.c.h.b16 %v22
  %v321 = vunpack.c.l.b16 %v23
  %v322 = vunpack.c.h.b16 %v23
  %v323 = vunpack.c.l.b16 %v24
  %v324 = vunpack.c.l.b16 %v25
  %v325 = vunpack.c.h.b16 %v25
  %v326 = vunpack.c.l.b16 %v26
  %v327 = vunpack.c.h.b16 %v26
  %v328 = vunpack.c.l.b16 %v27
  %v329 = vunpack.c.h.b16 %v27
  %v330 = vunpack.c.l.b16 %v28
  %v331 = vunpack.c.h.b16 %v28
  %v332 = vunpack.c.l.b16 %v29
  %v333 = vunpack.c.l.b16 %v30
  %v334 = vunpack.c.h.b16 %v30
  %v335 = vunpack.c.l.b16 %v31
  %v336 = vunpack.c.h.b16 %v31
  %v337 = vunpack.c.l.b16 %v32
  %v338 = vunpack.c.h.b16 %v32
  %v339 = vunpack.c.l.b16 %v33
  %v340 = vunpack.c.h.b16 %v33
  %v341 = vunpack.c.l.b16 %v34
  %v342 = vunpack.c.l.b16 %v35
  %v343 = vunpack.c.h.b16 %v35
  %v344 = vunpack.c.l.b16 %v36
  %v345 = vunpack.c.h.b16 %v36
  %v346 = vunpack.c.l.b16 %v37
  %v347 = vunpack.c.h.b16 %v37
  %v348 = vunpack.c.l.b16 %v38
  %v349 = vunpack.c.h.b16 %v38
  %v350 = vunpack.c.l.b16 %v39
  %v351 = vunpack.c.l.b16 %v40
  %v352 = vunpack.c.h.b16 %v40
  %v353 = vunpack.c.l.b16 %v41
  %v354 = vunpack.c.h.b16 %v41
  %v355 = vunpack.c.l.b16 %v42
  %v356 = vunpack.c.h.b16 %v42
  %v357 = vunpack.c.l.b16 %v43
  %v358 = vunpack.c.h.b16 %v43
  %v359 = vunpack.c.l.b16 %v44
  %v360 = vunpack.c.l.b16 %v45
  %v361 = vunpack.c.h.b16 %v45
  %v362 = vunpack.c.l.b16 %v46
  %v363 = vunpack.c.h.b16 %v46
  %v364 = vunpack.c.l.b16 %v47
  %v365 = vunpack.c.h.b16 %v47
  %v366 = vunpack.c.l.b16 %v48
  %v367 = vunpack.c.h.b16 %v48
  %v368 = vunpack.c.l.b16 %v49
  %v369 = vunpack.c.l.b16 %v50
  %v370 = vunpack.c.h.b16 %v50
  %v371 = vunpack.c.l.b16 %v51
  %v372 = vunpack.c.h.b16 %v51
  %v373 = vunpack.c.l.b16 %v52
  %v374 = vunpack.c.h.b16 %v52
  %v375 = vunpack.c.l.b16 %v53
  %v376 = vunpack.c.h.b16 %v53
  %v377 = vunpack.c.l.b16 %v54
  %v378 = vunpack.c.l.b16 %v55
  %v379 = vunpack.c.h.b16 %v55
  %v380 = vunpack.c.l.b16 %v56
  %v381 = vunpack.c.h.b16 %v56
  %v382 = vunpack.c.l.b16 %v57
  %v383 = vunpack.c.h.b16 %v57
  %v384 = vunpack.c.l.b16 %v58
  %v385 = vunpack.c.h.b16 %v58
  %v386 = vunpack.c.l.b16 %v59
  %v387 = vunpack.c.l.b16 %v60
  %v388 = vunpack.c.h.b16 %v60
  %v389 = vunpack.c.l.b16 %v61
  %v390 = vunpack.c.h.b16 %v61
  %v391 = vunpack.c.l.b16 %v62
  %v392 = vunpack.c.h.b16 %v62
  %v393 = vunpack.c.l.b16 %v63
  %v394 = vunpack.c.h.b16 %v63
  %v395 = vunpack.c.l.b16 %v64
  %v396 = vunpack.c.l.b16 %v65
  %v397 = vunpack.c.h.b16 %v65
  %v398 = vunpack.c.l.b16 %v66
  %v399 = vunpack.c.h.b16 %v66
  %v400 = vunpack.c.l.b16 %v67
  %v401 = vunpack.c.h.b16 %v67
  %v402 = vunpack.c.l.b16 %v68
  %v403 = vunpack.c.h.b16 %v68
  %v404 = vunpack.c.l.b16 %v69
  %v405 = vunpack.c.l.b16 %v70
  %v406 = vunpack.c.h.b16 %v70
  %v407 = vunpack.c.l.b16 %v71
  %v408 = vunpack.c.h.b16 %v71
  %v409 = vunpack.c.l.b16 %v72
  %v410 = vunpack.c.h.b16 %v72
  %v411 = vunpack.c.l.b16 %v73
  %v412 = vunpack.c.h.b16 %v73
  %v413 = vunpack.c.l.b16 %v74
  %v414 = vunpack.c.l.b16 %v75
  %v415 = vunpack.c.h.b16 %v75
  %v416 = vunpack.c.l.b16 %v76
  %v417 = vunpack.c.h.b16 %v76
  %v418 = vunpack.c.l.b16 %v77
  %v419 = vunpack.c.h.b16 %v77
  %v420 = vunpack.c.l.b16 %v78
  %v421 = vunpack.c.h.b16 %v78
  %v422 = vunpack.c.l.b16 %v79
  %v423 = vunpack.c.l.b16 %v80
  %v424 = vunpack.c.h.b16 %v80
  %v425 = vunpack.c.l.b16 %v81
  %v426 = vunpack.c.h.b16 %v81
  %v427 = vunpack.c.l.b16 %v82
  %v428 = vunpack.c.h.b16 %v82
  %v429 = vunpack.c.l.b16 %v83
  %v430 = vunpack.c.h.b16 %v83
  %v431 = vunpack.c.l.b16 %v84
  %v432 = vpack.c.b16 %v315, %v306
  %v433 = vpack.c.b16 %v316, %v307
  %v434 = vpack.c.b16 %v317, %v308
  %v435 = vpack.c.b16 %v318, %v309
  %v436 = vpack.c.b16 %v319, %v310
  %v437 = vpack.c.b16 %v320, %v311
  %v438 = vpack.c.b16 %v321, %v312
  %v439 = vpack.c.b16 %v322, %v313
  %v440 = vpack.c.b16 %v323, %v314
  %v441 = vpack.c.b16 %v333, %v324
  %v442 = vpack.c.b16 %v334, %v325
  %v443 = vpack.c.b16 %v335, %v326
  %v444 = vpack.c.b16 %v336, %v327
  %v445 = vpack.c.b16 %v337, %v328
  %v446 = vpack.c.b16 %v338, %v329
  %v447 = vpack.c.b16 %v339, %v330
  %v448 = vpack.c.b16 %v340, %v331
  %v449 = vpack.c.b16 %v341, %v332
  %v450 = vpack.c.b16 %v351, %v342
  %v451 = vpack.c.b16 %v352, %v343
  %v452 = vpack.c.b16 %v353, %v344
  %v453 = vpack.c.b16 %v354, %v345
  %v454 = vpack.c.b16 %v355, %v346
  %v455 = vpack.c.b16 %v356, %v347
  %v456 = vpack.c.b16 %v357, %v348
  %v457 = vpack.c.b16 %v358, %v349
  %v458 = vpack.c.b16 %v359, %v350
  %v459 = vpack.c.b16 %v369, %v360
  %v460 = vpack.c.b16 %v370, %v361
  %v461 = vpack.c.b16 %v371, %v362
  %v462 = vpack.c.b16 %v372, %v363
  %v463 = vpack.c.b16 %v373, %v364
  %v464 = vpack.c.b16 %v374, %v365
  %v465 = vpack.c.b16 %v375, %v366
  %v466 = vpack.c.b16 %v376, %v367
  %v467 = vpack.c.b16 %v377, %v368
  %v468 = vpack.c.b16 %v387, %v378
  %v469 = vpack.c.b16 %v388, %v379
  %v470 = vpack.c.b16 %v389, %v380
  %v471 = vpack.c.b16 %v390, %v381
  %v472 = vpack.c.b16 %v391, %v382
  %v473 = vpack.c.b16 %v392, %v383
  %v474 = vpack.c.b16 %v393, %v384
  %v475 = vpack.c.b16 %v394, %v385
  %v476 = vpack.c.b16 %v395, %v386
  %v477 = vpack.c.b16 %v405, %v396
  %v478 = vpack.c.b16 %v406, %v397
  %v479 = vpack.c.b16 %v407, %v398
  %v480 = vpack.c.b16 %v408, %v399
  %v481 = vpack.c.b16 %v409, %v400
  %v482 = vpack.c.b16 %v410, %v401
  %v483 = vpack.c.b16 %v411, %v402
  %v484 = vpack.c.b16 %v412, %v403
  %v485 = vpack.c.b16 %v413, %v404
  %v486 = vpack.c.b16 %v423, %v414
  %v487 = vpack.c.b16 %v424, %v415
  %v488 = vpack.c.b16 %v425, %v416
  %v489 = vpack.c.b16 %v426, %v417
  %v490 = vpack.c.b16 %v427, %v418
  %v491 = vpack.c.b16 %v428, %v419
  %v492 = vpack.c.b16 %v429, %v420
  %v493 = vpack.c.b16 %v430, %v421
  %v494 = vpack.c.b16 %v431, %v422
  %v702 = vunpack.c.l.b16 %v85
  %v703 = vunpack.c.l.b16 %v86
  %v704 = vunpack.c.l.b16 %v87
  %v705 = vunpack.c.l.b16 %v88
  %v706 = vunpack.c.l.b16 %v89
  %v707 = vunpack.c.l.b16 %v90
  %v708 = vunpack.c.l.b16 %v91
  %v709 = vunpack.c.l.b16 %v92
  %v710 = vunpack.c.l.b16 %v93
  %v711 = vunpack.c.l.b16 %v94
  %v712 = vunpack.c.l.b16 %v95
  %v713 = vunpack.c.l.b16 %v96
  %v714 = vunpack.c.l.b16 %v97
  %v715 = vunpack.c.l.b16 %v98
  %v716 = vunpack.c.l.b16 %v99
  %v717 = vunpack.c.l.b16 %v100
  %v718 = vunpack.c.l.b16 %v101
  %v719 = vunpack.c.l.b16 %v102
  %v720 = vunpack.c.l.b16 %v103
  %v721 = vunpack.c.l.b16 %v104
  %v722 = vunpack.c.l.b16 %v105
  %v723 = vunpack.c.l.b16 %v106
  %v724 = vunpack.c.l.b16 %v107
  %v725 = vunpack.c.l.b16 %v108
  %v726 = vunpack.c.l.b16 %v109
  %v727 = vunpack.c.l.b16 %v110
  %v728 = vunpack.c.l.b16 %v111
  %v729 = vunpack.c.l.b16 %v112
  %v730 = vunpack.c.l.b16 %v113
  %v731 = vunpack.c.l.b16 %v114
  %v732 = vunpack.c.l.b16 %v115
  %v733 = vunpack.c.l.b16 %v116
  %v734 = vunpack.c.l.b16 %v117
  %v735 = vunpack.c.l.b16 %v118
  %v736 = vunpack.c.l.b16 %v119
  %v737 = vunpack.c.l.b16 %v120
  %v738 = vunpack.c.l.b16 %v121
  %v739 = vunpack.c.l.b16 %v122
  %v740 = vunpack.c.l.b16 %v123
  %v741 = vunpack.c.l.b16 %v124
  %v742 = vunpack.c.l.b16 %v125
  %v743 = vunpack.c.l.b16 %v126
  %v744 = vunpack.c.l.b16 %v127
  %v745 = vunpack.c.l.b16 %v128
  %v746 = vunpack.c.l.b16 %v129
  %v747 = vunpack.c.l.b16 %v130
  %v748 = vunpack.c.l.b16 %v131
  %v749 = vunpack.c.l.b16 %v132
  %v750 = vunpack.c.l.b16 %v133
  %v751 = vunpack.c.l.b16 %v134
  %v752 = vunpack.c.l.b16 %v135
  %v753 = vunpack.c.l.b16 %v136
  %v754 = vunpack.c.l.b16 %v137
  %v755 = vunpack.c.l.b16 %v138
  %v756 = vunpack.c.l.b16 %v139
  %v757 = vunpack.c.l.b16 %v140
  %v758 = vunpack.c.l.b16 %v141
  %v759 = vunpack.c.l.b16 %v142
  %v760 = vunpack.c.l.b16 %v143
  %v761 = vunpack.c.l.b16 %v144
  %v762 = vunpack.c.l.b16 %v145
  %v763 = vunpack.c.l.b16 %v146
  %v764 = vunpack.c.l.b16 %v147
  %v765 = vunpack.c.l.b16 %v148
  %v766 = vunpack.c.l.b16 %v149
  %v767 = vunpack.c.l.b16 %v150
  %v768 = vunpack.c.l.b16 %v151
  %v769 = vunpack.c.l.b16 %v152
  %v770 = vunpack.c.l.b16 %v153
  %v771 = vunpack.c.l.b16 %v154
  %v772 = vunpack.c.l.b16 %v155
  %v773 = vunpack.c.l.b16 %v156
  %v774 = vunpack.c.l.b16 %v157
  %v775 = vunpack.c.l.b16 %v158
  %v776 = vunpack.c.l.b16 %v159
  %v777 = vunpack.c.l.b16 %v160
  %v778 = vunpack.c.l.b16 %v161
  %v779 = vunpack.c.l.b16 %v162
  %v780 = vunpack.c.l.b16 %v163
  %v781 = vunpack.c.l.b16 %v164
  %v782 = vunpack.c.l.b16 %v165
  %v783 = vunpack.c.l.b16 %v166
  %v784 = vunpack.c.l.b16 %v167
  %v785 = vunpack.c.l.b16 %v168
  %v786 = vunpack.c.l.b16 %v169
  %v787 = vunpack.c.l.b16 %v170
  %v788 = vunpack.c.l.b16 %v171
  %v789 = vunpack.c.l.b16 %v172
  %v790 = vunpack.c.l.b16 %v173
  %v791 = vunpack.c.l.b16 %v174
  %v792 = vunpack.c.l.b16 %v175
  %v793 = vunpack.c.l.b16 %v176
  %v794 = vunpack.c.l.b16 %v177
  %v795 = vunpack.c.l.b16 %v178
  %v796 = vunpack.c.l.b16 %v179
  %v797 = vunpack.c.l.b16 %v180
  %v798 = vunpack.c.l.b16 %v181
  %v799 = vunpack.c.l.b16 %v182
  %v800 = vunpack.c.l.b16 %v183
  %v801 = vunpack.c.l.b16 %v184
  %v802 = vunpack.c.l.b16 %v185
  %v803 = vunpack.c.l.b16 %v186
  %v804 = vunpack.c.l.b16 %v187
  %v805 = vunpack.c.l.b16 %v188
  %v806 = vunpack.c.l.b16 %v189
  %v807 = vunpack.c.l.b16 %v190
  %v808 = vunpack.c.l.b16 %v191
  %v809 = vunpack.c.l.b16 %v192
  %v810 = vunpack.c.l.b16 %v193
  %v811 = vunpack.c.l.b16 %v194
  %v812 = vunpack.c.l.b16 %v195
  %v813 = vunpack.c.l.b16 %v196
  %v814 = vunpack.c.l.b16 %v197
  %v815 = vunpack.c.l.b16 %v198
  %v816 = vunpack.c.l.b16 %v199
  %v817 = vunpack.c.l.b16 %v200
  %v818 = vunpack.c.l.b16 %v201
  %v819 = vunpack.c.l.b16 %v202
  %v820 = vunpack.c.l.b16 %v203
  %v821 = vunpack.c.l.b16 %v204
  %v822 = vunpack.c.l.b16 %v205
  %v823 = vunpack.c.l.b16 %v206
  %v824 = vunpack.c.l.b16 %v207
  %v825 = vunpack.c.l.b16 %v208
  %v826 = vunpack.c.l.b16 %v209
  %v827 = vunpack.c.l.b16 %v210
  %v828 = vunpack.c.l.b16 %v211
  %v829 = vunpack.c.l.b16 %v212
  %v830 = vunpack.c.l.b16 %v213
  %v831 = vunpack.c.l.b16 %v214
  %v832 = vunpack.c.l.b16 %v215
  %v833 = vunpack.c.l.b16 %v216
  %v834 = vunpack.c.l.b16 %v217
  %v835 = vunpack.c.l.b16 %v218
  %v836 = vunpack.c.l.b16 %v219
  %v837 = vunpack.c.l.b16 %v220
  %v838 = vunpack.c.l.b16 %v221
  %v839 = vunpack.c.l.b16 %v222
  %v840 = vunpack.c.l.b16 %v223
  %v841 = vunpack.c.l.b16 %v224
  %v842 = vunpack.c.l.b16 %v225
  %v843 = vunpack.c.l.b16 %v226
  %v844 = vunpack.c.l.b16 %v227
  %v845 = vunpack.c.l.b16 %v228
  %v846 = vpack.c.b16 %v703, %v702
  %v847 = vpack.c.b16 %v705, %v704
  %v848 = vpack.c.b16 %v707, %v706
  %v849 = vpack.c.b16 %v709, %v708
  %v850 = vpack.c.b16 %v711, %v710
  %v851 = vpack.c.b16 %v713, %v712
  %v852 = vpack.c.b16 %v715, %v714
  %v853 = vpack.c.b16 %v717, %v716
  %v854 = vpack.c.b16 %v719, %v718
  %v855 = vpack.c.b16 %v721, %v720
  %v856 = vpack.c.b16 %v723, %v722
  %v857 = vpack.c.b16 %v725, %v724
  %v858 = vpack.c.b16 %v727, %v726
  %v859 = vpack.c.b16 %v729, %v728
  %v860 = vpack.c.b16 %v731, %v730
  %v861 = vpack.c.b16 %v733, %v732
  %v862 = vpack.c.b16 %v735, %v734
  %v863 = vpack.c.b16 %v737, %v736
  %v864 = vpack.c.b16 %v739, %v738
  %v865 = vpack.c.b16 %v741, %v740
  %v866 = vpack.c.b16 %v743, %v742
  %v867 = vpack.c.b16 %v745, %v744
  %v868 = vpack.c.b16 %v747, %v746
  %v869 = vpack.c.b16 %v749, %v748
  %v870 = vpack.c.b16 %v751, %v750
  %v871 = vpack.c.b16 %v753, %v752
  %v872 = vpack.c.b16 %v755, %v754
  %v873 = vpack.c.b16 %v757, %v756
  %v874 = vpack.c.b16 %v759, %v758
  %v875 = vpack.c.b16 %v761, %v760
  %v876 = vpack.c.b16 %v763, %v762
  %v877 = vpack.c.b16 %v765, %v764
  %v878 = vpack.c.b16 %v767, %v766
  %v879 = vpack.c.b16 %v769, %v768
  %v880 = vpack.c.b16 %v771, %v770
  %v881 = vpack.c.b16 %v773, %v772
  %v882 = vpack.c.b16 %v775, %v774
  %v883 = vpack.c.b16 %v777, %v776
  %v884 = vpack.c.b16 %v779, %v778
  %v885 = vpack.c.b16 %v781, %v780
  %v886 = vpack.c.b16 %v783, %v782
  %v887 = vpack.c.b16 %v785, %v784
  %v888 = vpack.c.b16 %v787, %v786
  %v889 = vpack.c.b16 %v789, %v788
  %v890 = vpack.c.b16 %v791, %v790
  %v891 = vpack.c.b16 %v793, %v792
  %v892 = vpack.c.b16 %v795, %v794
  %v893 = vpack.c.b16 %v797, %v796
  %v894 = vpack.c.b16 %v799, %v798
  %v895 = vpack.c.b16 %v801, %v800
  %v896 = vpack.c.b16 %v803, %v802
  %v897 = vpack.c.b16 %v805, %v804
  %v898 = vpack.c.b16 %v807, %v806
  %v899 = vpack.c.b16 %v809, %v808
  %v900 = vpack.c.b16 %v811, %v810
  %v901 = vpack.c.b16 %v813, %v812
  %v902 = vpack.c.b16 %v815, %v814
  %v903 = vpack.c.b16 %v817, %v816
  %v904 = vpack.c.b16 %v819, %v818
  %v905 = vpack.c.b16 %v821, %v820
  %v906 = vpack.c.b16 %v823, %v822
  %v907 = vpack.c.b16 %v825, %v824
  %v908 = vpack.c.b16 %v827, %v826
  %v909 = vpack.c.b16 %v829, %v828
  %v910 = vpack.c.b16 %v831, %v830
  %v911 = vpack.c.b16 %v833, %v832
  %v912 = vpack.c.b16 %v835, %v834
  %v913 = vpack.c.b16 %v837, %v836
  %v914 = vpack.c.b16 %v839, %v838
  %v915 = vpack.c.b16 %v841, %v840
  %v916 = vpack.c.b16 %v843, %v842
  %v917 = vpack.c.b16 %v845, %v844
  %990 = vmatprep.subr.bf16.mxu0 0
  %991 = vmatpush1.bf16.msra.mxu0 %v846
  %992 = vmatprep.subr.bf16.mxu0 0
  %993 = vmatpush1.bf16.msra.mxu0 %v847
  %994 = vmatprep.subr.bf16.mxu0 0
  %995 = vmatpush1.bf16.msra.mxu0 %v848
  %996 = vmatprep.subr.bf16.mxu0 0
  %997 = vmatpush1.bf16.msra.mxu0 %v849
  %998 = vmatprep.subr.bf16.mxu0 0
  %999 = vmatpush1.bf16.msra.mxu0 %v850
  %1000 = vmatprep.subr.bf16.mxu0 0
  %1001 = vmatpush1.bf16.msra.mxu0 %v851
  %1002 = vmatprep.subr.bf16.mxu0 0
  %1003 = vmatpush1.bf16.msra.mxu0 %v852
  %1004 = vmatprep.subr.bf16.mxu0 0
  %1005 = vmatpush1.bf16.msra.mxu0 %v853
  %1006 = vmatprep.subr.bf16.mxu0 0
  %1007 = vmatpush1.bf16.msra.mxu0 %v854
  %1008 = vmatprep.subr.bf16.mxu0 0
  %1009 = vmatpush1.bf16.msra.mxu0 %v855
  %1010 = vmatprep.subr.bf16.mxu0 0
  %1011 = vmatpush1.bf16.msra.mxu0 %v856
  %1012 = vmatprep.subr.bf16.mxu0 0
  %1013 = vmatpush1.bf16.msra.mxu0 %v857
  %1014 = vmatprep.subr.bf16.mxu0 0
  %1015 = vmatpush1.bf16.msra.mxu0 %v858
  %1016 = vmatprep.subr.bf16.mxu0 0
  %1017 = vmatpush1.bf16.msra.mxu0 %v859
  %1018 = vmatprep.subr.bf16.mxu0 0
  %1019 = vmatpush1.bf16.msra.mxu0 %v860
  %1020 = vmatprep.subr.bf16.mxu0 0
  %1021 = vmatpush1.bf16.msra.mxu0 %v861
  %1022 = vmatprep.mubr.bf16.mxu0 %v433
  %1023 = vmatmul.mubr.bf16.gmra.mrb[0].mxu0 %v432
  %v1024 = vpop.f32.mrb[0].mxu0
  %v1025 = vadd.f32 %v234, %v1024
  %v1026 = vpop.f32.mrb[0].mxu0
  %v1027 = vpop.f32.mrb[0].mxu0
  %v1028 = vadd.f32 %v234, %v1027
  %v1029 = vpop.f32.mrb[0].mxu0
  %1030 = vmatprep.mubr.bf16.mxu0 %v442
  %1031 = vmatmul.mubr.bf16.gmra.mrb[0].mxu0 %v441
  %v1032 = vpop.f32.mrb[0].mxu0
  %v1033 = vadd.f32 %v234, %v1032
  %v1034 = vpop.f32.mrb[0].mxu0
  %v1035 = vpop.f32.mrb[0].mxu0
  %v1036 = vadd.f32 %v234, %v1035
  %v1037 = vpop.f32.mrb[0].mxu0
  %1038 = vmatprep.mubr.bf16.mxu0 %v451
  %1039 = vmatmul.mubr.bf16.gmra.mrb[0].mxu0 %v450
  %v1040 = vpop.f32.mrb[0].mxu0
  %v1041 = vadd.f32 %v234, %v1040
  %v1042 = vpop.f32.mrb[0].mxu0
  %v1043 = vpop.f32.mrb[0].mxu0
  %v1044 = vadd.f32 %v234, %v1043
  %v1045 = vpop.f32.mrb[0].mxu0
  %1046 = vmatprep.mubr.bf16.mxu0 %v460
  %1047 = vmatmul.mubr.bf16.gmra.mrb[0].mxu0 %v459
  %v1048 = vpop.f32.mrb[0].mxu0
  %v1049 = vadd.f32 %v234, %v1048
  %v1050 = vpop.f32.mrb[0].mxu0
  %v1051 = vpop.f32.mrb[0].mxu0
  %v1052 = vadd.f32 %v234, %v1051
  %v1053 = vpop.f32.mrb[0].mxu0
  %1054 = vmatprep.mubr.bf16.mxu0 %v469
  %1055 = vmatmul.mubr.bf16.gmra.mrb[0].mxu0 %v468
  %v1056 = vpop.f32.mrb[0].mxu0
  %v1057 = vadd.f32 %v234, %v1056
  %v1058 = vpop.f32.mrb[0].mxu0
  %v1059 = vpop.f32.mrb[0].mxu0
  %v1060 = vadd.f32 %v234, %v1059
  %v1061 = vpop.f32.mrb[0].mxu0
  %1062 = vmatprep.mubr.bf16.mxu0 %v478
  %1063 = vmatmul.mubr.bf16.gmra.mrb[0].mxu0 %v477
  %v1064 = vpop.f32.mrb[0].mxu0
  %v1065 = vadd.f32 %v234, %v1064
  %v1066 = vpop.f32.mrb[0].mxu0
  %v1067 = vpop.f32.mrb[0].mxu0
  %v1068 = vadd.f32 %v234, %v1067
  %v1069 = vpop.f32.mrb[0].mxu0
  %1070 = vmatprep.mubr.bf16.mxu0 %v487
  %1071 = vmatmul.mubr.bf16.gmra.mrb[0].mxu0 %v486
  %v1072 = vpop.f32.mrb[0].mxu0
  %v1073 = vadd.f32 %v234, %v1072
  %v1074 = vpop.f32.mrb[0].mxu0
  %v1075 = vpop.f32.mrb[0].mxu0
  %v1076 = vadd.f32 %v234, %v1075
  %v1077 = vpop.f32.mrb[0].mxu0
  %1078 = vdwg.mxu0
  %1079 = vmatprep.subr.bf16.mxu0 0
  %1080 = vmatpush1.bf16.msra.mxu0 %v862
  %1081 = vmatprep.subr.bf16.mxu0 0
  %1082 = vmatpush1.bf16.msra.mxu0 %v863
  %1083 = vmatprep.subr.bf16.mxu0 0
  %1084 = vmatpush1.bf16.msra.mxu0 %v864
  %1085 = vmatprep.subr.bf16.mxu0 0
  %1086 = vmatpush1.bf16.msra.mxu0 %v865
  %1087 = vmatprep.subr.bf16.mxu0 0
  %1088 = vmatpush1.bf16.msra.mxu0 %v866
  %1089 = vmatprep.subr.bf16.mxu0 0
  %1090 = vmatpush1.bf16.msra.mxu0 %v867
  %1091 = vmatprep.subr.bf16.mxu0 0
  %1092 = vmatpush1.bf16.msra.mxu0 %v868
  %1093 = vmatprep.subr.bf16.mxu0 0
  %1094 = vmatpush1.bf16.msra.mxu0 %v869
  %1095 = vmatprep.subr.bf16.mxu0 0
  %1096 = vmatpush1.bf16.msra.mxu0 %v870
  %1097 = vmatprep.subr.bf16.mxu0 0
  %1098 = vmatpush1.bf16.msra.mxu0 %v871
  %1099 = vmatprep.subr.bf16.mxu0 0
  %1100 = vmatpush1.bf16.msra.mxu0 %v872
  %1101 = vmatprep.subr.bf16.mxu0 0
  %1102 = vmatpush1.bf16.msra.mxu0 %v873
  %1103 = vmatprep.subr.bf16.mxu0 0
  %1104 = vmatpush1.bf16.msra.mxu0 %v874
  %1105 = vmatprep.subr.bf16.mxu0 0
  %1106 = vmatpush1.bf16.msra.mxu0 %v875
  %1107 = vmatprep.subr.bf16.mxu0 0
  %1108 = vmatpush1.bf16.msra.mxu0 %v876
  %1109 = vmatprep.subr.bf16.mxu0 0
  %1110 = vmatpush1.bf16.msra.mxu0 %v877
  %1111 = vmatprep.mubr.bf16.mxu0 %v435
  %1112 = vmatmul.mubr.bf16.gmra.mrb[0].mxu0 %v434
  %v1113 = vpop.f32.mrb[0].mxu0
  %v1114 = vadd.f32 %v1025, %v1113
  %v1115 = vpop.f32.mrb[0].mxu0
  %v1116 = vpop.f32.mrb[0].mxu0
  %v1117 = vadd.f32 %v1028, %v1116
  %v1118 = vpop.f32.mrb[0].mxu0
  %1119 = vmatprep.mubr.bf16.mxu0 %v444
  %1120 = vmatmul.mubr.bf16.gmra.mrb[0].mxu0 %v443
  %v1121 = vpop.f32.mrb[0].mxu0
  %v1122 = vadd.f32 %v1033, %v1121
  %v1123 = vpop.f32.mrb[0].mxu0
  %v1124 = vpop.f32.mrb[0].mxu0
  %v1125 = vadd.f32 %v1036, %v1124
  %v1126 = vpop.f32.mrb[0].mxu0
  %1127 = vmatprep.mubr.bf16.mxu0 %v453
  %1128 = vmatmul.mubr.bf16.gmra.mrb[0].mxu0 %v452
  %v1129 = vpop.f32.mrb[0].mxu0
  %v1130 = vadd.f32 %v1041, %v1129
  %v1131 = vpop.f32.mrb[0].mxu0
  %v1132 = vpop.f32.mrb[0].mxu0
  %v1133 = vadd.f32 %v1044, %v1132
  %v1134 = vpop.f32.mrb[0].mxu0
  %1135 = vmatprep.mubr.bf16.mxu0 %v462
  %1136 = vmatmul.mubr.bf16.gmra.mrb[0].mxu0 %v461
  %v1137 = vpop.f32.mrb[0].mxu0
  %v1138 = vadd.f32 %v1049, %v1137
  %v1139 = vpop.f32.mrb[0].mxu0
  %v1140 = vpop.f32.mrb[0].mxu0
  %v1141 = vadd.f32 %v1052, %v1140
  %v1142 = vpop.f32.mrb[0].mxu0
  %1143 = vmatprep.mubr.bf16.mxu0 %v471
  %1144 = vmatmul.mubr.bf16.gmra.mrb[0].mxu0 %v470
  %v1145 = vpop.f32.mrb[0].mxu0
  %v1146 = vadd.f32 %v1057, %v1145
  %v1147 = vpop.f32.mrb[0].mxu0
  %v1148 = vpop.f32.mrb[0].mxu0
  %v1149 = vadd.f32 %v1060, %v1148
  %v1150 = vpop.f32.mrb[0].mxu0
  %1151 = vmatprep.mubr.bf16.mxu0 %v480
  %1152 = vmatmul.mubr.bf16.gmra.mrb[0].mxu0 %v479
  %v1153 = vpop.f32.mrb[0].mxu0
  %v1154 = vadd.f32 %v1065, %v1153
  %v1155 = vpop.f32.mrb[0].mxu0
  %v1156 = vpop.f32.mrb[0].mxu0
  %v1157 = vadd.f32 %v1068, %v1156
  %v1158 = vpop.f32.mrb[0].mxu0
  %1159 = vmatprep.mubr.bf16.mxu0 %v489
  %1160 = vmatmul.mubr.bf16.gmra.mrb[0].mxu0 %v488
  %v1161 = vpop.f32.mrb[0].mxu0
  %v1162 = vadd.f32 %v1073, %v1161
  %v1163 = vpop.f32.mrb[0].mxu0
  %v1164 = vpop.f32.mrb[0].mxu0
  %v1165 = vadd.f32 %v1076, %v1164
  %v1166 = vpop.f32.mrb[0].mxu0
  %1167 = vdwg.mxu0
  %1168 = vmatprep.subr.bf16.mxu0 0
  %1169 = vmatpush1.bf16.msra.mxu0 %v878
  %1170 = vmatprep.subr.bf16.mxu0 0
  %1171 = vmatpush1.bf16.msra.mxu0 %v879
  %1172 = vmatprep.subr.bf16.mxu0 0
  %1173 = vmatpush1.bf16.msra.mxu0 %v880
  %1174 = vmatprep.subr.bf16.mxu0 0
  %1175 = vmatpush1.bf16.msra.mxu0 %v881
  %1176 = vmatprep.subr.bf16.mxu0 0
  %1177 = vmatpush1.bf16.msra.mxu0 %v882
  %1178 = vmatprep.subr.bf16.mxu0 0
  %1179 = vmatpush1.bf16.msra.mxu0 %v883
  %1180 = vmatprep.subr.bf16.mxu0 0
  %1181 = vmatpush1.bf16.msra.mxu0 %v884
  %1182 = vmatprep.subr.bf16.mxu0 0
  %1183 = vmatpush1.bf16.msra.mxu0 %v885
  %1184 = vmatprep.subr.bf16.mxu0 0
  %1185 = vmatpush1.bf16.msra.mxu0 %v886
  %1186 = vmatprep.subr.bf16.mxu0 0
  %1187 = vmatpush1.bf16.msra.mxu0 %v887
  %1188 = vmatprep.subr.bf16.mxu0 0
  %1189 = vmatpush1.bf16.msra.mxu0 %v888
  %1190 = vmatprep.subr.bf16.mxu0 0
  %1191 = vmatpush1.bf16.msra.mxu0 %v889
  %1192 = vmatprep.subr.bf16.mxu0 0
  %1193 = vmatpush1.bf16.msra.mxu0 %v890
  %1194 = vmatprep.subr.bf16.mxu0 0
  %1195 = vmatpush1.bf16.msra.mxu0 %v891
  %1196 = vmatprep.subr.bf16.mxu0 0
  %1197 = vmatpush1.bf16.msra.mxu0 %v892
  %1198 = vmatprep.subr.bf16.mxu0 0
  %1199 = vmatpush1.bf16.msra.mxu0 %v893
  %1200 = vmatprep.mubr.bf16.mxu0 %v437
  %1201 = vmatmul.mubr.bf16.gmra.mrb[0].mxu0 %v436
  %v1202 = vpop.f32.mrb[0].mxu0
  %v1203 = vadd.f32 %v1114, %v1202
  %v1204 = vpop.f32.mrb[0].mxu0
  %v1205 = vpop.f32.mrb[0].mxu0
  %v1206 = vadd.f32 %v1117, %v1205
  %v1207 = vpop.f32.mrb[0].mxu0
  %1208 = vmatprep.mubr.bf16.mxu0 %v446
  %1209 = vmatmul.mubr.bf16.gmra.mrb[0].mxu0 %v445
  %v1210 = vpop.f32.mrb[0].mxu0
  %v1211 = vadd.f32 %v1122, %v1210
  %v1212 = vpop.f32.mrb[0].mxu0
  %v1213 = vpop.f32.mrb[0].mxu0
  %v1214 = vadd.f32 %v1125, %v1213
  %v1215 = vpop.f32.mrb[0].mxu0
  %1216 = vmatprep.mubr.bf16.mxu0 %v455
  %1217 = vmatmul.mubr.bf16.gmra.mrb[0].mxu0 %v454
  %v1218 = vpop.f32.mrb[0].mxu0
  %v1219 = vadd.f32 %v1130, %v1218
  %v1220 = vpop.f32.mrb[0].mxu0
  %v1221 = vpop.f32.mrb[0].mxu0
  %v1222 = vadd.f32 %v1133, %v1221
  %v1223 = vpop.f32.mrb[0].mxu0
  %1224 = vmatprep.mubr.bf16.mxu0 %v464
  %1225 = vmatmul.mubr.bf16.gmra.mrb[0].mxu0 %v463
  %v1226 = vpop.f32.mrb[0].mxu0
  %v1227 = vadd.f32 %v1138, %v1226
  %v1228 = vpop.f32.mrb[0].mxu0
  %v1229 = vpop.f32.mrb[0].mxu0
  %v1230 = vadd.f32 %v1141, %v1229
  %v1231 = vpop.f32.mrb[0].mxu0
  %1232 = vmatprep.mubr.bf16.mxu0 %v473
  %1233 = vmatmul.mubr.bf16.gmra.mrb[0].mxu0 %v472
  %v1234 = vpop.f32.mrb[0].mxu0
  %v1235 = vadd.f32 %v1146, %v1234
  %v1236 = vpop.f32.mrb[0].mxu0
  %v1237 = vpop.f32.mrb[0].mxu0
  %v1238 = vadd.f32 %v1149, %v1237
  %v1239 = vpop.f32.mrb[0].mxu0
  %1240 = vmatprep.mubr.bf16.mxu0 %v482
  %1241 = vmatmul.mubr.bf16.gmra.mrb[0].mxu0 %v481
  %v1242 = vpop.f32.mrb[0].mxu0
  %v1243 = vadd.f32 %v1154, %v1242
  %v1244 = vpop.f32.mrb[0].mxu0
  %v1245 = vpop.f32.mrb[0].mxu0
  %v1246 = vadd.f32 %v1157, %v1245
  %v1247 = vpop.f32.mrb[0].mxu0
  %1248 = vmatprep.mubr.bf16.mxu0 %v491
  %1249 = vmatmul.mubr.bf16.gmra.mrb[0].mxu0 %v490
  %v1250 = vpop.f32.mrb[0].mxu0
  %v1251 = vadd.f32 %v1162, %v1250
  %v1252 = vpop.f32.mrb[0].mxu0
  %v1253 = vpop.f32.mrb[0].mxu0
  %v1254 = vadd.f32 %v1165, %v1253
  %v1255 = vpop.f32.mrb[0].mxu0
  %1256 = vdwg.mxu0
  %1257 = vmatprep.subr.bf16.mxu0 0
  %1258 = vmatpush1.bf16.msra.mxu0 %v894
  %1259 = vmatprep.subr.bf16.mxu0 0
  %1260 = vmatpush1.bf16.msra.mxu0 %v895
  %1261 = vmatprep.subr.bf16.mxu0 0
  %1262 = vmatpush1.bf16.msra.mxu0 %v896
  %1263 = vmatprep.subr.bf16.mxu0 0
  %1264 = vmatpush1.bf16.msra.mxu0 %v897
  %1265 = vmatprep.subr.bf16.mxu0 0
  %1266 = vmatpush1.bf16.msra.mxu0 %v898
  %1267 = vmatprep.subr.bf16.mxu0 0
  %1268 = vmatpush1.bf16.msra.mxu0 %v899
  %1269 = vmatprep.subr.bf16.mxu0 0
  %1270 = vmatpush1.bf16.msra.mxu0 %v900
  %1271 = vmatprep.subr.bf16.mxu0 0
  %1272 = vmatpush1.bf16.msra.mxu0 %v901
  %1273 = vmatprep.subr.bf16.mxu0 0
  %1274 = vmatpush1.bf16.msra.mxu0 %v902
  %1275 = vmatprep.subr.bf16.mxu0 0
  %1276 = vmatpush1.bf16.msra.mxu0 %v903
  %1277 = vmatprep.subr.bf16.mxu0 0
  %1278 = vmatpush1.bf16.msra.mxu0 %v904
  %1279 = vmatprep.subr.bf16.mxu0 0
  %1280 = vmatpush1.bf16.msra.mxu0 %v905
  %1281 = vmatprep.subr.bf16.mxu0 0
  %1282 = vmatpush1.bf16.msra.mxu0 %v906
  %1283 = vmatprep.subr.bf16.mxu0 0
  %1284 = vmatpush1.bf16.msra.mxu0 %v907
  %1285 = vmatprep.subr.bf16.mxu0 0
  %1286 = vmatpush1.bf16.msra.mxu0 %v908
  %1287 = vmatprep.subr.bf16.mxu0 0
  %1288 = vmatpush1.bf16.msra.mxu0 %v909
  %1289 = vmatprep.mubr.bf16.mxu0 %v439
  %1290 = vmatmul.mubr.bf16.gmra.mrb[0].mxu0 %v438
  %v1291 = vpop.f32.mrb[0].mxu0
  %v1292 = vadd.f32 %v1203, %v1291
  %v1293 = vpop.f32.mrb[0].mxu0
  %v1294 = vpop.f32.mrb[0].mxu0
  %v1295 = vadd.f32 %v1206, %v1294
  %v1296 = vpop.f32.mrb[0].mxu0
  %1297 = vmatprep.mubr.bf16.mxu0 %v448
  %1298 = vmatmul.mubr.bf16.gmra.mrb[0].mxu0 %v447
  %v1299 = vpop.f32.mrb[0].mxu0
  %v1300 = vadd.f32 %v1211, %v1299
  %v1301 = vpop.f32.mrb[0].mxu0
  %v1302 = vpop.f32.mrb[0].mxu0
  %v1303 = vadd.f32 %v1214, %v1302
  %v1304 = vpop.f32.mrb[0].mxu0
  %1305 = vmatprep.mubr.bf16.mxu0 %v457
  %1306 = vmatmul.mubr.bf16.gmra.mrb[0].mxu0 %v456
  %v1307 = vpop.f32.mrb[0].mxu0
  %v1308 = vadd.f32 %v1219, %v1307
  %v1309 = vpop.f32.mrb[0].mxu0
  %v1310 = vpop.f32.mrb[0].mxu0
  %v1311 = vadd.f32 %v1222, %v1310
  %v1312 = vpop.f32.mrb[0].mxu0
  %1313 = vmatprep.mubr.bf16.mxu0 %v466
  %1314 = vmatmul.mubr.bf16.gmra.mrb[0].mxu0 %v465
  %v1315 = vpop.f32.mrb[0].mxu0
  %v1316 = vadd.f32 %v1227, %v1315
  %v1317 = vpop.f32.mrb[0].mxu0
  %v1318 = vpop.f32.mrb[0].mxu0
  %v1319 = vadd.f32 %v1230, %v1318
  %v1320 = vpop.f32.mrb[0].mxu0
  %1321 = vmatprep.mubr.bf16.mxu0 %v475
  %1322 = vmatmul.mubr.bf16.gmra.mrb[0].mxu0 %v474
  %v1323 = vpop.f32.mrb[0].mxu0
  %v1324 = vadd.f32 %v1235, %v1323
  %v1325 = vpop.f32.mrb[0].mxu0
  %v1326 = vpop.f32.mrb[0].mxu0
  %v1327 = vadd.f32 %v1238, %v1326
  %v1328 = vpop.f32.mrb[0].mxu0
  %1329 = vmatprep.mubr.bf16.mxu0 %v484
  %1330 = vmatmul.mubr.bf16.gmra.mrb[0].mxu0 %v483
  %v1331 = vpop.f32.mrb[0].mxu0
  %v1332 = vadd.f32 %v1243, %v1331
  %v1333 = vpop.f32.mrb[0].mxu0
  %v1334 = vpop.f32.mrb[0].mxu0
  %v1335 = vadd.f32 %v1246, %v1334
  %v1336 = vpop.f32.mrb[0].mxu0
  %1337 = vmatprep.mubr.bf16.mxu0 %v493
  %1338 = vmatmul.mubr.bf16.gmra.mrb[0].mxu0 %v492
  %v1339 = vpop.f32.mrb[0].mxu0
  %v1340 = vadd.f32 %v1251, %v1339
  %v1341 = vpop.f32.mrb[0].mxu0
  %v1342 = vpop.f32.mrb[0].mxu0
  %v1343 = vadd.f32 %v1254, %v1342
  %v1344 = vpop.f32.mrb[0].mxu0
  %1345 = vdwg.mxu0
  %1346 = vmatprep.subr.bf16.mxu0 0
  %1347 = vmatpush1.bf16.msra.mxu0 %v910
  %1348 = vmatprep.subr.bf16.mxu0 0
  %1349 = vmatpush1.bf16.msra.mxu0 %v911
  %1350 = vmatprep.subr.bf16.mxu0 0
  %1351 = vmatpush1.bf16.msra.mxu0 %v912
  %1352 = vmatprep.subr.bf16.mxu0 0
  %1353 = vmatpush1.bf16.msra.mxu0 %v913
  %1354 = vmatprep.subr.bf16.mxu0 0
  %1355 = vmatpush1.bf16.msra.mxu0 %v914
  %1356 = vmatprep.subr.bf16.mxu0 0
  %1357 = vmatpush1.bf16.msra.mxu0 %v915
  %1358 = vmatprep.subr.bf16.mxu0 0
  %1359 = vmatpush1.bf16.msra.mxu0 %v916
  %1360 = vmatprep.subr.bf16.mxu0 0
  %1361 = vmatpush1.bf16.msra.mxu0 %v917
  %1362 = vmatprep.subr.bf16.mxu0 0
  %1363 = vmatpush1.bf16.msra.mxu0 0
  %1364 = vmatprep.subr.bf16.mxu0 0
  %1365 = vmatpush1.bf16.msra.mxu0 0
  %1366 = vmatprep.subr.bf16.mxu0 0
  %1367 = vmatpush1.bf16.msra.mxu0 0
  %1368 = vmatprep.subr.bf16.mxu0 0
  %1369 = vmatpush1.bf16.msra.mxu0 0
  %1370 = vmatprep.subr.bf16.mxu0 0
  %1371 = vmatpush1.bf16.msra.mxu0 0
  %1372 = vmatprep.subr.bf16.mxu0 0
  %1373 = vmatpush1.bf16.msra.mxu0 0
  %1374 = vmatprep.subr.bf16.mxu0 0
  %1375 = vmatpush1.bf16.msra.mxu0 0
  %1376 = vmatprep.subr.bf16.mxu0 0
  %1377 = vmatpush1.bf16.msra.mxu0 0
  %1378 = vmatprep.mubr.bf16.mxu0 0
  %1379 = vmatmul.mubr.bf16.gmra.mrb[0].mxu0 %v440
  %v1380 = vpop.f32.mrb[0].mxu0
  %v1381 = vadd.f32 %v1292, %v1380
  %v1382 = vpop.f32.mrb[0].mxu0
  %v1383 = vpop.f32.mrb[0].mxu0
  %v1384 = vadd.f32 %v1295, %v1383
  %v1385 = vpop.f32.mrb[0].mxu0
  %1386 = vmatprep.mubr.bf16.mxu0 0
  %1387 = vmatmul.mubr.bf16.gmra.mrb[0].mxu0 %v449
  %v1388 = vpop.f32.mrb[0].mxu0
  %v1389 = vadd.f32 %v1300, %v1388
  %v1390 = vpop.f32.mrb[0].mxu0
  %v1391 = vpop.f32.mrb[0].mxu0
  %v1392 = vadd.f32 %v1303, %v1391
  %v1393 = vpop.f32.mrb[0].mxu0
  %1394 = vmatprep.mubr.bf16.mxu0 0
  %1395 = vmatmul.mubr.bf16.gmra.mrb[0].mxu0 %v458
  %v1396 = vpop.f32.mrb[0].mxu0
  %v1397 = vadd.f32 %v1308, %v1396
  %v1398 = vpop.f32.mrb[0].mxu0
  %v1399 = vpop.f32.mrb[0].mxu0
  %v1400 = vadd.f32 %v1311, %v1399
  %v1401 = vpop.f32.mrb[0].mxu0
  %1402 = vmatprep.mubr.bf16.mxu0 0
  %1403 = vmatmul.mubr.bf16.gmra.mrb[0].mxu0 %v467
  %v1404 = vpop.f32.mrb[0].mxu0
  %v1405 = vadd.f32 %v1316, %v1404
  %v1406 = vpop.f32.mrb[0].mxu0
  %v1407 = vpop.f32.mrb[0].mxu0
  %v1408 = vadd.f32 %v1319, %v1407
  %v1409 = vpop.f32.mrb[0].mxu0
  %1410 = vmatprep.mubr.bf16.mxu0 0
  %1411 = vmatmul.mubr.bf16.gmra.mrb[0].mxu0 %v476
  %v1412 = vpop.f32.mrb[0].mxu0
  %v1413 = vadd.f32 %v1324, %v1412
  %v1414 = vpop.f32.mrb[0].mxu0
  %v1415 = vpop.f32.mrb[0].mxu0
  %v1416 = vadd.f32 %v1327, %v1415
  %v1417 = vpop.f32.mrb[0].mxu0
  %1418 = vmatprep.mubr.bf16.mxu0 0
  %1419 = vmatmul.mubr.bf16.gmra.mrb[0].mxu0 %v485
  %v1420 = vpop.f32.mrb[0].mxu0
  %v1421 = vadd.f32 %v1332, %v1420
  %v1422 = vpop.f32.mrb[0].mxu0
  %v1423 = vpop.f32.mrb[0].mxu0
  %v1424 = vadd.f32 %v1335, %v1423
  %v1425 = vpop.f32.mrb[0].mxu0
  %1426 = vmatprep.mubr.bf16.mxu0 0
  %1427 = vmatmul.mubr.bf16.gmra.mrb[0].mxu0 %v494
  %v1428 = vpop.f32.mrb[0].mxu0
  %v1429 = vadd.f32 %v1340, %v1428
  %v1430 = vpop.f32.mrb[0].mxu0
  %v1431 = vpop.f32.mrb[0].mxu0
  %v1432 = vadd.f32 %v1343, %v1431
  %v1433 = vpop.f32.mrb[0].mxu0
  %1434 = vdwg.mxu0
  %v1435 = vmax.f32 %v1381, 0.0
  %v1436 = vmax.f32 %v1384, 0.0
  %v1437 = vmax.f32 %v1389, 0.0
  %v1438 = vmax.f32 %v1392, 0.0
  %v1439 = vmax.f32 %v1397, 0.0
  %v1440 = vmax.f32 %v1400, 0.0
  %v1441 = vmax.f32 %v1405, 0.0
  %v1442 = vmax.f32 %v1408, 0.0
  %v1443 = vmax.f32 %v1413, 0.0
  %v1444 = vmax.f32 %v1416, 0.0
  %v1445 = vmax.f32 %v1421, 0.0
  %v1446 = vmax.f32 %v1424, 0.0
  %v1447 = vmax.f32 %v1429, 0.0
  %v1448 = vmax.f32 %v1432, 0.0
  %v1449 = vpack.c.bf16 %v1436, %v1435
  %v1450 = vpack.c.bf16 %v1438, %v1437
  %v1451 = vpack.c.bf16 %v1440, %v1439
  %v1452 = vpack.c.bf16 %v1442, %v1441
  %v1453 = vpack.c.bf16 %v1444, %v1443
  %v1454 = vpack.c.bf16 %v1446, %v1445
  %v1455 = vpack.c.bf16 %v1448, %v1447
  %v1463 = vunpack.c.l.b16 %v1449
  %v1464 = vunpack.c.h.b16 %v1449
  %v1465 = vunpack.c.l.b16 %v1450
  %v1466 = vunpack.c.h.b16 %v1450
  %v1467 = vunpack.c.l.b16 %v1451
  %v1468 = vunpack.c.h.b16 %v1451
  %v1469 = vunpack.c.l.b16 %v1452
  %v1470 = vunpack.c.h.b16 %v1452
  %v1471 = vunpack.c.l.b16 %v1453
  %v1472 = vunpack.c.h.b16 %v1453
  %v1473 = vunpack.c.l.b16 %v1454
  %v1474 = vunpack.c.h.b16 %v1454
  %v1475 = vunpack.c.l.b16 %v1455
  %v1476 = vunpack.c.h.b16 %v1455
  %v1477 = vpack.c.b16 %v1463, %v1463
  %v1478 = vpack.c.b16 %v1464, %v1464
  %v1479 = vpack.c.b16 %v1465, %v1465
  %v1480 = vpack.c.b16 %v1466, %v1466
  %v1481 = vpack.c.b16 %v1467, %v1467
  %v1482 = vpack.c.b16 %v1468, %v1468
  %v1483 = vpack.c.b16 %v1469, %v1469
  %v1484 = vpack.c.b16 %v1470, %v1470
  %v1485 = vpack.c.b16 %v1471, %v1471
  %v1486 = vpack.c.b16 %v1472, %v1472
  %v1487 = vpack.c.b16 %v1473, %v1473
  %v1488 = vpack.c.b16 %v1474, %v1474
  %v1489 = vpack.c.b16 %v1475, %v1475
  %v1490 = vpack.c.b16 %v1476, %v1476
  %vm1505 = vcmask 519168
  %1506 = vst.msk [vmem:[%s3] sm:$0xf] %vm1505, %v1477
  %1507 = vst.msk [vmem:[%s3 + $0x4] sm:$0xf] %vm1505, %v1478
  %1508 = vst.msk [vmem:[%s3 + $0x8] sm:$0xf] %vm1505, %v1479
  %1509 = vst.msk [vmem:[%s3 + $0xc] sm:$0xf] %vm1505, %v1480
  %1510 = vst.msk [vmem:[%s3 + $0x10] sm:$0xf] %vm1505, %v1481
  %1511 = vst.msk [vmem:[%s3 + $0x14] sm:$0xf] %vm1505, %v1482
  %1512 = vst.msk [vmem:[%s3 + $0x18] sm:$0xf] %vm1505, %v1483
  %1513 = vst.msk [vmem:[%s3 + $0x1c] sm:$0xf] %vm1505, %v1484
  %1514 = vst.msk [vmem:[%s3 + $0x20] sm:$0xf] %vm1505, %v1485
  %1515 = vst.msk [vmem:[%s3 + $0x24] sm:$0xf] %vm1505, %v1486
  %1516 = vst.msk [vmem:[%s3 + $0x28] sm:$0xf] %vm1505, %v1487
  %1517 = vst.msk [vmem:[%s3 + $0x2c] sm:$0xf] %vm1505, %v1488
  %1518 = vst.msk [vmem:[%s3 + $0x30] sm:$0xf] %vm1505, %v1489
  %1519 = vst.msk [vmem:[%s3 + $0x34] sm:$0xf] %vm1505, %v1490
  // Predicated region
  $region14: #{dueling_dqn_forward.6} parent=0 // pred_check
    _
  $region15: #{dueling_dqn_forward.6} parent=0 // pred_check_branch
    %1521 = sbr.rel (0) target = $region17
  $region16: #{dueling_dqn_forward.6} parent=0 // pred_region
    _
  $region17: #{dueling_dqn_forward.6} parent=0 // pred_fallthru
    _
  // Predicated region
  $region18: #{dueling_dqn_forward.6} parent=0 // pred_check
    _
  $region19: #{dueling_dqn_forward.6} parent=0 // pred_check_branch
    %1523 = sbr.rel (0) target = $region21
  $region20: #{dueling_dqn_forward.6} parent=0 // pred_region
    _
  $region21: #{dueling_dqn_forward.6} parent=0 // pred_fallthru
    _

// kernel: dueling_dqn_forward.7
$region0: #{dueling_dqn_forward.7}
  #allocation0 [shape = 'u32[]', space=smem, size = 0x4, offset = 0x4, fixed_abs, tag = 'smem constant byte address 0x4 - core index']
  #allocation1 [shape = 'u32[144,128]{1,0:T(1,128)}', space=vmem, size = 0x12000, scoped, tag = 'internal scratch']
  #allocation2 [shape = 'f32[16,1024]{1,0:T(8,128)}', space=vmem, size = 0x10000, scoped, tag = 'scratch operand']
  %s0 = inlined_call_operand.vmem [shape: bf16[16,3200], index: 0, kind: input, shape index: {}]
  %s1 = inlined_call_operand.vmem [shape: bf16[3200,1024], index: 1, kind: input, shape index: {}]
  %s2 = inlined_call_operand.vmem [shape: f32[1,1024], index: 2, kind: input, shape index: {}]
  %s3 = inlined_call_operand.vmem [shape: bf16[1024,128], index: 3, kind: input, shape index: {}]
  %s4 = inlined_call_operand.vmem [shape: f32[1,128], index: 4, kind: input, shape index: {}]
  %s5 = inlined_call_operand.vmem [shape: f32[16,128], index: 5, kind: output, shape index: {}]
  %s6 = sld [smem:[#allocation0]]
  $region87: #{dueling_dqn_forward.7} parent=0
    _
  %s8 = ssub.s32 1, %s6
  %s9 = scalar_select 0, %s8, %s6
  $region1: #{dueling_dqn_forward.7} parent=0
    #allocation3 [shape = 'u8[40960]{0}', space=vmem, size = 0xa000, scoped, tag = 'input window, operand 0']
    loop: start=0, step=1, limit=7
    $region2: #{dueling_dqn_forward.7} parent=1 // loop_pre_header
      _
    $region3: #{dueling_dqn_forward.7} parent=1 // loop_header
      %s11 = sphi 0, %s15
      %p12 = scmp.ge.s32.totalorder %s11, 7
      %s18 = sphi 0, %s30
      %s19 = sphi 0, %s26
      %s20 = sphi 0, %s18
      %s21 = sphi 0, %s19
      %s22 = sphi 0, %s20
      %s23 = sphi 0, %s21
      %s35 = sphi 0, %s37
      %s38 = sphi 0, %s35
      %s39 = sphi 0, %s38
      %s55 = sphi 0, %s39
      %s61 = sphi 0, %s63
      %s64 = sphi 0, %s61
      %s65 = sphi 0, %s64
      %s81 = sphi 0, %s65
      %s85 = sphi 0, %s85
      %s87 = sphi 0, %s85
      %s88 = sphi 0, %s87
      %s102 = sphi 0, %s88
      %s106 = sphi 0, %s106
      %s108 = sphi 0, %s106
      %s109 = sphi 0, %s108
      %s123 = sphi 0, %s109
      %s127 = sphi 0, %s127
      %s129 = sphi 0, %s127
      %s130 = sphi 0, %s129
      %s144 = sphi 0, %s130
      %s150 = sphi 0, %s152
      %s153 = sphi 0, %s150
      %s154 = sphi 0, %s153
      %s170 = sphi 0, %s154
    $region4: #{dueling_dqn_forward.7} parent=1 // loop_header_branch
      %14 = sbr.rel (%p12) target = $region8
    $region5: #{dueling_dqn_forward.7} parent=1 // loop_body
      %s16 = ssub.s32 %s11, 1
      %s17 = ssub.s32 %s11, 2
      %s24 = sadd.s32 1, %s19
      %p25 = scmp.ge.s32.totalorder %s24, 5
      %s26 = scalar_select %p25, 0, %s24
      %s27 = sadd.s32 1, %s18
      %s28 = scalar_select %p25, %s27, %s18
      %p29 = scmp.ge.s32.totalorder %s28, 1
      %s30 = scalar_select %p29, 0, %s28
      %s31 = ssub.s32 %s18, %s30
      %s32 = ssub.s32 %s19, %s26
      %s33 = sor.u32 %s31, %s32
      %p34 = scmp.eq.s32.totalorder %s33, 0
      %s36 = sadd.s32 %s35, 1
      %s37 = scalar_select %p34, %s35, %s36
      %p40 = pneg %p34
      %p41 = scmp.eq.s32.totalorder %s11, 4
      %p42 = por %p40, %p41
      %p43 = scmp.ne.s32.totalorder %s35, %s38
      %p44 = scmp.eq.s32.totalorder %s11, 0
      %p45 = por %p43, %p44
      %p46 = scmp.ne.s32.totalorder %s35, %s38
      %p47 = scmp.eq.s32.totalorder %s16, 4
      %p48 = por %p46, %p47
      %p49 = scmp.ne.s32.totalorder %s38, %s39
      %p50 = scmp.eq.s32.totalorder %s16, 0
      %p51 = por %p49, %p50
      %p52 = scmp.ne.s32.totalorder %s38, %s39
      %p53 = scmp.eq.s32.totalorder %s17, 4
      %p54 = por %p52, %p53
      %p56 = scmp.ne.s32.totalorder %s39, %s55
      %p57 = scmp.eq.s32.totalorder %s17, 0
      %p58 = por %p56, %p57
      %s59 = ssub.s32 %s19, %s26
      %p60 = scmp.eq.s32.totalorder %s59, 0
      %s62 = sadd.s32 %s61, 1
      %s63 = scalar_select %p60, %s61, %s62
      %p66 = pneg %p60
      %p67 = scmp.eq.s32.totalorder %s11, 4
      %p68 = por %p66, %p67
      %p69 = scmp.ne.s32.totalorder %s61, %s64
      %p70 = scmp.eq.s32.totalorder %s11, 0
      %p71 = por %p69, %p70
      %p72 = scmp.ne.s32.totalorder %s61, %s64
      %p73 = scmp.eq.s32.totalorder %s16, 4
      %p74 = por %p72, %p73
      %p75 = scmp.ne.s32.totalorder %s64, %s65
      %p76 = scmp.eq.s32.totalorder %s16, 0
      %p77 = por %p75, %p76
      %p78 = scmp.ne.s32.totalorder %s64, %s65
      %p79 = scmp.eq.s32.totalorder %s17, 4
      %p80 = por %p78, %p79
      %p82 = scmp.ne.s32.totalorder %s65, %s81
      %p83 = scmp.eq.s32.totalorder %s17, 0
      %p84 = por %p82, %p83
      %s86 = sadd.s32 %s85, 1
      %p89 = scmp.eq.s32.totalorder %s11, 4
      %p90 = scmp.ne.s32.totalorder %s85, %s87
      %p91 = scmp.eq.s32.totalorder %s11, 0
      %p92 = por %p90, %p91
      %p93 = scmp.ne.s32.totalorder %s85, %s87
      %p94 = scmp.eq.s32.totalorder %s16, 4
      %p95 = por %p93, %p94
      %p96 = scmp.ne.s32.totalorder %s87, %s88
      %p97 = scmp.eq.s32.totalorder %s16, 0
      %p98 = por %p96, %p97
      %p99 = scmp.ne.s32.totalorder %s87, %s88
      %p100 = scmp.eq.s32.totalorder %s17, 4
      %p101 = por %p99, %p100
      %p103 = scmp.ne.s32.totalorder %s88, %s102
      %p104 = scmp.eq.s32.totalorder %s17, 0
      %p105 = por %p103, %p104
      %s107 = sadd.s32 %s106, 1
      %p110 = scmp.eq.s32.totalorder %s11, 4
      %p111 = scmp.ne.s32.totalorder %s106, %s108
      %p112 = scmp.eq.s32.totalorder %s11, 0
      %p113 = por %p111, %p112
      %p114 = scmp.ne.s32.totalorder %s106, %s108
      %p115 = scmp.eq.s32.totalorder %s16, 4
      %p116 = por %p114, %p115
      %p117 = scmp.ne.s32.totalorder %s108, %s109
      %p118 = scmp.eq.s32.totalorder %s16, 0
      %p119 = por %p117, %p118
      %p120 = scmp.ne.s32.totalorder %s108, %s109
      %p121 = scmp.eq.s32.totalorder %s17, 4
      %p122 = por %p120, %p121
      %p124 = scmp.ne.s32.totalorder %s109, %s123
      %p125 = scmp.eq.s32.totalorder %s17, 0
      %p126 = por %p124, %p125
      %s128 = sadd.s32 %s127, 1
      %p131 = scmp.eq.s32.totalorder %s11, 4
      %p132 = scmp.ne.s32.totalorder %s127, %s129
      %p133 = scmp.eq.s32.totalorder %s11, 0
      %p134 = por %p132, %p133
      %p135 = scmp.ne.s32.totalorder %s127, %s129
      %p136 = scmp.eq.s32.totalorder %s16, 4
      %p137 = por %p135, %p136
      %p138 = scmp.ne.s32.totalorder %s129, %s130
      %p139 = scmp.eq.s32.totalorder %s16, 0
      %p140 = por %p138, %p139
      %p141 = scmp.ne.s32.totalorder %s129, %s130
      %p142 = scmp.eq.s32.totalorder %s17, 4
      %p143 = por %p141, %p142
      %p145 = scmp.ne.s32.totalorder %s130, %s144
      %p146 = scmp.eq.s32.totalorder %s17, 0
      %p147 = por %p145, %p146
      %s148 = ssub.s32 %s18, %s30
      %p149 = scmp.eq.s32.totalorder %s148, 0
      %s151 = sadd.s32 %s150, 1
      %s152 = scalar_select %p149, %s150, %s151
      %p155 = pneg %p149
      %p156 = scmp.eq.s32.totalorder %s11, 4
      %p157 = por %p155, %p156
      %p158 = scmp.ne.s32.totalorder %s150, %s153
      %p159 = scmp.eq.s32.totalorder %s11, 0
      %p160 = por %p158, %p159
      %p161 = scmp.ne.s32.totalorder %s150, %s153
      %p162 = scmp.eq.s32.totalorder %s16, 4
      %p163 = por %p161, %p162
      %p164 = scmp.ne.s32.totalorder %s153, %s154
      %p165 = scmp.eq.s32.totalorder %s16, 0
      %p166 = por %p164, %p165
      %p167 = scmp.ne.s32.totalorder %s153, %s154
      %p168 = scmp.eq.s32.totalorder %s17, 4
      %p169 = por %p167, %p168
      %p171 = scmp.ne.s32.totalorder %s154, %s170
      %p172 = scmp.eq.s32.totalorder %s17, 0
      %p173 = por %p171, %p172
      %p174 = scmp.le.s32.totalorder 1, %s11
      %p175 = scmp.lt.s32.totalorder %s11, 6
      %p176 = pnand %p174, %p175
      %p177 = pneg %p176
      // Predicated region
      $region9: #{dueling_dqn_forward.7} parent=5 // pred_check
        _
      $region10: #{dueling_dqn_forward.7} parent=5 // pred_check_branch
        %179 = sbr.rel (%p176) target = $region12
      $region11: #{dueling_dqn_forward.7} parent=5 // pred_region
        %s180 = ssub.s32 %s11, 1
        // Predicated region
        $region13: #{dueling_dqn_forward.7} parent=11 // pred_check
          %p181 = pneg %p98
        $region14: #{dueling_dqn_forward.7} parent=11 // pred_check_branch
          %183 = sbr.rel (%p181) target = $region16
        $region15: #{dueling_dqn_forward.7} parent=11 // pred_region
          _
        $region16: #{dueling_dqn_forward.7} parent=11 // pred_fallthru
          _
        // Predicated region
        $region17: #{dueling_dqn_forward.7} parent=11 // pred_check
          %p184 = pneg %p119
        $region18: #{dueling_dqn_forward.7} parent=11 // pred_check_branch
          %186 = sbr.rel (%p184) target = $region20
        $region19: #{dueling_dqn_forward.7} parent=11 // pred_region
          _
        $region20: #{dueling_dqn_forward.7} parent=11 // pred_fallthru
          _
        // Predicated region
        $region21: #{dueling_dqn_forward.7} parent=11 // pred_check
          %p187 = pneg %p140
        $region22: #{dueling_dqn_forward.7} parent=11 // pred_check_branch
          %189 = sbr.rel (%p187) target = $region24
        $region23: #{dueling_dqn_forward.7} parent=11 // pred_region
          _
        $region24: #{dueling_dqn_forward.7} parent=11 // pred_fallthru
          _
      $region12: #{dueling_dqn_forward.7} parent=5 // pred_fallthru
        _
      %p190 = scmp.lt.s32.totalorder %s11, 5
      // Predicated region
      $region25: #{dueling_dqn_forward.7} parent=5 // pred_check
        %p191 = pneg %p190
      $region26: #{dueling_dqn_forward.7} parent=5 // pred_check_branch
        %193 = sbr.rel (%p191) target = $region28
      $region27: #{dueling_dqn_forward.7} parent=5 // pred_region
        // Predicated region
        $region29: #{dueling_dqn_forward.7} parent=27 // pred_check
          %p194 = pneg %p45
        $region30: #{dueling_dqn_forward.7} parent=27 // pred_check_branch
          %196 = sbr.rel (%p194) target = $region32
        $region31: #{dueling_dqn_forward.7} parent=27 // pred_region
          %s197 = sand.u32 %s35, 1
          %s198 = sand.u32 %s35, 1
          %s199 = smul.addr %s198, 40
          %s200 = scalar_lea.vmem [#allocation3], %s199
          %s201 = smul.u32 2, %s18
          %s202 = smul.u32 5, %s19
          %s203 = smul.addr %s201, 25
          %s204 = sadd.s32 %s202, %s203
          %s205 = smul.addr %s204, 4
          %s206 = scalar_lea.vmem %s0, %s205
          // Predicated region
          $region33: #{dueling_dqn_forward.7} parent=31 // pred_check
            _
          $region34: #{dueling_dqn_forward.7} parent=31 // pred_check_branch
            %208 = sbr.rel (0) target = $region36
          $region35: #{dueling_dqn_forward.7} parent=31 // pred_region
            // Predicated region
            $region37: #{dueling_dqn_forward.7} parent=35 // pred_check
              _
            $region38: #{dueling_dqn_forward.7} parent=35 // pred_check_branch
              %210 = sbr.rel (0) target = $region40
            $region39: #{dueling_dqn_forward.7} parent=35 // pred_region
              %s211 = scalar_lea.vmem %s206, 16
              %s212 = scalar_lea.vmem %s200, 16 [#allocation3]
              loop: start=0, step=1, limit=1
              $region41: #{dueling_dqn_forward.7} parent=39 // loop_pre_header
                _
              $region42: #{dueling_dqn_forward.7} parent=39 // loop_header
                %s214 = sphi 0, %s218
                %p215 = scmp.ge.s32.totalorder %s214, 1
                %s219 = sphi %s206, %s206
                %s220 = sphi %s200, %s200
              $region43: #{dueling_dqn_forward.7} parent=39 // loop_header_branch
                %217 = sbr.rel (%p215) target = $region47
              $region44: #{dueling_dqn_forward.7} parent=39 // loop_body
                %v221 = vld [vmem:[%s219] sm:$0xff]
                %222 = vst [vmem:[%s220] sm:$0xff] %v221
                %v223 = vld [vmem:[%s219 + $0x8] sm:$0xff]
                %224 = vst [vmem:[%s220 + $0x8] sm:$0xff] %v223
                %v225 = vld [vmem:[%s219 + $0x64] sm:$0xff]
                %226 = vst [vmem:[%s220 + $0x14] sm:$0xff] %v225
                %v227 = vld [vmem:[%s219 + $0x6c] sm:$0xff]
                %228 = vst [vmem:[%s220 + $0x1c] sm:$0xff] %v227
              $region45: #{dueling_dqn_forward.7} parent=39 // loop_footer
                %s218 = sadd.s32 1, %s214
              $region46: #{dueling_dqn_forward.7} parent=39 // loop_footer_branch
                %213 = sbr.rel target = $region42
              $region47: #{dueling_dqn_forward.7} parent=39 // loop_exit
                _
              loop: start=0, step=1, limit=1
              $region48: #{dueling_dqn_forward.7} parent=39 // loop_pre_header
                _
              $region49: #{dueling_dqn_forward.7} parent=39 // loop_header
                %s231 = sphi 0, %s235
                %p232 = scmp.ge.s32.totalorder %s231, 1
                %s236 = sphi %s211, %s211
                %s237 = sphi %s212, %s212
              $region50: #{dueling_dqn_forward.7} parent=39 // loop_header_branch
                %234 = sbr.rel (%p232) target = $region54
              $region51: #{dueling_dqn_forward.7} parent=39 // loop_body
                %v238 = vld [vmem:[%s236] sm:$0xf]
                %239 = vst [vmem:[%s237] sm:$0xf] %v238
                %v240 = vld [vmem:[%s236 + $0x64] sm:$0xf]
                %241 = vst [vmem:[%s237 + $0x14] sm:$0xf] %v240
              $region52: #{dueling_dqn_forward.7} parent=39 // loop_footer
                %s235 = sadd.s32 1, %s231
              $region53: #{dueling_dqn_forward.7} parent=39 // loop_footer_branch
                %230 = sbr.rel target = $region49
              $region54: #{dueling_dqn_forward.7} parent=39 // loop_exit
                _
            $region40: #{dueling_dqn_forward.7} parent=35 // pred_fallthru
              _
          $region36: #{dueling_dqn_forward.7} parent=31 // pred_fallthru
            _
          %242 = vnop
        $region32: #{dueling_dqn_forward.7} parent=27 // pred_fallthru
          _
        // Predicated region
        $region55: #{dueling_dqn_forward.7} parent=27 // pred_check
          %p243 = pneg %p71
        $region56: #{dueling_dqn_forward.7} parent=27 // pred_check_branch
          %245 = sbr.rel (%p243) target = $region58
        $region57: #{dueling_dqn_forward.7} parent=27 // pred_region
          %s246 = smul.u32 80, %s19
          %p247 = scmp.lt.s32.totalorder %s246, 399
          %s248 = scalar_select %p247, %s246, 399
          %s249 = smul.addr %s248, 8
          %s250 = smul.addr %s249, 4
          %s251 = scalar_lea.vmem %s1, %s250
          %s252 = smul.u32 80, %s19
        $region58: #{dueling_dqn_forward.7} parent=27 // pred_fallthru
          _
      $region28: #{dueling_dqn_forward.7} parent=5 // pred_fallthru
        _
      %p253 = scmp.le.s32.totalorder 1, %s11
      %p254 = scmp.lt.s32.totalorder %s11, 6
      %p255 = pnand %p253, %p254
      %p256 = pneg %p255
      // Predicated region
      $region59: #{dueling_dqn_forward.7} parent=5 // pred_check
        _
      $region60: #{dueling_dqn_forward.7} parent=5 // pred_check_branch
        %258 = sbr.rel (%p255) target = $region62
      $region61: #{dueling_dqn_forward.7} parent=5 // pred_region
        %s259 = ssub.s32 %s11, 1
        %s260 = sand.u32 %s38, 1
        %s261 = sand.u32 %s38, 1
        %s262 = smul.addr %s261, 40
        %s263 = scalar_lea.vmem [#allocation3], %s262
        // Predicated region
        $region63: #{dueling_dqn_forward.7} parent=61 // pred_check
          %p264 = pneg %p51
        $region64: #{dueling_dqn_forward.7} parent=61 // pred_check_branch
          %266 = sbr.rel (%p264) target = $region66
        $region65: #{dueling_dqn_forward.7} parent=61 // pred_region
          _
        $region66: #{dueling_dqn_forward.7} parent=61 // pred_fallthru
          _
        %s267 = sand.u32 %s38, 1
        %s268 = sand.u32 %s38, 1
        %s269 = smul.addr %s268, 40
        %s270 = scalar_lea.vmem [#allocation3], %s269
        %p271 = pneg %p51
        %p272 = pneg %p48
        %s273 = smul.u32 80, %s21
        %p274 = scmp.lt.s32.totalorder %s273, 399
        %s275 = scalar_select %p274, %s273, 399
        %s276 = smul.addr %s275, 8
        %s277 = smul.addr %s276, 4
        %s278 = scalar_lea.vmem %s1, %s277
        %p279 = pneg %p77
        %p280 = pneg %p74
        %p281 = pneg %p98
        %p282 = pneg %p95
        %p283 = pneg %p119
        %p284 = pneg %p116
        %p285 = pneg %p140
        %p286 = pneg %p137
        %p287 = pneg %p166
        %p288 = pneg %p163
        %s289 = smul.u32 2, %s20
        %p290 = scmp.lt.s32.totalorder %s289, 1
        %s291 = scalar_select %p290, %s289, 1
        %s292 = smul.addr %s291, 8
        %s293 = scalar_lea.vmem %s5, %s292
        %s294 = smul.u32 2, %s20
        %s295 = smul.u32 5, %s21
        %s296 = smul.u32 80, %s21
        %p297 = scmp.lt.s32.totalorder %s296, 399
        %s298 = scalar_select %p297, %s296, 399
        %s299 = smul.addr %s298, 8
        %s300 = smul.addr %s299, 4
        %s301 = scalar_lea.vmem %s1, %s300
        %s302 = smul.u32 80, %s21
        %s303 = smul.u32 2, %s20
        %p304 = scmp.lt.s32.totalorder %s303, 1
        %s305 = scalar_select %p304, %s303, 1
        %s306 = smul.addr %s305, 8
        %s307 = scalar_lea.vmem %s5, %s306
        %s308 = smul.u32 2, %s20
        %p310 = scmp.eq.s32.totalorder %s21, 0
        // Predicated region
        $region67: #{dueling_dqn_forward.7} parent=61 // pred_check
          %p311 = pneg %p310
        $region68: #{dueling_dqn_forward.7} parent=61 // pred_check_branch
          %313 = sbr.rel (%p311) target = $region70
        $region69: #{dueling_dqn_forward.7} parent=61 // pred_region
          %v314 = vld [vmem:[%s2] sm:$0xff]
          %v316 = vlaneseq
          %v317 = vshrl.u32 %v316, 7
          %v318 = vsub.s32 0, %v317
          %v319 = vrot.slane %v314, %v318
          %v320 = vlaneseq
          %v321 = vshrl.u32 %v320, 7
          %v322 = vsub.s32 1, %v321
          %v323 = vrot.slane %v314, %v322
          %v324 = vlaneseq
          %v325 = vshrl.u32 %v324, 7
          %v326 = vsub.s32 2, %v325
          %v327 = vrot.slane %v314, %v326
          %v328 = vlaneseq
          %v329 = vshrl.u32 %v328, 7
          %v330 = vsub.s32 3, %v329
          %v331 = vrot.slane %v314, %v330
          %v332 = vlaneseq
          %v333 = vshrl.u32 %v332, 7
          %v334 = vsub.s32 4, %v333
          %v335 = vrot.slane %v314, %v334
          %v336 = vlaneseq
          %v337 = vshrl.u32 %v336, 7
          %v338 = vsub.s32 5, %v337
          %v339 = vrot.slane %v314, %v338
          %v340 = vlaneseq
          %v341 = vshrl.u32 %v340, 7
          %v342 = vsub.s32 6, %v341
          %v343 = vrot.slane %v314, %v342
          %v344 = vlaneseq
          %v345 = vshrl.u32 %v344, 7
          %v346 = vsub.s32 7, %v345
          %v347 = vrot.slane %v314, %v346
          %356 = vst [vmem:[#allocation2] sm:$0xff] %v319
          %357 = vst [vmem:[#allocation2 + $0x8] sm:$0xff] %v323
          %358 = vst [vmem:[#allocation2 + $0x10] sm:$0xff] %v327
          %359 = vst [vmem:[#allocation2 + $0x18] sm:$0xff] %v331
          %360 = vst [vmem:[#allocation2 + $0x20] sm:$0xff] %v335
          %361 = vst [vmem:[#allocation2 + $0x28] sm:$0xff] %v339
          %362 = vst [vmem:[#allocation2 + $0x30] sm:$0xff] %v343
          %363 = vst [vmem:[#allocation2 + $0x38] sm:$0xff] %v347
          %364 = vst [vmem:[#allocation2 + $0x40] sm:$0xff] %v319
          %365 = vst [vmem:[#allocation2 + $0x48] sm:$0xff] %v323
          %366 = vst [vmem:[#allocation2 + $0x50] sm:$0xff] %v327
          %367 = vst [vmem:[#allocation2 + $0x58] sm:$0xff] %v331
          %368 = vst [vmem:[#allocation2 + $0x60] sm:$0xff] %v335
          %369 = vst [vmem:[#allocation2 + $0x68] sm:$0xff] %v339
          %370 = vst [vmem:[#allocation2 + $0x70] sm:$0xff] %v343
          %371 = vst [vmem:[#allocation2 + $0x78] sm:$0xff] %v347
        $region70: #{dueling_dqn_forward.7} parent=61 // pred_fallthru
          _
        %v372 = vld [vmem:[#allocation2] sm:$0xff]
        %v373 = vld [vmem:[#allocation2 + $0x8] sm:$0xff]
        %v374 = vld [vmem:[#allocation2 + $0x10] sm:$0xff]
        %v375 = vld [vmem:[#allocation2 + $0x18] sm:$0xff]
        %v376 = vld [vmem:[#allocation2 + $0x20] sm:$0xff]
        %v377 = vld [vmem:[#allocation2 + $0x28] sm:$0xff]
        %v378 = vld [vmem:[#allocation2 + $0x30] sm:$0xff]
        %v379 = vld [vmem:[#allocation2 + $0x38] sm:$0xff]
        %v380 = vld [vmem:[#allocation2 + $0x40] sm:$0xff]
        %v381 = vld [vmem:[#allocation2 + $0x48] sm:$0xff]
        %v382 = vld [vmem:[#allocation2 + $0x50] sm:$0xff]
        %v383 = vld [vmem:[#allocation2 + $0x58] sm:$0xff]
        %v384 = vld [vmem:[#allocation2 + $0x60] sm:$0xff]
        %v385 = vld [vmem:[#allocation2 + $0x68] sm:$0xff]
        %v386 = vld [vmem:[#allocation2 + $0x70] sm:$0xff]
        %v387 = vld [vmem:[#allocation2 + $0x78] sm:$0xff]
        %v388 = vld [vmem:[%s263] sm:$0xff]
        %v389 = vld [vmem:[%s263 + $0x8] sm:$0xff]
        %v390 = vld [vmem:[%s263 + $0x10] sm:$0xf]
        %v391 = vld [vmem:[%s263 + $0x14] sm:$0xff]
        %v392 = vld [vmem:[%s263 + $0x1c] sm:$0xff]
        %v393 = vld [vmem:[%s263 + $0x24] sm:$0xf]
        %v394 = vld [vmem:[%s301] sm:$0xff]
        %v395 = vld [vmem:[%s301 + $0x8] sm:$0xff]
        %v396 = vld [vmem:[%s301 + $0x10] sm:$0xff]
        %v397 = vld [vmem:[%s301 + $0x18] sm:$0xff]
        %v398 = vld [vmem:[%s301 + $0x20] sm:$0xff]
        %v399 = vld [vmem:[%s301 + $0x28] sm:$0xff]
        %v400 = vld [vmem:[%s301 + $0x30] sm:$0xff]
        %v401 = vld [vmem:[%s301 + $0x38] sm:$0xff]
        %v402 = vld [vmem:[%s301 + $0x40] sm:$0xff]
        %v403 = vld [vmem:[%s301 + $0x48] sm:$0xff]
        %v404 = vld [vmem:[%s301 + $0x50] sm:$0xff]
        %v405 = vld [vmem:[%s301 + $0x58] sm:$0xff]
        %v406 = vld [vmem:[%s301 + $0x60] sm:$0xff]
        %v407 = vld [vmem:[%s301 + $0x68] sm:$0xff]
        %v408 = vld [vmem:[%s301 + $0x70] sm:$0xff]
        %v409 = vld [vmem:[%s301 + $0x78] sm:$0xff]
        %v410 = vld [vmem:[%s301 + $0x80] sm:$0xff]
        %v411 = vld [vmem:[%s301 + $0x88] sm:$0xff]
        %v412 = vld [vmem:[%s301 + $0x90] sm:$0xff]
        %v413 = vld [vmem:[%s301 + $0x98] sm:$0xff]
        %v414 = vld [vmem:[%s301 + $0xa0] sm:$0xff]
        %v415 = vld [vmem:[%s301 + $0xa8] sm:$0xff]
        %v416 = vld [vmem:[%s301 + $0xb0] sm:$0xff]
        %v417 = vld [vmem:[%s301 + $0xb8] sm:$0xff]
        %v418 = vld [vmem:[%s301 + $0xc0] sm:$0xff]
        %v419 = vld [vmem:[%s301 + $0xc8] sm:$0xff]
        %v420 = vld [vmem:[%s301 + $0xd0] sm:$0xff]
        %v421 = vld [vmem:[%s301 + $0xd8] sm:$0xff]
        %v422 = vld [vmem:[%s301 + $0xe0] sm:$0xff]
        %v423 = vld [vmem:[%s301 + $0xe8] sm:$0xff]
        %v424 = vld [vmem:[%s301 + $0xf0] sm:$0xff]
        %v425 = vld [vmem:[%s301 + $0xf8] sm:$0xff]
        %v426 = vld [vmem:[%s301 + $0x100] sm:$0xff]
        %v427 = vld [vmem:[%s301 + $0x108] sm:$0xff]
        %v428 = vld [vmem:[%s301 + $0x110] sm:$0xff]
        %v429 = vld [vmem:[%s301 + $0x118] sm:$0xff]
        %v430 = vld [vmem:[%s301 + $0x120] sm:$0xff]
        %v431 = vld [vmem:[%s301 + $0x128] sm:$0xff]
        %v432 = vld [vmem:[%s301 + $0x130] sm:$0xff]
        %v433 = vld [vmem:[%s301 + $0x138] sm:$0xff]
        %v434 = vld [vmem:[%s301 + $0x140] sm:$0xff]
        %v435 = vld [vmem:[%s301 + $0x148] sm:$0xff]
        %v436 = vld [vmem:[%s301 + $0x150] sm:$0xff]
        %v437 = vld [vmem:[%s301 + $0x158] sm:$0xff]
        %v438 = vld [vmem:[%s301 + $0x160] sm:$0xff]
        %v439 = vld [vmem:[%s301 + $0x168] sm:$0xff]
        %v440 = vld [vmem:[%s301 + $0x170] sm:$0xff]
        %v441 = vld [vmem:[%s301 + $0x178] sm:$0xff]
        %v442 = vld [vmem:[%s301 + $0x180] sm:$0xff]
        %v443 = vld [vmem:[%s301 + $0x188] sm:$0xff]
        %v444 = vld [vmem:[%s301 + $0x190] sm:$0xff]
        %v445 = vld [vmem:[%s301 + $0x198] sm:$0xff]
        %v446 = vld [vmem:[%s301 + $0x1a0] sm:$0xff]
        %v447 = vld [vmem:[%s301 + $0x1a8] sm:$0xff]
        %v448 = vld [vmem:[%s301 + $0x1b0] sm:$0xff]
        %v449 = vld [vmem:[%s301 + $0x1b8] sm:$0xff]
        %v450 = vld [vmem:[%s301 + $0x1c0] sm:$0xff]
        %v451 = vld [vmem:[%s301 + $0x1c8] sm:$0xff]
        %v452 = vld [vmem:[%s301 + $0x1d0] sm:$0xff]
        %v453 = vld [vmem:[%s301 + $0x1d8] sm:$0xff]
        %v454 = vld [vmem:[%s301 + $0x1e0] sm:$0xff]
        %v455 = vld [vmem:[%s301 + $0x1e8] sm:$0xff]
        %v456 = vld [vmem:[%s301 + $0x1f0] sm:$0xff]
        %v457 = vld [vmem:[%s301 + $0x1f8] sm:$0xff]
        %v458 = vld [vmem:[%s301 + $0x200] sm:$0xff]
        %v459 = vld [vmem:[%s301 + $0x208] sm:$0xff]
        %v460 = vld [vmem:[%s301 + $0x210] sm:$0xff]
        %v461 = vld [vmem:[%s301 + $0x218] sm:$0xff]
        %v462 = vld [vmem:[%s301 + $0x220] sm:$0xff]
        %v463 = vld [vmem:[%s301 + $0x228] sm:$0xff]
        %v464 = vld [vmem:[%s301 + $0x230] sm:$0xff]
        %v465 = vld [vmem:[%s301 + $0x238] sm:$0xff]
        %v466 = vld [vmem:[%s301 + $0x240] sm:$0xff]
        %v467 = vld [vmem:[%s301 + $0x248] sm:$0xff]
        %v468 = vld [vmem:[%s301 + $0x250] sm:$0xff]
        %v469 = vld [vmem:[%s301 + $0x258] sm:$0xff]
        %v470 = vld [vmem:[%s301 + $0x260] sm:$0xff]
        %v471 = vld [vmem:[%s301 + $0x268] sm:$0xff]
        %v472 = vld [vmem:[%s301 + $0x270] sm:$0xff]
        %v473 = vld [vmem:[%s301 + $0x278] sm:$0xff]
        %v474 = vld [vmem:[%s301 + $0x280] sm:$0xff]
        %v475 = vld [vmem:[%s301 + $0x288] sm:$0xff]
        %v476 = vld [vmem:[%s301 + $0x290] sm:$0xff]
        %v477 = vld [vmem:[%s301 + $0x298] sm:$0xff]
        %v478 = vld [vmem:[%s301 + $0x2a0] sm:$0xff]
        %v479 = vld [vmem:[%s301 + $0x2a8] sm:$0xff]
        %v480 = vld [vmem:[%s301 + $0x2b0] sm:$0xff]
        %v481 = vld [vmem:[%s301 + $0x2b8] sm:$0xff]
        %v482 = vld [vmem:[%s301 + $0x2c0] sm:$0xff]
        %v483 = vld [vmem:[%s301 + $0x2c8] sm:$0xff]
        %v484 = vld [vmem:[%s301 + $0x2d0] sm:$0xff]
        %v485 = vld [vmem:[%s301 + $0x2d8] sm:$0xff]
        %v486 = vld [vmem:[%s301 + $0x2e0] sm:$0xff]
        %v487 = vld [vmem:[%s301 + $0x2e8] sm:$0xff]
        %v488 = vld [vmem:[%s301 + $0x2f0] sm:$0xff]
        %v489 = vld [vmem:[%s301 + $0x2f8] sm:$0xff]
        %v490 = vld [vmem:[%s301 + $0x300] sm:$0xff]
        %v491 = vld [vmem:[%s301 + $0x308] sm:$0xff]
        %v492 = vld [vmem:[%s301 + $0x310] sm:$0xff]
        %v493 = vld [vmem:[%s301 + $0x318] sm:$0xff]
        %v494 = vld [vmem:[%s301 + $0x320] sm:$0xff]
        %v495 = vld [vmem:[%s301 + $0x328] sm:$0xff]
        %v496 = vld [vmem:[%s301 + $0x330] sm:$0xff]
        %v497 = vld [vmem:[%s301 + $0x338] sm:$0xff]
        %v498 = vld [vmem:[%s301 + $0x340] sm:$0xff]
        %v499 = vld [vmem:[%s301 + $0x348] sm:$0xff]
        %v500 = vld [vmem:[%s301 + $0x350] sm:$0xff]
        %v501 = vld [vmem:[%s301 + $0x358] sm:$0xff]
        %v502 = vld [vmem:[%s301 + $0x360] sm:$0xff]
        %v503 = vld [vmem:[%s301 + $0x368] sm:$0xff]
        %v504 = vld [vmem:[%s301 + $0x370] sm:$0xff]
        %v505 = vld [vmem:[%s301 + $0x378] sm:$0xff]
        %v506 = vld [vmem:[%s301 + $0x380] sm:$0xff]
        %v507 = vld [vmem:[%s301 + $0x388] sm:$0xff]
        %v508 = vld [vmem:[%s301 + $0x390] sm:$0xff]
        %v509 = vld [vmem:[%s301 + $0x398] sm:$0xff]
        %v510 = vld [vmem:[%s301 + $0x3a0] sm:$0xff]
        %v511 = vld [vmem:[%s301 + $0x3a8] sm:$0xff]
        %v512 = vld [vmem:[%s301 + $0x3b0] sm:$0xff]
        %v513 = vld [vmem:[%s301 + $0x3b8] sm:$0xff]
        %v514 = vld [vmem:[%s301 + $0x3c0] sm:$0xff]
        %v515 = vld [vmem:[%s301 + $0x3c8] sm:$0xff]
        %v516 = vld [vmem:[%s301 + $0x3d0] sm:$0xff]
        %v517 = vld [vmem:[%s301 + $0x3d8] sm:$0xff]
        %v518 = vld [vmem:[%s301 + $0x3e0] sm:$0xff]
        %v519 = vld [vmem:[%s301 + $0x3e8] sm:$0xff]
        %v520 = vld [vmem:[%s301 + $0x3f0] sm:$0xff]
        %v521 = vld [vmem:[%s301 + $0x3f8] sm:$0xff]
        %v522 = vld [vmem:[%s301 + $0x400] sm:$0xff]
        %v523 = vld [vmem:[%s301 + $0x408] sm:$0xff]
        %v524 = vld [vmem:[%s301 + $0x410] sm:$0xff]
        %v525 = vld [vmem:[%s301 + $0x418] sm:$0xff]
        %v526 = vld [vmem:[%s301 + $0x420] sm:$0xff]
        %v527 = vld [vmem:[%s301 + $0x428] sm:$0xff]
        %v528 = vld [vmem:[%s301 + $0x430] sm:$0xff]
        %v529 = vld [vmem:[%s301 + $0x438] sm:$0xff]
        %v530 = vld [vmem:[%s301 + $0x440] sm:$0xff]
        %v531 = vld [vmem:[%s301 + $0x448] sm:$0xff]
        %v532 = vld [vmem:[%s301 + $0x450] sm:$0xff]
        %v533 = vld [vmem:[%s301 + $0x458] sm:$0xff]
        %v534 = vld [vmem:[%s301 + $0x460] sm:$0xff]
        %v535 = vld [vmem:[%s301 + $0x468] sm:$0xff]
        %v536 = vld [vmem:[%s301 + $0x470] sm:$0xff]
        %v537 = vld [vmem:[%s301 + $0x478] sm:$0xff]
        %v538 = vld [vmem:[%s301 + $0x480] sm:$0xff]
        %v539 = vld [vmem:[%s301 + $0x488] sm:$0xff]
        %v540 = vld [vmem:[%s301 + $0x490] sm:$0xff]
        %v541 = vld [vmem:[%s301 + $0x498] sm:$0xff]
        %v542 = vld [vmem:[%s301 + $0x4a0] sm:$0xff]
        %v543 = vld [vmem:[%s301 + $0x4a8] sm:$0xff]
        %v544 = vld [vmem:[%s301 + $0x4b0] sm:$0xff]
        %v545 = vld [vmem:[%s301 + $0x4b8] sm:$0xff]
        %v546 = vld [vmem:[%s301 + $0x4c0] sm:$0xff]
        %v547 = vld [vmem:[%s301 + $0x4c8] sm:$0xff]
        %v548 = vld [vmem:[%s301 + $0x4d0] sm:$0xff]
        %v549 = vld [vmem:[%s301 + $0x4d8] sm:$0xff]
        %v550 = vld [vmem:[%s301 + $0x4e0] sm:$0xff]
        %v551 = vld [vmem:[%s301 + $0x4e8] sm:$0xff]
        %v552 = vld [vmem:[%s301 + $0x4f0] sm:$0xff]
        %v553 = vld [vmem:[%s301 + $0x4f8] sm:$0xff]
        %v554 = vld [vmem:[%s301 + $0x500] sm:$0xff]
        %v555 = vld [vmem:[%s301 + $0x508] sm:$0xff]
        %v556 = vld [vmem:[%s301 + $0x510] sm:$0xff]
        %v557 = vld [vmem:[%s301 + $0x518] sm:$0xff]
        %v558 = vld [vmem:[%s301 + $0x520] sm:$0xff]
        %v559 = vld [vmem:[%s301 + $0x528] sm:$0xff]
        %v560 = vld [vmem:[%s301 + $0x530] sm:$0xff]
        %v561 = vld [vmem:[%s301 + $0x538] sm:$0xff]
        %v562 = vld [vmem:[%s301 + $0x540] sm:$0xff]
        %v563 = vld [vmem:[%s301 + $0x548] sm:$0xff]
        %v564 = vld [vmem:[%s301 + $0x550] sm:$0xff]
        %v565 = vld [vmem:[%s301 + $0x558] sm:$0xff]
        %v566 = vld [vmem:[%s301 + $0x560] sm:$0xff]
        %v567 = vld [vmem:[%s301 + $0x568] sm:$0xff]
        %v568 = vld [vmem:[%s301 + $0x570] sm:$0xff]
        %v569 = vld [vmem:[%s301 + $0x578] sm:$0xff]
        %v570 = vld [vmem:[%s301 + $0x580] sm:$0xff]
        %v571 = vld [vmem:[%s301 + $0x588] sm:$0xff]
        %v572 = vld [vmem:[%s301 + $0x590] sm:$0xff]
        %v573 = vld [vmem:[%s301 + $0x598] sm:$0xff]
        %v574 = vld [vmem:[%s301 + $0x5a0] sm:$0xff]
        %v575 = vld [vmem:[%s301 + $0x5a8] sm:$0xff]
        %v576 = vld [vmem:[%s301 + $0x5b0] sm:$0xff]
        %v577 = vld [vmem:[%s301 + $0x5b8] sm:$0xff]
        %v578 = vld [vmem:[%s301 + $0x5c0] sm:$0xff]
        %v579 = vld [vmem:[%s301 + $0x5c8] sm:$0xff]
        %v580 = vld [vmem:[%s301 + $0x5d0] sm:$0xff]
        %v581 = vld [vmem:[%s301 + $0x5d8] sm:$0xff]
        %v582 = vld [vmem:[%s301 + $0x5e0] sm:$0xff]
        %v583 = vld [vmem:[%s301 + $0x5e8] sm:$0xff]
        %v584 = vld [vmem:[%s301 + $0x5f0] sm:$0xff]
        %v585 = vld [vmem:[%s301 + $0x5f8] sm:$0xff]
        %v586 = vld [vmem:[%s301 + $0x600] sm:$0xff]
        %v587 = vld [vmem:[%s301 + $0x608] sm:$0xff]
        %v588 = vld [vmem:[%s301 + $0x610] sm:$0xff]
        %v589 = vld [vmem:[%s301 + $0x618] sm:$0xff]
        %v590 = vld [vmem:[%s301 + $0x620] sm:$0xff]
        %v591 = vld [vmem:[%s301 + $0x628] sm:$0xff]
        %v592 = vld [vmem:[%s301 + $0x630] sm:$0xff]
        %v593 = vld [vmem:[%s301 + $0x638] sm:$0xff]
        %v594 = vld [vmem:[%s301 + $0x640] sm:$0xff]
        %v595 = vld [vmem:[%s301 + $0x648] sm:$0xff]
        %v596 = vld [vmem:[%s301 + $0x650] sm:$0xff]
        %v597 = vld [vmem:[%s301 + $0x658] sm:$0xff]
        %v598 = vld [vmem:[%s301 + $0x660] sm:$0xff]
        %v599 = vld [vmem:[%s301 + $0x668] sm:$0xff]
        %v600 = vld [vmem:[%s301 + $0x670] sm:$0xff]
        %v601 = vld [vmem:[%s301 + $0x678] sm:$0xff]
        %v602 = vld [vmem:[%s301 + $0x680] sm:$0xff]
        %v603 = vld [vmem:[%s301 + $0x688] sm:$0xff]
        %v604 = vld [vmem:[%s301 + $0x690] sm:$0xff]
        %v605 = vld [vmem:[%s301 + $0x698] sm:$0xff]
        %v606 = vld [vmem:[%s301 + $0x6a0] sm:$0xff]
        %v607 = vld [vmem:[%s301 + $0x6a8] sm:$0xff]
        %v608 = vld [vmem:[%s301 + $0x6b0] sm:$0xff]
        %v609 = vld [vmem:[%s301 + $0x6b8] sm:$0xff]
        %v610 = vld [vmem:[%s301 + $0x6c0] sm:$0xff]
        %v611 = vld [vmem:[%s301 + $0x6c8] sm:$0xff]
        %v612 = vld [vmem:[%s301 + $0x6d0] sm:$0xff]
        %v613 = vld [vmem:[%s301 + $0x6d8] sm:$0xff]
        %v614 = vld [vmem:[%s301 + $0x6e0] sm:$0xff]
        %v615 = vld [vmem:[%s301 + $0x6e8] sm:$0xff]
        %v616 = vld [vmem:[%s301 + $0x6f0] sm:$0xff]
        %v617 = vld [vmem:[%s301 + $0x6f8] sm:$0xff]
        %v618 = vld [vmem:[%s301 + $0x700] sm:$0xff]
        %v619 = vld [vmem:[%s301 + $0x708] sm:$0xff]
        %v620 = vld [vmem:[%s301 + $0x710] sm:$0xff]
        %v621 = vld [vmem:[%s301 + $0x718] sm:$0xff]
        %v622 = vld [vmem:[%s301 + $0x720] sm:$0xff]
        %v623 = vld [vmem:[%s301 + $0x728] sm:$0xff]
        %v624 = vld [vmem:[%s301 + $0x730] sm:$0xff]
        %v625 = vld [vmem:[%s301 + $0x738] sm:$0xff]
        %v626 = vld [vmem:[%s301 + $0x740] sm:$0xff]
        %v627 = vld [vmem:[%s301 + $0x748] sm:$0xff]
        %v628 = vld [vmem:[%s301 + $0x750] sm:$0xff]
        %v629 = vld [vmem:[%s301 + $0x758] sm:$0xff]
        %v630 = vld [vmem:[%s301 + $0x760] sm:$0xff]
        %v631 = vld [vmem:[%s301 + $0x768] sm:$0xff]
        %v632 = vld [vmem:[%s301 + $0x770] sm:$0xff]
        %v633 = vld [vmem:[%s301 + $0x778] sm:$0xff]
        %v634 = vld [vmem:[%s301 + $0x780] sm:$0xff]
        %v635 = vld [vmem:[%s301 + $0x788] sm:$0xff]
        %v636 = vld [vmem:[%s301 + $0x790] sm:$0xff]
        %v637 = vld [vmem:[%s301 + $0x798] sm:$0xff]
        %v638 = vld [vmem:[%s301 + $0x7a0] sm:$0xff]
        %v639 = vld [vmem:[%s301 + $0x7a8] sm:$0xff]
        %v640 = vld [vmem:[%s301 + $0x7b0] sm:$0xff]
        %v641 = vld [vmem:[%s301 + $0x7b8] sm:$0xff]
        %v642 = vld [vmem:[%s301 + $0x7c0] sm:$0xff]
        %v643 = vld [vmem:[%s301 + $0x7c8] sm:$0xff]
        %v644 = vld [vmem:[%s301 + $0x7d0] sm:$0xff]
        %v645 = vld [vmem:[%s301 + $0x7d8] sm:$0xff]
        %v646 = vld [vmem:[%s301 + $0x7e0] sm:$0xff]
        %v647 = vld [vmem:[%s301 + $0x7e8] sm:$0xff]
        %v648 = vld [vmem:[%s301 + $0x7f0] sm:$0xff]
        %v649 = vld [vmem:[%s301 + $0x7f8] sm:$0xff]
        %v650 = vld [vmem:[%s301 + $0x800] sm:$0xff]
        %v651 = vld [vmem:[%s301 + $0x808] sm:$0xff]
        %v652 = vld [vmem:[%s301 + $0x810] sm:$0xff]
        %v653 = vld [vmem:[%s301 + $0x818] sm:$0xff]
        %v654 = vld [vmem:[%s301 + $0x820] sm:$0xff]
        %v655 = vld [vmem:[%s301 + $0x828] sm:$0xff]
        %v656 = vld [vmem:[%s301 + $0x830] sm:$0xff]
        %v657 = vld [vmem:[%s301 + $0x838] sm:$0xff]
        %v658 = vld [vmem:[%s301 + $0x840] sm:$0xff]
        %v659 = vld [vmem:[%s301 + $0x848] sm:$0xff]
        %v660 = vld [vmem:[%s301 + $0x850] sm:$0xff]
        %v661 = vld [vmem:[%s301 + $0x858] sm:$0xff]
        %v662 = vld [vmem:[%s301 + $0x860] sm:$0xff]
        %v663 = vld [vmem:[%s301 + $0x868] sm:$0xff]
        %v664 = vld [vmem:[%s301 + $0x870] sm:$0xff]
        %v665 = vld [vmem:[%s301 + $0x878] sm:$0xff]
        %v666 = vld [vmem:[%s301 + $0x880] sm:$0xff]
        %v667 = vld [vmem:[%s301 + $0x888] sm:$0xff]
        %v668 = vld [vmem:[%s301 + $0x890] sm:$0xff]
        %v669 = vld [vmem:[%s301 + $0x898] sm:$0xff]
        %v670 = vld [vmem:[%s301 + $0x8a0] sm:$0xff]
        %v671 = vld [vmem:[%s301 + $0x8a8] sm:$0xff]
        %v672 = vld [vmem:[%s301 + $0x8b0] sm:$0xff]
        %v673 = vld [vmem:[%s301 + $0x8b8] sm:$0xff]
        %v674 = vld [vmem:[%s301 + $0x8c0] sm:$0xff]
        %v675 = vld [vmem:[%s301 + $0x8c8] sm:$0xff]
        %v676 = vld [vmem:[%s301 + $0x8d0] sm:$0xff]
        %v677 = vld [vmem:[%s301 + $0x8d8] sm:$0xff]
        %v678 = vld [vmem:[%s301 + $0x8e0] sm:$0xff]
        %v679 = vld [vmem:[%s301 + $0x8e8] sm:$0xff]
        %v680 = vld [vmem:[%s301 + $0x8f0] sm:$0xff]
        %v681 = vld [vmem:[%s301 + $0x8f8] sm:$0xff]
        %v682 = vld [vmem:[%s301 + $0x900] sm:$0xff]
        %v683 = vld [vmem:[%s301 + $0x908] sm:$0xff]
        %v684 = vld [vmem:[%s301 + $0x910] sm:$0xff]
        %v685 = vld [vmem:[%s301 + $0x918] sm:$0xff]
        %v686 = vld [vmem:[%s301 + $0x920] sm:$0xff]
        %v687 = vld [vmem:[%s301 + $0x928] sm:$0xff]
        %v688 = vld [vmem:[%s301 + $0x930] sm:$0xff]
        %v689 = vld [vmem:[%s301 + $0x938] sm:$0xff]
        %v690 = vld [vmem:[%s301 + $0x940] sm:$0xff]
        %v691 = vld [vmem:[%s301 + $0x948] sm:$0xff]
        %v692 = vld [vmem:[%s301 + $0x950] sm:$0xff]
        %v693 = vld [vmem:[%s301 + $0x958] sm:$0xff]
        %v694 = vld [vmem:[%s301 + $0x960] sm:$0xff]
        %v695 = vld [vmem:[%s301 + $0x968] sm:$0xff]
        %v696 = vld [vmem:[%s301 + $0x970] sm:$0xff]
        %v697 = vld [vmem:[%s301 + $0x978] sm:$0xff]
        %v698 = vld [vmem:[%s301 + $0x980] sm:$0xff]
        %v699 = vld [vmem:[%s301 + $0x988] sm:$0xff]
        %v700 = vld [vmem:[%s301 + $0x990] sm:$0xff]
        %v701 = vld [vmem:[%s301 + $0x998] sm:$0xff]
        %v702 = vld [vmem:[%s301 + $0x9a0] sm:$0xff]
        %v703 = vld [vmem:[%s301 + $0x9a8] sm:$0xff]
        %v704 = vld [vmem:[%s301 + $0x9b0] sm:$0xff]
        %v705 = vld [vmem:[%s301 + $0x9b8] sm:$0xff]
        %v706 = vld [vmem:[%s301 + $0x9c0] sm:$0xff]
        %v707 = vld [vmem:[%s301 + $0x9c8] sm:$0xff]
        %v708 = vld [vmem:[%s301 + $0x9d0] sm:$0xff]
        %v709 = vld [vmem:[%s301 + $0x9d8] sm:$0xff]
        %v710 = vld [vmem:[%s301 + $0x9e0] sm:$0xff]
        %v711 = vld [vmem:[%s301 + $0x9e8] sm:$0xff]
        %v712 = vld [vmem:[%s301 + $0x9f0] sm:$0xff]
        %v713 = vld [vmem:[%s301 + $0x9f8] sm:$0xff]
        %v720 = vunpack.c.l.b16 %v388
        %v721 = vunpack.c.h.b16 %v388
        %v722 = vunpack.c.l.b16 %v389
        %v723 = vunpack.c.h.b16 %v389
        %v724 = vunpack.c.l.b16 %v390
        %v725 = vunpack.c.l.b16 %v391
        %v726 = vunpack.c.h.b16 %v391
        %v727 = vunpack.c.l.b16 %v392
        %v728 = vunpack.c.h.b16 %v392
        %v729 = vunpack.c.l.b16 %v393
        %v730 = vpack.c.b16 %v725, %v720
        %v731 = vpack.c.b16 %v726, %v721
        %v732 = vpack.c.b16 %v727, %v722
        %v733 = vpack.c.b16 %v728, %v723
        %v734 = vpack.c.b16 %v729, %v724
        %v1060 = vunpack.c.l.b16 %v394
        %v1061 = vunpack.c.h.b16 %v394
        %v1062 = vunpack.c.l.b16 %v395
        %v1063 = vunpack.c.h.b16 %v395
        %v1064 = vunpack.c.l.b16 %v396
        %v1065 = vunpack.c.h.b16 %v396
        %v1066 = vunpack.c.l.b16 %v397
        %v1067 = vunpack.c.h.b16 %v397
        %v1068 = vunpack.c.l.b16 %v398
        %v1069 = vunpack.c.h.b16 %v398
        %v1070 = vunpack.c.l.b16 %v399
        %v1071 = vunpack.c.h.b16 %v399
        %v1072 = vunpack.c.l.b16 %v400
        %v1073 = vunpack.c.h.b16 %v400
        %v1074 = vunpack.c.l.b16 %v401
        %v1075 = vunpack.c.h.b16 %v401
        %v1076 = vunpack.c.l.b16 %v402
        %v1077 = vunpack.c.h.b16 %v402
        %v1078 = vunpack.c.l.b16 %v403
        %v1079 = vunpack.c.h.b16 %v403
        %v1080 = vunpack.c.l.b16 %v404
        %v1081 = vunpack.c.h.b16 %v404
        %v1082 = vunpack.c.l.b16 %v405
        %v1083 = vunpack.c.h.b16 %v405
        %v1084 = vunpack.c.l.b16 %v406
        %v1085 = vunpack.c.h.b16 %v406
        %v1086 = vunpack.c.l.b16 %v407
        %v1087 = vunpack.c.h.b16 %v407
        %v1088 = vunpack.c.l.b16 %v408
        %v1089 = vunpack.c.h.b16 %v408
        %v1090 = vunpack.c.l.b16 %v409
        %v1091 = vunpack.c.h.b16 %v409
        %v1092 = vunpack.c.l.b16 %v410
        %v1093 = vunpack.c.h.b16 %v410
        %v1094 = vunpack.c.l.b16 %v411
        %v1095 = vunpack.c.h.b16 %v411
        %v1096 = vunpack.c.l.b16 %v412
        %v1097 = vunpack.c.h.b16 %v412
        %v1098 = vunpack.c.l.b16 %v413
        %v1099 = vunpack.c.h.b16 %v413
        %v1100 = vunpack.c.l.b16 %v414
        %v1101 = vunpack.c.h.b16 %v414
        %v1102 = vunpack.c.l.b16 %v415
        %v1103 = vunpack.c.h.b16 %v415
        %v1104 = vunpack.c.l.b16 %v416
        %v1105 = vunpack.c.h.b16 %v416
        %v1106 = vunpack.c.l.b16 %v417
        %v1107 = vunpack.c.h.b16 %v417
        %v1108 = vunpack.c.l.b16 %v418
        %v1109 = vunpack.c.h.b16 %v418
        %v1110 = vunpack.c.l.b16 %v419
        %v1111 = vunpack.c.h.b16 %v419
        %v1112 = vunpack.c.l.b16 %v420
        %v1113 = vunpack.c.h.b16 %v420
        %v1114 = vunpack.c.l.b16 %v421
        %v1115 = vunpack.c.h.b16 %v421
        %v1116 = vunpack.c.l.b16 %v422
        %v1117 = vunpack.c.h.b16 %v422
        %v1118 = vunpack.c.l.b16 %v423
        %v1119 = vunpack.c.h.b16 %v423
        %v1120 = vunpack.c.l.b16 %v424
        %v1121 = vunpack.c.h.b16 %v424
        %v1122 = vunpack.c.l.b16 %v425
        %v1123 = vunpack.c.h.b16 %v425
        %v1124 = vunpack.c.l.b16 %v426
        %v1125 = vunpack.c.h.b16 %v426
        %v1126 = vunpack.c.l.b16 %v427
        %v1127 = vunpack.c.h.b16 %v427
        %v1128 = vunpack.c.l.b16 %v428
        %v1129 = vunpack.c.h.b16 %v428
        %v1130 = vunpack.c.l.b16 %v429
        %v1131 = vunpack.c.h.b16 %v429
        %v1132 = vunpack.c.l.b16 %v430
        %v1133 = vunpack.c.h.b16 %v430
        %v1134 = vunpack.c.l.b16 %v431
        %v1135 = vunpack.c.h.b16 %v431
        %v1136 = vunpack.c.l.b16 %v432
        %v1137 = vunpack.c.h.b16 %v432
        %v1138 = vunpack.c.l.b16 %v433
        %v1139 = vunpack.c.h.b16 %v433
        %v1140 = vunpack.c.l.b16 %v434
        %v1141 = vunpack.c.h.b16 %v434
        %v1142 = vunpack.c.l.b16 %v435
        %v1143 = vunpack.c.h.b16 %v435
        %v1144 = vunpack.c.l.b16 %v436
        %v1145 = vunpack.c.h.b16 %v436
        %v1146 = vunpack.c.l.b16 %v437
        %v1147 = vunpack.c.h.b16 %v437
        %v1148 = vunpack.c.l.b16 %v438
        %v1149 = vunpack.c.h.b16 %v438
        %v1150 = vunpack.c.l.b16 %v439
        %v1151 = vunpack.c.h.b16 %v439
        %v1152 = vunpack.c.l.b16 %v440
        %v1153 = vunpack.c.h.b16 %v440
        %v1154 = vunpack.c.l.b16 %v441
        %v1155 = vunpack.c.h.b16 %v441
        %v1156 = vunpack.c.l.b16 %v442
        %v1157 = vunpack.c.h.b16 %v442
        %v1158 = vunpack.c.l.b16 %v443
        %v1159 = vunpack.c.h.b16 %v443
        %v1160 = vunpack.c.l.b16 %v444
        %v1161 = vunpack.c.h.b16 %v444
        %v1162 = vunpack.c.l.b16 %v445
        %v1163 = vunpack.c.h.b16 %v445
        %v1164 = vunpack.c.l.b16 %v446
        %v1165 = vunpack.c.h.b16 %v446
        %v1166 = vunpack.c.l.b16 %v447
        %v1167 = vunpack.c.h.b16 %v447
        %v1168 = vunpack.c.l.b16 %v448
        %v1169 = vunpack.c.h.b16 %v448
        %v1170 = vunpack.c.l.b16 %v449
        %v1171 = vunpack.c.h.b16 %v449
        %v1172 = vunpack.c.l.b16 %v450
        %v1173 = vunpack.c.h.b16 %v450
        %v1174 = vunpack.c.l.b16 %v451
        %v1175 = vunpack.c.h.b16 %v451
        %v1176 = vunpack.c.l.b16 %v452
        %v1177 = vunpack.c.h.b16 %v452
        %v1178 = vunpack.c.l.b16 %v453
        %v1179 = vunpack.c.h.b16 %v453
        %v1180 = vunpack.c.l.b16 %v454
        %v1181 = vunpack.c.h.b16 %v454
        %v1182 = vunpack.c.l.b16 %v455
        %v1183 = vunpack.c.h.b16 %v455
        %v1184 = vunpack.c.l.b16 %v456
        %v1185 = vunpack.c.h.b16 %v456
        %v1186 = vunpack.c.l.b16 %v457
        %v1187 = vunpack.c.h.b16 %v457
        %v1188 = vunpack.c.l.b16 %v458
        %v1189 = vunpack.c.h.b16 %v458
        %v1190 = vunpack.c.l.b16 %v459
        %v1191 = vunpack.c.h.b16 %v459
        %v1192 = vunpack.c.l.b16 %v460
        %v1193 = vunpack.c.h.b16 %v460
        %v1194 = vunpack.c.l.b16 %v461
        %v1195 = vunpack.c.h.b16 %v461
        %v1196 = vunpack.c.l.b16 %v462
        %v1197 = vunpack.c.h.b16 %v462
        %v1198 = vunpack.c.l.b16 %v463
        %v1199 = vunpack.c.h.b16 %v463
        %v1200 = vunpack.c.l.b16 %v464
        %v1201 = vunpack.c.h.b16 %v464
        %v1202 = vunpack.c.l.b16 %v465
        %v1203 = vunpack.c.h.b16 %v465
        %v1204 = vunpack.c.l.b16 %v466
        %v1205 = vunpack.c.h.b16 %v466
        %v1206 = vunpack.c.l.b16 %v467
        %v1207 = vunpack.c.h.b16 %v467
        %v1208 = vunpack.c.l.b16 %v468
        %v1209 = vunpack.c.h.b16 %v468
        %v1210 = vunpack.c.l.b16 %v469
        %v1211 = vunpack.c.h.b16 %v469
        %v1212 = vunpack.c.l.b16 %v470
        %v1213 = vunpack.c.h.b16 %v470
        %v1214 = vunpack.c.l.b16 %v471
        %v1215 = vunpack.c.h.b16 %v471
        %v1216 = vunpack.c.l.b16 %v472
        %v1217 = vunpack.c.h.b16 %v472
        %v1218 = vunpack.c.l.b16 %v473
        %v1219 = vunpack.c.h.b16 %v473
        %v1220 = vunpack.c.l.b16 %v474
        %v1221 = vunpack.c.h.b16 %v474
        %v1222 = vunpack.c.l.b16 %v475
        %v1223 = vunpack.c.h.b16 %v475
        %v1224 = vunpack.c.l.b16 %v476
        %v1225 = vunpack.c.h.b16 %v476
        %v1226 = vunpack.c.l.b16 %v477
        %v1227 = vunpack.c.h.b16 %v477
        %v1228 = vunpack.c.l.b16 %v478
        %v1229 = vunpack.c.h.b16 %v478
        %v1230 = vunpack.c.l.b16 %v479
        %v1231 = vunpack.c.h.b16 %v479
        %v1232 = vunpack.c.l.b16 %v480
        %v1233 = vunpack.c.h.b16 %v480
        %v1234 = vunpack.c.l.b16 %v481
        %v1235 = vunpack.c.h.b16 %v481
        %v1236 = vunpack.c.l.b16 %v482
        %v1237 = vunpack.c.h.b16 %v482
        %v1238 = vunpack.c.l.b16 %v483
        %v1239 = vunpack.c.h.b16 %v483
        %v1240 = vunpack.c.l.b16 %v484
        %v1241 = vunpack.c.h.b16 %v484
        %v1242 = vunpack.c.l.b16 %v485
        %v1243 = vunpack.c.h.b16 %v485
        %v1244 = vunpack.c.l.b16 %v486
        %v1245 = vunpack.c.h.b16 %v486
        %v1246 = vunpack.c.l.b16 %v487
        %v1247 = vunpack.c.h.b16 %v487
        %v1248 = vunpack.c.l.b16 %v488
        %v1249 = vunpack.c.h.b16 %v488
        %v1250 = vunpack.c.l.b16 %v489
        %v1251 = vunpack.c.h.b16 %v489
        %v1252 = vunpack.c.l.b16 %v490
        %v1253 = vunpack.c.h.b16 %v490
        %v1254 = vunpack.c.l.b16 %v491
        %v1255 = vunpack.c.h.b16 %v491
        %v1256 = vunpack.c.l.b16 %v492
        %v1257 = vunpack.c.h.b16 %v492
        %v1258 = vunpack.c.l.b16 %v493
        %v1259 = vunpack.c.h.b16 %v493
        %v1260 = vunpack.c.l.b16 %v494
        %v1261 = vunpack.c.h.b16 %v494
        %v1262 = vunpack.c.l.b16 %v495
        %v1263 = vunpack.c.h.b16 %v495
        %v1264 = vunpack.c.l.b16 %v496
        %v1265 = vunpack.c.h.b16 %v496
        %v1266 = vunpack.c.l.b16 %v497
        %v1267 = vunpack.c.h.b16 %v497
        %v1268 = vunpack.c.l.b16 %v498
        %v1269 = vunpack.c.h.b16 %v498
        %v1270 = vunpack.c.l.b16 %v499
        %v1271 = vunpack.c.h.b16 %v499
        %v1272 = vunpack.c.l.b16 %v500
        %v1273 = vunpack.c.h.b16 %v500
        %v1274 = vunpack.c.l.b16 %v501
        %v1275 = vunpack.c.h.b16 %v501
        %v1276 = vunpack.c.l.b16 %v502
        %v1277 = vunpack.c.h.b16 %v502
        %v1278 = vunpack.c.l.b16 %v503
        %v1279 = vunpack.c.h.b16 %v503
        %v1280 = vunpack.c.l.b16 %v504
        %v1281 = vunpack.c.h.b16 %v504
        %v1282 = vunpack.c.l.b16 %v505
        %v1283 = vunpack.c.h.b16 %v505
        %v1284 = vunpack.c.l.b16 %v506
        %v1285 = vunpack.c.h.b16 %v506
        %v1286 = vunpack.c.l.b16 %v507
        %v1287 = vunpack.c.h.b16 %v507
        %v1288 = vunpack.c.l.b16 %v508
        %v1289 = vunpack.c.h.b16 %v508
        %v1290 = vunpack.c.l.b16 %v509
        %v1291 = vunpack.c.h.b16 %v509
        %v1292 = vunpack.c.l.b16 %v510
        %v1293 = vunpack.c.h.b16 %v510
        %v1294 = vunpack.c.l.b16 %v511
        %v1295 = vunpack.c.h.b16 %v511
        %v1296 = vunpack.c.l.b16 %v512
        %v1297 = vunpack.c.h.b16 %v512
        %v1298 = vunpack.c.l.b16 %v513
        %v1299 = vunpack.c.h.b16 %v513
        %v1300 = vunpack.c.l.b16 %v514
        %v1301 = vunpack.c.h.b16 %v514
        %v1302 = vunpack.c.l.b16 %v515
        %v1303 = vunpack.c.h.b16 %v515
        %v1304 = vunpack.c.l.b16 %v516
        %v1305 = vunpack.c.h.b16 %v516
        %v1306 = vunpack.c.l.b16 %v517
        %v1307 = vunpack.c.h.b16 %v517
        %v1308 = vunpack.c.l.b16 %v518
        %v1309 = vunpack.c.h.b16 %v518
        %v1310 = vunpack.c.l.b16 %v519
        %v1311 = vunpack.c.h.b16 %v519
        %v1312 = vunpack.c.l.b16 %v520
        %v1313 = vunpack.c.h.b16 %v520
        %v1314 = vunpack.c.l.b16 %v521
        %v1315 = vunpack.c.h.b16 %v521
        %v1316 = vunpack.c.l.b16 %v522
        %v1317 = vunpack.c.h.b16 %v522
        %v1318 = vunpack.c.l.b16 %v523
        %v1319 = vunpack.c.h.b16 %v523
        %v1320 = vunpack.c.l.b16 %v524
        %v1321 = vunpack.c.h.b16 %v524
        %v1322 = vunpack.c.l.b16 %v525
        %v1323 = vunpack.c.h.b16 %v525
        %v1324 = vunpack.c.l.b16 %v526
        %v1325 = vunpack.c.h.b16 %v526
        %v1326 = vunpack.c.l.b16 %v527
        %v1327 = vunpack.c.h.b16 %v527
        %v1328 = vunpack.c.l.b16 %v528
        %v1329 = vunpack.c.h.b16 %v528
        %v1330 = vunpack.c.l.b16 %v529
        %v1331 = vunpack.c.h.b16 %v529
        %v1332 = vunpack.c.l.b16 %v530
        %v1333 = vunpack.c.h.b16 %v530
        %v1334 = vunpack.c.l.b16 %v531
        %v1335 = vunpack.c.h.b16 %v531
        %v1336 = vunpack.c.l.b16 %v532
        %v1337 = vunpack.c.h.b16 %v532
        %v1338 = vunpack.c.l.b16 %v533
        %v1339 = vunpack.c.h.b16 %v533
        %v1340 = vunpack.c.l.b16 %v534
        %v1341 = vunpack.c.h.b16 %v534
        %v1342 = vunpack.c.l.b16 %v535
        %v1343 = vunpack.c.h.b16 %v535
        %v1344 = vunpack.c.l.b16 %v536
        %v1345 = vunpack.c.h.b16 %v536
        %v1346 = vunpack.c.l.b16 %v537
        %v1347 = vunpack.c.h.b16 %v537
        %v1348 = vunpack.c.l.b16 %v538
        %v1349 = vunpack.c.h.b16 %v538
        %v1350 = vunpack.c.l.b16 %v539
        %v1351 = vunpack.c.h.b16 %v539
        %v1352 = vunpack.c.l.b16 %v540
        %v1353 = vunpack.c.h.b16 %v540
        %v1354 = vunpack.c.l.b16 %v541
        %v1355 = vunpack.c.h.b16 %v541
        %v1356 = vunpack.c.l.b16 %v542
        %v1357 = vunpack.c.h.b16 %v542
        %v1358 = vunpack.c.l.b16 %v543
        %v1359 = vunpack.c.h.b16 %v543
        %v1360 = vunpack.c.l.b16 %v544
        %v1361 = vunpack.c.h.b16 %v544
        %v1362 = vunpack.c.l.b16 %v545
        %v1363 = vunpack.c.h.b16 %v545
        %v1364 = vunpack.c.l.b16 %v546
        %v1365 = vunpack.c.h.b16 %v546
        %v1366 = vunpack.c.l.b16 %v547
        %v1367 = vunpack.c.h.b16 %v547
        %v1368 = vunpack.c.l.b16 %v548
        %v1369 = vunpack.c.h.b16 %v548
        %v1370 = vunpack.c.l.b16 %v549
        %v1371 = vunpack.c.h.b16 %v549
        %v1372 = vunpack.c.l.b16 %v550
        %v1373 = vunpack.c.h.b16 %v550
        %v1374 = vunpack.c.l.b16 %v551
        %v1375 = vunpack.c.h.b16 %v551
        %v1376 = vunpack.c.l.b16 %v552
        %v1377 = vunpack.c.h.b16 %v552
        %v1378 = vunpack.c.l.b16 %v553
        %v1379 = vunpack.c.h.b16 %v553
        %v1380 = vunpack.c.l.b16 %v554
        %v1381 = vunpack.c.h.b16 %v554
        %v1382 = vunpack.c.l.b16 %v555
        %v1383 = vunpack.c.h.b16 %v555
        %v1384 = vunpack.c.l.b16 %v556
        %v1385 = vunpack.c.h.b16 %v556
        %v1386 = vunpack.c.l.b16 %v557
        %v1387 = vunpack.c.h.b16 %v557
        %v1388 = vunpack.c.l.b16 %v558
        %v1389 = vunpack.c.h.b16 %v558
        %v1390 = vunpack.c.l.b16 %v559
        %v1391 = vunpack.c.h.b16 %v559
        %v1392 = vunpack.c.l.b16 %v560
        %v1393 = vunpack.c.h.b16 %v560
        %v1394 = vunpack.c.l.b16 %v561
        %v1395 = vunpack.c.h.b16 %v561
        %v1396 = vunpack.c.l.b16 %v562
        %v1397 = vunpack.c.h.b16 %v562
        %v1398 = vunpack.c.l.b16 %v563
        %v1399 = vunpack.c.h.b16 %v563
        %v1400 = vunpack.c.l.b16 %v564
        %v1401 = vunpack.c.h.b16 %v564
        %v1402 = vunpack.c.l.b16 %v565
        %v1403 = vunpack.c.h.b16 %v565
        %v1404 = vunpack.c.l.b16 %v566
        %v1405 = vunpack.c.h.b16 %v566
        %v1406 = vunpack.c.l.b16 %v567
        %v1407 = vunpack.c.h.b16 %v567
        %v1408 = vunpack.c.l.b16 %v568
        %v1409 = vunpack.c.h.b16 %v568
        %v1410 = vunpack.c.l.b16 %v569
        %v1411 = vunpack.c.h.b16 %v569
        %v1412 = vunpack.c.l.b16 %v570
        %v1413 = vunpack.c.h.b16 %v570
        %v1414 = vunpack.c.l.b16 %v571
        %v1415 = vunpack.c.h.b16 %v571
        %v1416 = vunpack.c.l.b16 %v572
        %v1417 = vunpack.c.h.b16 %v572
        %v1418 = vunpack.c.l.b16 %v573
        %v1419 = vunpack.c.h.b16 %v573
        %v1420 = vunpack.c.l.b16 %v574
        %v1421 = vunpack.c.h.b16 %v574
        %v1422 = vunpack.c.l.b16 %v575
        %v1423 = vunpack.c.h.b16 %v575
        %v1424 = vunpack.c.l.b16 %v576
        %v1425 = vunpack.c.h.b16 %v576
        %v1426 = vunpack.c.l.b16 %v577
        %v1427 = vunpack.c.h.b16 %v577
        %v1428 = vunpack.c.l.b16 %v578
        %v1429 = vunpack.c.h.b16 %v578
        %v1430 = vunpack.c.l.b16 %v579
        %v1431 = vunpack.c.h.b16 %v579
        %v1432 = vunpack.c.l.b16 %v580
        %v1433 = vunpack.c.h.b16 %v580
        %v1434 = vunpack.c.l.b16 %v581
        %v1435 = vunpack.c.h.b16 %v581
        %v1436 = vunpack.c.l.b16 %v582
        %v1437 = vunpack.c.h.b16 %v582
        %v1438 = vunpack.c.l.b16 %v583
        %v1439 = vunpack.c.h.b16 %v583
        %v1440 = vunpack.c.l.b16 %v584
        %v1441 = vunpack.c.h.b16 %v584
        %v1442 = vunpack.c.l.b16 %v585
        %v1443 = vunpack.c.h.b16 %v585
        %v1444 = vunpack.c.l.b16 %v586
        %v1445 = vunpack.c.h.b16 %v586
        %v1446 = vunpack.c.l.b16 %v587
        %v1447 = vunpack.c.h.b16 %v587
        %v1448 = vunpack.c.l.b16 %v588
        %v1449 = vunpack.c.h.b16 %v588
        %v1450 = vunpack.c.l.b16 %v589
        %v1451 = vunpack.c.h.b16 %v589
        %v1452 = vunpack.c.l.b16 %v590
        %v1453 = vunpack.c.h.b16 %v590
        %v1454 = vunpack.c.l.b16 %v591
        %v1455 = vunpack.c.h.b16 %v591
        %v1456 = vunpack.c.l.b16 %v592
        %v1457 = vunpack.c.h.b16 %v592
        %v1458 = vunpack.c.l.b16 %v593
        %v1459 = vunpack.c.h.b16 %v593
        %v1460 = vunpack.c.l.b16 %v594
        %v1461 = vunpack.c.h.b16 %v594
        %v1462 = vunpack.c.l.b16 %v595
        %v1463 = vunpack.c.h.b16 %v595
        %v1464 = vunpack.c.l.b16 %v596
        %v1465 = vunpack.c.h.b16 %v596
        %v1466 = vunpack.c.l.b16 %v597
        %v1467 = vunpack.c.h.b16 %v597
        %v1468 = vunpack.c.l.b16 %v598
        %v1469 = vunpack.c.h.b16 %v598
        %v1470 = vunpack.c.l.b16 %v599
        %v1471 = vunpack.c.h.b16 %v599
        %v1472 = vunpack.c.l.b16 %v600
        %v1473 = vunpack.c.h.b16 %v600
        %v1474 = vunpack.c.l.b16 %v601
        %v1475 = vunpack.c.h.b16 %v601
        %v1476 = vunpack.c.l.b16 %v602
        %v1477 = vunpack.c.h.b16 %v602
        %v1478 = vunpack.c.l.b16 %v603
        %v1479 = vunpack.c.h.b16 %v603
        %v1480 = vunpack.c.l.b16 %v604
        %v1481 = vunpack.c.h.b16 %v604
        %v1482 = vunpack.c.l.b16 %v605
        %v1483 = vunpack.c.h.b16 %v605
        %v1484 = vunpack.c.l.b16 %v606
        %v1485 = vunpack.c.h.b16 %v606
        %v1486 = vunpack.c.l.b16 %v607
        %v1487 = vunpack.c.h.b16 %v607
        %v1488 = vunpack.c.l.b16 %v608
        %v1489 = vunpack.c.h.b16 %v608
        %v1490 = vunpack.c.l.b16 %v609
        %v1491 = vunpack.c.h.b16 %v609
        %v1492 = vunpack.c.l.b16 %v610
        %v1493 = vunpack.c.h.b16 %v610
        %v1494 = vunpack.c.l.b16 %v611
        %v1495 = vunpack.c.h.b16 %v611
        %v1496 = vunpack.c.l.b16 %v612
        %v1497 = vunpack.c.h.b16 %v612
        %v1498 = vunpack.c.l.b16 %v613
        %v1499 = vunpack.c.h.b16 %v613
        %v1500 = vunpack.c.l.b16 %v614
        %v1501 = vunpack.c.h.b16 %v614
        %v1502 = vunpack.c.l.b16 %v615
        %v1503 = vunpack.c.h.b16 %v615
        %v1504 = vunpack.c.l.b16 %v616
        %v1505 = vunpack.c.h.b16 %v616
        %v1506 = vunpack.c.l.b16 %v617
        %v1507 = vunpack.c.h.b16 %v617
        %v1508 = vunpack.c.l.b16 %v618
        %v1509 = vunpack.c.h.b16 %v618
        %v1510 = vunpack.c.l.b16 %v619
        %v1511 = vunpack.c.h.b16 %v619
        %v1512 = vunpack.c.l.b16 %v620
        %v1513 = vunpack.c.h.b16 %v620
        %v1514 = vunpack.c.l.b16 %v621
        %v1515 = vunpack.c.h.b16 %v621
        %v1516 = vunpack.c.l.b16 %v622
        %v1517 = vunpack.c.h.b16 %v622
        %v1518 = vunpack.c.l.b16 %v623
        %v1519 = vunpack.c.h.b16 %v623
        %v1520 = vunpack.c.l.b16 %v624
        %v1521 = vunpack.c.h.b16 %v624
        %v1522 = vunpack.c.l.b16 %v625
        %v1523 = vunpack.c.h.b16 %v625
        %v1524 = vunpack.c.l.b16 %v626
        %v1525 = vunpack.c.h.b16 %v626
        %v1526 = vunpack.c.l.b16 %v627
        %v1527 = vunpack.c.h.b16 %v627
        %v1528 = vunpack.c.l.b16 %v628
        %v1529 = vunpack.c.h.b16 %v628
        %v1530 = vunpack.c.l.b16 %v629
        %v1531 = vunpack.c.h.b16 %v629
        %v1532 = vunpack.c.l.b16 %v630
        %v1533 = vunpack.c.h.b16 %v630
        %v1534 = vunpack.c.l.b16 %v631
        %v1535 = vunpack.c.h.b16 %v631
        %v1536 = vunpack.c.l.b16 %v632
        %v1537 = vunpack.c.h.b16 %v632
        %v1538 = vunpack.c.l.b16 %v633
        %v1539 = vunpack.c.h.b16 %v633
        %v1540 = vunpack.c.l.b16 %v634
        %v1541 = vunpack.c.h.b16 %v634
        %v1542 = vunpack.c.l.b16 %v635
        %v1543 = vunpack.c.h.b16 %v635
        %v1544 = vunpack.c.l.b16 %v636
        %v1545 = vunpack.c.h.b16 %v636
        %v1546 = vunpack.c.l.b16 %v637
        %v1547 = vunpack.c.h.b16 %v637
        %v1548 = vunpack.c.l.b16 %v638
        %v1549 = vunpack.c.h.b16 %v638
        %v1550 = vunpack.c.l.b16 %v639
        %v1551 = vunpack.c.h.b16 %v639
        %v1552 = vunpack.c.l.b16 %v640
        %v1553 = vunpack.c.h.b16 %v640
        %v1554 = vunpack.c.l.b16 %v641
        %v1555 = vunpack.c.h.b16 %v641
        %v1556 = vunpack.c.l.b16 %v642
        %v1557 = vunpack.c.h.b16 %v642
        %v1558 = vunpack.c.l.b16 %v643
        %v1559 = vunpack.c.h.b16 %v643
        %v1560 = vunpack.c.l.b16 %v644
        %v1561 = vunpack.c.h.b16 %v644
        %v1562 = vunpack.c.l.b16 %v645
        %v1563 = vunpack.c.h.b16 %v645
        %v1564 = vunpack.c.l.b16 %v646
        %v1565 = vunpack.c.h.b16 %v646
        %v1566 = vunpack.c.l.b16 %v647
        %v1567 = vunpack.c.h.b16 %v647
        %v1568 = vunpack.c.l.b16 %v648
        %v1569 = vunpack.c.h.b16 %v648
        %v1570 = vunpack.c.l.b16 %v649
        %v1571 = vunpack.c.h.b16 %v649
        %v1572 = vunpack.c.l.b16 %v650
        %v1573 = vunpack.c.h.b16 %v650
        %v1574 = vunpack.c.l.b16 %v651
        %v1575 = vunpack.c.h.b16 %v651
        %v1576 = vunpack.c.l.b16 %v652
        %v1577 = vunpack.c.h.b16 %v652
        %v1578 = vunpack.c.l.b16 %v653
        %v1579 = vunpack.c.h.b16 %v653
        %v1580 = vunpack.c.l.b16 %v654
        %v1581 = vunpack.c.h.b16 %v654
        %v1582 = vunpack.c.l.b16 %v655
        %v1583 = vunpack.c.h.b16 %v655
        %v1584 = vunpack.c.l.b16 %v656
        %v1585 = vunpack.c.h.b16 %v656
        %v1586 = vunpack.c.l.b16 %v657
        %v1587 = vunpack.c.h.b16 %v657
        %v1588 = vunpack.c.l.b16 %v658
        %v1589 = vunpack.c.h.b16 %v658
        %v1590 = vunpack.c.l.b16 %v659
        %v1591 = vunpack.c.h.b16 %v659
        %v1592 = vunpack.c.l.b16 %v660
        %v1593 = vunpack.c.h.b16 %v660
        %v1594 = vunpack.c.l.b16 %v661
        %v1595 = vunpack.c.h.b16 %v661
        %v1596 = vunpack.c.l.b16 %v662
        %v1597 = vunpack.c.h.b16 %v662
        %v1598 = vunpack.c.l.b16 %v663
        %v1599 = vunpack.c.h.b16 %v663
        %v1600 = vunpack.c.l.b16 %v664
        %v1601 = vunpack.c.h.b16 %v664
        %v1602 = vunpack.c.l.b16 %v665
        %v1603 = vunpack.c.h.b16 %v665
        %v1604 = vunpack.c.l.b16 %v666
        %v1605 = vunpack.c.h.b16 %v666
        %v1606 = vunpack.c.l.b16 %v667
        %v1607 = vunpack.c.h.b16 %v667
        %v1608 = vunpack.c.l.b16 %v668
        %v1609 = vunpack.c.h.b16 %v668
        %v1610 = vunpack.c.l.b16 %v669
        %v1611 = vunpack.c.h.b16 %v669
        %v1612 = vunpack.c.l.b16 %v670
        %v1613 = vunpack.c.h.b16 %v670
        %v1614 = vunpack.c.l.b16 %v671
        %v1615 = vunpack.c.h.b16 %v671
        %v1616 = vunpack.c.l.b16 %v672
        %v1617 = vunpack.c.h.b16 %v672
        %v1618 = vunpack.c.l.b16 %v673
        %v1619 = vunpack.c.h.b16 %v673
        %v1620 = vunpack.c.l.b16 %v674
        %v1621 = vunpack.c.h.b16 %v674
        %v1622 = vunpack.c.l.b16 %v675
        %v1623 = vunpack.c.h.b16 %v675
        %v1624 = vunpack.c.l.b16 %v676
        %v1625 = vunpack.c.h.b16 %v676
        %v1626 = vunpack.c.l.b16 %v677
        %v1627 = vunpack.c.h.b16 %v677
        %v1628 = vunpack.c.l.b16 %v678
        %v1629 = vunpack.c.h.b16 %v678
        %v1630 = vunpack.c.l.b16 %v679
        %v1631 = vunpack.c.h.b16 %v679
        %v1632 = vunpack.c.l.b16 %v680
        %v1633 = vunpack.c.h.b16 %v680
        %v1634 = vunpack.c.l.b16 %v681
        %v1635 = vunpack.c.h.b16 %v681
        %v1636 = vunpack.c.l.b16 %v682
        %v1637 = vunpack.c.h.b16 %v682
        %v1638 = vunpack.c.l.b16 %v683
        %v1639 = vunpack.c.h.b16 %v683
        %v1640 = vunpack.c.l.b16 %v684
        %v1641 = vunpack.c.h.b16 %v684
        %v1642 = vunpack.c.l.b16 %v685
        %v1643 = vunpack.c.h.b16 %v685
        %v1644 = vunpack.c.l.b16 %v686
        %v1645 = vunpack.c.h.b16 %v686
        %v1646 = vunpack.c.l.b16 %v687
        %v1647 = vunpack.c.h.b16 %v687
        %v1648 = vunpack.c.l.b16 %v688
        %v1649 = vunpack.c.h.b16 %v688
        %v1650 = vunpack.c.l.b16 %v689
        %v1651 = vunpack.c.h.b16 %v689
        %v1652 = vunpack.c.l.b16 %v690
        %v1653 = vunpack.c.h.b16 %v690
        %v1654 = vunpack.c.l.b16 %v691
        %v1655 = vunpack.c.h.b16 %v691
        %v1656 = vunpack.c.l.b16 %v692
        %v1657 = vunpack.c.h.b16 %v692
        %v1658 = vunpack.c.l.b16 %v693
        %v1659 = vunpack.c.h.b16 %v693
        %v1660 = vunpack.c.l.b16 %v694
        %v1661 = vunpack.c.h.b16 %v694
        %v1662 = vunpack.c.l.b16 %v695
        %v1663 = vunpack.c.h.b16 %v695
        %v1664 = vunpack.c.l.b16 %v696
        %v1665 = vunpack.c.h.b16 %v696
        %v1666 = vunpack.c.l.b16 %v697
        %v1667 = vunpack.c.h.b16 %v697
        %v1668 = vunpack.c.l.b16 %v698
        %v1669 = vunpack.c.h.b16 %v698
        %v1670 = vunpack.c.l.b16 %v699
        %v1671 = vunpack.c.h.b16 %v699
        %v1672 = vunpack.c.l.b16 %v700
        %v1673 = vunpack.c.h.b16 %v700
        %v1674 = vunpack.c.l.b16 %v701
        %v1675 = vunpack.c.h.b16 %v701
        %v1676 = vunpack.c.l.b16 %v702
        %v1677 = vunpack.c.h.b16 %v702
        %v1678 = vunpack.c.l.b16 %v703
        %v1679 = vunpack.c.h.b16 %v703
        %v1680 = vunpack.c.l.b16 %v704
        %v1681 = vunpack.c.h.b16 %v704
        %v1682 = vunpack.c.l.b16 %v705
        %v1683 = vunpack.c.h.b16 %v705
        %v1684 = vunpack.c.l.b16 %v706
        %v1685 = vunpack.c.h.b16 %v706
        %v1686 = vunpack.c.l.b16 %v707
        %v1687 = vunpack.c.h.b16 %v707
        %v1688 = vunpack.c.l.b16 %v708
        %v1689 = vunpack.c.h.b16 %v708
        %v1690 = vunpack.c.l.b16 %v709
        %v1691 = vunpack.c.h.b16 %v709
        %v1692 = vunpack.c.l.b16 %v710
        %v1693 = vunpack.c.h.b16 %v710
        %v1694 = vunpack.c.l.b16 %v711
        %v1695 = vunpack.c.h.b16 %v711
        %v1696 = vunpack.c.l.b16 %v712
        %v1697 = vunpack.c.h.b16 %v712
        %v1698 = vunpack.c.l.b16 %v713
        %v1699 = vunpack.c.h.b16 %v713
        %v1700 = vpack.c.b16 %v1068, %v1060
        %v1701 = vpack.c.b16 %v1069, %v1061
        %v1702 = vpack.c.b16 %v1070, %v1062
        %v1703 = vpack.c.b16 %v1071, %v1063
        %v1704 = vpack.c.b16 %v1072, %v1064
        %v1705 = vpack.c.b16 %v1073, %v1065
        %v1706 = vpack.c.b16 %v1074, %v1066
        %v1707 = vpack.c.b16 %v1075, %v1067
        %v1708 = vpack.c.b16 %v1084, %v1076
        %v1709 = vpack.c.b16 %v1085, %v1077
        %v1710 = vpack.c.b16 %v1086, %v1078
        %v1711 = vpack.c.b16 %v1087, %v1079
        %v1712 = vpack.c.b16 %v1088, %v1080
        %v1713 = vpack.c.b16 %v1089, %v1081
        %v1714 = vpack.c.b16 %v1090, %v1082
        %v1715 = vpack.c.b16 %v1091, %v1083
        %v1716 = vpack.c.b16 %v1100, %v1092
        %v1717 = vpack.c.b16 %v1101, %v1093
        %v1718 = vpack.c.b16 %v1102, %v1094
        %v1719 = vpack.c.b16 %v1103, %v1095
        %v1720 = vpack.c.b16 %v1104, %v1096
        %v1721 = vpack.c.b16 %v1105, %v1097
        %v1722 = vpack.c.b16 %v1106, %v1098
        %v1723 = vpack.c.b16 %v1107, %v1099
        %v1724 = vpack.c.b16 %v1116, %v1108
        %v1725 = vpack.c.b16 %v1117, %v1109
        %v1726 = vpack.c.b16 %v1118, %v1110
        %v1727 = vpack.c.b16 %v1119, %v1111
        %v1728 = vpack.c.b16 %v1120, %v1112
        %v1729 = vpack.c.b16 %v1121, %v1113
        %v1730 = vpack.c.b16 %v1122, %v1114
        %v1731 = vpack.c.b16 %v1123, %v1115
        %v1732 = vpack.c.b16 %v1132, %v1124
        %v1733 = vpack.c.b16 %v1133, %v1125
        %v1734 = vpack.c.b16 %v1134, %v1126
        %v1735 = vpack.c.b16 %v1135, %v1127
        %v1736 = vpack.c.b16 %v1136, %v1128
        %v1737 = vpack.c.b16 %v1137, %v1129
        %v1738 = vpack.c.b16 %v1138, %v1130
        %v1739 = vpack.c.b16 %v1139, %v1131
        %v1740 = vpack.c.b16 %v1148, %v1140
        %v1741 = vpack.c.b16 %v1149, %v1141
        %v1742 = vpack.c.b16 %v1150, %v1142
        %v1743 = vpack.c.b16 %v1151, %v1143
        %v1744 = vpack.c.b16 %v1152, %v1144
        %v1745 = vpack.c.b16 %v1153, %v1145
        %v1746 = vpack.c.b16 %v1154, %v1146
        %v1747 = vpack.c.b16 %v1155, %v1147
        %v1748 = vpack.c.b16 %v1164, %v1156
        %v1749 = vpack.c.b16 %v1165, %v1157
        %v1750 = vpack.c.b16 %v1166, %v1158
        %v1751 = vpack.c.b16 %v1167, %v1159
        %v1752 = vpack.c.b16 %v1168, %v1160
        %v1753 = vpack.c.b16 %v1169, %v1161
        %v1754 = vpack.c.b16 %v1170, %v1162
        %v1755 = vpack.c.b16 %v1171, %v1163
        %v1756 = vpack.c.b16 %v1180, %v1172
        %v1757 = vpack.c.b16 %v1181, %v1173
        %v1758 = vpack.c.b16 %v1182, %v1174
        %v1759 = vpack.c.b16 %v1183, %v1175
        %v1760 = vpack.c.b16 %v1184, %v1176
        %v1761 = vpack.c.b16 %v1185, %v1177
        %v1762 = vpack.c.b16 %v1186, %v1178
        %v1763 = vpack.c.b16 %v1187, %v1179
        %v1764 = vpack.c.b16 %v1196, %v1188
        %v1765 = vpack.c.b16 %v1197, %v1189
        %v1766 = vpack.c.b16 %v1198, %v1190
        %v1767 = vpack.c.b16 %v1199, %v1191
        %v1768 = vpack.c.b16 %v1200, %v1192
        %v1769 = vpack.c.b16 %v1201, %v1193
        %v1770 = vpack.c.b16 %v1202, %v1194
        %v1771 = vpack.c.b16 %v1203, %v1195
        %v1772 = vpack.c.b16 %v1212, %v1204
        %v1773 = vpack.c.b16 %v1213, %v1205
        %v1774 = vpack.c.b16 %v1214, %v1206
        %v1775 = vpack.c.b16 %v1215, %v1207
        %v1776 = vpack.c.b16 %v1216, %v1208
        %v1777 = vpack.c.b16 %v1217, %v1209
        %v1778 = vpack.c.b16 %v1218, %v1210
        %v1779 = vpack.c.b16 %v1219, %v1211
        %v1780 = vpack.c.b16 %v1228, %v1220
        %v1781 = vpack.c.b16 %v1229, %v1221
        %v1782 = vpack.c.b16 %v1230, %v1222
        %v1783 = vpack.c.b16 %v1231, %v1223
        %v1784 = vpack.c.b16 %v1232, %v1224
        %v1785 = vpack.c.b16 %v1233, %v1225
        %v1786 = vpack.c.b16 %v1234, %v1226
        %v1787 = vpack.c.b16 %v1235, %v1227
        %v1788 = vpack.c.b16 %v1244, %v1236
        %v1789 = vpack.c.b16 %v1245, %v1237
        %v1790 = vpack.c.b16 %v1246, %v1238
        %v1791 = vpack.c.b16 %v1247, %v1239
        %v1792 = vpack.c.b16 %v1248, %v1240
        %v1793 = vpack.c.b16 %v1249, %v1241
        %v1794 = vpack.c.b16 %v1250, %v1242
        %v1795 = vpack.c.b16 %v1251, %v1243
        %v1796 = vpack.c.b16 %v1260, %v1252
        %v1797 = vpack.c.b16 %v1261, %v1253
        %v1798 = vpack.c.b16 %v1262, %v1254
        %v1799 = vpack.c.b16 %v1263, %v1255
        %v1800 = vpack.c.b16 %v1264, %v1256
        %v1801 = vpack.c.b16 %v1265, %v1257
        %v1802 = vpack.c.b16 %v1266, %v1258
        %v1803 = vpack.c.b16 %v1267, %v1259
        %v1804 = vpack.c.b16 %v1276, %v1268
        %v1805 = vpack.c.b16 %v1277, %v1269
        %v1806 = vpack.c.b16 %v1278, %v1270
        %v1807 = vpack.c.b16 %v1279, %v1271
        %v1808 = vpack.c.b16 %v1280, %v1272
        %v1809 = vpack.c.b16 %v1281, %v1273
        %v1810 = vpack.c.b16 %v1282, %v1274
        %v1811 = vpack.c.b16 %v1283, %v1275
        %v1812 = vpack.c.b16 %v1292, %v1284
        %v1813 = vpack.c.b16 %v1293, %v1285
        %v1814 = vpack.c.b16 %v1294, %v1286
        %v1815 = vpack.c.b16 %v1295, %v1287
        %v1816 = vpack.c.b16 %v1296, %v1288
        %v1817 = vpack.c.b16 %v1297, %v1289
        %v1818 = vpack.c.b16 %v1298, %v1290
        %v1819 = vpack.c.b16 %v1299, %v1291
        %v1820 = vpack.c.b16 %v1308, %v1300
        %v1821 = vpack.c.b16 %v1309, %v1301
        %v1822 = vpack.c.b16 %v1310, %v1302
        %v1823 = vpack.c.b16 %v1311, %v1303
        %v1824 = vpack.c.b16 %v1312, %v1304
        %v1825 = vpack.c.b16 %v1313, %v1305
        %v1826 = vpack.c.b16 %v1314, %v1306
        %v1827 = vpack.c.b16 %v1315, %v1307
        %v1828 = vpack.c.b16 %v1324, %v1316
        %v1829 = vpack.c.b16 %v1325, %v1317
        %v1830 = vpack.c.b16 %v1326, %v1318
        %v1831 = vpack.c.b16 %v1327, %v1319
        %v1832 = vpack.c.b16 %v1328, %v1320
        %v1833 = vpack.c.b16 %v1329, %v1321
        %v1834 = vpack.c.b16 %v1330, %v1322
        %v1835 = vpack.c.b16 %v1331, %v1323
        %v1836 = vpack.c.b16 %v1340, %v1332
        %v1837 = vpack.c.b16 %v1341, %v1333
        %v1838 = vpack.c.b16 %v1342, %v1334
        %v1839 = vpack.c.b16 %v1343, %v1335
        %v1840 = vpack.c.b16 %v1344, %v1336
        %v1841 = vpack.c.b16 %v1345, %v1337
        %v1842 = vpack.c.b16 %v1346, %v1338
        %v1843 = vpack.c.b16 %v1347, %v1339
        %v1844 = vpack.c.b16 %v1356, %v1348
        %v1845 = vpack.c.b16 %v1357, %v1349
        %v1846 = vpack.c.b16 %v1358, %v1350
        %v1847 = vpack.c.b16 %v1359, %v1351
        %v1848 = vpack.c.b16 %v1360, %v1352
        %v1849 = vpack.c.b16 %v1361, %v1353
        %v1850 = vpack.c.b16 %v1362, %v1354
        %v1851 = vpack.c.b16 %v1363, %v1355
        %v1852 = vpack.c.b16 %v1372, %v1364
        %v1853 = vpack.c.b16 %v1373, %v1365
        %v1854 = vpack.c.b16 %v1374, %v1366
        %v1855 = vpack.c.b16 %v1375, %v1367
        %v1856 = vpack.c.b16 %v1376, %v1368
        %v1857 = vpack.c.b16 %v1377, %v1369
        %v1858 = vpack.c.b16 %v1378, %v1370
        %v1859 = vpack.c.b16 %v1379, %v1371
        %v1860 = vpack.c.b16 %v1388, %v1380
        %v1861 = vpack.c.b16 %v1389, %v1381
        %v1862 = vpack.c.b16 %v1390, %v1382
        %v1863 = vpack.c.b16 %v1391, %v1383
        %v1864 = vpack.c.b16 %v1392, %v1384
        %v1865 = vpack.c.b16 %v1393, %v1385
        %v1866 = vpack.c.b16 %v1394, %v1386
        %v1867 = vpack.c.b16 %v1395, %v1387
        %v1868 = vpack.c.b16 %v1404, %v1396
        %v1869 = vpack.c.b16 %v1405, %v1397
        %v1870 = vpack.c.b16 %v1406, %v1398
        %v1871 = vpack.c.b16 %v1407, %v1399
        %v1872 = vpack.c.b16 %v1408, %v1400
        %v1873 = vpack.c.b16 %v1409, %v1401
        %v1874 = vpack.c.b16 %v1410, %v1402
        %v1875 = vpack.c.b16 %v1411, %v1403
        %v1876 = vpack.c.b16 %v1420, %v1412
        %v1877 = vpack.c.b16 %v1421, %v1413
        %v1878 = vpack.c.b16 %v1422, %v1414
        %v1879 = vpack.c.b16 %v1423, %v1415
        %v1880 = vpack.c.b16 %v1424, %v1416
        %v1881 = vpack.c.b16 %v1425, %v1417
        %v1882 = vpack.c.b16 %v1426, %v1418
        %v1883 = vpack.c.b16 %v1427, %v1419
        %v1884 = vpack.c.b16 %v1436, %v1428
        %v1885 = vpack.c.b16 %v1437, %v1429
        %v1886 = vpack.c.b16 %v1438, %v1430
        %v1887 = vpack.c.b16 %v1439, %v1431
        %v1888 = vpack.c.b16 %v1440, %v1432
        %v1889 = vpack.c.b16 %v1441, %v1433
        %v1890 = vpack.c.b16 %v1442, %v1434
        %v1891 = vpack.c.b16 %v1443, %v1435
        %v1892 = vpack.c.b16 %v1452, %v1444
        %v1893 = vpack.c.b16 %v1453, %v1445
        %v1894 = vpack.c.b16 %v1454, %v1446
        %v1895 = vpack.c.b16 %v1455, %v1447
        %v1896 = vpack.c.b16 %v1456, %v1448
        %v1897 = vpack.c.b16 %v1457, %v1449
        %v1898 = vpack.c.b16 %v1458, %v1450
        %v1899 = vpack.c.b16 %v1459, %v1451
        %v1900 = vpack.c.b16 %v1468, %v1460
        %v1901 = vpack.c.b16 %v1469, %v1461
        %v1902 = vpack.c.b16 %v1470, %v1462
        %v1903 = vpack.c.b16 %v1471, %v1463
        %v1904 = vpack.c.b16 %v1472, %v1464
        %v1905 = vpack.c.b16 %v1473, %v1465
        %v1906 = vpack.c.b16 %v1474, %v1466
        %v1907 = vpack.c.b16 %v1475, %v1467
        %v1908 = vpack.c.b16 %v1484, %v1476
        %v1909 = vpack.c.b16 %v1485, %v1477
        %v1910 = vpack.c.b16 %v1486, %v1478
        %v1911 = vpack.c.b16 %v1487, %v1479
        %v1912 = vpack.c.b16 %v1488, %v1480
        %v1913 = vpack.c.b16 %v1489, %v1481
        %v1914 = vpack.c.b16 %v1490, %v1482
        %v1915 = vpack.c.b16 %v1491, %v1483
        %v1916 = vpack.c.b16 %v1500, %v1492
        %v1917 = vpack.c.b16 %v1501, %v1493
        %v1918 = vpack.c.b16 %v1502, %v1494
        %v1919 = vpack.c.b16 %v1503, %v1495
        %v1920 = vpack.c.b16 %v1504, %v1496
        %v1921 = vpack.c.b16 %v1505, %v1497
        %v1922 = vpack.c.b16 %v1506, %v1498
        %v1923 = vpack.c.b16 %v1507, %v1499
        %v1924 = vpack.c.b16 %v1516, %v1508
        %v1925 = vpack.c.b16 %v1517, %v1509
        %v1926 = vpack.c.b16 %v1518, %v1510
        %v1927 = vpack.c.b16 %v1519, %v1511
        %v1928 = vpack.c.b16 %v1520, %v1512
        %v1929 = vpack.c.b16 %v1521, %v1513
        %v1930 = vpack.c.b16 %v1522, %v1514
        %v1931 = vpack.c.b16 %v1523, %v1515
        %v1932 = vpack.c.b16 %v1532, %v1524
        %v1933 = vpack.c.b16 %v1533, %v1525
        %v1934 = vpack.c.b16 %v1534, %v1526
        %v1935 = vpack.c.b16 %v1535, %v1527
        %v1936 = vpack.c.b16 %v1536, %v1528
        %v1937 = vpack.c.b16 %v1537, %v1529
        %v1938 = vpack.c.b16 %v1538, %v1530
        %v1939 = vpack.c.b16 %v1539, %v1531
        %v1940 = vpack.c.b16 %v1548, %v1540
        %v1941 = vpack.c.b16 %v1549, %v1541
        %v1942 = vpack.c.b16 %v1550, %v1542
        %v1943 = vpack.c.b16 %v1551, %v1543
        %v1944 = vpack.c.b16 %v1552, %v1544
        %v1945 = vpack.c.b16 %v1553, %v1545
        %v1946 = vpack.c.b16 %v1554, %v1546
        %v1947 = vpack.c.b16 %v1555, %v1547
        %v1948 = vpack.c.b16 %v1564, %v1556
        %v1949 = vpack.c.b16 %v1565, %v1557
        %v1950 = vpack.c.b16 %v1566, %v1558
        %v1951 = vpack.c.b16 %v1567, %v1559
        %v1952 = vpack.c.b16 %v1568, %v1560
        %v1953 = vpack.c.b16 %v1569, %v1561
        %v1954 = vpack.c.b16 %v1570, %v1562
        %v1955 = vpack.c.b16 %v1571, %v1563
        %v1956 = vpack.c.b16 %v1580, %v1572
        %v1957 = vpack.c.b16 %v1581, %v1573
        %v1958 = vpack.c.b16 %v1582, %v1574
        %v1959 = vpack.c.b16 %v1583, %v1575
        %v1960 = vpack.c.b16 %v1584, %v1576
        %v1961 = vpack.c.b16 %v1585, %v1577
        %v1962 = vpack.c.b16 %v1586, %v1578
        %v1963 = vpack.c.b16 %v1587, %v1579
        %v1964 = vpack.c.b16 %v1596, %v1588
        %v1965 = vpack.c.b16 %v1597, %v1589
        %v1966 = vpack.c.b16 %v1598, %v1590
        %v1967 = vpack.c.b16 %v1599, %v1591
        %v1968 = vpack.c.b16 %v1600, %v1592
        %v1969 = vpack.c.b16 %v1601, %v1593
        %v1970 = vpack.c.b16 %v1602, %v1594
        %v1971 = vpack.c.b16 %v1603, %v1595
        %v1972 = vpack.c.b16 %v1612, %v1604
        %v1973 = vpack.c.b16 %v1613, %v1605
        %v1974 = vpack.c.b16 %v1614, %v1606
        %v1975 = vpack.c.b16 %v1615, %v1607
        %v1976 = vpack.c.b16 %v1616, %v1608
        %v1977 = vpack.c.b16 %v1617, %v1609
        %v1978 = vpack.c.b16 %v1618, %v1610
        %v1979 = vpack.c.b16 %v1619, %v1611
        %v1980 = vpack.c.b16 %v1628, %v1620
        %v1981 = vpack.c.b16 %v1629, %v1621
        %v1982 = vpack.c.b16 %v1630, %v1622
        %v1983 = vpack.c.b16 %v1631, %v1623
        %v1984 = vpack.c.b16 %v1632, %v1624
        %v1985 = vpack.c.b16 %v1633, %v1625
        %v1986 = vpack.c.b16 %v1634, %v1626
        %v1987 = vpack.c.b16 %v1635, %v1627
        %v1988 = vpack.c.b16 %v1644, %v1636
        %v1989 = vpack.c.b16 %v1645, %v1637
        %v1990 = vpack.c.b16 %v1646, %v1638
        %v1991 = vpack.c.b16 %v1647, %v1639
        %v1992 = vpack.c.b16 %v1648, %v1640
        %v1993 = vpack.c.b16 %v1649, %v1641
        %v1994 = vpack.c.b16 %v1650, %v1642
        %v1995 = vpack.c.b16 %v1651, %v1643
        %v1996 = vpack.c.b16 %v1660, %v1652
        %v1997 = vpack.c.b16 %v1661, %v1653
        %v1998 = vpack.c.b16 %v1662, %v1654
        %v1999 = vpack.c.b16 %v1663, %v1655
        %v2000 = vpack.c.b16 %v1664, %v1656
        %v2001 = vpack.c.b16 %v1665, %v1657
        %v2002 = vpack.c.b16 %v1666, %v1658
        %v2003 = vpack.c.b16 %v1667, %v1659
        %v2004 = vpack.c.b16 %v1676, %v1668
        %v2005 = vpack.c.b16 %v1677, %v1669
        %v2006 = vpack.c.b16 %v1678, %v1670
        %v2007 = vpack.c.b16 %v1679, %v1671
        %v2008 = vpack.c.b16 %v1680, %v1672
        %v2009 = vpack.c.b16 %v1681, %v1673
        %v2010 = vpack.c.b16 %v1682, %v1674
        %v2011 = vpack.c.b16 %v1683, %v1675
        %v2012 = vpack.c.b16 %v1692, %v1684
        %v2013 = vpack.c.b16 %v1693, %v1685
        %v2014 = vpack.c.b16 %v1694, %v1686
        %v2015 = vpack.c.b16 %v1695, %v1687
        %v2016 = vpack.c.b16 %v1696, %v1688
        %v2017 = vpack.c.b16 %v1697, %v1689
        %v2018 = vpack.c.b16 %v1698, %v1690
        %v2019 = vpack.c.b16 %v1699, %v1691
        %2340 = vmatprep.subr.bf16.mxu0 %v1701
        %2341 = vmatpush1.bf16.msra.mxu0 %v1700
        %2342 = vmatprep.subr.bf16.mxu0 %v1709
        %2343 = vmatpush1.bf16.msra.mxu0 %v1708
        %2344 = vmatprep.subr.bf16.mxu0 %v1717
        %2345 = vmatpush1.bf16.msra.mxu0 %v1716
        %2346 = vmatprep.subr.bf16.mxu0 %v1725
        %2347 = vmatpush1.bf16.msra.mxu0 %v1724
        %2348 = vmatprep.subr.bf16.mxu0 %v1733
        %2349 = vmatpush1.bf16.msra.mxu0 %v1732
        %2350 = vmatprep.subr.bf16.mxu0 %v1741
        %2351 = vmatpush1.bf16.msra.mxu0 %v1740
        %2352 = vmatprep.subr.bf16.mxu0 %v1749
        %2353 = vmatpush1.bf16.msra.mxu0 %v1748
        %2354 = vmatprep.subr.bf16.mxu0 %v1757
        %2355 = vmatpush1.bf16.msra.mxu0 %v1756
        %2356 = vmatprep.subr.bf16.mxu0 %v1765
        %2357 = vmatpush1.bf16.msra.mxu0 %v1764
        %2358 = vmatprep.subr.bf16.mxu0 %v1773
        %2359 = vmatpush1.bf16.msra.mxu0 %v1772
        %2360 = vmatprep.subr.bf16.mxu0 %v1781
        %2361 = vmatpush1.bf16.msra.mxu0 %v1780
        %2362 = vmatprep.subr.bf16.mxu0 %v1789
        %2363 = vmatpush1.bf16.msra.mxu0 %v1788
        %2364 = vmatprep.subr.bf16.mxu0 %v1797
        %2365 = vmatpush1.bf16.msra.mxu0 %v1796
        %2366 = vmatprep.subr.bf16.mxu0 %v1805
        %2367 = vmatpush1.bf16.msra.mxu0 %v1804
        %2368 = vmatprep.subr.bf16.mxu0 %v1813
        %2369 = vmatpush1.bf16.msra.mxu0 %v1812
        %2370 = vmatprep.subr.bf16.mxu0 %v1821
        %2371 = vmatpush1.bf16.msra.mxu0 %v1820
        %2372 = vmatprep.mubr.bf16.mxu0 %v731
        %2373 = vmatmul.mubr.bf16.gmra.mrb[0].mxu0 %v730
        %v2374 = vpop.f32.mrb[0].mxu0
        %v2375 = vadd.f32 0.0, %v2374
        %v2376 = vpop.f32.mrb[0].mxu0
        %v2377 = vadd.f32 0.0, %v2376
        %v2378 = vpop.f32.mrb[0].mxu0
        %v2379 = vadd.f32 0.0, %v2378
        %v2380 = vpop.f32.mrb[0].mxu0
        %v2381 = vadd.f32 0.0, %v2380
        %2382 = vdwg.mxu0
        %2383 = vmatprep.subr.bf16.mxu0 %v1829
        %2384 = vmatpush1.bf16.msra.mxu0 %v1828
        %2385 = vmatprep.subr.bf16.mxu0 %v1837
        %2386 = vmatpush1.bf16.msra.mxu0 %v1836
        %2387 = vmatprep.subr.bf16.mxu0 %v1845
        %2388 = vmatpush1.bf16.msra.mxu0 %v1844
        %2389 = vmatprep.subr.bf16.mxu0 %v1853
        %2390 = vmatpush1.bf16.msra.mxu0 %v1852
        %2391 = vmatprep.subr.bf16.mxu0 %v1861
        %2392 = vmatpush1.bf16.msra.mxu0 %v1860
        %2393 = vmatprep.subr.bf16.mxu0 %v1869
        %2394 = vmatpush1.bf16.msra.mxu0 %v1868
        %2395 = vmatprep.subr.bf16.mxu0 %v1877
        %2396 = vmatpush1.bf16.msra.mxu0 %v1876
        %2397 = vmatprep.subr.bf16.mxu0 %v1885
        %2398 = vmatpush1.bf16.msra.mxu0 %v1884
        %2399 = vmatprep.subr.bf16.mxu0 %v1893
        %2400 = vmatpush1.bf16.msra.mxu0 %v1892
        %2401 = vmatprep.subr.bf16.mxu0 %v1901
        %2402 = vmatpush1.bf16.msra.mxu0 %v1900
        %2403 = vmatprep.subr.bf16.mxu0 %v1909
        %2404 = vmatpush1.bf16.msra.mxu0 %v1908
        %2405 = vmatprep.subr.bf16.mxu0 %v1917
        %2406 = vmatpush1.bf16.msra.mxu0 %v1916
        %2407 = vmatprep.subr.bf16.mxu0 %v1925
        %2408 = vmatpush1.bf16.msra.mxu0 %v1924
        %2409 = vmatprep.subr.bf16.mxu0 %v1933
        %2410 = vmatpush1.bf16.msra.mxu0 %v1932
        %2411 = vmatprep.subr.bf16.mxu0 %v1941
        %2412 = vmatpush1.bf16.msra.mxu0 %v1940
        %2413 = vmatprep.subr.bf16.mxu0 %v1949
        %2414 = vmatpush1.bf16.msra.mxu0 %v1948
        %2415 = vmatprep.mubr.bf16.mxu0 %v733
        %2416 = vmatmul.mubr.bf16.gmra.mrb[0].mxu0 %v732
        %v2417 = vpop.f32.mrb[0].mxu0
        %v2418 = vadd.f32 %v2375, %v2417
        %v2419 = vpop.f32.mrb[0].mxu0
        %v2420 = vadd.f32 %v2377, %v2419
        %v2421 = vpop.f32.mrb[0].mxu0
        %v2422 = vadd.f32 %v2379, %v2421
        %v2423 = vpop.f32.mrb[0].mxu0
        %v2424 = vadd.f32 %v2381, %v2423
        %2425 = vdwg.mxu0
        %2426 = vmatprep.subr.bf16.mxu0 %v1957
        %2427 = vmatpush1.bf16.msra.mxu0 %v1956
        %2428 = vmatprep.subr.bf16.mxu0 %v1965
        %2429 = vmatpush1.bf16.msra.mxu0 %v1964
        %2430 = vmatprep.subr.bf16.mxu0 %v1973
        %2431 = vmatpush1.bf16.msra.mxu0 %v1972
        %2432 = vmatprep.subr.bf16.mxu0 %v1981
        %2433 = vmatpush1.bf16.msra.mxu0 %v1980
        %2434 = vmatprep.subr.bf16.mxu0 %v1989
        %2435 = vmatpush1.bf16.msra.mxu0 %v1988
        %2436 = vmatprep.subr.bf16.mxu0 %v1997
        %2437 = vmatpush1.bf16.msra.mxu0 %v1996
        %2438 = vmatprep.subr.bf16.mxu0 %v2005
        %2439 = vmatpush1.bf16.msra.mxu0 %v2004
        %2440 = vmatprep.subr.bf16.mxu0 %v2013
        %2441 = vmatpush1.bf16.msra.mxu0 %v2012
        %2442 = vmatprep.subr.bf16.mxu0 0
        %2443 = vmatpush1.bf16.msra.mxu0 0
        %2444 = vmatprep.subr.bf16.mxu0 0
        %2445 = vmatpush1.bf16.msra.mxu0 0
        %2446 = vmatprep.subr.bf16.mxu0 0
        %2447 = vmatpush1.bf16.msra.mxu0 0
        %2448 = vmatprep.subr.bf16.mxu0 0
        %2449 = vmatpush1.bf16.msra.mxu0 0
        %2450 = vmatprep.subr.bf16.mxu0 0
        %2451 = vmatpush1.bf16.msra.mxu0 0
        %2452 = vmatprep.subr.bf16.mxu0 0
        %2453 = vmatpush1.bf16.msra.mxu0 0
        %2454 = vmatprep.subr.bf16.mxu0 0
        %2455 = vmatpush1.bf16.msra.mxu0 0
        %2456 = vmatprep.subr.bf16.mxu0 0
        %2457 = vmatpush1.bf16.msra.mxu0 0
        %2458 = vmatprep.mubr.bf16.mxu0 0
        %2459 = vmatmul.mubr.bf16.gmra.mrb[0].mxu0 %v734
        %v2460 = vpop.f32.mrb[0].mxu0
        %v2461 = vadd.f32 %v2418, %v2460
        %v2462 = vpop.f32.mrb[0].mxu0
        %v2463 = vadd.f32 %v2420, %v2462
        %v2464 = vpop.f32.mrb[0].mxu0
        %v2465 = vadd.f32 %v2422, %v2464
        %v2466 = vpop.f32.mrb[0].mxu0
        %v2467 = vadd.f32 %v2424, %v2466
        %2468 = vdwg.mxu0
        %2469 = vmatprep.subr.bf16.mxu0 %v1703
        %2470 = vmatpush1.bf16.msra.mxu0 %v1702
        %2471 = vmatprep.subr.bf16.mxu0 %v1711
        %2472 = vmatpush1.bf16.msra.mxu0 %v1710
        %2473 = vmatprep.subr.bf16.mxu0 %v1719
        %2474 = vmatpush1.bf16.msra.mxu0 %v1718
        %2475 = vmatprep.subr.bf16.mxu0 %v1727
        %2476 = vmatpush1.bf16.msra.mxu0 %v1726
        %2477 = vmatprep.subr.bf16.mxu0 %v1735
        %2478 = vmatpush1.bf16.msra.mxu0 %v1734
        %2479 = vmatprep.subr.bf16.mxu0 %v1743
        %2480 = vmatpush1.bf16.msra.mxu0 %v1742
        %2481 = vmatprep.subr.bf16.mxu0 %v1751
        %2482 = vmatpush1.bf16.msra.mxu0 %v1750
        %2483 = vmatprep.subr.bf16.mxu0 %v1759
        %2484 = vmatpush1.bf16.msra.mxu0 %v1758
        %2485 = vmatprep.subr.bf16.mxu0 %v1767
        %2486 = vmatpush1.bf16.msra.mxu0 %v1766
        %2487 = vmatprep.subr.bf16.mxu0 %v1775
        %2488 = vmatpush1.bf16.msra.mxu0 %v1774
        %2489 = vmatprep.subr.bf16.mxu0 %v1783
        %2490 = vmatpush1.bf16.msra.mxu0 %v1782
        %2491 = vmatprep.subr.bf16.mxu0 %v1791
        %2492 = vmatpush1.bf16.msra.mxu0 %v1790
        %2493 = vmatprep.subr.bf16.mxu0 %v1799
        %2494 = vmatpush1.bf16.msra.mxu0 %v1798
        %2495 = vmatprep.subr.bf16.mxu0 %v1807
        %2496 = vmatpush1.bf16.msra.mxu0 %v1806
        %2497 = vmatprep.subr.bf16.mxu0 %v1815
        %2498 = vmatpush1.bf16.msra.mxu0 %v1814
        %2499 = vmatprep.subr.bf16.mxu0 %v1823
        %2500 = vmatpush1.bf16.msra.mxu0 %v1822
        %2501 = vmatprep.mubr.bf16.mxu0 %v731
        %2502 = vmatmul.mubr.bf16.gmra.mrb[0].mxu0 %v730
        %v2503 = vpop.f32.mrb[0].mxu0
        %v2504 = vadd.f32 0.0, %v2503
        %v2505 = vpop.f32.mrb[0].mxu0
        %v2506 = vadd.f32 0.0, %v2505
        %v2507 = vpop.f32.mrb[0].mxu0
        %v2508 = vadd.f32 0.0, %v2507
        %v2509 = vpop.f32.mrb[0].mxu0
        %v2510 = vadd.f32 0.0, %v2509
        %2511 = vdwg.mxu0
        %2512 = vmatprep.subr.bf16.mxu0 %v1831
        %2513 = vmatpush1.bf16.msra.mxu0 %v1830
        %2514 = vmatprep.subr.bf16.mxu0 %v1839
        %2515 = vmatpush1.bf16.msra.mxu0 %v1838
        %2516 = vmatprep.subr.bf16.mxu0 %v1847
        %2517 = vmatpush1.bf16.msra.mxu0 %v1846
        %2518 = vmatprep.subr.bf16.mxu0 %v1855
        %2519 = vmatpush1.bf16.msra.mxu0 %v1854
        %2520 = vmatprep.subr.bf16.mxu0 %v1863
        %2521 = vmatpush1.bf16.msra.mxu0 %v1862
        %2522 = vmatprep.subr.bf16.mxu0 %v1871
        %2523 = vmatpush1.bf16.msra.mxu0 %v1870
        %2524 = vmatprep.subr.bf16.mxu0 %v1879
        %2525 = vmatpush1.bf16.msra.mxu0 %v1878
        %2526 = vmatprep.subr.bf16.mxu0 %v1887
        %2527 = vmatpush1.bf16.msra.mxu0 %v1886
        %2528 = vmatprep.subr.bf16.mxu0 %v1895
        %2529 = vmatpush1.bf16.msra.mxu0 %v1894
        %2530 = vmatprep.subr.bf16.mxu0 %v1903
        %2531 = vmatpush1.bf16.msra.mxu0 %v1902
        %2532 = vmatprep.subr.bf16.mxu0 %v1911
        %2533 = vmatpush1.bf16.msra.mxu0 %v1910
        %2534 = vmatprep.subr.bf16.mxu0 %v1919
        %2535 = vmatpush1.bf16.msra.mxu0 %v1918
        %2536 = vmatprep.subr.bf16.mxu0 %v1927
        %2537 = vmatpush1.bf16.msra.mxu0 %v1926
        %2538 = vmatprep.subr.bf16.mxu0 %v1935
        %2539 = vmatpush1.bf16.msra.mxu0 %v1934
        %2540 = vmatprep.subr.bf16.mxu0 %v1943
        %2541 = vmatpush1.bf16.msra.mxu0 %v1942
        %2542 = vmatprep.subr.bf16.mxu0 %v1951
        %2543 = vmatpush1.bf16.msra.mxu0 %v1950
        %2544 = vmatprep.mubr.bf16.mxu0 %v733
        %2545 = vmatmul.mubr.bf16.gmra.mrb[0].mxu0 %v732
        %v2546 = vpop.f32.mrb[0].mxu0
        %v2547 = vadd.f32 %v2504, %v2546
        %v2548 = vpop.f32.mrb[0].mxu0
        %v2549 = vadd.f32 %v2506, %v2548
        %v2550 = vpop.f32.mrb[0].mxu0
        %v2551 = vadd.f32 %v2508, %v2550
        %v2552 = vpop.f32.mrb[0].mxu0
        %v2553 = vadd.f32 %v2510, %v2552
        %2554 = vdwg.mxu0
        %2555 = vmatprep.subr.bf16.mxu0 %v1959
        %2556 = vmatpush1.bf16.msra.mxu0 %v1958
        %2557 = vmatprep.subr.bf16.mxu0 %v1967
        %2558 = vmatpush1.bf16.msra.mxu0 %v1966
        %2559 = vmatprep.subr.bf16.mxu0 %v1975
        %2560 = vmatpush1.bf16.msra.mxu0 %v1974
        %2561 = vmatprep.subr.bf16.mxu0 %v1983
        %2562 = vmatpush1.bf16.msra.mxu0 %v1982
        %2563 = vmatprep.subr.bf16.mxu0 %v1991
        %2564 = vmatpush1.bf16.msra.mxu0 %v1990
        %2565 = vmatprep.subr.bf16.mxu0 %v1999
        %2566 = vmatpush1.bf16.msra.mxu0 %v1998
        %2567 = vmatprep.subr.bf16.mxu0 %v2007
        %2568 = vmatpush1.bf16.msra.mxu0 %v2006
        %2569 = vmatprep.subr.bf16.mxu0 %v2015
        %2570 = vmatpush1.bf16.msra.mxu0 %v2014
        %2571 = vmatprep.subr.bf16.mxu0 0
        %2572 = vmatpush1.bf16.msra.mxu0 0
        %2573 = vmatprep.subr.bf16.mxu0 0
        %2574 = vmatpush1.bf16.msra.mxu0 0
        %2575 = vmatprep.subr.bf16.mxu0 0
        %2576 = vmatpush1.bf16.msra.mxu0 0
        %2577 = vmatprep.subr.bf16.mxu0 0
        %2578 = vmatpush1.bf16.msra.mxu0 0
        %2579 = vmatprep.subr.bf16.mxu0 0
        %2580 = vmatpush1.bf16.msra.mxu0 0
        %2581 = vmatprep.subr.bf16.mxu0 0
        %2582 = vmatpush1.bf16.msra.mxu0 0
        %2583 = vmatprep.subr.bf16.mxu0 0
        %2584 = vmatpush1.bf16.msra.mxu0 0
        %2585 = vmatprep.subr.bf16.mxu0 0
        %2586 = vmatpush1.bf16.msra.mxu0 0
        %2587 = vmatprep.mubr.bf16.mxu0 0
        %2588 = vmatmul.mubr.bf16.gmra.mrb[0].mxu0 %v734
        %v2589 = vpop.f32.mrb[0].mxu0
        %v2590 = vadd.f32 %v2547, %v2589
        %v2591 = vpop.f32.mrb[0].mxu0
        %v2592 = vadd.f32 %v2549, %v2591
        %v2593 = vpop.f32.mrb[0].mxu0
        %v2594 = vadd.f32 %v2551, %v2593
        %v2595 = vpop.f32.mrb[0].mxu0
        %v2596 = vadd.f32 %v2553, %v2595
        %2597 = vdwg.mxu0
        %2598 = vmatprep.subr.bf16.mxu0 %v1705
        %2599 = vmatpush1.bf16.msra.mxu0 %v1704
        %2600 = vmatprep.subr.bf16.mxu0 %v1713
        %2601 = vmatpush1.bf16.msra.mxu0 %v1712
        %2602 = vmatprep.subr.bf16.mxu0 %v1721
        %2603 = vmatpush1.bf16.msra.mxu0 %v1720
        %2604 = vmatprep.subr.bf16.mxu0 %v1729
        %2605 = vmatpush1.bf16.msra.mxu0 %v1728
        %2606 = vmatprep.subr.bf16.mxu0 %v1737
        %2607 = vmatpush1.bf16.msra.mxu0 %v1736
        %2608 = vmatprep.subr.bf16.mxu0 %v1745
        %2609 = vmatpush1.bf16.msra.mxu0 %v1744
        %2610 = vmatprep.subr.bf16.mxu0 %v1753
        %2611 = vmatpush1.bf16.msra.mxu0 %v1752
        %2612 = vmatprep.subr.bf16.mxu0 %v1761
        %2613 = vmatpush1.bf16.msra.mxu0 %v1760
        %2614 = vmatprep.subr.bf16.mxu0 %v1769
        %2615 = vmatpush1.bf16.msra.mxu0 %v1768
        %2616 = vmatprep.subr.bf16.mxu0 %v1777
        %2617 = vmatpush1.bf16.msra.mxu0 %v1776
        %2618 = vmatprep.subr.bf16.mxu0 %v1785
        %2619 = vmatpush1.bf16.msra.mxu0 %v1784
        %2620 = vmatprep.subr.bf16.mxu0 %v1793
        %2621 = vmatpush1.bf16.msra.mxu0 %v1792
        %2622 = vmatprep.subr.bf16.mxu0 %v1801
        %2623 = vmatpush1.bf16.msra.mxu0 %v1800
        %2624 = vmatprep.subr.bf16.mxu0 %v1809
        %2625 = vmatpush1.bf16.msra.mxu0 %v1808
        %2626 = vmatprep.subr.bf16.mxu0 %v1817
        %2627 = vmatpush1.bf16.msra.mxu0 %v1816
        %2628 = vmatprep.subr.bf16.mxu0 %v1825
        %2629 = vmatpush1.bf16.msra.mxu0 %v1824
        %2630 = vmatprep.mubr.bf16.mxu0 %v731
        %2631 = vmatmul.mubr.bf16.gmra.mrb[0].mxu0 %v730
        %v2632 = vpop.f32.mrb[0].mxu0
        %v2633 = vadd.f32 0.0, %v2632
        %v2634 = vpop.f32.mrb[0].mxu0
        %v2635 = vadd.f32 0.0, %v2634
        %v2636 = vpop.f32.mrb[0].mxu0
        %v2637 = vadd.f32 0.0, %v2636
        %v2638 = vpop.f32.mrb[0].mxu0
        %v2639 = vadd.f32 0.0, %v2638
        %2640 = vdwg.mxu0
        %2641 = vmatprep.subr.bf16.mxu0 %v1833
        %2642 = vmatpush1.bf16.msra.mxu0 %v1832
        %2643 = vmatprep.subr.bf16.mxu0 %v1841
        %2644 = vmatpush1.bf16.msra.mxu0 %v1840
        %2645 = vmatprep.subr.bf16.mxu0 %v1849
        %2646 = vmatpush1.bf16.msra.mxu0 %v1848
        %2647 = vmatprep.subr.bf16.mxu0 %v1857
        %2648 = vmatpush1.bf16.msra.mxu0 %v1856
        %2649 = vmatprep.subr.bf16.mxu0 %v1865
        %2650 = vmatpush1.bf16.msra.mxu0 %v1864
        %2651 = vmatprep.subr.bf16.mxu0 %v1873
        %2652 = vmatpush1.bf16.msra.mxu0 %v1872
        %2653 = vmatprep.subr.bf16.mxu0 %v1881
        %2654 = vmatpush1.bf16.msra.mxu0 %v1880
        %2655 = vmatprep.subr.bf16.mxu0 %v1889
        %2656 = vmatpush1.bf16.msra.mxu0 %v1888
        %2657 = vmatprep.subr.bf16.mxu0 %v1897
        %2658 = vmatpush1.bf16.msra.mxu0 %v1896
        %2659 = vmatprep.subr.bf16.mxu0 %v1905
        %2660 = vmatpush1.bf16.msra.mxu0 %v1904
        %2661 = vmatprep.subr.bf16.mxu0 %v1913
        %2662 = vmatpush1.bf16.msra.mxu0 %v1912
        %2663 = vmatprep.subr.bf16.mxu0 %v1921
        %2664 = vmatpush1.bf16.msra.mxu0 %v1920
        %2665 = vmatprep.subr.bf16.mxu0 %v1929
        %2666 = vmatpush1.bf16.msra.mxu0 %v1928
        %2667 = vmatprep.subr.bf16.mxu0 %v1937
        %2668 = vmatpush1.bf16.msra.mxu0 %v1936
        %2669 = vmatprep.subr.bf16.mxu0 %v1945
        %2670 = vmatpush1.bf16.msra.mxu0 %v1944
        %2671 = vmatprep.subr.bf16.mxu0 %v1953
        %2672 = vmatpush1.bf16.msra.mxu0 %v1952
        %2673 = vmatprep.mubr.bf16.mxu0 %v733
        %2674 = vmatmul.mubr.bf16.gmra.mrb[0].mxu0 %v732
        %v2675 = vpop.f32.mrb[0].mxu0
        %v2676 = vadd.f32 %v2633, %v2675
        %v2677 = vpop.f32.mrb[0].mxu0
        %v2678 = vadd.f32 %v2635, %v2677
        %v2679 = vpop.f32.mrb[0].mxu0
        %v2680 = vadd.f32 %v2637, %v2679
        %v2681 = vpop.f32.mrb[0].mxu0
        %v2682 = vadd.f32 %v2639, %v2681
        %2683 = vdwg.mxu0
        %2684 = vmatprep.subr.bf16.mxu0 %v1961
        %2685 = vmatpush1.bf16.msra.mxu0 %v1960
        %2686 = vmatprep.subr.bf16.mxu0 %v1969
        %2687 = vmatpush1.bf16.msra.mxu0 %v1968
        %2688 = vmatprep.subr.bf16.mxu0 %v1977
        %2689 = vmatpush1.bf16.msra.mxu0 %v1976
        %2690 = vmatprep.subr.bf16.mxu0 %v1985
        %2691 = vmatpush1.bf16.msra.mxu0 %v1984
        %2692 = vmatprep.subr.bf16.mxu0 %v1993
        %2693 = vmatpush1.bf16.msra.mxu0 %v1992
        %2694 = vmatprep.subr.bf16.mxu0 %v2001
        %2695 = vmatpush1.bf16.msra.mxu0 %v2000
        %2696 = vmatprep.subr.bf16.mxu0 %v2009
        %2697 = vmatpush1.bf16.msra.mxu0 %v2008
        %2698 = vmatprep.subr.bf16.mxu0 %v2017
        %2699 = vmatpush1.bf16.msra.mxu0 %v2016
        %2700 = vmatprep.subr.bf16.mxu0 0
        %2701 = vmatpush1.bf16.msra.mxu0 0
        %2702 = vmatprep.subr.bf16.mxu0 0
        %2703 = vmatpush1.bf16.msra.mxu0 0
        %2704 = vmatprep.subr.bf16.mxu0 0
        %2705 = vmatpush1.bf16.msra.mxu0 0
        %2706 = vmatprep.subr.bf16.mxu0 0
        %2707 = vmatpush1.bf16.msra.mxu0 0
        %2708 = vmatprep.subr.bf16.mxu0 0
        %2709 = vmatpush1.bf16.msra.mxu0 0
        %2710 = vmatprep.subr.bf16.mxu0 0
        %2711 = vmatpush1.bf16.msra.mxu0 0
        %2712 = vmatprep.subr.bf16.mxu0 0
        %2713 = vmatpush1.bf16.msra.mxu0 0
        %2714 = vmatprep.subr.bf16.mxu0 0
        %2715 = vmatpush1.bf16.msra.mxu0 0
        %2716 = vmatprep.mubr.bf16.mxu0 0
        %2717 = vmatmul.mubr.bf16.gmra.mrb[0].mxu0 %v734
        %v2718 = vpop.f32.mrb[0].mxu0
        %v2719 = vadd.f32 %v2676, %v2718
        %v2720 = vpop.f32.mrb[0].mxu0
        %v2721 = vadd.f32 %v2678, %v2720
        %v2722 = vpop.f32.mrb[0].mxu0
        %v2723 = vadd.f32 %v2680, %v2722
        %v2724 = vpop.f32.mrb[0].mxu0
        %v2725 = vadd.f32 %v2682, %v2724
        %2726 = vdwg.mxu0
        %2727 = vmatprep.subr.bf16.mxu0 %v1707
        %2728 = vmatpush1.bf16.msra.mxu0 %v1706
        %2729 = vmatprep.subr.bf16.mxu0 %v1715
        %2730 = vmatpush1.bf16.msra.mxu0 %v1714
        %2731 = vmatprep.subr.bf16.mxu0 %v1723
        %2732 = vmatpush1.bf16.msra.mxu0 %v1722
        %2733 = vmatprep.subr.bf16.mxu0 %v1731
        %2734 = vmatpush1.bf16.msra.mxu0 %v1730
        %2735 = vmatprep.subr.bf16.mxu0 %v1739
        %2736 = vmatpush1.bf16.msra.mxu0 %v1738
        %2737 = vmatprep.subr.bf16.mxu0 %v1747
        %2738 = vmatpush1.bf16.msra.mxu0 %v1746
        %2739 = vmatprep.subr.bf16.mxu0 %v1755
        %2740 = vmatpush1.bf16.msra.mxu0 %v1754
        %2741 = vmatprep.subr.bf16.mxu0 %v1763
        %2742 = vmatpush1.bf16.msra.mxu0 %v1762
        %2743 = vmatprep.subr.bf16.mxu0 %v1771
        %2744 = vmatpush1.bf16.msra.mxu0 %v1770
        %2745 = vmatprep.subr.bf16.mxu0 %v1779
        %2746 = vmatpush1.bf16.msra.mxu0 %v1778
        %2747 = vmatprep.subr.bf16.mxu0 %v1787
        %2748 = vmatpush1.bf16.msra.mxu0 %v1786
        %2749 = vmatprep.subr.bf16.mxu0 %v1795
        %2750 = vmatpush1.bf16.msra.mxu0 %v1794
        %2751 = vmatprep.subr.bf16.mxu0 %v1803
        %2752 = vmatpush1.bf16.msra.mxu0 %v1802
        %2753 = vmatprep.subr.bf16.mxu0 %v1811
        %2754 = vmatpush1.bf16.msra.mxu0 %v1810
        %2755 = vmatprep.subr.bf16.mxu0 %v1819
        %2756 = vmatpush1.bf16.msra.mxu0 %v1818
        %2757 = vmatprep.subr.bf16.mxu0 %v1827
        %2758 = vmatpush1.bf16.msra.mxu0 %v1826
        %2759 = vmatprep.mubr.bf16.mxu0 %v731
        %2760 = vmatmul.mubr.bf16.gmra.mrb[0].mxu0 %v730
        %v2761 = vpop.f32.mrb[0].mxu0
        %v2762 = vadd.f32 0.0, %v2761
        %v2763 = vpop.f32.mrb[0].mxu0
        %v2764 = vadd.f32 0.0, %v2763
        %v2765 = vpop.f32.mrb[0].mxu0
        %v2766 = vadd.f32 0.0, %v2765
        %v2767 = vpop.f32.mrb[0].mxu0
        %v2768 = vadd.f32 0.0, %v2767
        %2769 = vdwg.mxu0
        %2770 = vmatprep.subr.bf16.mxu0 %v1835
        %2771 = vmatpush1.bf16.msra.mxu0 %v1834
        %2772 = vmatprep.subr.bf16.mxu0 %v1843
        %2773 = vmatpush1.bf16.msra.mxu0 %v1842
        %2774 = vmatprep.subr.bf16.mxu0 %v1851
        %2775 = vmatpush1.bf16.msra.mxu0 %v1850
        %2776 = vmatprep.subr.bf16.mxu0 %v1859
        %2777 = vmatpush1.bf16.msra.mxu0 %v1858
        %2778 = vmatprep.subr.bf16.mxu0 %v1867
        %2779 = vmatpush1.bf16.msra.mxu0 %v1866
        %2780 = vmatprep.subr.bf16.mxu0 %v1875
        %2781 = vmatpush1.bf16.msra.mxu0 %v1874
        %2782 = vmatprep.subr.bf16.mxu0 %v1883
        %2783 = vmatpush1.bf16.msra.mxu0 %v1882
        %2784 = vmatprep.subr.bf16.mxu0 %v1891
        %2785 = vmatpush1.bf16.msra.mxu0 %v1890
        %2786 = vmatprep.subr.bf16.mxu0 %v1899
        %2787 = vmatpush1.bf16.msra.mxu0 %v1898
        %2788 = vmatprep.subr.bf16.mxu0 %v1907
        %2789 = vmatpush1.bf16.msra.mxu0 %v1906
        %2790 = vmatprep.subr.bf16.mxu0 %v1915
        %2791 = vmatpush1.bf16.msra.mxu0 %v1914
        %2792 = vmatprep.subr.bf16.mxu0 %v1923
        %2793 = vmatpush1.bf16.msra.mxu0 %v1922
        %2794 = vmatprep.subr.bf16.mxu0 %v1931
        %2795 = vmatpush1.bf16.msra.mxu0 %v1930
        %2796 = vmatprep.subr.bf16.mxu0 %v1939
        %2797 = vmatpush1.bf16.msra.mxu0 %v1938
        %2798 = vmatprep.subr.bf16.mxu0 %v1947
        %2799 = vmatpush1.bf16.msra.mxu0 %v1946
        %2800 = vmatprep.subr.bf16.mxu0 %v1955
        %2801 = vmatpush1.bf16.msra.mxu0 %v1954
        %2802 = vmatprep.mubr.bf16.mxu0 %v733
        %2803 = vmatmul.mubr.bf16.gmra.mrb[0].mxu0 %v732
        %v2804 = vpop.f32.mrb[0].mxu0
        %v2805 = vadd.f32 %v2762, %v2804
        %v2806 = vpop.f32.mrb[0].mxu0
        %v2807 = vadd.f32 %v2764, %v2806
        %v2808 = vpop.f32.mrb[0].mxu0
        %v2809 = vadd.f32 %v2766, %v2808
        %v2810 = vpop.f32.mrb[0].mxu0
        %v2811 = vadd.f32 %v2768, %v2810
        %2812 = vdwg.mxu0
        %2813 = vmatprep.subr.bf16.mxu0 %v1963
        %2814 = vmatpush1.bf16.msra.mxu0 %v1962
        %2815 = vmatprep.subr.bf16.mxu0 %v1971
        %2816 = vmatpush1.bf16.msra.mxu0 %v1970
        %2817 = vmatprep.subr.bf16.mxu0 %v1979
        %2818 = vmatpush1.bf16.msra.mxu0 %v1978
        %2819 = vmatprep.subr.bf16.mxu0 %v1987
        %2820 = vmatpush1.bf16.msra.mxu0 %v1986
        %2821 = vmatprep.subr.bf16.mxu0 %v1995
        %2822 = vmatpush1.bf16.msra.mxu0 %v1994
        %2823 = vmatprep.subr.bf16.mxu0 %v2003
        %2824 = vmatpush1.bf16.msra.mxu0 %v2002
        %2825 = vmatprep.subr.bf16.mxu0 %v2011
        %2826 = vmatpush1.bf16.msra.mxu0 %v2010
        %2827 = vmatprep.subr.bf16.mxu0 %v2019
        %2828 = vmatpush1.bf16.msra.mxu0 %v2018
        %2829 = vmatprep.subr.bf16.mxu0 0
        %2830 = vmatpush1.bf16.msra.mxu0 0
        %2831 = vmatprep.subr.bf16.mxu0 0
        %2832 = vmatpush1.bf16.msra.mxu0 0
        %2833 = vmatprep.subr.bf16.mxu0 0
        %2834 = vmatpush1.bf16.msra.mxu0 0
        %2835 = vmatprep.subr.bf16.mxu0 0
        %2836 = vmatpush1.bf16.msra.mxu0 0
        %2837 = vmatprep.subr.bf16.mxu0 0
        %2838 = vmatpush1.bf16.msra.mxu0 0
        %2839 = vmatprep.subr.bf16.mxu0 0
        %2840 = vmatpush1.bf16.msra.mxu0 0
        %2841 = vmatprep.subr.bf16.mxu0 0
        %2842 = vmatpush1.bf16.msra.mxu0 0
        %2843 = vmatprep.subr.bf16.mxu0 0
        %2844 = vmatpush1.bf16.msra.mxu0 0
        %2845 = vmatprep.mubr.bf16.mxu0 0
        %2846 = vmatmul.mubr.bf16.gmra.mrb[0].mxu0 %v734
        %v2847 = vpop.f32.mrb[0].mxu0
        %v2848 = vadd.f32 %v2805, %v2847
        %v2849 = vpop.f32.mrb[0].mxu0
        %v2850 = vadd.f32 %v2807, %v2849
        %v2851 = vpop.f32.mrb[0].mxu0
        %v2852 = vadd.f32 %v2809, %v2851
        %v2853 = vpop.f32.mrb[0].mxu0
        %v2854 = vadd.f32 %v2811, %v2853
        %2855 = vdwg.mxu0
        %v2856 = vadd.f32 %v372, %v2461
        %v2857 = vadd.f32 %v373, %v2463
        %v2858 = vadd.f32 %v374, %v2590
        %v2859 = vadd.f32 %v375, %v2592
        %v2860 = vadd.f32 %v376, %v2719
        %v2861 = vadd.f32 %v377, %v2721
        %v2862 = vadd.f32 %v378, %v2848
        %v2863 = vadd.f32 %v379, %v2850
        %v2864 = vadd.f32 %v380, %v2465
        %v2865 = vadd.f32 %v381, %v2467
        %v2866 = vadd.f32 %v382, %v2594
        %v2867 = vadd.f32 %v383, %v2596
        %v2868 = vadd.f32 %v384, %v2723
        %v2869 = vadd.f32 %v385, %v2725
        %v2870 = vadd.f32 %v386, %v2852
        %v2871 = vadd.f32 %v387, %v2854
        %2872 = vst [vmem:[#allocation2] sm:$0xff] %v2856
        %2873 = vst [vmem:[#allocation2 + $0x8] sm:$0xff] %v2857
        %2874 = vst [vmem:[#allocation2 + $0x10] sm:$0xff] %v2858
        %2875 = vst [vmem:[#allocation2 + $0x18] sm:$0xff] %v2859
        %2876 = vst [vmem:[#allocation2 + $0x20] sm:$0xff] %v2860
        %2877 = vst [vmem:[#allocation2 + $0x28] sm:$0xff] %v2861
        %2878 = vst [vmem:[#allocation2 + $0x30] sm:$0xff] %v2862
        %2879 = vst [vmem:[#allocation2 + $0x38] sm:$0xff] %v2863
        %2880 = vst [vmem:[#allocation2 + $0x40] sm:$0xff] %v2864
        %2881 = vst [vmem:[#allocation2 + $0x48] sm:$0xff] %v2865
        %2882 = vst [vmem:[#allocation2 + $0x50] sm:$0xff] %v2866
        %2883 = vst [vmem:[#allocation2 + $0x58] sm:$0xff] %v2867
        %2884 = vst [vmem:[#allocation2 + $0x60] sm:$0xff] %v2868
        %2885 = vst [vmem:[#allocation2 + $0x68] sm:$0xff] %v2869
        %2886 = vst [vmem:[#allocation2 + $0x70] sm:$0xff] %v2870
        %2887 = vst [vmem:[#allocation2 + $0x78] sm:$0xff] %v2871
        %p2888 = scmp.eq.s32.totalorder %s21, 4
        // Predicated region
        $region71: #{dueling_dqn_forward.7} parent=61 // pred_check
          %p2889 = pneg %p2888
        $region72: #{dueling_dqn_forward.7} parent=61 // pred_check_branch
          %2891 = sbr.rel (%p2889) target = $region74
        $region73: #{dueling_dqn_forward.7} parent=61 // pred_region
          %v2892 = vld [vmem:[#allocation2] sm:$0xff]
          %v2893 = vld [vmem:[#allocation2 + $0x8] sm:$0xff]
          %v2894 = vld [vmem:[#allocation2 + $0x10] sm:$0xff]
          %v2895 = vld [vmem:[#allocation2 + $0x18] sm:$0xff]
          %v2896 = vld [vmem:[#allocation2 + $0x20] sm:$0xff]
          %v2897 = vld [vmem:[#allocation2 + $0x28] sm:$0xff]
          %v2898 = vld [vmem:[#allocation2 + $0x30] sm:$0xff]
          %v2899 = vld [vmem:[#allocation2 + $0x38] sm:$0xff]
          %v2900 = vld [vmem:[#allocation2 + $0x40] sm:$0xff]
          %v2901 = vld [vmem:[#allocation2 + $0x48] sm:$0xff]
          %v2902 = vld [vmem:[#allocation2 + $0x50] sm:$0xff]
          %v2903 = vld [vmem:[#allocation2 + $0x58] sm:$0xff]
          %v2904 = vld [vmem:[#allocation2 + $0x60] sm:$0xff]
          %v2905 = vld [vmem:[#allocation2 + $0x68] sm:$0xff]
          %v2906 = vld [vmem:[#allocation2 + $0x70] sm:$0xff]
          %v2907 = vld [vmem:[#allocation2 + $0x78] sm:$0xff]
          %v2908 = vmax.f32 %v2892, 0.0
          %v2909 = vmax.f32 %v2893, 0.0
          %v2910 = vmax.f32 %v2894, 0.0
          %v2911 = vmax.f32 %v2895, 0.0
          %v2912 = vmax.f32 %v2896, 0.0
          %v2913 = vmax.f32 %v2897, 0.0
          %v2914 = vmax.f32 %v2898, 0.0
          %v2915 = vmax.f32 %v2899, 0.0
          %v2916 = vmax.f32 %v2900, 0.0
          %v2917 = vmax.f32 %v2901, 0.0
          %v2918 = vmax.f32 %v2902, 0.0
          %v2919 = vmax.f32 %v2903, 0.0
          %v2920 = vmax.f32 %v2904, 0.0
          %v2921 = vmax.f32 %v2905, 0.0
          %v2922 = vmax.f32 %v2906, 0.0
          %v2923 = vmax.f32 %v2907, 0.0
          %v2924 = vpack.c.bf16 %v2916, %v2908
          %v2925 = vpack.c.bf16 %v2917, %v2909
          %v2926 = vpack.c.bf16 %v2918, %v2910
          %v2927 = vpack.c.bf16 %v2919, %v2911
          %v2928 = vpack.c.bf16 %v2920, %v2912
          %v2929 = vpack.c.bf16 %v2921, %v2913
          %v2930 = vpack.c.bf16 %v2922, %v2914
          %v2931 = vpack.c.bf16 %v2923, %v2915
          %v2932 = vld [vmem:[%s3] sm:$0xf]
          %v2933 = vld [vmem:[%s3 + $0x4] sm:$0xf]
          %v2934 = vld [vmem:[%s3 + $0x8] sm:$0xf]
          %v2935 = vld [vmem:[%s3 + $0xc] sm:$0xf]
          %v2936 = vld [vmem:[%s3 + $0x10] sm:$0xf]
          %v2937 = vld [vmem:[%s3 + $0x14] sm:$0xf]
          %v2938 = vld [vmem:[%s3 + $0x18] sm:$0xf]
          %v2939 = vld [vmem:[%s3 + $0x1c] sm:$0xf]
          %v2940 = vld [vmem:[%s3 + $0x20] sm:$0xf]
          %v2941 = vld [vmem:[%s3 + $0x24] sm:$0xf]
          %v2942 = vld [vmem:[%s3 + $0x28] sm:$0xf]
          %v2943 = vld [vmem:[%s3 + $0x2c] sm:$0xf]
          %v2944 = vld [vmem:[%s3 + $0x30] sm:$0xf]
          %v2945 = vld [vmem:[%s3 + $0x34] sm:$0xf]
          %v2946 = vld [vmem:[%s3 + $0x38] sm:$0xf]
          %v2947 = vld [vmem:[%s3 + $0x3c] sm:$0xf]
          %v2948 = vld [vmem:[%s3 + $0x40] sm:$0xf]
          %v2949 = vld [vmem:[%s3 + $0x44] sm:$0xf]
          %v2950 = vld [vmem:[%s3 + $0x48] sm:$0xf]
          %v2951 = vld [vmem:[%s3 + $0x4c] sm:$0xf]
          %v2952 = vld [vmem:[%s3 + $0x50] sm:$0xf]
          %v2953 = vld [vmem:[%s3 + $0x54] sm:$0xf]
          %v2954 = vld [vmem:[%s3 + $0x58] sm:$0xf]
          %v2955 = vld [vmem:[%s3 + $0x5c] sm:$0xf]
          %v2956 = vld [vmem:[%s3 + $0x60] sm:$0xf]
          %v2957 = vld [vmem:[%s3 + $0x64] sm:$0xf]
          %v2958 = vld [vmem:[%s3 + $0x68] sm:$0xf]
          %v2959 = vld [vmem:[%s3 + $0x6c] sm:$0xf]
          %v2960 = vld [vmem:[%s3 + $0x70] sm:$0xf]
          %v2961 = vld [vmem:[%s3 + $0x74] sm:$0xf]
          %v2962 = vld [vmem:[%s3 + $0x78] sm:$0xf]
          %v2963 = vld [vmem:[%s3 + $0x7c] sm:$0xf]
          %v2964 = vld [vmem:[%s3 + $0x80] sm:$0xf]
          %v2965 = vld [vmem:[%s3 + $0x84] sm:$0xf]
          %v2966 = vld [vmem:[%s3 + $0x88] sm:$0xf]
          %v2967 = vld [vmem:[%s3 + $0x8c] sm:$0xf]
          %v2968 = vld [vmem:[%s3 + $0x90] sm:$0xf]
          %v2969 = vld [vmem:[%s3 + $0x94] sm:$0xf]
          %v2970 = vld [vmem:[%s3 + $0x98] sm:$0xf]
          %v2971 = vld [vmem:[%s3 + $0x9c] sm:$0xf]
          %v2972 = vld [vmem:[%s3 + $0xa0] sm:$0xf]
          %v2973 = vld [vmem:[%s3 + $0xa4] sm:$0xf]
          %v2974 = vld [vmem:[%s3 + $0xa8] sm:$0xf]
          %v2975 = vld [vmem:[%s3 + $0xac] sm:$0xf]
          %v2976 = vld [vmem:[%s3 + $0xb0] sm:$0xf]
          %v2977 = vld [vmem:[%s3 + $0xb4] sm:$0xf]
          %v2978 = vld [vmem:[%s3 + $0xb8] sm:$0xf]
          %v2979 = vld [vmem:[%s3 + $0xbc] sm:$0xf]
          %v2980 = vld [vmem:[%s3 + $0xc0] sm:$0xf]
          %v2981 = vld [vmem:[%s3 + $0xc4] sm:$0xf]
          %v2982 = vld [vmem:[%s3 + $0xc8] sm:$0xf]
          %v2983 = vld [vmem:[%s3 + $0xcc] sm:$0xf]
          %v2984 = vld [vmem:[%s3 + $0xd0] sm:$0xf]
          %v2985 = vld [vmem:[%s3 + $0xd4] sm:$0xf]
          %v2986 = vld [vmem:[%s3 + $0xd8] sm:$0xf]
          %v2987 = vld [vmem:[%s3 + $0xdc] sm:$0xf]
          %v2988 = vld [vmem:[%s3 + $0xe0] sm:$0xf]
          %v2989 = vld [vmem:[%s3 + $0xe4] sm:$0xf]
          %v2990 = vld [vmem:[%s3 + $0xe8] sm:$0xf]
          %v2991 = vld [vmem:[%s3 + $0xec] sm:$0xf]
          %v2992 = vld [vmem:[%s3 + $0xf0] sm:$0xf]
          %v2993 = vld [vmem:[%s3 + $0xf4] sm:$0xf]
          %v2994 = vld [vmem:[%s3 + $0xf8] sm:$0xf]
          %v2995 = vld [vmem:[%s3 + $0xfc] sm:$0xf]
          %v2996 = vld [vmem:[%s3 + $0x100] sm:$0xf]
          %v2997 = vld [vmem:[%s3 + $0x104] sm:$0xf]
          %v2998 = vld [vmem:[%s3 + $0x108] sm:$0xf]
          %v2999 = vld [vmem:[%s3 + $0x10c] sm:$0xf]
          %v3000 = vld [vmem:[%s3 + $0x110] sm:$0xf]
          %v3001 = vld [vmem:[%s3 + $0x114] sm:$0xf]
          %v3002 = vld [vmem:[%s3 + $0x118] sm:$0xf]
          %v3003 = vld [vmem:[%s3 + $0x11c] sm:$0xf]
          %v3004 = vld [vmem:[%s3 + $0x120] sm:$0xf]
          %v3005 = vld [vmem:[%s3 + $0x124] sm:$0xf]
          %v3006 = vld [vmem:[%s3 + $0x128] sm:$0xf]
          %v3007 = vld [vmem:[%s3 + $0x12c] sm:$0xf]
          %v3008 = vld [vmem:[%s3 + $0x130] sm:$0xf]
          %v3009 = vld [vmem:[%s3 + $0x134] sm:$0xf]
          %v3010 = vld [vmem:[%s3 + $0x138] sm:$0xf]
          %v3011 = vld [vmem:[%s3 + $0x13c] sm:$0xf]
          %v3012 = vld [vmem:[%s3 + $0x140] sm:$0xf]
          %v3013 = vld [vmem:[%s3 + $0x144] sm:$0xf]
          %v3014 = vld [vmem:[%s3 + $0x148] sm:$0xf]
          %v3015 = vld [vmem:[%s3 + $0x14c] sm:$0xf]
          %v3016 = vld [vmem:[%s3 + $0x150] sm:$0xf]
          %v3017 = vld [vmem:[%s3 + $0x154] sm:$0xf]
          %v3018 = vld [vmem:[%s3 + $0x158] sm:$0xf]
          %v3019 = vld [vmem:[%s3 + $0x15c] sm:$0xf]
          %v3020 = vld [vmem:[%s3 + $0x160] sm:$0xf]
          %v3021 = vld [vmem:[%s3 + $0x164] sm:$0xf]
          %v3022 = vld [vmem:[%s3 + $0x168] sm:$0xf]
          %v3023 = vld [vmem:[%s3 + $0x16c] sm:$0xf]
          %v3024 = vld [vmem:[%s3 + $0x170] sm:$0xf]
          %v3025 = vld [vmem:[%s3 + $0x174] sm:$0xf]
          %v3026 = vld [vmem:[%s3 + $0x178] sm:$0xf]
          %v3027 = vld [vmem:[%s3 + $0x17c] sm:$0xf]
          %v3028 = vld [vmem:[%s3 + $0x180] sm:$0xf]
          %v3029 = vld [vmem:[%s3 + $0x184] sm:$0xf]
          %v3030 = vld [vmem:[%s3 + $0x188] sm:$0xf]
          %v3031 = vld [vmem:[%s3 + $0x18c] sm:$0xf]
          %v3032 = vld [vmem:[%s3 + $0x190] sm:$0xf]
          %v3033 = vld [vmem:[%s3 + $0x194] sm:$0xf]
          %v3034 = vld [vmem:[%s3 + $0x198] sm:$0xf]
          %v3035 = vld [vmem:[%s3 + $0x19c] sm:$0xf]
          %v3036 = vld [vmem:[%s3 + $0x1a0] sm:$0xf]
          %v3037 = vld [vmem:[%s3 + $0x1a4] sm:$0xf]
          %v3038 = vld [vmem:[%s3 + $0x1a8] sm:$0xf]
          %v3039 = vld [vmem:[%s3 + $0x1ac] sm:$0xf]
          %v3040 = vld [vmem:[%s3 + $0x1b0] sm:$0xf]
          %v3041 = vld [vmem:[%s3 + $0x1b4] sm:$0xf]
          %v3042 = vld [vmem:[%s3 + $0x1b8] sm:$0xf]
          %v3043 = vld [vmem:[%s3 + $0x1bc] sm:$0xf]
          %v3044 = vld [vmem:[%s3 + $0x1c0] sm:$0xf]
          %v3045 = vld [vmem:[%s3 + $0x1c4] sm:$0xf]
          %v3046 = vld [vmem:[%s3 + $0x1c8] sm:$0xf]
          %v3047 = vld [vmem:[%s3 + $0x1cc] sm:$0xf]
          %v3048 = vld [vmem:[%s3 + $0x1d0] sm:$0xf]
          %v3049 = vld [vmem:[%s3 + $0x1d4] sm:$0xf]
          %v3050 = vld [vmem:[%s3 + $0x1d8] sm:$0xf]
          %v3051 = vld [vmem:[%s3 + $0x1dc] sm:$0xf]
          %v3052 = vld [vmem:[%s3 + $0x1e0] sm:$0xf]
          %v3053 = vld [vmem:[%s3 + $0x1e4] sm:$0xf]
          %v3054 = vld [vmem:[%s3 + $0x1e8] sm:$0xf]
          %v3055 = vld [vmem:[%s3 + $0x1ec] sm:$0xf]
          %v3056 = vld [vmem:[%s3 + $0x1f0] sm:$0xf]
          %v3057 = vld [vmem:[%s3 + $0x1f4] sm:$0xf]
          %v3058 = vld [vmem:[%s3 + $0x1f8] sm:$0xf]
          %v3059 = vld [vmem:[%s3 + $0x1fc] sm:$0xf]
          %v3060 = vld [vmem:[%s4] sm:$0x1]
          %v3062 = vlaneseq
          %v3063 = vshrl.u32 %v3062, 7
          %v3064 = vsub.s32 0, %v3063
          %v3065 = vrot.slane %v3060, %v3064
          %v3195 = vunpack.c.l.b16 %v2932
          %v3196 = vunpack.c.l.b16 %v2933
          %v3197 = vunpack.c.l.b16 %v2934
          %v3198 = vunpack.c.l.b16 %v2935
          %v3199 = vunpack.c.l.b16 %v2936
          %v3200 = vunpack.c.l.b16 %v2937
          %v3201 = vunpack.c.l.b16 %v2938
          %v3202 = vunpack.c.l.b16 %v2939
          %v3203 = vunpack.c.l.b16 %v2940
          %v3204 = vunpack.c.l.b16 %v2941
          %v3205 = vunpack.c.l.b16 %v2942
          %v3206 = vunpack.c.l.b16 %v2943
          %v3207 = vunpack.c.l.b16 %v2944
          %v3208 = vunpack.c.l.b16 %v2945
          %v3209 = vunpack.c.l.b16 %v2946
          %v3210 = vunpack.c.l.b16 %v2947
          %v3211 = vunpack.c.l.b16 %v2948
          %v3212 = vunpack.c.l.b16 %v2949
          %v3213 = vunpack.c.l.b16 %v2950
          %v3214 = vunpack.c.l.b16 %v2951
          %v3215 = vunpack.c.l.b16 %v2952
          %v3216 = vunpack.c.l.b16 %v2953
          %v3217 = vunpack.c.l.b16 %v2954
          %v3218 = vunpack.c.l.b16 %v2955
          %v3219 = vunpack.c.l.b16 %v2956
          %v3220 = vunpack.c.l.b16 %v2957
          %v3221 = vunpack.c.l.b16 %v2958
          %v3222 = vunpack.c.l.b16 %v2959
          %v3223 = vunpack.c.l.b16 %v2960
          %v3224 = vunpack.c.l.b16 %v2961
          %v3225 = vunpack.c.l.b16 %v2962
          %v3226 = vunpack.c.l.b16 %v2963
          %v3227 = vunpack.c.l.b16 %v2964
          %v3228 = vunpack.c.l.b16 %v2965
          %v3229 = vunpack.c.l.b16 %v2966
          %v3230 = vunpack.c.l.b16 %v2967
          %v3231 = vunpack.c.l.b16 %v2968
          %v3232 = vunpack.c.l.b16 %v2969
          %v3233 = vunpack.c.l.b16 %v2970
          %v3234 = vunpack.c.l.b16 %v2971
          %v3235 = vunpack.c.l.b16 %v2972
          %v3236 = vunpack.c.l.b16 %v2973
          %v3237 = vunpack.c.l.b16 %v2974
          %v3238 = vunpack.c.l.b16 %v2975
          %v3239 = vunpack.c.l.b16 %v2976
          %v3240 = vunpack.c.l.b16 %v2977
          %v3241 = vunpack.c.l.b16 %v2978
          %v3242 = vunpack.c.l.b16 %v2979
          %v3243 = vunpack.c.l.b16 %v2980
          %v3244 = vunpack.c.l.b16 %v2981
          %v3245 = vunpack.c.l.b16 %v2982
          %v3246 = vunpack.c.l.b16 %v2983
          %v3247 = vunpack.c.l.b16 %v2984
          %v3248 = vunpack.c.l.b16 %v2985
          %v3249 = vunpack.c.l.b16 %v2986
          %v3250 = vunpack.c.l.b16 %v2987
          %v3251 = vunpack.c.l.b16 %v2988
          %v3252 = vunpack.c.l.b16 %v2989
          %v3253 = vunpack.c.l.b16 %v2990
          %v3254 = vunpack.c.l.b16 %v2991
          %v3255 = vunpack.c.l.b16 %v2992
          %v3256 = vunpack.c.l.b16 %v2993
          %v3257 = vunpack.c.l.b16 %v2994
          %v3258 = vunpack.c.l.b16 %v2995
          %v3259 = vunpack.c.l.b16 %v2996
          %v3260 = vunpack.c.l.b16 %v2997
          %v3261 = vunpack.c.l.b16 %v2998
          %v3262 = vunpack.c.l.b16 %v2999
          %v3263 = vunpack.c.l.b16 %v3000
          %v3264 = vunpack.c.l.b16 %v3001
          %v3265 = vunpack.c.l.b16 %v3002
          %v3266 = vunpack.c.l.b16 %v3003
          %v3267 = vunpack.c.l.b16 %v3004
          %v3268 = vunpack.c.l.b16 %v3005
          %v3269 = vunpack.c.l.b16 %v3006
          %v3270 = vunpack.c.l.b16 %v3007
          %v3271 = vunpack.c.l.b16 %v3008
          %v3272 = vunpack.c.l.b16 %v3009
          %v3273 = vunpack.c.l.b16 %v3010
          %v3274 = vunpack.c.l.b16 %v3011
          %v3275 = vunpack.c.l.b16 %v3012
          %v3276 = vunpack.c.l.b16 %v3013
          %v3277 = vunpack.c.l.b16 %v3014
          %v3278 = vunpack.c.l.b16 %v3015
          %v3279 = vunpack.c.l.b16 %v3016
          %v3280 = vunpack.c.l.b16 %v3017
          %v3281 = vunpack.c.l.b16 %v3018
          %v3282 = vunpack.c.l.b16 %v3019
          %v3283 = vunpack.c.l.b16 %v3020
          %v3284 = vunpack.c.l.b16 %v3021
          %v3285 = vunpack.c.l.b16 %v3022
          %v3286 = vunpack.c.l.b16 %v3023
          %v3287 = vunpack.c.l.b16 %v3024
          %v3288 = vunpack.c.l.b16 %v3025
          %v3289 = vunpack.c.l.b16 %v3026
          %v3290 = vunpack.c.l.b16 %v3027
          %v3291 = vunpack.c.l.b16 %v3028
          %v3292 = vunpack.c.l.b16 %v3029
          %v3293 = vunpack.c.l.b16 %v3030
          %v3294 = vunpack.c.l.b16 %v3031
          %v3295 = vunpack.c.l.b16 %v3032
          %v3296 = vunpack.c.l.b16 %v3033
          %v3297 = vunpack.c.l.b16 %v3034
          %v3298 = vunpack.c.l.b16 %v3035
          %v3299 = vunpack.c.l.b16 %v3036
          %v3300 = vunpack.c.l.b16 %v3037
          %v3301 = vunpack.c.l.b16 %v3038
          %v3302 = vunpack.c.l.b16 %v3039
          %v3303 = vunpack.c.l.b16 %v3040
          %v3304 = vunpack.c.l.b16 %v3041
          %v3305 = vunpack.c.l.b16 %v3042
          %v3306 = vunpack.c.l.b16 %v3043
          %v3307 = vunpack.c.l.b16 %v3044
          %v3308 = vunpack.c.l.b16 %v3045
          %v3309 = vunpack.c.l.b16 %v3046
          %v3310 = vunpack.c.l.b16 %v3047
          %v3311 = vunpack.c.l.b16 %v3048
          %v3312 = vunpack.c.l.b16 %v3049
          %v3313 = vunpack.c.l.b16 %v3050
          %v3314 = vunpack.c.l.b16 %v3051
          %v3315 = vunpack.c.l.b16 %v3052
          %v3316 = vunpack.c.l.b16 %v3053
          %v3317 = vunpack.c.l.b16 %v3054
          %v3318 = vunpack.c.l.b16 %v3055
          %v3319 = vunpack.c.l.b16 %v3056
          %v3320 = vunpack.c.l.b16 %v3057
          %v3321 = vunpack.c.l.b16 %v3058
          %v3322 = vunpack.c.l.b16 %v3059
          %v3323 = vpack.c.b16 %v3196, %v3195
          %v3324 = vpack.c.b16 %v3198, %v3197
          %v3325 = vpack.c.b16 %v3200, %v3199
          %v3326 = vpack.c.b16 %v3202, %v3201
          %v3327 = vpack.c.b16 %v3204, %v3203
          %v3328 = vpack.c.b16 %v3206, %v3205
          %v3329 = vpack.c.b16 %v3208, %v3207
          %v3330 = vpack.c.b16 %v3210, %v3209
          %v3331 = vpack.c.b16 %v3212, %v3211
          %v3332 = vpack.c.b16 %v3214, %v3213
          %v3333 = vpack.c.b16 %v3216, %v3215
          %v3334 = vpack.c.b16 %v3218, %v3217
          %v3335 = vpack.c.b16 %v3220, %v3219
          %v3336 = vpack.c.b16 %v3222, %v3221
          %v3337 = vpack.c.b16 %v3224, %v3223
          %v3338 = vpack.c.b16 %v3226, %v3225
          %v3339 = vpack.c.b16 %v3228, %v3227
          %v3340 = vpack.c.b16 %v3230, %v3229
          %v3341 = vpack.c.b16 %v3232, %v3231
          %v3342 = vpack.c.b16 %v3234, %v3233
          %v3343 = vpack.c.b16 %v3236, %v3235
          %v3344 = vpack.c.b16 %v3238, %v3237
          %v3345 = vpack.c.b16 %v3240, %v3239
          %v3346 = vpack.c.b16 %v3242, %v3241
          %v3347 = vpack.c.b16 %v3244, %v3243
          %v3348 = vpack.c.b16 %v3246, %v3245
          %v3349 = vpack.c.b16 %v3248, %v3247
          %v3350 = vpack.c.b16 %v3250, %v3249
          %v3351 = vpack.c.b16 %v3252, %v3251
          %v3352 = vpack.c.b16 %v3254, %v3253
          %v3353 = vpack.c.b16 %v3256, %v3255
          %v3354 = vpack.c.b16 %v3258, %v3257
          %v3355 = vpack.c.b16 %v3260, %v3259
          %v3356 = vpack.c.b16 %v3262, %v3261
          %v3357 = vpack.c.b16 %v3264, %v3263
          %v3358 = vpack.c.b16 %v3266, %v3265
          %v3359 = vpack.c.b16 %v3268, %v3267
          %v3360 = vpack.c.b16 %v3270, %v3269
          %v3361 = vpack.c.b16 %v3272, %v3271
          %v3362 = vpack.c.b16 %v3274, %v3273
          %v3363 = vpack.c.b16 %v3276, %v3275
          %v3364 = vpack.c.b16 %v3278, %v3277
          %v3365 = vpack.c.b16 %v3280, %v3279
          %v3366 = vpack.c.b16 %v3282, %v3281
          %v3367 = vpack.c.b16 %v3284, %v3283
          %v3368 = vpack.c.b16 %v3286, %v3285
          %v3369 = vpack.c.b16 %v3288, %v3287
          %v3370 = vpack.c.b16 %v3290, %v3289
          %v3371 = vpack.c.b16 %v3292, %v3291
          %v3372 = vpack.c.b16 %v3294, %v3293
          %v3373 = vpack.c.b16 %v3296, %v3295
          %v3374 = vpack.c.b16 %v3298, %v3297
          %v3375 = vpack.c.b16 %v3300, %v3299
          %v3376 = vpack.c.b16 %v3302, %v3301
          %v3377 = vpack.c.b16 %v3304, %v3303
          %v3378 = vpack.c.b16 %v3306, %v3305
          %v3379 = vpack.c.b16 %v3308, %v3307
          %v3380 = vpack.c.b16 %v3310, %v3309
          %v3381 = vpack.c.b16 %v3312, %v3311
          %v3382 = vpack.c.b16 %v3314, %v3313
          %v3383 = vpack.c.b16 %v3316, %v3315
          %v3384 = vpack.c.b16 %v3318, %v3317
          %v3385 = vpack.c.b16 %v3320, %v3319
          %v3386 = vpack.c.b16 %v3322, %v3321
          %3451 = vmatprep.subr.bf16.mxu0 0
          %3452 = vmatpush1.bf16.msra.mxu0 %v3323
          %3453 = vmatprep.subr.bf16.mxu0 0
          %3454 = vmatpush1.bf16.msra.mxu0 %v3324
          %3455 = vmatprep.subr.bf16.mxu0 0
          %3456 = vmatpush1.bf16.msra.mxu0 %v3325
          %3457 = vmatprep.subr.bf16.mxu0 0
          %3458 = vmatpush1.bf16.msra.mxu0 %v3326
          %3459 = vmatprep.subr.bf16.mxu0 0
          %3460 = vmatpush1.bf16.msra.mxu0 %v3327
          %3461 = vmatprep.subr.bf16.mxu0 0
          %3462 = vmatpush1.bf16.msra.mxu0 %v3328
          %3463 = vmatprep.subr.bf16.mxu0 0
          %3464 = vmatpush1.bf16.msra.mxu0 %v3329
          %3465 = vmatprep.subr.bf16.mxu0 0
          %3466 = vmatpush1.bf16.msra.mxu0 %v3330
          %3467 = vmatprep.subr.bf16.mxu0 0
          %3468 = vmatpush1.bf16.msra.mxu0 %v3331
          %3469 = vmatprep.subr.bf16.mxu0 0
          %3470 = vmatpush1.bf16.msra.mxu0 %v3332
          %3471 = vmatprep.subr.bf16.mxu0 0
          %3472 = vmatpush1.bf16.msra.mxu0 %v3333
          %3473 = vmatprep.subr.bf16.mxu0 0
          %3474 = vmatpush1.bf16.msra.mxu0 %v3334
          %3475 = vmatprep.subr.bf16.mxu0 0
          %3476 = vmatpush1.bf16.msra.mxu0 %v3335
          %3477 = vmatprep.subr.bf16.mxu0 0
          %3478 = vmatpush1.bf16.msra.mxu0 %v3336
          %3479 = vmatprep.subr.bf16.mxu0 0
          %3480 = vmatpush1.bf16.msra.mxu0 %v3337
          %3481 = vmatprep.subr.bf16.mxu0 0
          %3482 = vmatpush1.bf16.msra.mxu0 %v3338
          %3483 = vmatprep.mubr.bf16.mxu0 %v2925
          %3484 = vmatmul.mubr.bf16.gmra.mrb[0].mxu0 %v2924
          %v3485 = vpop.f32.mrb[0].mxu0
          %v3486 = vadd.f32 %v3065, %v3485
          %v3487 = vpop.f32.mrb[0].mxu0
          %v3488 = vpop.f32.mrb[0].mxu0
          %v3489 = vadd.f32 %v3065, %v3488
          %v3490 = vpop.f32.mrb[0].mxu0
          %3491 = vdwg.mxu0
          %3492 = vmatprep.subr.bf16.mxu0 0
          %3493 = vmatpush1.bf16.msra.mxu0 %v3339
          %3494 = vmatprep.subr.bf16.mxu0 0
          %3495 = vmatpush1.bf16.msra.mxu0 %v3340
          %3496 = vmatprep.subr.bf16.mxu0 0
          %3497 = vmatpush1.bf16.msra.mxu0 %v3341
          %3498 = vmatprep.subr.bf16.mxu0 0
          %3499 = vmatpush1.bf16.msra.mxu0 %v3342
          %3500 = vmatprep.subr.bf16.mxu0 0
          %3501 = vmatpush1.bf16.msra.mxu0 %v3343
          %3502 = vmatprep.subr.bf16.mxu0 0
          %3503 = vmatpush1.bf16.msra.mxu0 %v3344
          %3504 = vmatprep.subr.bf16.mxu0 0
          %3505 = vmatpush1.bf16.msra.mxu0 %v3345
          %3506 = vmatprep.subr.bf16.mxu0 0
          %3507 = vmatpush1.bf16.msra.mxu0 %v3346
          %3508 = vmatprep.subr.bf16.mxu0 0
          %3509 = vmatpush1.bf16.msra.mxu0 %v3347
          %3510 = vmatprep.subr.bf16.mxu0 0
          %3511 = vmatpush1.bf16.msra.mxu0 %v3348
          %3512 = vmatprep.subr.bf16.mxu0 0
          %3513 = vmatpush1.bf16.msra.mxu0 %v3349
          %3514 = vmatprep.subr.bf16.mxu0 0
          %3515 = vmatpush1.bf16.msra.mxu0 %v3350
          %3516 = vmatprep.subr.bf16.mxu0 0
          %3517 = vmatpush1.bf16.msra.mxu0 %v3351
          %3518 = vmatprep.subr.bf16.mxu0 0
          %3519 = vmatpush1.bf16.msra.mxu0 %v3352
          %3520 = vmatprep.subr.bf16.mxu0 0
          %3521 = vmatpush1.bf16.msra.mxu0 %v3353
          %3522 = vmatprep.subr.bf16.mxu0 0
          %3523 = vmatpush1.bf16.msra.mxu0 %v3354
          %3524 = vmatprep.mubr.bf16.mxu0 %v2927
          %3525 = vmatmul.mubr.bf16.gmra.mrb[0].mxu0 %v2926
          %v3526 = vpop.f32.mrb[0].mxu0
          %v3527 = vadd.f32 %v3486, %v3526
          %v3528 = vpop.f32.mrb[0].mxu0
          %v3529 = vpop.f32.mrb[0].mxu0
          %v3530 = vadd.f32 %v3489, %v3529
          %v3531 = vpop.f32.mrb[0].mxu0
          %3532 = vdwg.mxu0
          %3533 = vmatprep.subr.bf16.mxu0 0
          %3534 = vmatpush1.bf16.msra.mxu0 %v3355
          %3535 = vmatprep.subr.bf16.mxu0 0
          %3536 = vmatpush1.bf16.msra.mxu0 %v3356
          %3537 = vmatprep.subr.bf16.mxu0 0
          %3538 = vmatpush1.bf16.msra.mxu0 %v3357
          %3539 = vmatprep.subr.bf16.mxu0 0
          %3540 = vmatpush1.bf16.msra.mxu0 %v3358
          %3541 = vmatprep.subr.bf16.mxu0 0
          %3542 = vmatpush1.bf16.msra.mxu0 %v3359
          %3543 = vmatprep.subr.bf16.mxu0 0
          %3544 = vmatpush1.bf16.msra.mxu0 %v3360
          %3545 = vmatprep.subr.bf16.mxu0 0
          %3546 = vmatpush1.bf16.msra.mxu0 %v3361
          %3547 = vmatprep.subr.bf16.mxu0 0
          %3548 = vmatpush1.bf16.msra.mxu0 %v3362
          %3549 = vmatprep.subr.bf16.mxu0 0
          %3550 = vmatpush1.bf16.msra.mxu0 %v3363
          %3551 = vmatprep.subr.bf16.mxu0 0
          %3552 = vmatpush1.bf16.msra.mxu0 %v3364
          %3553 = vmatprep.subr.bf16.mxu0 0
          %3554 = vmatpush1.bf16.msra.mxu0 %v3365
          %3555 = vmatprep.subr.bf16.mxu0 0
          %3556 = vmatpush1.bf16.msra.mxu0 %v3366
          %3557 = vmatprep.subr.bf16.mxu0 0
          %3558 = vmatpush1.bf16.msra.mxu0 %v3367
          %3559 = vmatprep.subr.bf16.mxu0 0
          %3560 = vmatpush1.bf16.msra.mxu0 %v3368
          %3561 = vmatprep.subr.bf16.mxu0 0
          %3562 = vmatpush1.bf16.msra.mxu0 %v3369
          %3563 = vmatprep.subr.bf16.mxu0 0
          %3564 = vmatpush1.bf16.msra.mxu0 %v3370
          %3565 = vmatprep.mubr.bf16.mxu0 %v2929
          %3566 = vmatmul.mubr.bf16.gmra.mrb[0].mxu0 %v2928
          %v3567 = vpop.f32.mrb[0].mxu0
          %v3568 = vadd.f32 %v3527, %v3567
          %v3569 = vpop.f32.mrb[0].mxu0
          %v3570 = vpop.f32.mrb[0].mxu0
          %v3571 = vadd.f32 %v3530, %v3570
          %v3572 = vpop.f32.mrb[0].mxu0
          %3573 = vdwg.mxu0
          %3574 = vmatprep.subr.bf16.mxu0 0
          %3575 = vmatpush1.bf16.msra.mxu0 %v3371
          %3576 = vmatprep.subr.bf16.mxu0 0
          %3577 = vmatpush1.bf16.msra.mxu0 %v3372
          %3578 = vmatprep.subr.bf16.mxu0 0
          %3579 = vmatpush1.bf16.msra.mxu0 %v3373
          %3580 = vmatprep.subr.bf16.mxu0 0
          %3581 = vmatpush1.bf16.msra.mxu0 %v3374
          %3582 = vmatprep.subr.bf16.mxu0 0
          %3583 = vmatpush1.bf16.msra.mxu0 %v3375
          %3584 = vmatprep.subr.bf16.mxu0 0
          %3585 = vmatpush1.bf16.msra.mxu0 %v3376
          %3586 = vmatprep.subr.bf16.mxu0 0
          %3587 = vmatpush1.bf16.msra.mxu0 %v3377
          %3588 = vmatprep.subr.bf16.mxu0 0
          %3589 = vmatpush1.bf16.msra.mxu0 %v3378
          %3590 = vmatprep.subr.bf16.mxu0 0
          %3591 = vmatpush1.bf16.msra.mxu0 %v3379
          %3592 = vmatprep.subr.bf16.mxu0 0
          %3593 = vmatpush1.bf16.msra.mxu0 %v3380
          %3594 = vmatprep.subr.bf16.mxu0 0
          %3595 = vmatpush1.bf16.msra.mxu0 %v3381
          %3596 = vmatprep.subr.bf16.mxu0 0
          %3597 = vmatpush1.bf16.msra.mxu0 %v3382
          %3598 = vmatprep.subr.bf16.mxu0 0
          %3599 = vmatpush1.bf16.msra.mxu0 %v3383
          %3600 = vmatprep.subr.bf16.mxu0 0
          %3601 = vmatpush1.bf16.msra.mxu0 %v3384
          %3602 = vmatprep.subr.bf16.mxu0 0
          %3603 = vmatpush1.bf16.msra.mxu0 %v3385
          %3604 = vmatprep.subr.bf16.mxu0 0
          %3605 = vmatpush1.bf16.msra.mxu0 %v3386
          %3606 = vmatprep.mubr.bf16.mxu0 %v2931
          %3607 = vmatmul.mubr.bf16.gmra.mrb[0].mxu0 %v2930
          %v3608 = vpop.f32.mrb[0].mxu0
          %v3609 = vadd.f32 %v3568, %v3608
          %v3610 = vpop.f32.mrb[0].mxu0
          %v3611 = vpop.f32.mrb[0].mxu0
          %v3612 = vadd.f32 %v3571, %v3611
          %v3613 = vpop.f32.mrb[0].mxu0
          %3614 = vdwg.mxu0
          %v3615 = vlaneseq
          %v3616 = vand.u32 %v3615, 127
          %vm3617 = vcmp.lt.s32.totalorder %v3616, 6
          %vm3618 = vcmp.eq.s32.totalorder %v3616, 6
          %v3619 = vsel %vm3618, %v3609, 0.0
          %v3620 = vsel %vm3618, %v3612, 0.0
          %3621 = vadd.xlane.f32.xlu0 %v3619
          %v3622 = vpop.xlane.xlu0 %3621
          %3623 = vadd.xlane.f32.xlu0 %v3620
          %v3624 = vpop.xlane.xlu0 %3623
          %v3625 = vsel %vm3617, %v3609, 0.0
          %v3626 = vsel %vm3617, %v3612, 0.0
          %3627 = vadd.xlane.f32.xlu0 %v3625
          %v3628 = vpop.xlane.xlu0 %3627
          %3629 = vadd.xlane.f32.xlu0 %v3626
          %v3630 = vpop.xlane.xlu0 %3629
          %v3631 = vmul.f32 %v3628, 0.16666667
          %v3632 = vmul.f32 %v3630, 0.16666667
          %v3633 = vadd.f32 %v3609, %v3622
          %v3634 = vadd.f32 %v3612, %v3624
          %v3635 = vsub.f32 %v3633, %v3631
          %v3636 = vsub.f32 %v3634, %v3632
          %v3637 = vsel %vm3617, %v3635, 0.0
          %v3638 = vsel %vm3617, %v3636, 0.0
          %3639 = vst [vmem:[%s307] sm:$0xff] %v3637
          %3640 = vst [vmem:[%s307 + $0x8] sm:$0xff] %v3638
        $region74: #{dueling_dqn_forward.7} parent=61 // pred_fallthru
          _
        %s3641 = smul.u32 2, %s20
        %p3642 = scmp.lt.s32.totalorder %s3641, 1
        %s3643 = scalar_select %p3642, %s3641, 1
        %s3644 = smul.addr %s3643, 8
        %s3645 = scalar_lea.vmem %s5, %s3644
        // Predicated region
        $region75: #{dueling_dqn_forward.7} parent=61 // pred_check
          %p3646 = pneg %p163
        $region76: #{dueling_dqn_forward.7} parent=61 // pred_check_branch
          %3648 = sbr.rel (%p3646) target = $region78
        $region77: #{dueling_dqn_forward.7} parent=61 // pred_region
          %s3649 = smul.u32 2, %s20
        $region78: #{dueling_dqn_forward.7} parent=61 // pred_fallthru
          _
        // Predicated region
        $region79: #{dueling_dqn_forward.7} parent=61 // pred_check
          %p3650 = pneg %p163
        $region80: #{dueling_dqn_forward.7} parent=61 // pred_check_branch
          %3652 = sbr.rel (%p3650) target = $region82
        $region81: #{dueling_dqn_forward.7} parent=61 // pred_region
          %s3653 = smul.u32 2, %s20
          %p3654 = scmp.lt.s32.totalorder %s3653, 1
          %s3655 = scalar_select %p3654, %s3653, 1
          %s3656 = smul.addr %s3655, 8
          %s3657 = scalar_lea.vmem %s5, %s3656
        $region82: #{dueling_dqn_forward.7} parent=61 // pred_fallthru
          _
      $region62: #{dueling_dqn_forward.7} parent=5 // pred_fallthru
        _
      %p3658 = scmp.le.s32.totalorder 2, %s11
      // Predicated region
      $region83: #{dueling_dqn_forward.7} parent=5 // pred_check
        %p3659 = pneg %p3658
      $region84: #{dueling_dqn_forward.7} parent=5 // pred_check_branch
        %3661 = sbr.rel (%p3659) target = $region86
      $region85: #{dueling_dqn_forward.7} parent=5 // pred_region
        %s3662 = ssub.s32 %s11, 2
      $region86: #{dueling_dqn_forward.7} parent=5 // pred_fallthru
        _
    $region6: #{dueling_dqn_forward.7} parent=1 // loop_footer
      %s15 = sadd.s32 1, %s11
    $region7: #{dueling_dqn_forward.7} parent=1 // loop_footer_branch
      %10 = sbr.rel target = $region3
    $region8: #{dueling_dqn_forward.7} parent=1 // loop_exit
      _

</llo_original>
